<compile_context>
chip_gen: v6e
topology: v6e:2x2x1
jax: 0.10.0
libtpu: 0.0.40
codegen_flags: <defaults>
</compile_context>

<pallas_src>
import functools

import jax
import jax.numpy as jnp
from jax import lax
from jax.experimental import pallas as pl
from jax.experimental.pallas import tpu as pltpu


def _round_up(n, m):
    return ((n + m - 1) // m) * m


# ----------------------------------------------------------------------------
# Fused kernel: one grid step == Bt samples through all layers + final Linear.
# ----------------------------------------------------------------------------
def _fused_encoder_kernel(x_ref, p_ref, o_ref, *, layer_cfgs, fc_cfg, Bt):
    act = x_ref[...].astype(jnp.float32)                 # (C0_pad, Bt*T0)

    for cfg in layer_cfgs:
        (C_in_p, _C_out, C_out_p, T_in, T_out, shifts, pool,
         r_w, r_g, r_be, r_mask, r_seg) = cfg
        BtT = Bt * T_in
        n_blk = len(shifts)

        # ---- stacked shifted operand, built entirely in registers ----------
        # Block j holds x_padded[:, shift_j : shift_j + T_in] for every sample.
        # Static lane slice + zero concat shifts the whole flat slab; the 0/1
        # mask row (precomputed host-side) zeroes the positions that would leak
        # across a sample boundary ('same' padding).
        blocks = []
        mi = 0
        for s in shifts:
            if s == 0:
                blocks.append(act)
                continue
            if s > 0:
                shifted = jnp.concatenate(
                    [act[:, s:], jnp.zeros((C_in_p, s), jnp.float32)], axis=1)
            else:
                shifted = jnp.concatenate(
                    [jnp.zeros((C_in_p, -s), jnp.float32), act[:, :BtT + s]], axis=1)
            mask = p_ref[r_mask + mi:r_mask + mi + 1, 0:BtT]        # (1, BtT)
            mi += 1
            blocks.append(shifted * mask)
        stacked = jnp.concatenate(blocks, axis=0)        # (n_blk*C_in_p, BtT), 8-aligned

        # ---- single MXU push: rows [0:C_out_p) = dilated conv,
        #                       rows [C_out_p:2*C_out_p) = 1x1 skip projection --
        ncol = n_blk * C_in_p
        wcomb = p_ref[r_w:r_w + 2 * C_out_p, 0:ncol]
        bias = p_ref[r_w:r_w + 2 * C_out_p, ncol:ncol + 1]
        # TODO(synk): pre-pack wcomb as bf16 and cast `stacked` to bf16 here once
        # the accuracy budget allows; kept f32 for the strict reference check.
        r = jnp.dot(wcomb, stacked, preferred_element_type=jnp.float32) + bias
        conv = r[:C_out_p, :]
        skip = r[C_out_p:, :]

        # ---- LayerNorm over timesteps (per sample), two-pass variance -------
        # Per-sample segment sums along the lane axis are tiny MXU matmuls
        # against a 0/1 (Bt, BtT) matrix -> no reshapes, no scratch.
        segT = p_ref[r_seg:r_seg + Bt, 0:BtT]            # (Bt, BtT)
        seg = segT.T                                     # (BtT, Bt)
        inv_t = 1.0 / T_in
        mean_b = jnp.dot(conv, seg, preferred_element_type=jnp.float32) * inv_t
        mean_f = jnp.dot(mean_b, segT, preferred_element_type=jnp.float32)
        cen = conv - mean_f
        var_b = jnp.dot(cen * cen, seg, preferred_element_type=jnp.float32) * inv_t
        istd_f = jnp.dot(lax.rsqrt(var_b + 1e-5), segT,
                         preferred_element_type=jnp.float32)
        gam = p_ref[r_g:r_g + 1, 0:BtT]                  # gamma tiled across samples
        bet = p_ref[r_be:r_be + 1, 0:BtT]
        y = cen * istd_f * gam + bet

        # TODO(synk): torch nn.GELU default is exact erf; tanh approximation kept
        # because an erf lowering is not guaranteed in Mosaic.
        y = jax.nn.gelu(y, approximate=True)

        # ---- skip add + AdaptiveMaxPool1d (divisible case) ------------------
        z = y + skip                                     # (C_out_p, BtT)
        if pool == 1:
            act = z
        else:
            act = jnp.max(z.reshape(C_out_p, Bt * T_out, pool), axis=-1)

    # ---- flatten (per-sample (C, T) row-major) + final Linear, in registers --
    C_last_p, T_last, F_p, r_wf, r_bf, L_pad = fc_cfg
    act3 = act.reshape(C_last_p, Bt, T_last)             # split lane dim
    featT = jnp.swapaxes(act3, 1, 2).reshape(F_p, Bt)     # rows ordered c*T_last + t
    feat = featT.T                                        # (Bt, F_p)
    wf = p_ref[r_wf:r_wf + F_p, 0:L_pad]
    bf = p_ref[r_bf:r_bf + 1, 0:L_pad]
    out = jnp.dot(feat, wf, preferred_element_type=jnp.float32) + bf
    o_ref[...] = out.astype(o_ref.dtype)                  # lane-dense (Bt, 128) store


# ----------------------------------------------------------------------------
# Host-side packing of every parameter into one lane-dense f32 slab.
# ----------------------------------------------------------------------------
def prepare_encoder_params(params, *, K, timesteps, Bt):
    layers_p = params["layers"]
    wf, bf = params["fc"]
    L = wf.shape[1]
    L_pad = _round_up(L, 128)
    W = _round_up(max(128, Bt * timesteps[0], L_pad), 128)

    cursor = 0
    placements = []

    def alloc(nrows):
        nonlocal cursor
        start = cursor
        cursor = _round_up(cursor + nrows, 8)        # 8-aligned blocks (sublane tiles)
        return start

    layer_cfgs = []
    c_last_p = None
    for i, (w, b, g, beta, ws, bs) in enumerate(layers_p):
        C_out, C_in, _ = w.shape
        T_in, T_out = timesteps[i], timesteps[i + 1]
        assert T_in % T_out == 0, "AdaptiveMaxPool1d: only the divisible case is supported"
        C_in_p, C_out_p = _round_up(C_in, 8), _round_up(C_out, 8)
        BtT = Bt * T_in
        dil = 2 ** i
        pad_total = dil * (K - 1)                    # PyTorch padding='same'
        pad_left = pad_total // 2
        shifts = [k * dil - pad_left for k in range(K)]
        # the 1x1 skip conv reuses the zero-shift tap when one exists
        if pad_left % dil == 0 and pad_left // dil < K:
            skip_blk = pad_left // dil
        else:
            shifts.append(0)
            skip_blk = K
        n_blk = len(shifts)

        # combined (conv taps | skip) weight, bias folded in as the last column
        wblocks = []
        for k in range(n_blk):
            wb = jnp.zeros((2 * C_out_p, C_in_p), jnp.float32)
            if k < K:
                wb = wb.at[:C_out, :C_in].set(w[:, :, k])
            if k == skip_blk:
                wb = wb.at[C_out_p:C_out_p + C_out, :C_in].set(ws)
            wblocks.append(wb)
        bias_col = jnp.zeros((2 * C_out_p, 1), jnp.float32)
        bias_col = bias_col.at[:C_out, 0].set(b).at[C_out_p:C_out_p + C_out, 0].set(bs)
        wslab = jnp.concatenate(wblocks + [bias_col], axis=1)
        r_w = alloc(2 * C_out_p)
        placements.append((r_w, wslab))

        # gamma/beta tiled across the Bt samples, 'same'-padding masks per shift,
        # and the (Bt, BtT) segment matrix for per-sample LayerNorm statistics.
        col = jnp.arange(BtT)
        t_loc = col % T_in
        rows = [jnp.tile(g.reshape(1, T_in), (1, Bt)),
                jnp.tile(beta.reshape(1, T_in), (1, Bt))]
        n_masks = 0
        for s in shifts:
            if s == 0:
                continue
            lo, hi = max(0, -s), min(T_in, T_in - s)
            rows.append(((t_loc >= lo) & (t_loc < hi))
                        .astype(jnp.float32).reshape(1, BtT))
            n_masks += 1
        segT = (col[None, :] // T_in == jnp.arange(Bt)[:, None]).astype(jnp.float32)
        rows.append(segT)
        misc = jnp.concatenate(rows, axis=0)
        r_misc = alloc(misc.shape[0])
        placements.append((r_misc, misc))

        layer_cfgs.append((C_in_p, C_out, C_out_p, T_in, T_out, tuple(shifts),
                           T_in // T_out, r_w, r_misc, r_misc + 1, r_misc + 2,
                           r_misc + 2 + n_masks))
        c_last_p = C_out_p

    # final Linear: rows ordered c*T_last + t (PyTorch flatten order), padded
    # channels get zero rows, latent dim lane-padded to 128.
    C_last = layers_p[-1][0].shape[0]
    T_last = timesteps[-1]
    F_p = c_last_p * T_last
    wf_pad = jnp.zeros((F_p, L_pad), jnp.float32).at[:C_last * T_last, :L].set(wf)
    bf_pad = jnp.zeros((1, L_pad), jnp.float32).at[0, :L].set(bf)
    r_wf = alloc(F_p)
    placements.append((r_wf, wf_pad))
    r_bf = alloc(1)
    placements.append((r_bf, bf_pad))

    pslab = jnp.zeros((_round_up(cursor, 8), W), jnp.float32)
    for r0, arr in placements:
        pslab = pslab.at[r0:r0 + arr.shape[0], 0:arr.shape[1]].set(arr)

    return dict(pslab=pslab, layer_cfgs=tuple(layer_cfgs),
                fc_cfg=(c_last_p, T_last, F_p, r_wf, r_bf, L_pad),
                Bt=Bt, latent_dim=L, L_pad=L_pad,
                C0=layers_p[0][0].shape[1],
                C0_p=_round_up(layers_p[0][0].shape[1], 8),
                T0=timesteps[0])


def skip_encoder_forward(x, prep):
    pslab, layer_cfgs, fc_cfg = prep["pslab"], prep["layer_cfgs"], prep["fc_cfg"]
    Bt, L, L_pad = prep["Bt"], prep["latent_dim"], prep["L_pad"]
    C0, C0_p, T0 = prep["C0"], prep["C0_p"], prep["T0"]

    B = x.shape[0]
    assert x.shape[1] == C0 and x.shape[2] == T0
    Bp = _round_up(B, Bt)
    # zero-pad batch to the batch tile and channels to a sublane-aligned count,
    # then present a (C0_p, Bp*T0) slab so each grid step's Bt samples sit side
    # by side along the lane axis (layout plumbing outside the kernel).
    xp = jnp.pad(x.astype(jnp.float32), ((0, Bp - B), (0, C0_p - C0), (0, 0)))
    x_cbt = jnp.transpose(xp, (1, 0, 2)).reshape(C0_p, Bp * T0)

    kernel = functools.partial(_fused_encoder_kernel, layer_cfgs=layer_cfgs,
                               fc_cfg=fc_cfg, Bt=Bt)
    out = pl.pallas_call(
        kernel,
        out_shape=jax.ShapeDtypeStruct((Bp, L_pad), jnp.float32),
        grid=(Bp // Bt,),
        in_specs=[
            pl.BlockSpec((C0_p, Bt * T0), lambda b: (0, b)),
            pl.BlockSpec(pslab.shape, lambda b: (0, 0)),   # weights: VMEM-resident
        ],
        out_specs=pl.BlockSpec((Bt, L_pad), lambda b: (b, 0)),
        compiler_params=pltpu.CompilerParams(dimension_semantics=("parallel",)),
    )(x_cbt, pslab)
    return out[:B, :L]


# ----------------------------------------------------------------------------
# Parameter init (deterministic, synthetic) + pure-JAX reference for checking
# ----------------------------------------------------------------------------
def init_params(key, channels, timesteps, K, latent_dim):
    layers = []
    for i in range(len(timesteps) - 1):
        cin, cout, tin = channels[i], channels[i + 1], timesteps[i]
        key, k1, k2, k3, k4 = jax.random.split(key, 5)
        w = jax.random.normal(k1, (cout, cin, K), jnp.float32) / (cin * K) ** 0.5
        b = 0.01 * jax.random.normal(k2, (cout,), jnp.float32)
        g = jnp.ones((tin,), jnp.float32)
        beta = jnp.zeros((tin,), jnp.float32)
        ws = jax.random.normal(k3, (cout, cin), jnp.float32) / cin ** 0.5
        bs = 0.01 * jax.random.normal(k4, (cout,), jnp.float32)
        layers.append((w, b, g, beta, ws, bs))
    F = channels[-1] * timesteps[-1]
    key, k1, k2 = jax.random.split(key, 3)
    wf = jax.random.normal(k1, (F, latent_dim), jnp.float32) / F ** 0.5
    bf = 0.01 * jax.random.normal(k2, (latent_dim,), jnp.float32)
    return {"layers": layers, "fc": (wf, bf)}


def _reference_forward(x, params, *, K, timesteps):
    """Plain-JAX reference (same math, unfused)."""
    B = x.shape[0]
    h = x
    for i, (w, b, g, beta, ws, bs) in enumerate(params["layers"]):
        dil = 2 ** i
        C_out = w.shape[0]
        T_in = h.shape[-1]
        pad_total = dil * (K - 1)
        p_l, p_r = pad_total // 2, pad_total - pad_total // 2
        hp = jnp.pad(h, ((0, 0), (0, 0), (p_l, p_r)))
        conv = jnp.zeros((B, C_out, T_in), jnp.float32)
        for k in range(K):
            conv = conv + jnp.einsum('oc,bct->bot', w[:, :, k],
                                     hp[:, :, k * dil:k * dil + T_in],
                                     precision='highest')
        conv = conv + b[None, :, None]
        mean = conv.mean(-1, keepdims=True)
        var = ((conv - mean) ** 2).mean(-1, keepdims=True)
        y = (conv - mean) / jnp.sqrt(var + 1e-5) * g[None, None, :] + beta[None, None, :]
        y = jax.nn.gelu(y, approximate=True)
        skip = jnp.einsum('oc,bct->bot', ws, h, precision='highest') + bs[None, :, None]
        z = y + skip
        T_out = timesteps[i + 1]
        pool = T_in // T_out
        h = z.reshape(B, C_out, T_out, pool).max(-1)
    wf, bf = params["fc"]
    return jnp.dot(h.reshape(B, -1), wf, precision='highest') + bf


if __name__ == "__main__":
    B = 16
    channels = [4, 8, 16]
    timesteps = [32, 16, 8]
    latent_dim = 10
    K = 3
    Bt = 8        # batch tile per grid step -> conv matmul lane dim = Bt*T0 = 256

    key = jax.random.PRNGKey(0)
    key, xkey = jax.random.split(key)
    x = jax.random.normal(xkey, (B, channels[0], timesteps[0]), jnp.float32)
    params = init_params(key, channels, timesteps, K, latent_dim)

    prep = prepare_encoder_params(params, K=K, timesteps=timesteps, Bt=Bt)
    out = skip_encoder_forward(x, prep)
    out = jax.block_until_ready(out)

    assert out.shape == (B, latent_dim), out.shape
    assert bool(jnp.all(jnp.isfinite(out)))

    ref = _reference_forward(x, params, K=K, timesteps=timesteps)
    assert bool(jnp.allclose(out, ref, rtol=1e-2, atol=1e-2)), \
        float(jnp.max(jnp.abs(out - ref)))
    print("KERNEL_OK")
</pallas_src>

<mosaic_0001>
module attributes {stable_mosaic.version = 11 : i64} {
  func.func @_fused_encoder_kernel(%arg0: i32, %arg1: memref<8x256xf32, #tpu.memory_space<vmem>>, %arg2: memref<216x256xf32, #tpu.memory_space<vmem>>, %arg3: memref<8x128xf32, #tpu.memory_space<vmem>>) attributes {dimension_semantics = [#tpu.dimension_semantics<parallel>], iteration_bounds = array<i64: 2>, scalar_prefetch = 0 : i64, scratch_operands = 0 : i64, tpu.core_type = #tpu.core_type<tc>, window_params = [{transform_indices = @transform_0, window_bounds = array<i64: 8, 256>}, {pipeline_mode = #tpu.pipeline_mode<synchronous>, transform_indices = @transform_1, window_bounds = array<i64: 216, 256>}, {transform_indices = @transform_2, window_bounds = array<i64: 8, 128>}]} {
    %c0 = arith.constant 0 : index
    %c0_0 = arith.constant 0 : index
    %0 = vector.load %arg1[%c0, %c0_0] : memref<8x256xf32, #tpu.memory_space<vmem>>, vector<8x256xf32>
    %cst = arith.constant 0.000000e+00 : f32
    %1 = vector.broadcast %cst : f32 to vector<8x1xf32>
    %2 = vector.extract_strided_slice %0 {offsets = [0, 0], sizes = [8, 255], strides = [1, 1]} : vector<8x256xf32> to vector<8x255xf32>
    %3 = tpu.concatenate %1, %2 in 1 : vector<8x1xf32>, vector<8x255xf32> -> vector<8x256xf32>
    %c18 = arith.constant 18 : index
    %c0_1 = arith.constant 0 : index
    %4 = vector.load %arg2[%c18, %c0_1] : memref<216x256xf32, #tpu.memory_space<vmem>>, vector<1x256xf32>
    %5 = vector.broadcast %4 : vector<1x256xf32> to vector<8x256xf32>
    %6 = arith.mulf %3, %5 : vector<8x256xf32>
    %7 = vector.extract_strided_slice %0 {offsets = [0, 1], sizes = [8, 255], strides = [1, 1]} : vector<8x256xf32> to vector<8x255xf32>
    %cst_2 = arith.constant 0.000000e+00 : f32
    %8 = vector.broadcast %cst_2 : f32 to vector<8x1xf32>
    %9 = tpu.concatenate %7, %8 in 1 : vector<8x255xf32>, vector<8x1xf32> -> vector<8x256xf32>
    %c19 = arith.constant 19 : index
    %c0_3 = arith.constant 0 : index
    %10 = vector.load %arg2[%c19, %c0_3] : memref<216x256xf32, #tpu.memory_space<vmem>>, vector<1x256xf32>
    %11 = vector.broadcast %10 : vector<1x256xf32> to vector<8x256xf32>
    %12 = arith.mulf %9, %11 : vector<8x256xf32>
    %13 = tpu.concatenate %6, %0, %12 in 0 : vector<8x256xf32>, vector<8x256xf32>, vector<8x256xf32> -> vector<24x256xf32>
    %c0_4 = arith.constant 0 : index
    %c0_5 = arith.constant 0 : index
    %14 = vector.load %arg2[%c0_4, %c0_5] : memref<216x256xf32, #tpu.memory_space<vmem>>, vector<16x24xf32>
    %c0_6 = arith.constant 0 : index
    %c24 = arith.constant 24 : index
    %15 = vector.load %arg2[%c0_6, %c24] : memref<216x256xf32, #tpu.memory_space<vmem>>, vector<16x1xf32>
    %cst_7 = arith.constant dense<0.000000e+00> : vector<16x256xf32>
    %16 = tpu.matmul %14, %13, %cst_7 {dimension_numbers = #tpu.dot_dimension_numbers<[1], [0], [0], [1], [0, 0, 1, 1], [], []>} : vector<16x24xf32>, vector<24x256xf32>, vector<16x256xf32> -> vector<16x256xf32>
    %17 = vector.broadcast %15 : vector<16x1xf32> to vector<16x256xf32>
    %18 = arith.addf %16, %17 : vector<16x256xf32>
    %19 = vector.extract_strided_slice %18 {offsets = [0, 0], sizes = [8, 256], strides = [1, 1]} : vector<16x256xf32> to vector<8x256xf32>
    %20 = vector.extract_strided_slice %18 {offsets = [8, 0], sizes = [8, 256], strides = [1, 1]} : vector<16x256xf32> to vector<8x256xf32>
    %c20 = arith.constant 20 : index
    %c0_8 = arith.constant 0 : index
    %21 = vector.load %arg2[%c20, %c0_8] : memref<216x256xf32, #tpu.memory_space<vmem>>, vector<8x256xf32>
    %22 = tpu.transpose %21, [1, 0] : vector<8x256xf32> -> vector<256x8xf32>
    %cst_9 = arith.constant dense<0.000000e+00> : vector<8x8xf32>
    %23 = tpu.matmul %19, %22, %cst_9 {dimension_numbers = #tpu.dot_dimension_numbers<[1], [0], [0], [1], [0, 0, 1, 1], [], []>} : vector<8x256xf32>, vector<256x8xf32>, vector<8x8xf32> -> vector<8x8xf32>
    %cst_10 = arith.constant 3.125000e-02 : f32
    %24 = vector.broadcast %cst_10 : f32 to vector<8x8xf32>
    %25 = arith.mulf %23, %24 : vector<8x8xf32>
    %cst_11 = arith.constant dense<0.000000e+00> : vector<8x256xf32>
    %26 = tpu.matmul %25, %21, %cst_11 {dimension_numbers = #tpu.dot_dimension_numbers<[1], [0], [0], [1], [0, 0, 1, 1], [], []>} : vector<8x8xf32>, vector<8x256xf32>, vector<8x256xf32> -> vector<8x256xf32>
    %27 = arith.subf %19, %26 : vector<8x256xf32>
    %28 = arith.mulf %27, %27 : vector<8x256xf32>
    %cst_12 = arith.constant dense<0.000000e+00> : vector<8x8xf32>
    %29 = tpu.matmul %28, %22, %cst_12 {dimension_numbers = #tpu.dot_dimension_numbers<[1], [0], [0], [1], [0, 0, 1, 1], [], []>} : vector<8x256xf32>, vector<256x8xf32>, vector<8x8xf32> -> vector<8x8xf32>
    %cst_13 = arith.constant 3.125000e-02 : f32
    %30 = vector.broadcast %cst_13 : f32 to vector<8x8xf32>
    %31 = arith.mulf %29, %30 : vector<8x8xf32>
    %cst_14 = arith.constant 9.99999974E-6 : f32
    %32 = vector.broadcast %cst_14 : f32 to vector<8x8xf32>
    %33 = arith.addf %31, %32 : vector<8x8xf32>
    %34 = math.rsqrt %33 : vector<8x8xf32>
    %cst_15 = arith.constant dense<0.000000e+00> : vector<8x256xf32>
    %35 = tpu.matmul %34, %21, %cst_15 {dimension_numbers = #tpu.dot_dimension_numbers<[1], [0], [0], [1], [0, 0, 1, 1], [], []>} : vector<8x8xf32>, vector<8x256xf32>, vector<8x256xf32> -> vector<8x256xf32>
    %c16 = arith.constant 16 : index
    %c0_16 = arith.constant 0 : index
    %36 = vector.load %arg2[%c16, %c0_16] : memref<216x256xf32, #tpu.memory_space<vmem>>, vector<1x256xf32>
    %c17 = arith.constant 17 : index
    %c0_17 = arith.constant 0 : index
    %37 = vector.load %arg2[%c17, %c0_17] : memref<216x256xf32, #tpu.memory_space<vmem>>, vector<1x256xf32>
    %38 = arith.mulf %27, %35 : vector<8x256xf32>
    %39 = vector.broadcast %36 : vector<1x256xf32> to vector<8x256xf32>
    %40 = arith.mulf %38, %39 : vector<8x256xf32>
    %41 = vector.broadcast %37 : vector<1x256xf32> to vector<8x256xf32>
    %42 = arith.addf %40, %41 : vector<8x256xf32>
    %43 = arith.mulf %42, %42 : vector<8x256xf32>
    %44 = arith.mulf %42, %43 : vector<8x256xf32>
    %cst_18 = arith.constant 4.471500e-02 : f32
    %45 = vector.broadcast %cst_18 : f32 to vector<8x256xf32>
    %46 = arith.mulf %45, %44 : vector<8x256xf32>
    %47 = arith.addf %42, %46 : vector<8x256xf32>
    %cst_19 = arith.constant 0.797884583 : f32
    %48 = vector.broadcast %cst_19 : f32 to vector<8x256xf32>
    %49 = arith.mulf %48, %47 : vector<8x256xf32>
    %50 = math.tanh %49 : vector<8x256xf32>
    %cst_20 = arith.constant 1.000000e+00 : f32
    %51 = vector.broadcast %cst_20 : f32 to vector<8x256xf32>
    %52 = arith.addf %51, %50 : vector<8x256xf32>
    %cst_21 = arith.constant 5.000000e-01 : f32
    %53 = vector.broadcast %cst_21 : f32 to vector<8x256xf32>
    %54 = arith.mulf %53, %52 : vector<8x256xf32>
    %55 = arith.mulf %42, %54 : vector<8x256xf32>
    %56 = arith.addf %55, %20 : vector<8x256xf32>
    %57 = vector.shape_cast %56 : vector<8x256xf32> to vector<8x128x2xf32>
    %cst_22 = arith.constant dense<0xFF800000> : vector<8x128xf32>
    %58 = vector.multi_reduction <maximumf>, %57, %cst_22 [2] : vector<8x128x2xf32> to vector<8x128xf32>
    %cst_23 = arith.constant 0.000000e+00 : f32
    %59 = vector.broadcast %cst_23 : f32 to vector<8x2xf32>
    %60 = vector.extract_strided_slice %58 {offsets = [0, 0], sizes = [8, 126], strides = [1, 1]} : vector<8x128xf32> to vector<8x126xf32>
    %61 = tpu.concatenate %59, %60 in 1 : vector<8x2xf32>, vector<8x126xf32> -> vector<8x128xf32>
    %c66 = arith.constant 66 : index
    %c0_24 = arith.constant 0 : index
    %62 = vector.load %arg2[%c66, %c0_24] : memref<216x256xf32, #tpu.memory_space<vmem>>, vector<1x128xf32>
    %63 = vector.broadcast %62 : vector<1x128xf32> to vector<8x128xf32>
    %64 = arith.mulf %61, %63 : vector<8x128xf32>
    %65 = vector.extract_strided_slice %58 {offsets = [0, 2], sizes = [8, 126], strides = [1, 1]} : vector<8x128xf32> to vector<8x126xf32>
    %cst_25 = arith.constant 0.000000e+00 : f32
    %66 = vector.broadcast %cst_25 : f32 to vector<8x2xf32>
    %67 = tpu.concatenate %65, %66 in 1 : vector<8x126xf32>, vector<8x2xf32> -> vector<8x128xf32>
    %c67 = arith.constant 67 : index
    %c0_26 = arith.constant 0 : index
    %68 = vector.load %arg2[%c67, %c0_26] : memref<216x256xf32, #tpu.memory_space<vmem>>, vector<1x128xf32>
    %69 = vector.broadcast %68 : vector<1x128xf32> to vector<8x128xf32>
    %70 = arith.mulf %67, %69 : vector<8x128xf32>
    %71 = tpu.concatenate %64, %58, %70 in 0 : vector<8x128xf32>, vector<8x128xf32>, vector<8x128xf32> -> vector<24x128xf32>
    %c32 = arith.constant 32 : index
    %c0_27 = arith.constant 0 : index
    %72 = vector.load %arg2[%c32, %c0_27] : memref<216x256xf32, #tpu.memory_space<vmem>>, vector<32x24xf32>
    %c32_28 = arith.constant 32 : index
    %c24_29 = arith.constant 24 : index
    %73 = vector.load %arg2[%c32_28, %c24_29] : memref<216x256xf32, #tpu.memory_space<vmem>>, vector<32x1xf32>
    %cst_30 = arith.constant dense<0.000000e+00> : vector<32x128xf32>
    %74 = tpu.matmul %72, %71, %cst_30 {dimension_numbers = #tpu.dot_dimension_numbers<[1], [0], [0], [1], [0, 0, 1, 1], [], []>} : vector<32x24xf32>, vector<24x128xf32>, vector<32x128xf32> -> vector<32x128xf32>
    %75 = vector.broadcast %73 : vector<32x1xf32> to vector<32x128xf32>
    %76 = arith.addf %74, %75 : vector<32x128xf32>
    %77 = vector.extract_strided_slice %76 {offsets = [0, 0], sizes = [16, 128], strides = [1, 1]} : vector<32x128xf32> to vector<16x128xf32>
    %78 = vector.extract_strided_slice %76 {offsets = [16, 0], sizes = [16, 128], strides = [1, 1]} : vector<32x128xf32> to vector<16x128xf32>
    %c68 = arith.constant 68 : index
    %c0_31 = arith.constant 0 : index
    %79 = vector.load %arg2[%c68, %c0_31] : memref<216x256xf32, #tpu.memory_space<vmem>>, vector<8x128xf32>
    %80 = tpu.transpose %79, [1, 0] : vector<8x128xf32> -> vector<128x8xf32>
    %cst_32 = arith.constant dense<0.000000e+00> : vector<16x8xf32>
    %81 = tpu.matmul %77, %80, %cst_32 {dimension_numbers = #tpu.dot_dimension_numbers<[1], [0], [0], [1], [0, 0, 1, 1], [], []>} : vector<16x128xf32>, vector<128x8xf32>, vector<16x8xf32> -> vector<16x8xf32>
    %cst_33 = arith.constant 6.250000e-02 : f32
    %82 = vector.broadcast %cst_33 : f32 to vector<16x8xf32>
    %83 = arith.mulf %81, %82 : vector<16x8xf32>
    %cst_34 = arith.constant dense<0.000000e+00> : vector<16x128xf32>
    %84 = tpu.matmul %83, %79, %cst_34 {dimension_numbers = #tpu.dot_dimension_numbers<[1], [0], [0], [1], [0, 0, 1, 1], [], []>} : vector<16x8xf32>, vector<8x128xf32>, vector<16x128xf32> -> vector<16x128xf32>
    %85 = arith.subf %77, %84 : vector<16x128xf32>
    %86 = arith.mulf %85, %85 : vector<16x128xf32>
    %cst_35 = arith.constant dense<0.000000e+00> : vector<16x8xf32>
    %87 = tpu.matmul %86, %80, %cst_35 {dimension_numbers = #tpu.dot_dimension_numbers<[1], [0], [0], [1], [0, 0, 1, 1], [], []>} : vector<16x128xf32>, vector<128x8xf32>, vector<16x8xf32> -> vector<16x8xf32>
    %cst_36 = arith.constant 6.250000e-02 : f32
    %88 = vector.broadcast %cst_36 : f32 to vector<16x8xf32>
    %89 = arith.mulf %87, %88 : vector<16x8xf32>
    %cst_37 = arith.constant 9.99999974E-6 : f32
    %90 = vector.broadcast %cst_37 : f32 to vector<16x8xf32>
    %91 = arith.addf %89, %90 : vector<16x8xf32>
    %92 = math.rsqrt %91 : vector<16x8xf32>
    %cst_38 = arith.constant dense<0.000000e+00> : vector<16x128xf32>
    %93 = tpu.matmul %92, %79, %cst_38 {dimension_numbers = #tpu.dot_dimension_numbers<[1], [0], [0], [1], [0, 0, 1, 1], [], []>} : vector<16x8xf32>, vector<8x128xf32>, vector<16x128xf32> -> vector<16x128xf32>
    %c64 = arith.constant 64 : index
    %c0_39 = arith.constant 0 : index
    %94 = vector.load %arg2[%c64, %c0_39] : memref<216x256xf32, #tpu.memory_space<vmem>>, vector<1x128xf32>
    %c65 = arith.constant 65 : index
    %c0_40 = arith.constant 0 : index
    %95 = vector.load %arg2[%c65, %c0_40] : memref<216x256xf32, #tpu.memory_space<vmem>>, vector<1x128xf32>
    %96 = arith.mulf %85, %93 : vector<16x128xf32>
    %97 = vector.broadcast %94 : vector<1x128xf32> to vector<16x128xf32>
    %98 = arith.mulf %96, %97 : vector<16x128xf32>
    %99 = vector.broadcast %95 : vector<1x128xf32> to vector<16x128xf32>
    %100 = arith.addf %98, %99 : vector<16x128xf32>
    %101 = arith.mulf %100, %100 : vector<16x128xf32>
    %102 = arith.mulf %100, %101 : vector<16x128xf32>
    %cst_41 = arith.constant 4.471500e-02 : f32
    %103 = vector.broadcast %cst_41 : f32 to vector<16x128xf32>
    %104 = arith.mulf %103, %102 : vector<16x128xf32>
    %105 = arith.addf %100, %104 : vector<16x128xf32>
    %cst_42 = arith.constant 0.797884583 : f32
    %106 = vector.broadcast %cst_42 : f32 to vector<16x128xf32>
    %107 = arith.mulf %106, %105 : vector<16x128xf32>
    %108 = math.tanh %107 : vector<16x128xf32>
    %cst_43 = arith.constant 1.000000e+00 : f32
    %109 = vector.broadcast %cst_43 : f32 to vector<16x128xf32>
    %110 = arith.addf %109, %108 : vector<16x128xf32>
    %cst_44 = arith.constant 5.000000e-01 : f32
    %111 = vector.broadcast %cst_44 : f32 to vector<16x128xf32>
    %112 = arith.mulf %111, %110 : vector<16x128xf32>
    %113 = arith.mulf %100, %112 : vector<16x128xf32>
    %114 = arith.addf %113, %78 : vector<16x128xf32>
    %115 = vector.shape_cast %114 : vector<16x128xf32> to vector<16x64x2xf32>
    %cst_45 = arith.constant dense<0xFF800000> : vector<16x64xf32>
    %116 = vector.multi_reduction <maximumf>, %115, %cst_45 [2] : vector<16x64x2xf32> to vector<16x64xf32>
    %117 = vector.shape_cast %116 : vector<16x64xf32> to vector<16x8x8xf32>
    %118 = tpu.transpose %117, [0, 2, 1] : vector<16x8x8xf32> -> vector<16x8x8xf32>
    %119 = vector.shape_cast %118 : vector<16x8x8xf32> to vector<128x8xf32>
    %120 = tpu.transpose %119, [1, 0] : vector<128x8xf32> -> vector<8x128xf32>
    %c80 = arith.constant 80 : index
    %c0_46 = arith.constant 0 : index
    %121 = vector.load %arg2[%c80, %c0_46] : memref<216x256xf32, #tpu.memory_space<vmem>>, vector<128x128xf32>
    %c208 = arith.constant 208 : index
    %c0_47 = arith.constant 0 : index
    %122 = vector.load %arg2[%c208, %c0_47] : memref<216x256xf32, #tpu.memory_space<vmem>>, vector<1x128xf32>
    %cst_48 = arith.constant dense<0.000000e+00> : vector<8x128xf32>
    %123 = tpu.matmul %120, %121, %cst_48 {dimension_numbers = #tpu.dot_dimension_numbers<[1], [0], [0], [1], [0, 0, 1, 1], [], []>} : vector<8x128xf32>, vector<128x128xf32>, vector<8x128xf32> -> vector<8x128xf32>
    %124 = vector.broadcast %122 : vector<1x128xf32> to vector<8x128xf32>
    %125 = arith.addf %123, %124 : vector<8x128xf32>
    %c0_49 = arith.constant 0 : index
    %c0_50 = arith.constant 0 : index
    %126 = vector.load %arg3[%c0_49, %c0_50] : memref<8x128xf32, #tpu.memory_space<vmem>>, vector<8x128xf32>
    tpu.vector_store %arg3[%c0_49, %c0_50], %125 {strides = array<i32>} : memref<8x128xf32, #tpu.memory_space<vmem>>, vector<8x128xf32>,
    return
  }
  func.func @transform_0(%arg0: i32) -> (i32, i32) {
    %c0_i32 = arith.constant 0 : i32
    %c0_i32_0 = arith.constant 0 : i32
    return %c0_i32, %arg0 : i32, i32
  }
  func.func @transform_1(%arg0: i32) -> (i32, i32) {
    %c0_i32 = arith.constant 0 : i32
    %c0_i32_0 = arith.constant 0 : i32
    %c0_i32_1 = arith.constant 0 : i32
    return %c0_i32, %c0_i32_0 : i32, i32
  }
  func.func @transform_2(%arg0: i32) -> (i32, i32) {
    %c0_i32 = arith.constant 0 : i32
    %c0_i32_0 = arith.constant 0 : i32
    return %arg0, %c0_i32 : i32, i32
  }
}

</mosaic_0001>

<llo_original>
// kernel: tpu_custom_call.1
$region0: #{tpu_custom_call.1}
  #allocation0 [shape = 'u32[]', space=smem, size = 0x4, offset = 0x4, fixed_abs, tag = 'smem constant byte address 0x4 - core index']
  #allocation1 [shape = 'u32[144,128]{1,0:T(1,128)}', space=vmem, size = 0x12000, scoped, tag = 'internal scratch']
  %s0 = inlined_call_operand.hbm [shape: f32[8,512], index: 0, kind: input, shape index: {}]
  %s1 = inlined_call_operand.hbm [shape: f32[216,256], index: 1, kind: input, shape index: {}]
  %s2 = inlined_call_operand.hbm [shape: f32[16,128], index: 2, kind: output, shape index: {}]
  %s3 = sld [smem:[#allocation0]]
  $region49: #{tpu_custom_call.1} parent=0
    _
  %s5 = ssub.s32 1, %s3
  %s6 = scalar_select 0, %s5, %s3
  $region1: #{tpu_custom_call.1} parent=0
    #allocation2 [shape = 'u8[16384]{0}', space=vmem, size = 0x4000, scoped, tag = 'input window, operand 0']
    #allocation3 [shape = 's32[2]{0}', space=sflag, size = 0x8, scoped, tag = 'scoped memory for tpu_custom_call.1']
    #allocation4 [shape = 's32[2]{0}', space=sflag, size = 0x8, scoped, tag = 'scoped memory for tpu_custom_call.1']
    #allocation5 [shape = 'u8[221184]{0}', space=vmem, size = 0x36000, scoped, tag = 'input window, operand 1, single buffered']
    #allocation6 [shape = 's32[1]{0}', space=sflag, size = 0x4, scoped, tag = 'scoped memory for tpu_custom_call.1']
    #allocation7 [shape = 'u8[8192]{0}', space=vmem, size = 0x2000, scoped, tag = 'output window, operand 0']
    %7 = vsyncpa [#allocation3], 0
    %s8 = scalar_lea.sflag [#allocation3], 1
    %9 = vsyncpa %s8, 0
    %10 = vsyncpa [#allocation6], 0
    %11 = vsyncpa [#allocation4], 0
    %s12 = scalar_lea.sflag [#allocation4], 1
    %13 = vsyncpa %s12, 0
    loop: start=0, step=1, limit=4
    $region2: #{tpu_custom_call.1} parent=1 // loop_pre_header
      _
    $region3: #{tpu_custom_call.1} parent=1 // loop_header
      %s15 = sphi 0, %s19
      %p16 = scmp.ge.s32.totalorder %s15, 4
      %s25 = sphi 0, %s27
      %s28 = sphi 0, %s25
      %s29 = sphi 0, %s28
      %s45 = sphi 0, %s29
      %s49 = sphi 0, %s49
      %s51 = sphi 0, %s49
      %s52 = sphi 0, %s51
      %s66 = sphi 0, %s52
      %s72 = sphi 0, %s74
      %s75 = sphi 0, %s72
      %s76 = sphi 0, %s75
      %s92 = sphi 0, %s76
    $region4: #{tpu_custom_call.1} parent=1 // loop_header_branch
      %18 = sbr.rel (%p16) target = $region8
    $region5: #{tpu_custom_call.1} parent=1 // loop_body
      %s20 = ssub.s32 %s15, 1
      %s21 = ssub.s32 %s15, 2
      %s22 = sadd.s32 %s15, 1
      %s23 = ssub.s32 %s15, %s22
      %p24 = scmp.eq.s32.totalorder %s23, 0
      %s26 = sadd.s32 %s25, 1
      %s27 = scalar_select %p24, %s25, %s26
      %p30 = pneg %p24
      %p31 = scmp.eq.s32.totalorder %s15, 1
      %p32 = por %p30, %p31
      %p33 = scmp.ne.s32.totalorder %s25, %s28
      %p34 = scmp.eq.s32.totalorder %s15, 0
      %p35 = por %p33, %p34
      %p36 = scmp.ne.s32.totalorder %s25, %s28
      %p37 = scmp.eq.s32.totalorder %s20, 1
      %p38 = por %p36, %p37
      %p39 = scmp.ne.s32.totalorder %s28, %s29
      %p40 = scmp.eq.s32.totalorder %s20, 0
      %p41 = por %p39, %p40
      %p42 = scmp.ne.s32.totalorder %s28, %s29
      %p43 = scmp.eq.s32.totalorder %s21, 1
      %p44 = por %p42, %p43
      %p46 = scmp.ne.s32.totalorder %s29, %s45
      %p47 = scmp.eq.s32.totalorder %s21, 0
      %p48 = por %p46, %p47
      %s50 = sadd.s32 %s49, 1
      %p53 = scmp.eq.s32.totalorder %s15, 1
      %p54 = scmp.ne.s32.totalorder %s49, %s51
      %p55 = scmp.eq.s32.totalorder %s15, 0
      %p56 = por %p54, %p55
      %p57 = scmp.ne.s32.totalorder %s49, %s51
      %p58 = scmp.eq.s32.totalorder %s20, 1
      %p59 = por %p57, %p58
      %p60 = scmp.ne.s32.totalorder %s51, %s52
      %p61 = scmp.eq.s32.totalorder %s20, 0
      %p62 = por %p60, %p61
      %p63 = scmp.ne.s32.totalorder %s51, %s52
      %p64 = scmp.eq.s32.totalorder %s21, 1
      %p65 = por %p63, %p64
      %p67 = scmp.ne.s32.totalorder %s52, %s66
      %p68 = scmp.eq.s32.totalorder %s21, 0
      %p69 = por %p67, %p68
      %s70 = ssub.s32 %s15, %s22
      %p71 = scmp.eq.s32.totalorder %s70, 0
      %s73 = sadd.s32 %s72, 1
      %s74 = scalar_select %p71, %s72, %s73
      %p77 = pneg %p71
      %p78 = scmp.eq.s32.totalorder %s15, 1
      %p79 = por %p77, %p78
      %p80 = scmp.ne.s32.totalorder %s72, %s75
      %p81 = scmp.eq.s32.totalorder %s15, 0
      %p82 = por %p80, %p81
      %p83 = scmp.ne.s32.totalorder %s72, %s75
      %p84 = scmp.eq.s32.totalorder %s20, 1
      %p85 = por %p83, %p84
      %p86 = scmp.ne.s32.totalorder %s75, %s76
      %p87 = scmp.eq.s32.totalorder %s20, 0
      %p88 = por %p86, %p87
      %p89 = scmp.ne.s32.totalorder %s75, %s76
      %p90 = scmp.eq.s32.totalorder %s21, 1
      %p91 = por %p89, %p90
      %p93 = scmp.ne.s32.totalorder %s76, %s92
      %p94 = scmp.eq.s32.totalorder %s21, 0
      %p95 = por %p93, %p94
      %p96 = scmp.le.s32.totalorder 1, %s15
      %p97 = scmp.lt.s32.totalorder %s15, 3
      %p98 = pnand %p96, %p97
      %p99 = pneg %p98
      // Predicated region
      $region9: #{tpu_custom_call.1} parent=5 // pred_check
        _
      $region10: #{tpu_custom_call.1} parent=5 // pred_check_branch
        %101 = sbr.rel (%p98) target = $region12
      $region11: #{tpu_custom_call.1} parent=5 // pred_region
        %s102 = ssub.s32 %s15, 1
        // Predicated region
        $region13: #{tpu_custom_call.1} parent=11 // pred_check
          %p103 = pneg %p62
        $region14: #{tpu_custom_call.1} parent=11 // pred_check_branch
          %105 = sbr.rel (%p103) target = $region16
        $region15: #{tpu_custom_call.1} parent=11 // pred_region
          %s107 = ssub.s32 6912, 6912
          %108 = vsyncadd [#allocation6], %s107
          %s109 = sshll.u32 [#allocation5], 4
          %s110 = int_to_ptr.vmem [resolvable:$true] %s109
          %115 = dma.hbm_to_vmem [thread:$0]  %s1, 6912, %s110, [#allocation6], 256, 256, 16
        $region16: #{tpu_custom_call.1} parent=11 // pred_fallthru
          _
      $region12: #{tpu_custom_call.1} parent=5 // pred_fallthru
        _
      %p116 = scmp.lt.s32.totalorder %s15, 2
      // Predicated region
      $region17: #{tpu_custom_call.1} parent=5 // pred_check
        %p117 = pneg %p116
      $region18: #{tpu_custom_call.1} parent=5 // pred_check_branch
        %119 = sbr.rel (%p117) target = $region20
      $region19: #{tpu_custom_call.1} parent=5 // pred_region
        // Predicated region
        $region21: #{tpu_custom_call.1} parent=19 // pred_check
          %p120 = pneg %p35
        $region22: #{tpu_custom_call.1} parent=19 // pred_check_branch
          %122 = sbr.rel (%p120) target = $region24
        $region23: #{tpu_custom_call.1} parent=19 // pred_region
          %s123 = sand.u32 %s25, 1
          %s124 = scalar_lea.sflag [#allocation3], %s123
          %s125 = sand.u32 %s25, 1
          %s126 = smul.addr %s125, 16
          %s127 = scalar_lea.vmem [#allocation2], %s126
          %s128 = smul.u32 2, %s15
          %s130 = ssub.s32 256, 256
          %131 = vsyncadd %s124, %s130
          %s132 = smul.addr %s128, 128
          %s133 = scalar_lea.hbm %s0, %s132
          %s135 = sshll.u32 %s127, 4
          %s136 = int_to_ptr.vmem [resolvable:$true] %s135
          %138 = dma.hbm_to_vmem [thread:$0]  %s133, 256, %s136, %s124
        $region24: #{tpu_custom_call.1} parent=19 // pred_fallthru
          _
      $region20: #{tpu_custom_call.1} parent=5 // pred_fallthru
        _
      %p139 = scmp.le.s32.totalorder 1, %s15
      %p140 = scmp.lt.s32.totalorder %s15, 3
      %p141 = pnand %p139, %p140
      %p142 = pneg %p141
      // Predicated region
      $region25: #{tpu_custom_call.1} parent=5 // pred_check
        _
      $region26: #{tpu_custom_call.1} parent=5 // pred_check_branch
        %144 = sbr.rel (%p141) target = $region28
      $region27: #{tpu_custom_call.1} parent=5 // pred_region
        %s145 = ssub.s32 %s15, 1
        %s146 = sand.u32 %s28, 1
        %s147 = scalar_lea.sflag [#allocation3], %s146
        %s148 = sand.u32 %s28, 1
        %s149 = smul.addr %s148, 16
        %s150 = scalar_lea.vmem [#allocation2], %s149
        // Predicated region
        $region29: #{tpu_custom_call.1} parent=27 // pred_check
          %p151 = pneg %p41
        $region30: #{tpu_custom_call.1} parent=27 // pred_check_branch
          %153 = sbr.rel (%p151) target = $region32
        $region31: #{tpu_custom_call.1} parent=27 // pred_region
          %154 = dma.done %s147, 256
        $region32: #{tpu_custom_call.1} parent=27 // pred_fallthru
          _
        // Predicated region
        $region33: #{tpu_custom_call.1} parent=27 // pred_check
          %p155 = pneg %p62
        $region34: #{tpu_custom_call.1} parent=27 // pred_check_branch
          %157 = sbr.rel (%p155) target = $region36
        $region35: #{tpu_custom_call.1} parent=27 // pred_region
          %158 = dma.done [#allocation6], 6912
        $region36: #{tpu_custom_call.1} parent=27 // pred_fallthru
          _
        %s159 = sand.u32 %s28, 1
        %s160 = scalar_lea.sflag [#allocation3], %s159
        %s161 = sand.u32 %s28, 1
        %s162 = smul.addr %s161, 16
        %s163 = scalar_lea.vmem [#allocation2], %s162
        %p164 = pneg %p41
        %p165 = pneg %p38
        %p166 = pneg %p62
        %p167 = pneg %p59
        %p168 = pneg %p88
        %p169 = pneg %p85
        %s170 = sand.u32 %s75, 1
        %s171 = scalar_lea.sflag [#allocation4], %s170
        %s172 = sand.u32 %s75, 1
        %s173 = smul.addr %s172, 8
        %s174 = scalar_lea.vmem [#allocation7], %s173
        %s175 = smul.u32 2, %s20
        %v176 = vld [vmem:[%s150] sm:$0xff]
        %v177 = vld [vmem:[%s150 + $0x8] sm:$0xff]
        %180 = vrot.lane.b32.xlu0 %v176, 1
        %v181 = vpop.permute.xlu0 %180
        %182 = vrot.lane.b32.xlu0 %v177, 1
        %v183 = vpop.permute.xlu0 %182
        %vm184 = vcmask 7168
        %v185 = vsel %vm184, %v181, %v183
        %v188 = vsel %vm184, 0.0, %v181
        %s189 = scalar_lea.vmem [#allocation5], 34
        %v190 = vld [vmem:[%s189] ss:$8 sm:$0x3]
        %v192 = vlaneseq
        %v193 = vshrl.u32 %v192, 7
        %v194 = vsub.s32 0, %v193
        %v195 = vrot.slane %v190, %v194
        %v196 = vlaneseq
        %v197 = vshrl.u32 %v196, 7
        %v198 = vsub.s32 1, %v197
        %v199 = vrot.slane %v190, %v198
        %v202 = vmul.f32 %v188, %v195
        %v203 = vmul.f32 %v185, %v199
        %204 = vrot.lane.b32.xlu0 %v176, 127
        %v205 = vpop.permute.xlu0 %204
        %206 = vrot.lane.b32.xlu0 %v177, 127
        %v207 = vpop.permute.xlu0 %206
        %vm208 = vcmask 1039360
        %v209 = vsel %vm208, %v205, %v207
        %v212 = vsel %vm208, %v207, 0.0
        %s213 = scalar_lea.vmem [#allocation5], 35
        %v214 = vld [vmem:[%s213] ss:$8 sm:$0x3]
        %v216 = vlaneseq
        %v217 = vshrl.u32 %v216, 7
        %v218 = vsub.s32 0, %v217
        %v219 = vrot.slane %v214, %v218
        %v220 = vlaneseq
        %v221 = vshrl.u32 %v220, 7
        %v222 = vsub.s32 1, %v221
        %v223 = vrot.slane %v214, %v222
        %v226 = vmul.f32 %v209, %v219
        %v227 = vmul.f32 %v212, %v223
        %v228 = vld [vmem:[#allocation5] sm:$0xff]
        %v229 = vld [vmem:[#allocation5 + $0x10] sm:$0xff]
        %231 = vset.pattern.permute.xlu0 24
        %232 = vperm.xlu0 %231, %v228
        %v233 = vpop.permute.xlu0 %232
        %236 = vset.pattern.permute.xlu0 24
        %237 = vperm.xlu0 %236, %v229
        %v238 = vpop.permute.xlu0 %237
        %vm240 = vcmask 195584
        %v241 = vsel %vm240, %v228, 0
        %v243 = vsel %vm240, %v229, 0
        %245 = vmatprep.subr.mxu0 0.0
        %246 = vmatpush1.msra.mxu0 0.0
        %247 = vmatprep.subr.mxu0 0.0
        %248 = vmatpush1.msra.mxu0 0.0
        %249 = vmatprep.subr.mxu0 0.0
        %250 = vmatpush1.msra.mxu0 0.0
        %251 = vmatprep.subr.mxu0 0.0
        %252 = vmatpush1.msra.mxu0 0.0
        %253 = vmatprep.subr.mxu0 0.0
        %254 = vmatpush1.msra.mxu0 0.0
        %255 = vmatprep.subr.mxu0 0.0
        %256 = vmatpush1.msra.mxu0 0.0
        %257 = vmatprep.subr.mxu0 0.0
        %258 = vmatpush1.msra.mxu0 0.0
        %259 = vmatprep.subr.mxu0 0.0
        %260 = vmatpush1.msra.mxu0 0.0
        %261 = vmatprep.subr.mxu0 0.0
        %262 = vmatpush1.msra.mxu0 0.0
        %263 = vmatprep.subr.mxu0 0.0
        %264 = vmatpush1.msra.mxu0 0.0
        %265 = vmatprep.subr.mxu0 0.0
        %266 = vmatpush1.msra.mxu0 0.0
        %267 = vmatprep.subr.mxu0 0.0
        %268 = vmatpush1.msra.mxu0 0.0
        %269 = vmatprep.subr.mxu0 0.0
        %270 = vmatpush1.msra.mxu0 0.0
        %271 = vmatprep.subr.mxu0 %v227
        %272 = vmatpush1.msra.mxu0 %v226
        %273 = vmatprep.subr.mxu0 %v177
        %274 = vmatpush1.msra.mxu0 %v176
        %275 = vmatprep.subr.mxu0 %v203
        %276 = vmatpush1.msra.mxu0 %v202
        %277 = vmatprep.subr.mxu0 0.0
        %278 = vmatpush2.msra.mxu0 0.0
        %279 = vmatprep.subr.mxu0 0.0
        %280 = vmatpush2.msra.mxu0 0.0
        %281 = vmatprep.subr.mxu0 0.0
        %282 = vmatpush2.msra.mxu0 0.0
        %283 = vmatprep.subr.mxu0 0.0
        %284 = vmatpush2.msra.mxu0 0.0
        %285 = vmatprep.subr.mxu0 0.0
        %286 = vmatpush2.msra.mxu0 0.0
        %287 = vmatprep.subr.mxu0 0.0
        %288 = vmatpush2.msra.mxu0 0.0
        %289 = vmatprep.subr.mxu0 0.0
        %290 = vmatpush2.msra.mxu0 0.0
        %291 = vmatprep.subr.mxu0 0.0
        %292 = vmatpush2.msra.mxu0 0.0
        %293 = vmatprep.subr.mxu0 0.0
        %294 = vmatpush2.msra.mxu0 0.0
        %295 = vmatprep.subr.mxu0 0.0
        %296 = vmatpush2.msra.mxu0 0.0
        %297 = vmatprep.subr.mxu0 0.0
        %298 = vmatpush2.msra.mxu0 0.0
        %299 = vmatprep.subr.mxu0 0.0
        %300 = vmatpush2.msra.mxu0 0.0
        %301 = vmatprep.subr.mxu0 0.0
        %302 = vmatpush2.msra.mxu0 0.0
        %303 = vmatprep.subr.mxu0 0.0
        %304 = vmatpush2.msra.mxu0 0.0
        %305 = vmatprep.subr.mxu0 0.0
        %306 = vmatpush2.msra.mxu0 0.0
        %307 = vmatprep.subr.mxu0 0.0
        %308 = vmatpush2.msra.mxu0 0.0
        %309 = vmatprep.mubr.f32.mxu0 0.0
        %310 = vmatmul.mubr.f32.gmra.mxu0 %v241
        %v311 = vpop.f32.mrf.mxu0
        %v312 = vadd.f32 %v233, %v311
        %v313 = vpop.f32.mrf.mxu0
        %v314 = vadd.f32 %v233, %v313
        %315 = vmatprep.mubr.f32.mxu0 0.0
        %316 = vmatmul.mubr.f32.gmra.mxu0 %v243
        %v317 = vpop.f32.mrf.mxu0
        %v318 = vadd.f32 %v238, %v317
        %v319 = vpop.f32.mrf.mxu0
        %v320 = vadd.f32 %v238, %v319
        %321 = vdwg.mxu0
        %v322 = vld [vmem:[#allocation5 + $0x20] sm:$0xf0]
        %v323 = vld [vmem:[#allocation5 + $0x28] sm:$0xf0]
        %v324 = vld [vmem:[#allocation5 + $0x30] sm:$0xf]
        %v325 = vld [vmem:[#allocation5 + $0x38] sm:$0xf]
        %vm330 = vcmask 1043456
        %v331 = vrot.slane %v322, 4
        %v332 = vrot.slane %v324, 4
        %v333 = vsel %vm330, %v331, %v332
        %v334 = vrot.slane %v323, 4
        %v335 = vrot.slane %v325, 4
        %v336 = vsel %vm330, %v334, %v335
        %339 = vmatprep.subr.mxu0 0.0
        %340 = vmatpush1.xpose.msra.mxu0 0.0
        %341 = vmatprep.subr.mxu0 0.0
        %342 = vmatpush1.xpose.msra.mxu0 0.0
        %343 = vmatprep.subr.mxu0 0.0
        %344 = vmatpush1.xpose.msra.mxu0 0.0
        %345 = vmatprep.subr.mxu0 0.0
        %346 = vmatpush1.xpose.msra.mxu0 0.0
        %347 = vmatprep.subr.mxu0 0.0
        %348 = vmatpush1.xpose.msra.mxu0 0.0
        %349 = vmatprep.subr.mxu0 0.0
        %350 = vmatpush1.xpose.msra.mxu0 0.0
        %351 = vmatprep.subr.mxu0 0.0
        %352 = vmatpush1.xpose.msra.mxu0 0.0
        %353 = vmatprep.subr.mxu0 0.0
        %354 = vmatpush1.xpose.msra.mxu0 0.0
        %355 = vmatprep.subr.mxu0 0.0
        %356 = vmatpush1.xpose.msra.mxu0 0.0
        %357 = vmatprep.subr.mxu0 0.0
        %358 = vmatpush1.xpose.msra.mxu0 0.0
        %359 = vmatprep.subr.mxu0 0.0
        %360 = vmatpush1.xpose.msra.mxu0 0.0
        %361 = vmatprep.subr.mxu0 0.0
        %362 = vmatpush1.xpose.msra.mxu0 0.0
        %363 = vmatprep.subr.mxu0 0.0
        %364 = vmatpush1.xpose.msra.mxu0 0.0
        %365 = vmatprep.subr.mxu0 0.0
        %366 = vmatpush1.xpose.msra.mxu0 0.0
        %367 = vmatprep.subr.mxu0 0.0
        %368 = vmatpush1.xpose.msra.mxu0 0.0
        %369 = vmatprep.subr.mxu0 %v336
        %370 = vmatpush1.xpose.msra.mxu0 %v333
        %371 = vmatprep.subr.mxu0 0.0
        %372 = vmatpush2.xpose.msra.mxu0 0.0
        %373 = vmatprep.subr.mxu0 0.0
        %374 = vmatpush2.xpose.msra.mxu0 0.0
        %375 = vmatprep.subr.mxu0 0.0
        %376 = vmatpush2.xpose.msra.mxu0 0.0
        %377 = vmatprep.subr.mxu0 0.0
        %378 = vmatpush2.xpose.msra.mxu0 0.0
        %379 = vmatprep.subr.mxu0 0.0
        %380 = vmatpush2.xpose.msra.mxu0 0.0
        %381 = vmatprep.subr.mxu0 0.0
        %382 = vmatpush2.xpose.msra.mxu0 0.0
        %383 = vmatprep.subr.mxu0 0.0
        %384 = vmatpush2.xpose.msra.mxu0 0.0
        %385 = vmatprep.subr.mxu0 0.0
        %386 = vmatpush2.xpose.msra.mxu0 0.0
        %387 = vmatprep.subr.mxu0 0.0
        %388 = vmatpush2.xpose.msra.mxu0 0.0
        %389 = vmatprep.subr.mxu0 0.0
        %390 = vmatpush2.xpose.msra.mxu0 0.0
        %391 = vmatprep.subr.mxu0 0.0
        %392 = vmatpush2.xpose.msra.mxu0 0.0
        %393 = vmatprep.subr.mxu0 0.0
        %394 = vmatpush2.xpose.msra.mxu0 0.0
        %395 = vmatprep.subr.mxu0 0.0
        %396 = vmatpush2.xpose.msra.mxu0 0.0
        %397 = vmatprep.subr.mxu0 0.0
        %398 = vmatpush2.xpose.msra.mxu0 0.0
        %399 = vmatprep.subr.mxu0 0.0
        %400 = vmatpush2.xpose.msra.mxu0 0.0
        %401 = vmatprep.subr.mxu0 0.0
        %402 = vmatpush2.xpose.msra.mxu0 0.0
        %403 = vmatprep.mubr.f32.mxu0 %v314
        %404 = vmatmul.mubr.f32.gmra.mxu0 %v312
        %v405 = vpop.f32.mrf.mxu0
        %v406 = vadd.f32 0.0, %v405
        %v407 = vpop.f32.mrf.mxu0
        %408 = vdwg.mxu0
        %v409 = vmul.f32 %v406, 0.03125
        %vm410 = vcmask 64512
        %v412 = vsel %vm410, %v409, 0
        %414 = vmatprep.subr.mxu0 0.0
        %415 = vmatpush1.msra.mxu0 0.0
        %416 = vmatprep.subr.mxu0 0.0
        %417 = vmatpush1.msra.mxu0 0.0
        %418 = vmatprep.subr.mxu0 0.0
        %419 = vmatpush1.msra.mxu0 0.0
        %420 = vmatprep.subr.mxu0 0.0
        %421 = vmatpush1.msra.mxu0 0.0
        %422 = vmatprep.subr.mxu0 0.0
        %423 = vmatpush1.msra.mxu0 0.0
        %424 = vmatprep.subr.mxu0 0.0
        %425 = vmatpush1.msra.mxu0 0.0
        %426 = vmatprep.subr.mxu0 0.0
        %427 = vmatpush1.msra.mxu0 0.0
        %428 = vmatprep.subr.mxu0 0.0
        %429 = vmatpush1.msra.mxu0 0.0
        %430 = vmatprep.subr.mxu0 0.0
        %431 = vmatpush1.msra.mxu0 0.0
        %432 = vmatprep.subr.mxu0 0.0
        %433 = vmatpush1.msra.mxu0 0.0
        %434 = vmatprep.subr.mxu0 0.0
        %435 = vmatpush1.msra.mxu0 0.0
        %436 = vmatprep.subr.mxu0 0.0
        %437 = vmatpush1.msra.mxu0 0.0
        %438 = vmatprep.subr.mxu0 0.0
        %439 = vmatpush1.msra.mxu0 0.0
        %440 = vmatprep.subr.mxu0 0.0
        %441 = vmatpush1.msra.mxu0 0.0
        %442 = vmatprep.subr.mxu0 0.0
        %443 = vmatpush1.msra.mxu0 0.0
        %444 = vmatprep.subr.mxu0 %v336
        %445 = vmatpush1.msra.mxu0 %v333
        %446 = vmatprep.subr.mxu0 0.0
        %447 = vmatpush2.msra.mxu0 0.0
        %448 = vmatprep.subr.mxu0 0.0
        %449 = vmatpush2.msra.mxu0 0.0
        %450 = vmatprep.subr.mxu0 0.0
        %451 = vmatpush2.msra.mxu0 0.0
        %452 = vmatprep.subr.mxu0 0.0
        %453 = vmatpush2.msra.mxu0 0.0
        %454 = vmatprep.subr.mxu0 0.0
        %455 = vmatpush2.msra.mxu0 0.0
        %456 = vmatprep.subr.mxu0 0.0
        %457 = vmatpush2.msra.mxu0 0.0
        %458 = vmatprep.subr.mxu0 0.0
        %459 = vmatpush2.msra.mxu0 0.0
        %460 = vmatprep.subr.mxu0 0.0
        %461 = vmatpush2.msra.mxu0 0.0
        %462 = vmatprep.subr.mxu0 0.0
        %463 = vmatpush2.msra.mxu0 0.0
        %464 = vmatprep.subr.mxu0 0.0
        %465 = vmatpush2.msra.mxu0 0.0
        %466 = vmatprep.subr.mxu0 0.0
        %467 = vmatpush2.msra.mxu0 0.0
        %468 = vmatprep.subr.mxu0 0.0
        %469 = vmatpush2.msra.mxu0 0.0
        %470 = vmatprep.subr.mxu0 0.0
        %471 = vmatpush2.msra.mxu0 0.0
        %472 = vmatprep.subr.mxu0 0.0
        %473 = vmatpush2.msra.mxu0 0.0
        %474 = vmatprep.subr.mxu0 0.0
        %475 = vmatpush2.msra.mxu0 0.0
        %476 = vmatprep.subr.mxu0 0.0
        %477 = vmatpush2.msra.mxu0 0.0
        %478 = vmatprep.mubr.f32.mxu0 0.0
        %479 = vmatmul.mubr.f32.gmra.mxu0 %v412
        %v480 = vpop.f32.mrf.mxu0
        %v481 = vadd.f32 0.0, %v480
        %v482 = vpop.f32.mrf.mxu0
        %v483 = vadd.f32 0.0, %v482
        %484 = vdwg.mxu0
        %v485 = vsub.f32 %v312, %v481
        %v486 = vsub.f32 %v314, %v483
        %v487 = vmul.f32 %v485, %v485
        %v488 = vmul.f32 %v486, %v486
        %489 = vmatprep.subr.mxu0 0.0
        %490 = vmatpush1.xpose.msra.mxu0 0.0
        %491 = vmatprep.subr.mxu0 0.0
        %492 = vmatpush1.xpose.msra.mxu0 0.0
        %493 = vmatprep.subr.mxu0 0.0
        %494 = vmatpush1.xpose.msra.mxu0 0.0
        %495 = vmatprep.subr.mxu0 0.0
        %496 = vmatpush1.xpose.msra.mxu0 0.0
        %497 = vmatprep.subr.mxu0 0.0
        %498 = vmatpush1.xpose.msra.mxu0 0.0
        %499 = vmatprep.subr.mxu0 0.0
        %500 = vmatpush1.xpose.msra.mxu0 0.0
        %501 = vmatprep.subr.mxu0 0.0
        %502 = vmatpush1.xpose.msra.mxu0 0.0
        %503 = vmatprep.subr.mxu0 0.0
        %504 = vmatpush1.xpose.msra.mxu0 0.0
        %505 = vmatprep.subr.mxu0 0.0
        %506 = vmatpush1.xpose.msra.mxu0 0.0
        %507 = vmatprep.subr.mxu0 0.0
        %508 = vmatpush1.xpose.msra.mxu0 0.0
        %509 = vmatprep.subr.mxu0 0.0
        %510 = vmatpush1.xpose.msra.mxu0 0.0
        %511 = vmatprep.subr.mxu0 0.0
        %512 = vmatpush1.xpose.msra.mxu0 0.0
        %513 = vmatprep.subr.mxu0 0.0
        %514 = vmatpush1.xpose.msra.mxu0 0.0
        %515 = vmatprep.subr.mxu0 0.0
        %516 = vmatpush1.xpose.msra.mxu0 0.0
        %517 = vmatprep.subr.mxu0 0.0
        %518 = vmatpush1.xpose.msra.mxu0 0.0
        %519 = vmatprep.subr.mxu0 %v336
        %520 = vmatpush1.xpose.msra.mxu0 %v333
        %521 = vmatprep.subr.mxu0 0.0
        %522 = vmatpush2.xpose.msra.mxu0 0.0
        %523 = vmatprep.subr.mxu0 0.0
        %524 = vmatpush2.xpose.msra.mxu0 0.0
        %525 = vmatprep.subr.mxu0 0.0
        %526 = vmatpush2.xpose.msra.mxu0 0.0
        %527 = vmatprep.subr.mxu0 0.0
        %528 = vmatpush2.xpose.msra.mxu0 0.0
        %529 = vmatprep.subr.mxu0 0.0
        %530 = vmatpush2.xpose.msra.mxu0 0.0
        %531 = vmatprep.subr.mxu0 0.0
        %532 = vmatpush2.xpose.msra.mxu0 0.0
        %533 = vmatprep.subr.mxu0 0.0
        %534 = vmatpush2.xpose.msra.mxu0 0.0
        %535 = vmatprep.subr.mxu0 0.0
        %536 = vmatpush2.xpose.msra.mxu0 0.0
        %537 = vmatprep.subr.mxu0 0.0
        %538 = vmatpush2.xpose.msra.mxu0 0.0
        %539 = vmatprep.subr.mxu0 0.0
        %540 = vmatpush2.xpose.msra.mxu0 0.0
        %541 = vmatprep.subr.mxu0 0.0
        %542 = vmatpush2.xpose.msra.mxu0 0.0
        %543 = vmatprep.subr.mxu0 0.0
        %544 = vmatpush2.xpose.msra.mxu0 0.0
        %545 = vmatprep.subr.mxu0 0.0
        %546 = vmatpush2.xpose.msra.mxu0 0.0
        %547 = vmatprep.subr.mxu0 0.0
        %548 = vmatpush2.xpose.msra.mxu0 0.0
        %549 = vmatprep.subr.mxu0 0.0
        %550 = vmatpush2.xpose.msra.mxu0 0.0
        %551 = vmatprep.subr.mxu0 0.0
        %552 = vmatpush2.xpose.msra.mxu0 0.0
        %553 = vmatprep.mubr.f32.mxu0 %v488
        %554 = vmatmul.mubr.f32.gmra.mxu0 %v487
        %v555 = vpop.f32.mrf.mxu0
        %v556 = vadd.f32 0.0, %v555
        %v557 = vpop.f32.mrf.mxu0
        %558 = vdwg.mxu0
        %v559 = vmul.f32 %v556, 0.03125
        %v560 = vadd.f32 %v559, 1e-05
        %v561 = vrsqrt.pop %v560
        %v563 = vsel %vm410, %v561, 0
        %565 = vmatprep.subr.mxu0 0.0
        %566 = vmatpush1.msra.mxu0 0.0
        %567 = vmatprep.subr.mxu0 0.0
        %568 = vmatpush1.msra.mxu0 0.0
        %569 = vmatprep.subr.mxu0 0.0
        %570 = vmatpush1.msra.mxu0 0.0
        %571 = vmatprep.subr.mxu0 0.0
        %572 = vmatpush1.msra.mxu0 0.0
        %573 = vmatprep.subr.mxu0 0.0
        %574 = vmatpush1.msra.mxu0 0.0
        %575 = vmatprep.subr.mxu0 0.0
        %576 = vmatpush1.msra.mxu0 0.0
        %577 = vmatprep.subr.mxu0 0.0
        %578 = vmatpush1.msra.mxu0 0.0
        %579 = vmatprep.subr.mxu0 0.0
        %580 = vmatpush1.msra.mxu0 0.0
        %581 = vmatprep.subr.mxu0 0.0
        %582 = vmatpush1.msra.mxu0 0.0
        %583 = vmatprep.subr.mxu0 0.0
        %584 = vmatpush1.msra.mxu0 0.0
        %585 = vmatprep.subr.mxu0 0.0
        %586 = vmatpush1.msra.mxu0 0.0
        %587 = vmatprep.subr.mxu0 0.0
        %588 = vmatpush1.msra.mxu0 0.0
        %589 = vmatprep.subr.mxu0 0.0
        %590 = vmatpush1.msra.mxu0 0.0
        %591 = vmatprep.subr.mxu0 0.0
        %592 = vmatpush1.msra.mxu0 0.0
        %593 = vmatprep.subr.mxu0 0.0
        %594 = vmatpush1.msra.mxu0 0.0
        %595 = vmatprep.subr.mxu0 %v336
        %596 = vmatpush1.msra.mxu0 %v333
        %597 = vmatprep.subr.mxu0 0.0
        %598 = vmatpush2.msra.mxu0 0.0
        %599 = vmatprep.subr.mxu0 0.0
        %600 = vmatpush2.msra.mxu0 0.0
        %601 = vmatprep.subr.mxu0 0.0
        %602 = vmatpush2.msra.mxu0 0.0
        %603 = vmatprep.subr.mxu0 0.0
        %604 = vmatpush2.msra.mxu0 0.0
        %605 = vmatprep.subr.mxu0 0.0
        %606 = vmatpush2.msra.mxu0 0.0
        %607 = vmatprep.subr.mxu0 0.0
        %608 = vmatpush2.msra.mxu0 0.0
        %609 = vmatprep.subr.mxu0 0.0
        %610 = vmatpush2.msra.mxu0 0.0
        %611 = vmatprep.subr.mxu0 0.0
        %612 = vmatpush2.msra.mxu0 0.0
        %613 = vmatprep.subr.mxu0 0.0
        %614 = vmatpush2.msra.mxu0 0.0
        %615 = vmatprep.subr.mxu0 0.0
        %616 = vmatpush2.msra.mxu0 0.0
        %617 = vmatprep.subr.mxu0 0.0
        %618 = vmatpush2.msra.mxu0 0.0
        %619 = vmatprep.subr.mxu0 0.0
        %620 = vmatpush2.msra.mxu0 0.0
        %621 = vmatprep.subr.mxu0 0.0
        %622 = vmatpush2.msra.mxu0 0.0
        %623 = vmatprep.subr.mxu0 0.0
        %624 = vmatpush2.msra.mxu0 0.0
        %625 = vmatprep.subr.mxu0 0.0
        %626 = vmatpush2.msra.mxu0 0.0
        %627 = vmatprep.subr.mxu0 0.0
        %628 = vmatpush2.msra.mxu0 0.0
        %629 = vmatprep.mubr.f32.mxu0 0.0
        %630 = vmatmul.mubr.f32.gmra.mxu0 %v563
        %v631 = vpop.f32.mrf.mxu0
        %v632 = vadd.f32 0.0, %v631
        %v633 = vpop.f32.mrf.mxu0
        %v634 = vadd.f32 0.0, %v633
        %635 = vdwg.mxu0
        %s636 = scalar_lea.vmem [#allocation5], 32
        %v637 = vld [vmem:[%s636] ss:$8 sm:$0x3]
        %s638 = scalar_lea.vmem [#allocation5], 33
        %v639 = vld [vmem:[%s638] ss:$8 sm:$0x3]
        %v640 = vmul.f32 %v485, %v632
        %v641 = vmul.f32 %v486, %v634
        %v643 = vlaneseq
        %v644 = vshrl.u32 %v643, 7
        %v645 = vsub.s32 0, %v644
        %v646 = vrot.slane %v637, %v645
        %v647 = vlaneseq
        %v648 = vshrl.u32 %v647, 7
        %v649 = vsub.s32 1, %v648
        %v650 = vrot.slane %v637, %v649
        %v653 = vmul.f32 %v640, %v646
        %v654 = vmul.f32 %v641, %v650
        %v656 = vlaneseq
        %v657 = vshrl.u32 %v656, 7
        %v658 = vsub.s32 0, %v657
        %v659 = vrot.slane %v639, %v658
        %v660 = vlaneseq
        %v661 = vshrl.u32 %v660, 7
        %v662 = vsub.s32 1, %v661
        %v663 = vrot.slane %v639, %v662
        %v666 = vadd.f32 %v653, %v659
        %v667 = vadd.f32 %v654, %v663
        %v668 = vmul.f32 %v666, %v666
        %v669 = vmul.f32 %v667, %v667
        %v670 = vmul.f32 %v666, %v668
        %v671 = vmul.f32 %v667, %v669
        %v672 = vmul.f32 %v670, 0.044715
        %v673 = vmul.f32 %v671, 0.044715
        %v674 = vadd.f32 %v666, %v672
        %v675 = vadd.f32 %v667, %v673
        %v676 = vmul.f32 %v674, 0.7978846
        %v677 = vmul.f32 %v675, 0.7978846
        %v678 = vtanh.pop %v676
        %v679 = vtanh.pop %v677
        %v680 = vadd.f32 %v678, 1.0
        %v681 = vadd.f32 %v679, 1.0
        %v682 = vmul.f32 %v680, 0.5
        %v683 = vmul.f32 %v681, 0.5
        %v684 = vmul.f32 %v666, %v682
        %v685 = vmul.f32 %v667, %v683
        %v686 = vadd.f32 %v684, %v318
        %v687 = vadd.f32 %v685, %v320
        %689 = vrot.lane.b32.xlu0 %v686, 126
        %v690 = vpop.permute.xlu0 %689
        %692 = vrot.lane.b32.xlu0 %v686, 124
        %v693 = vpop.permute.xlu0 %692
        %695 = vrot.lane.b32.xlu0 %v686, 122
        %v696 = vpop.permute.xlu0 %695
        %698 = vrot.lane.b32.xlu0 %v686, 120
        %v699 = vpop.permute.xlu0 %698
        %701 = vrot.lane.b32.xlu0 %v686, 118
        %v702 = vpop.permute.xlu0 %701
        %704 = vrot.lane.b32.xlu0 %v686, 116
        %v705 = vpop.permute.xlu0 %704
        %707 = vrot.lane.b32.xlu0 %v686, 114
        %v708 = vpop.permute.xlu0 %707
        %710 = vrot.lane.b32.xlu0 %v686, 112
        %v711 = vpop.permute.xlu0 %710
        %713 = vrot.lane.b32.xlu0 %v686, 110
        %v714 = vpop.permute.xlu0 %713
        %716 = vrot.lane.b32.xlu0 %v686, 108
        %v717 = vpop.permute.xlu0 %716
        %719 = vrot.lane.b32.xlu0 %v686, 106
        %v720 = vpop.permute.xlu0 %719
        %722 = vrot.lane.b32.xlu0 %v686, 104
        %v723 = vpop.permute.xlu0 %722
        %725 = vrot.lane.b32.xlu0 %v686, 102
        %v726 = vpop.permute.xlu0 %725
        %728 = vrot.lane.b32.xlu0 %v686, 100
        %v729 = vpop.permute.xlu0 %728
        %731 = vrot.lane.b32.xlu0 %v686, 98
        %v732 = vpop.permute.xlu0 %731
        %734 = vrot.lane.b32.xlu0 %v686, 96
        %v735 = vpop.permute.xlu0 %734
        %737 = vrot.lane.b32.xlu0 %v686, 94
        %v738 = vpop.permute.xlu0 %737
        %740 = vrot.lane.b32.xlu0 %v686, 92
        %v741 = vpop.permute.xlu0 %740
        %743 = vrot.lane.b32.xlu0 %v686, 90
        %v744 = vpop.permute.xlu0 %743
        %746 = vrot.lane.b32.xlu0 %v686, 88
        %v747 = vpop.permute.xlu0 %746
        %749 = vrot.lane.b32.xlu0 %v686, 86
        %v750 = vpop.permute.xlu0 %749
        %752 = vrot.lane.b32.xlu0 %v686, 84
        %v753 = vpop.permute.xlu0 %752
        %755 = vrot.lane.b32.xlu0 %v686, 82
        %v756 = vpop.permute.xlu0 %755
        %758 = vrot.lane.b32.xlu0 %v686, 80
        %v759 = vpop.permute.xlu0 %758
        %761 = vrot.lane.b32.xlu0 %v686, 78
        %v762 = vpop.permute.xlu0 %761
        %764 = vrot.lane.b32.xlu0 %v686, 76
        %v765 = vpop.permute.xlu0 %764
        %767 = vrot.lane.b32.xlu0 %v686, 74
        %v768 = vpop.permute.xlu0 %767
        %770 = vrot.lane.b32.xlu0 %v686, 72
        %v771 = vpop.permute.xlu0 %770
        %773 = vrot.lane.b32.xlu0 %v686, 70
        %v774 = vpop.permute.xlu0 %773
        %776 = vrot.lane.b32.xlu0 %v686, 68
        %v777 = vpop.permute.xlu0 %776
        %779 = vrot.lane.b32.xlu0 %v686, 66
        %v780 = vpop.permute.xlu0 %779
        %782 = vrot.lane.b32.xlu0 %v686, 64
        %v783 = vpop.permute.xlu0 %782
        %785 = vrot.lane.b32.xlu0 %v686, 62
        %v786 = vpop.permute.xlu0 %785
        %788 = vrot.lane.b32.xlu0 %v686, 60
        %v789 = vpop.permute.xlu0 %788
        %791 = vrot.lane.b32.xlu0 %v686, 58
        %v792 = vpop.permute.xlu0 %791
        %794 = vrot.lane.b32.xlu0 %v686, 56
        %v795 = vpop.permute.xlu0 %794
        %797 = vrot.lane.b32.xlu0 %v686, 54
        %v798 = vpop.permute.xlu0 %797
        %800 = vrot.lane.b32.xlu0 %v686, 52
        %v801 = vpop.permute.xlu0 %800
        %803 = vrot.lane.b32.xlu0 %v686, 50
        %v804 = vpop.permute.xlu0 %803
        %806 = vrot.lane.b32.xlu0 %v686, 48
        %v807 = vpop.permute.xlu0 %806
        %809 = vrot.lane.b32.xlu0 %v686, 46
        %v810 = vpop.permute.xlu0 %809
        %812 = vrot.lane.b32.xlu0 %v686, 44
        %v813 = vpop.permute.xlu0 %812
        %815 = vrot.lane.b32.xlu0 %v686, 42
        %v816 = vpop.permute.xlu0 %815
        %818 = vrot.lane.b32.xlu0 %v686, 40
        %v819 = vpop.permute.xlu0 %818
        %821 = vrot.lane.b32.xlu0 %v686, 38
        %v822 = vpop.permute.xlu0 %821
        %824 = vrot.lane.b32.xlu0 %v686, 36
        %v825 = vpop.permute.xlu0 %824
        %827 = vrot.lane.b32.xlu0 %v686, 34
        %v828 = vpop.permute.xlu0 %827
        %830 = vrot.lane.b32.xlu0 %v686, 32
        %v831 = vpop.permute.xlu0 %830
        %833 = vrot.lane.b32.xlu0 %v686, 30
        %v834 = vpop.permute.xlu0 %833
        %836 = vrot.lane.b32.xlu0 %v686, 28
        %v837 = vpop.permute.xlu0 %836
        %839 = vrot.lane.b32.xlu0 %v686, 26
        %v840 = vpop.permute.xlu0 %839
        %842 = vrot.lane.b32.xlu0 %v686, 24
        %v843 = vpop.permute.xlu0 %842
        %845 = vrot.lane.b32.xlu0 %v686, 22
        %v846 = vpop.permute.xlu0 %845
        %848 = vrot.lane.b32.xlu0 %v686, 20
        %v849 = vpop.permute.xlu0 %848
        %851 = vrot.lane.b32.xlu0 %v686, 18
        %v852 = vpop.permute.xlu0 %851
        %854 = vrot.lane.b32.xlu0 %v686, 16
        %v855 = vpop.permute.xlu0 %854
        %857 = vrot.lane.b32.xlu0 %v686, 14
        %v858 = vpop.permute.xlu0 %857
        %860 = vrot.lane.b32.xlu0 %v686, 12
        %v861 = vpop.permute.xlu0 %860
        %863 = vrot.lane.b32.xlu0 %v686, 10
        %v864 = vpop.permute.xlu0 %863
        %866 = vrot.lane.b32.xlu0 %v686, 8
        %v867 = vpop.permute.xlu0 %866
        %869 = vrot.lane.b32.xlu0 %v686, 6
        %v870 = vpop.permute.xlu0 %869
        %872 = vrot.lane.b32.xlu0 %v686, 4
        %v873 = vpop.permute.xlu0 %872
        %875 = vrot.lane.b32.xlu0 %v686, 2
        %v876 = vpop.permute.xlu0 %875
        %879 = vrot.lane.b32.xlu0 %v687, 126
        %v880 = vpop.permute.xlu0 %879
        %882 = vrot.lane.b32.xlu0 %v687, 124
        %v883 = vpop.permute.xlu0 %882
        %885 = vrot.lane.b32.xlu0 %v687, 122
        %v886 = vpop.permute.xlu0 %885
        %888 = vrot.lane.b32.xlu0 %v687, 120
        %v889 = vpop.permute.xlu0 %888
        %891 = vrot.lane.b32.xlu0 %v687, 118
        %v892 = vpop.permute.xlu0 %891
        %894 = vrot.lane.b32.xlu0 %v687, 116
        %v895 = vpop.permute.xlu0 %894
        %897 = vrot.lane.b32.xlu0 %v687, 114
        %v898 = vpop.permute.xlu0 %897
        %900 = vrot.lane.b32.xlu0 %v687, 112
        %v901 = vpop.permute.xlu0 %900
        %903 = vrot.lane.b32.xlu0 %v687, 110
        %v904 = vpop.permute.xlu0 %903
        %906 = vrot.lane.b32.xlu0 %v687, 108
        %v907 = vpop.permute.xlu0 %906
        %909 = vrot.lane.b32.xlu0 %v687, 106
        %v910 = vpop.permute.xlu0 %909
        %912 = vrot.lane.b32.xlu0 %v687, 104
        %v913 = vpop.permute.xlu0 %912
        %915 = vrot.lane.b32.xlu0 %v687, 102
        %v916 = vpop.permute.xlu0 %915
        %918 = vrot.lane.b32.xlu0 %v687, 100
        %v919 = vpop.permute.xlu0 %918
        %921 = vrot.lane.b32.xlu0 %v687, 98
        %v922 = vpop.permute.xlu0 %921
        %924 = vrot.lane.b32.xlu0 %v687, 96
        %v925 = vpop.permute.xlu0 %924
        %927 = vrot.lane.b32.xlu0 %v687, 94
        %v928 = vpop.permute.xlu0 %927
        %930 = vrot.lane.b32.xlu0 %v687, 92
        %v931 = vpop.permute.xlu0 %930
        %933 = vrot.lane.b32.xlu0 %v687, 90
        %v934 = vpop.permute.xlu0 %933
        %936 = vrot.lane.b32.xlu0 %v687, 88
        %v937 = vpop.permute.xlu0 %936
        %939 = vrot.lane.b32.xlu0 %v687, 86
        %v940 = vpop.permute.xlu0 %939
        %942 = vrot.lane.b32.xlu0 %v687, 84
        %v943 = vpop.permute.xlu0 %942
        %945 = vrot.lane.b32.xlu0 %v687, 82
        %v946 = vpop.permute.xlu0 %945
        %948 = vrot.lane.b32.xlu0 %v687, 80
        %v949 = vpop.permute.xlu0 %948
        %951 = vrot.lane.b32.xlu0 %v687, 78
        %v952 = vpop.permute.xlu0 %951
        %954 = vrot.lane.b32.xlu0 %v687, 76
        %v955 = vpop.permute.xlu0 %954
        %957 = vrot.lane.b32.xlu0 %v687, 74
        %v958 = vpop.permute.xlu0 %957
        %960 = vrot.lane.b32.xlu0 %v687, 72
        %v961 = vpop.permute.xlu0 %960
        %963 = vrot.lane.b32.xlu0 %v687, 70
        %v964 = vpop.permute.xlu0 %963
        %966 = vrot.lane.b32.xlu0 %v687, 68
        %v967 = vpop.permute.xlu0 %966
        %969 = vrot.lane.b32.xlu0 %v687, 66
        %v970 = vpop.permute.xlu0 %969
        %972 = vrot.lane.b32.xlu0 %v687, 64
        %v973 = vpop.permute.xlu0 %972
        %975 = vrot.lane.b32.xlu0 %v687, 62
        %v976 = vpop.permute.xlu0 %975
        %978 = vrot.lane.b32.xlu0 %v687, 60
        %v979 = vpop.permute.xlu0 %978
        %981 = vrot.lane.b32.xlu0 %v687, 58
        %v982 = vpop.permute.xlu0 %981
        %984 = vrot.lane.b32.xlu0 %v687, 56
        %v985 = vpop.permute.xlu0 %984
        %987 = vrot.lane.b32.xlu0 %v687, 54
        %v988 = vpop.permute.xlu0 %987
        %990 = vrot.lane.b32.xlu0 %v687, 52
        %v991 = vpop.permute.xlu0 %990
        %993 = vrot.lane.b32.xlu0 %v687, 50
        %v994 = vpop.permute.xlu0 %993
        %996 = vrot.lane.b32.xlu0 %v687, 48
        %v997 = vpop.permute.xlu0 %996
        %999 = vrot.lane.b32.xlu0 %v687, 46
        %v1000 = vpop.permute.xlu0 %999
        %1002 = vrot.lane.b32.xlu0 %v687, 44
        %v1003 = vpop.permute.xlu0 %1002
        %1005 = vrot.lane.b32.xlu0 %v687, 42
        %v1006 = vpop.permute.xlu0 %1005
        %1008 = vrot.lane.b32.xlu0 %v687, 40
        %v1009 = vpop.permute.xlu0 %1008
        %1011 = vrot.lane.b32.xlu0 %v687, 38
        %v1012 = vpop.permute.xlu0 %1011
        %1014 = vrot.lane.b32.xlu0 %v687, 36
        %v1015 = vpop.permute.xlu0 %1014
        %1017 = vrot.lane.b32.xlu0 %v687, 34
        %v1018 = vpop.permute.xlu0 %1017
        %1020 = vrot.lane.b32.xlu0 %v687, 32
        %v1021 = vpop.permute.xlu0 %1020
        %1023 = vrot.lane.b32.xlu0 %v687, 30
        %v1024 = vpop.permute.xlu0 %1023
        %1026 = vrot.lane.b32.xlu0 %v687, 28
        %v1027 = vpop.permute.xlu0 %1026
        %1029 = vrot.lane.b32.xlu0 %v687, 26
        %v1030 = vpop.permute.xlu0 %1029
        %1032 = vrot.lane.b32.xlu0 %v687, 24
        %v1033 = vpop.permute.xlu0 %1032
        %1035 = vrot.lane.b32.xlu0 %v687, 22
        %v1036 = vpop.permute.xlu0 %1035
        %1038 = vrot.lane.b32.xlu0 %v687, 20
        %v1039 = vpop.permute.xlu0 %1038
        %1041 = vrot.lane.b32.xlu0 %v687, 18
        %v1042 = vpop.permute.xlu0 %1041
        %1044 = vrot.lane.b32.xlu0 %v687, 16
        %v1045 = vpop.permute.xlu0 %1044
        %1047 = vrot.lane.b32.xlu0 %v687, 14
        %v1048 = vpop.permute.xlu0 %1047
        %1050 = vrot.lane.b32.xlu0 %v687, 12
        %v1051 = vpop.permute.xlu0 %1050
        %1053 = vrot.lane.b32.xlu0 %v687, 10
        %v1054 = vpop.permute.xlu0 %1053
        %1056 = vrot.lane.b32.xlu0 %v687, 8
        %v1057 = vpop.permute.xlu0 %1056
        %1059 = vrot.lane.b32.xlu0 %v687, 6
        %v1060 = vpop.permute.xlu0 %1059
        %1062 = vrot.lane.b32.xlu0 %v687, 4
        %v1063 = vpop.permute.xlu0 %1062
        %1065 = vrot.lane.b32.xlu0 %v687, 2
        %v1066 = vpop.permute.xlu0 %1065
        %v1068 = vcombine.low %v686, %v693
        %v1069 = vcombine.high %v686, %v693
        %v1071 = vunpack.c.l.s4 1983009808
        %v1072 = vunpack.c.0.s8 %v1071
        %v1073 = vlaneseq
        %v1074 = vshrl.u32 %v1073, 7
        %v1075 = vsub.s32 %v1072, %v1074
        %v1076 = vrot.slane %v1068, %v1075
        %v1078 = vunpack.c.l.s4 1983009808
        %v1079 = vunpack.c.0.s8 %v1078
        %v1080 = vlaneseq
        %v1081 = vshrl.u32 %v1080, 7
        %v1082 = vsub.s32 %v1079, %v1081
        %v1083 = vrot.slane %v1069, %v1082
        %v1084 = vcombine.low %v690, %v696
        %v1085 = vcombine.high %v690, %v696
        %v1087 = vunpack.c.l.s4 1983009808
        %v1088 = vunpack.c.0.s8 %v1087
        %v1089 = vlaneseq
        %v1090 = vshrl.u32 %v1089, 7
        %v1091 = vsub.s32 %v1088, %v1090
        %v1092 = vrot.slane %v1084, %v1091
        %v1094 = vunpack.c.l.s4 1983009808
        %v1095 = vunpack.c.0.s8 %v1094
        %v1096 = vlaneseq
        %v1097 = vshrl.u32 %v1096, 7
        %v1098 = vsub.s32 %v1095, %v1097
        %v1099 = vrot.slane %v1085, %v1098
        %v1100 = vcombine.low %v699, %v705
        %v1101 = vcombine.high %v699, %v705
        %v1103 = vunpack.c.l.s4 1983009808
        %v1104 = vunpack.c.0.s8 %v1103
        %v1105 = vlaneseq
        %v1106 = vshrl.u32 %v1105, 7
        %v1107 = vsub.s32 %v1104, %v1106
        %v1108 = vrot.slane %v1100, %v1107
        %v1110 = vunpack.c.l.s4 1983009808
        %v1111 = vunpack.c.0.s8 %v1110
        %v1112 = vlaneseq
        %v1113 = vshrl.u32 %v1112, 7
        %v1114 = vsub.s32 %v1111, %v1113
        %v1115 = vrot.slane %v1101, %v1114
        %v1116 = vcombine.low %v702, %v708
        %v1117 = vcombine.high %v702, %v708
        %v1119 = vunpack.c.l.s4 1983009808
        %v1120 = vunpack.c.0.s8 %v1119
        %v1121 = vlaneseq
        %v1122 = vshrl.u32 %v1121, 7
        %v1123 = vsub.s32 %v1120, %v1122
        %v1124 = vrot.slane %v1116, %v1123
        %v1126 = vunpack.c.l.s4 1983009808
        %v1127 = vunpack.c.0.s8 %v1126
        %v1128 = vlaneseq
        %v1129 = vshrl.u32 %v1128, 7
        %v1130 = vsub.s32 %v1127, %v1129
        %v1131 = vrot.slane %v1117, %v1130
        %v1132 = vcombine.low %v1076, %v1092
        %v1133 = vcombine.high %v1076, %v1092
        %v1135 = vunpack.c.l.s4 1934713408
        %v1136 = vunpack.c.0.s8 %v1135
        %v1137 = vlaneseq
        %v1138 = vshrl.u32 %v1137, 7
        %v1139 = vsub.s32 %v1136, %v1138
        %v1140 = vrot.slane %v1132, %v1139
        %v1142 = vunpack.c.l.s4 1934713408
        %v1143 = vunpack.c.0.s8 %v1142
        %v1144 = vlaneseq
        %v1145 = vshrl.u32 %v1144, 7
        %v1146 = vsub.s32 %v1143, %v1145
        %v1147 = vrot.slane %v1133, %v1146
        %v1148 = vcombine.low %v1083, %v1099
        %v1149 = vcombine.high %v1083, %v1099
        %v1151 = vunpack.c.l.s4 1934713408
        %v1152 = vunpack.c.0.s8 %v1151
        %v1153 = vlaneseq
        %v1154 = vshrl.u32 %v1153, 7
        %v1155 = vsub.s32 %v1152, %v1154
        %v1156 = vrot.slane %v1148, %v1155
        %v1158 = vunpack.c.l.s4 1934713408
        %v1159 = vunpack.c.0.s8 %v1158
        %v1160 = vlaneseq
        %v1161 = vshrl.u32 %v1160, 7
        %v1162 = vsub.s32 %v1159, %v1161
        %v1163 = vrot.slane %v1149, %v1162
        %v1164 = vcombine.low %v1108, %v1124
        %v1165 = vcombine.high %v1108, %v1124
        %v1167 = vunpack.c.l.s4 1934713408
        %v1168 = vunpack.c.0.s8 %v1167
        %v1169 = vlaneseq
        %v1170 = vshrl.u32 %v1169, 7
        %v1171 = vsub.s32 %v1168, %v1170
        %v1172 = vrot.slane %v1164, %v1171
        %v1174 = vunpack.c.l.s4 1934713408
        %v1175 = vunpack.c.0.s8 %v1174
        %v1176 = vlaneseq
        %v1177 = vshrl.u32 %v1176, 7
        %v1178 = vsub.s32 %v1175, %v1177
        %v1179 = vrot.slane %v1165, %v1178
        %v1180 = vcombine.low %v1115, %v1131
        %v1181 = vcombine.high %v1115, %v1131
        %v1183 = vunpack.c.l.s4 1934713408
        %v1184 = vunpack.c.0.s8 %v1183
        %v1185 = vlaneseq
        %v1186 = vshrl.u32 %v1185, 7
        %v1187 = vsub.s32 %v1184, %v1186
        %v1188 = vrot.slane %v1180, %v1187
        %v1190 = vunpack.c.l.s4 1934713408
        %v1191 = vunpack.c.0.s8 %v1190
        %v1192 = vlaneseq
        %v1193 = vshrl.u32 %v1192, 7
        %v1194 = vsub.s32 %v1191, %v1193
        %v1195 = vrot.slane %v1181, %v1194
        %v1196 = vcombine.low %v1140, %v1172
        %v1197 = vcombine.high %v1140, %v1172
        %v1198 = vcombine.low %v1147, %v1179
        %v1199 = vcombine.high %v1147, %v1179
        %v1200 = vcombine.low %v1156, %v1188
        %v1201 = vcombine.high %v1156, %v1188
        %v1202 = vcombine.low %v1163, %v1195
        %v1203 = vcombine.high %v1163, %v1195
        %v1204 = vcombine.low %v711, %v717
        %v1205 = vcombine.high %v711, %v717
        %v1207 = vunpack.c.l.s4 1983009808
        %v1208 = vunpack.c.0.s8 %v1207
        %v1209 = vlaneseq
        %v1210 = vshrl.u32 %v1209, 7
        %v1211 = vsub.s32 %v1208, %v1210
        %v1212 = vrot.slane %v1204, %v1211
        %v1214 = vunpack.c.l.s4 1983009808
        %v1215 = vunpack.c.0.s8 %v1214
        %v1216 = vlaneseq
        %v1217 = vshrl.u32 %v1216, 7
        %v1218 = vsub.s32 %v1215, %v1217
        %v1219 = vrot.slane %v1205, %v1218
        %v1220 = vcombine.low %v714, %v720
        %v1221 = vcombine.high %v714, %v720
        %v1223 = vunpack.c.l.s4 1983009808
        %v1224 = vunpack.c.0.s8 %v1223
        %v1225 = vlaneseq
        %v1226 = vshrl.u32 %v1225, 7
        %v1227 = vsub.s32 %v1224, %v1226
        %v1228 = vrot.slane %v1220, %v1227
        %v1230 = vunpack.c.l.s4 1983009808
        %v1231 = vunpack.c.0.s8 %v1230
        %v1232 = vlaneseq
        %v1233 = vshrl.u32 %v1232, 7
        %v1234 = vsub.s32 %v1231, %v1233
        %v1235 = vrot.slane %v1221, %v1234
        %v1236 = vcombine.low %v723, %v729
        %v1237 = vcombine.high %v723, %v729
        %v1239 = vunpack.c.l.s4 1983009808
        %v1240 = vunpack.c.0.s8 %v1239
        %v1241 = vlaneseq
        %v1242 = vshrl.u32 %v1241, 7
        %v1243 = vsub.s32 %v1240, %v1242
        %v1244 = vrot.slane %v1236, %v1243
        %v1246 = vunpack.c.l.s4 1983009808
        %v1247 = vunpack.c.0.s8 %v1246
        %v1248 = vlaneseq
        %v1249 = vshrl.u32 %v1248, 7
        %v1250 = vsub.s32 %v1247, %v1249
        %v1251 = vrot.slane %v1237, %v1250
        %v1252 = vcombine.low %v726, %v732
        %v1253 = vcombine.high %v726, %v732
        %v1255 = vunpack.c.l.s4 1983009808
        %v1256 = vunpack.c.0.s8 %v1255
        %v1257 = vlaneseq
        %v1258 = vshrl.u32 %v1257, 7
        %v1259 = vsub.s32 %v1256, %v1258
        %v1260 = vrot.slane %v1252, %v1259
        %v1262 = vunpack.c.l.s4 1983009808
        %v1263 = vunpack.c.0.s8 %v1262
        %v1264 = vlaneseq
        %v1265 = vshrl.u32 %v1264, 7
        %v1266 = vsub.s32 %v1263, %v1265
        %v1267 = vrot.slane %v1253, %v1266
        %v1268 = vcombine.low %v1212, %v1228
        %v1269 = vcombine.high %v1212, %v1228
        %v1271 = vunpack.c.l.s4 1934713408
        %v1272 = vunpack.c.0.s8 %v1271
        %v1273 = vlaneseq
        %v1274 = vshrl.u32 %v1273, 7
        %v1275 = vsub.s32 %v1272, %v1274
        %v1276 = vrot.slane %v1268, %v1275
        %v1278 = vunpack.c.l.s4 1934713408
        %v1279 = vunpack.c.0.s8 %v1278
        %v1280 = vlaneseq
        %v1281 = vshrl.u32 %v1280, 7
        %v1282 = vsub.s32 %v1279, %v1281
        %v1283 = vrot.slane %v1269, %v1282
        %v1284 = vcombine.low %v1219, %v1235
        %v1285 = vcombine.high %v1219, %v1235
        %v1287 = vunpack.c.l.s4 1934713408
        %v1288 = vunpack.c.0.s8 %v1287
        %v1289 = vlaneseq
        %v1290 = vshrl.u32 %v1289, 7
        %v1291 = vsub.s32 %v1288, %v1290
        %v1292 = vrot.slane %v1284, %v1291
        %v1294 = vunpack.c.l.s4 1934713408
        %v1295 = vunpack.c.0.s8 %v1294
        %v1296 = vlaneseq
        %v1297 = vshrl.u32 %v1296, 7
        %v1298 = vsub.s32 %v1295, %v1297
        %v1299 = vrot.slane %v1285, %v1298
        %v1300 = vcombine.low %v1244, %v1260
        %v1301 = vcombine.high %v1244, %v1260
        %v1303 = vunpack.c.l.s4 1934713408
        %v1304 = vunpack.c.0.s8 %v1303
        %v1305 = vlaneseq
        %v1306 = vshrl.u32 %v1305, 7
        %v1307 = vsub.s32 %v1304, %v1306
        %v1308 = vrot.slane %v1300, %v1307
        %v1310 = vunpack.c.l.s4 1934713408
        %v1311 = vunpack.c.0.s8 %v1310
        %v1312 = vlaneseq
        %v1313 = vshrl.u32 %v1312, 7
        %v1314 = vsub.s32 %v1311, %v1313
        %v1315 = vrot.slane %v1301, %v1314
        %v1316 = vcombine.low %v1251, %v1267
        %v1317 = vcombine.high %v1251, %v1267
        %v1319 = vunpack.c.l.s4 1934713408
        %v1320 = vunpack.c.0.s8 %v1319
        %v1321 = vlaneseq
        %v1322 = vshrl.u32 %v1321, 7
        %v1323 = vsub.s32 %v1320, %v1322
        %v1324 = vrot.slane %v1316, %v1323
        %v1326 = vunpack.c.l.s4 1934713408
        %v1327 = vunpack.c.0.s8 %v1326
        %v1328 = vlaneseq
        %v1329 = vshrl.u32 %v1328, 7
        %v1330 = vsub.s32 %v1327, %v1329
        %v1331 = vrot.slane %v1317, %v1330
        %v1332 = vcombine.low %v1276, %v1308
        %v1333 = vcombine.high %v1276, %v1308
        %v1334 = vcombine.low %v1283, %v1315
        %v1335 = vcombine.high %v1283, %v1315
        %v1336 = vcombine.low %v1292, %v1324
        %v1337 = vcombine.high %v1292, %v1324
        %v1338 = vcombine.low %v1299, %v1331
        %v1339 = vcombine.high %v1299, %v1331
        %v1340 = vcombine.low %v735, %v741
        %v1341 = vcombine.high %v735, %v741
        %v1343 = vunpack.c.l.s4 1983009808
        %v1344 = vunpack.c.0.s8 %v1343
        %v1345 = vlaneseq
        %v1346 = vshrl.u32 %v1345, 7
        %v1347 = vsub.s32 %v1344, %v1346
        %v1348 = vrot.slane %v1340, %v1347
        %v1350 = vunpack.c.l.s4 1983009808
        %v1351 = vunpack.c.0.s8 %v1350
        %v1352 = vlaneseq
        %v1353 = vshrl.u32 %v1352, 7
        %v1354 = vsub.s32 %v1351, %v1353
        %v1355 = vrot.slane %v1341, %v1354
        %v1356 = vcombine.low %v738, %v744
        %v1357 = vcombine.high %v738, %v744
        %v1359 = vunpack.c.l.s4 1983009808
        %v1360 = vunpack.c.0.s8 %v1359
        %v1361 = vlaneseq
        %v1362 = vshrl.u32 %v1361, 7
        %v1363 = vsub.s32 %v1360, %v1362
        %v1364 = vrot.slane %v1356, %v1363
        %v1366 = vunpack.c.l.s4 1983009808
        %v1367 = vunpack.c.0.s8 %v1366
        %v1368 = vlaneseq
        %v1369 = vshrl.u32 %v1368, 7
        %v1370 = vsub.s32 %v1367, %v1369
        %v1371 = vrot.slane %v1357, %v1370
        %v1372 = vcombine.low %v747, %v753
        %v1373 = vcombine.high %v747, %v753
        %v1375 = vunpack.c.l.s4 1983009808
        %v1376 = vunpack.c.0.s8 %v1375
        %v1377 = vlaneseq
        %v1378 = vshrl.u32 %v1377, 7
        %v1379 = vsub.s32 %v1376, %v1378
        %v1380 = vrot.slane %v1372, %v1379
        %v1382 = vunpack.c.l.s4 1983009808
        %v1383 = vunpack.c.0.s8 %v1382
        %v1384 = vlaneseq
        %v1385 = vshrl.u32 %v1384, 7
        %v1386 = vsub.s32 %v1383, %v1385
        %v1387 = vrot.slane %v1373, %v1386
        %v1388 = vcombine.low %v750, %v756
        %v1389 = vcombine.high %v750, %v756
        %v1391 = vunpack.c.l.s4 1983009808
        %v1392 = vunpack.c.0.s8 %v1391
        %v1393 = vlaneseq
        %v1394 = vshrl.u32 %v1393, 7
        %v1395 = vsub.s32 %v1392, %v1394
        %v1396 = vrot.slane %v1388, %v1395
        %v1398 = vunpack.c.l.s4 1983009808
        %v1399 = vunpack.c.0.s8 %v1398
        %v1400 = vlaneseq
        %v1401 = vshrl.u32 %v1400, 7
        %v1402 = vsub.s32 %v1399, %v1401
        %v1403 = vrot.slane %v1389, %v1402
        %v1404 = vcombine.low %v1348, %v1364
        %v1405 = vcombine.high %v1348, %v1364
        %v1407 = vunpack.c.l.s4 1934713408
        %v1408 = vunpack.c.0.s8 %v1407
        %v1409 = vlaneseq
        %v1410 = vshrl.u32 %v1409, 7
        %v1411 = vsub.s32 %v1408, %v1410
        %v1412 = vrot.slane %v1404, %v1411
        %v1414 = vunpack.c.l.s4 1934713408
        %v1415 = vunpack.c.0.s8 %v1414
        %v1416 = vlaneseq
        %v1417 = vshrl.u32 %v1416, 7
        %v1418 = vsub.s32 %v1415, %v1417
        %v1419 = vrot.slane %v1405, %v1418
        %v1420 = vcombine.low %v1355, %v1371
        %v1421 = vcombine.high %v1355, %v1371
        %v1423 = vunpack.c.l.s4 1934713408
        %v1424 = vunpack.c.0.s8 %v1423
        %v1425 = vlaneseq
        %v1426 = vshrl.u32 %v1425, 7
        %v1427 = vsub.s32 %v1424, %v1426
        %v1428 = vrot.slane %v1420, %v1427
        %v1430 = vunpack.c.l.s4 1934713408
        %v1431 = vunpack.c.0.s8 %v1430
        %v1432 = vlaneseq
        %v1433 = vshrl.u32 %v1432, 7
        %v1434 = vsub.s32 %v1431, %v1433
        %v1435 = vrot.slane %v1421, %v1434
        %v1436 = vcombine.low %v1380, %v1396
        %v1437 = vcombine.high %v1380, %v1396
        %v1439 = vunpack.c.l.s4 1934713408
        %v1440 = vunpack.c.0.s8 %v1439
        %v1441 = vlaneseq
        %v1442 = vshrl.u32 %v1441, 7
        %v1443 = vsub.s32 %v1440, %v1442
        %v1444 = vrot.slane %v1436, %v1443
        %v1446 = vunpack.c.l.s4 1934713408
        %v1447 = vunpack.c.0.s8 %v1446
        %v1448 = vlaneseq
        %v1449 = vshrl.u32 %v1448, 7
        %v1450 = vsub.s32 %v1447, %v1449
        %v1451 = vrot.slane %v1437, %v1450
        %v1452 = vcombine.low %v1387, %v1403
        %v1453 = vcombine.high %v1387, %v1403
        %v1455 = vunpack.c.l.s4 1934713408
        %v1456 = vunpack.c.0.s8 %v1455
        %v1457 = vlaneseq
        %v1458 = vshrl.u32 %v1457, 7
        %v1459 = vsub.s32 %v1456, %v1458
        %v1460 = vrot.slane %v1452, %v1459
        %v1462 = vunpack.c.l.s4 1934713408
        %v1463 = vunpack.c.0.s8 %v1462
        %v1464 = vlaneseq
        %v1465 = vshrl.u32 %v1464, 7
        %v1466 = vsub.s32 %v1463, %v1465
        %v1467 = vrot.slane %v1453, %v1466
        %v1468 = vcombine.low %v1412, %v1444
        %v1469 = vcombine.high %v1412, %v1444
        %v1470 = vcombine.low %v1419, %v1451
        %v1471 = vcombine.high %v1419, %v1451
        %v1472 = vcombine.low %v1428, %v1460
        %v1473 = vcombine.high %v1428, %v1460
        %v1474 = vcombine.low %v1435, %v1467
        %v1475 = vcombine.high %v1435, %v1467
        %v1476 = vcombine.low %v759, %v765
        %v1477 = vcombine.high %v759, %v765
        %v1479 = vunpack.c.l.s4 1983009808
        %v1480 = vunpack.c.0.s8 %v1479
        %v1481 = vlaneseq
        %v1482 = vshrl.u32 %v1481, 7
        %v1483 = vsub.s32 %v1480, %v1482
        %v1484 = vrot.slane %v1476, %v1483
        %v1486 = vunpack.c.l.s4 1983009808
        %v1487 = vunpack.c.0.s8 %v1486
        %v1488 = vlaneseq
        %v1489 = vshrl.u32 %v1488, 7
        %v1490 = vsub.s32 %v1487, %v1489
        %v1491 = vrot.slane %v1477, %v1490
        %v1492 = vcombine.low %v762, %v768
        %v1493 = vcombine.high %v762, %v768
        %v1495 = vunpack.c.l.s4 1983009808
        %v1496 = vunpack.c.0.s8 %v1495
        %v1497 = vlaneseq
        %v1498 = vshrl.u32 %v1497, 7
        %v1499 = vsub.s32 %v1496, %v1498
        %v1500 = vrot.slane %v1492, %v1499
        %v1502 = vunpack.c.l.s4 1983009808
        %v1503 = vunpack.c.0.s8 %v1502
        %v1504 = vlaneseq
        %v1505 = vshrl.u32 %v1504, 7
        %v1506 = vsub.s32 %v1503, %v1505
        %v1507 = vrot.slane %v1493, %v1506
        %v1508 = vcombine.low %v771, %v777
        %v1509 = vcombine.high %v771, %v777
        %v1511 = vunpack.c.l.s4 1983009808
        %v1512 = vunpack.c.0.s8 %v1511
        %v1513 = vlaneseq
        %v1514 = vshrl.u32 %v1513, 7
        %v1515 = vsub.s32 %v1512, %v1514
        %v1516 = vrot.slane %v1508, %v1515
        %v1518 = vunpack.c.l.s4 1983009808
        %v1519 = vunpack.c.0.s8 %v1518
        %v1520 = vlaneseq
        %v1521 = vshrl.u32 %v1520, 7
        %v1522 = vsub.s32 %v1519, %v1521
        %v1523 = vrot.slane %v1509, %v1522
        %v1524 = vcombine.low %v774, %v780
        %v1525 = vcombine.high %v774, %v780
        %v1527 = vunpack.c.l.s4 1983009808
        %v1528 = vunpack.c.0.s8 %v1527
        %v1529 = vlaneseq
        %v1530 = vshrl.u32 %v1529, 7
        %v1531 = vsub.s32 %v1528, %v1530
        %v1532 = vrot.slane %v1524, %v1531
        %v1534 = vunpack.c.l.s4 1983009808
        %v1535 = vunpack.c.0.s8 %v1534
        %v1536 = vlaneseq
        %v1537 = vshrl.u32 %v1536, 7
        %v1538 = vsub.s32 %v1535, %v1537
        %v1539 = vrot.slane %v1525, %v1538
        %v1540 = vcombine.low %v1484, %v1500
        %v1541 = vcombine.high %v1484, %v1500
        %v1543 = vunpack.c.l.s4 1934713408
        %v1544 = vunpack.c.0.s8 %v1543
        %v1545 = vlaneseq
        %v1546 = vshrl.u32 %v1545, 7
        %v1547 = vsub.s32 %v1544, %v1546
        %v1548 = vrot.slane %v1540, %v1547
        %v1550 = vunpack.c.l.s4 1934713408
        %v1551 = vunpack.c.0.s8 %v1550
        %v1552 = vlaneseq
        %v1553 = vshrl.u32 %v1552, 7
        %v1554 = vsub.s32 %v1551, %v1553
        %v1555 = vrot.slane %v1541, %v1554
        %v1556 = vcombine.low %v1491, %v1507
        %v1557 = vcombine.high %v1491, %v1507
        %v1559 = vunpack.c.l.s4 1934713408
        %v1560 = vunpack.c.0.s8 %v1559
        %v1561 = vlaneseq
        %v1562 = vshrl.u32 %v1561, 7
        %v1563 = vsub.s32 %v1560, %v1562
        %v1564 = vrot.slane %v1556, %v1563
        %v1566 = vunpack.c.l.s4 1934713408
        %v1567 = vunpack.c.0.s8 %v1566
        %v1568 = vlaneseq
        %v1569 = vshrl.u32 %v1568, 7
        %v1570 = vsub.s32 %v1567, %v1569
        %v1571 = vrot.slane %v1557, %v1570
        %v1572 = vcombine.low %v1516, %v1532
        %v1573 = vcombine.high %v1516, %v1532
        %v1575 = vunpack.c.l.s4 1934713408
        %v1576 = vunpack.c.0.s8 %v1575
        %v1577 = vlaneseq
        %v1578 = vshrl.u32 %v1577, 7
        %v1579 = vsub.s32 %v1576, %v1578
        %v1580 = vrot.slane %v1572, %v1579
        %v1582 = vunpack.c.l.s4 1934713408
        %v1583 = vunpack.c.0.s8 %v1582
        %v1584 = vlaneseq
        %v1585 = vshrl.u32 %v1584, 7
        %v1586 = vsub.s32 %v1583, %v1585
        %v1587 = vrot.slane %v1573, %v1586
        %v1588 = vcombine.low %v1523, %v1539
        %v1589 = vcombine.high %v1523, %v1539
        %v1591 = vunpack.c.l.s4 1934713408
        %v1592 = vunpack.c.0.s8 %v1591
        %v1593 = vlaneseq
        %v1594 = vshrl.u32 %v1593, 7
        %v1595 = vsub.s32 %v1592, %v1594
        %v1596 = vrot.slane %v1588, %v1595
        %v1598 = vunpack.c.l.s4 1934713408
        %v1599 = vunpack.c.0.s8 %v1598
        %v1600 = vlaneseq
        %v1601 = vshrl.u32 %v1600, 7
        %v1602 = vsub.s32 %v1599, %v1601
        %v1603 = vrot.slane %v1589, %v1602
        %v1604 = vcombine.low %v1548, %v1580
        %v1605 = vcombine.high %v1548, %v1580
        %v1606 = vcombine.low %v1555, %v1587
        %v1607 = vcombine.high %v1555, %v1587
        %v1608 = vcombine.low %v1564, %v1596
        %v1609 = vcombine.high %v1564, %v1596
        %v1610 = vcombine.low %v1571, %v1603
        %v1611 = vcombine.high %v1571, %v1603
        %v1612 = vcombine.low %v783, %v789
        %v1613 = vcombine.high %v783, %v789
        %v1615 = vunpack.c.l.s4 1983009808
        %v1616 = vunpack.c.0.s8 %v1615
        %v1617 = vlaneseq
        %v1618 = vshrl.u32 %v1617, 7
        %v1619 = vsub.s32 %v1616, %v1618
        %v1620 = vrot.slane %v1612, %v1619
        %v1622 = vunpack.c.l.s4 1983009808
        %v1623 = vunpack.c.0.s8 %v1622
        %v1624 = vlaneseq
        %v1625 = vshrl.u32 %v1624, 7
        %v1626 = vsub.s32 %v1623, %v1625
        %v1627 = vrot.slane %v1613, %v1626
        %v1628 = vcombine.low %v786, %v792
        %v1629 = vcombine.high %v786, %v792
        %v1631 = vunpack.c.l.s4 1983009808
        %v1632 = vunpack.c.0.s8 %v1631
        %v1633 = vlaneseq
        %v1634 = vshrl.u32 %v1633, 7
        %v1635 = vsub.s32 %v1632, %v1634
        %v1636 = vrot.slane %v1628, %v1635
        %v1638 = vunpack.c.l.s4 1983009808
        %v1639 = vunpack.c.0.s8 %v1638
        %v1640 = vlaneseq
        %v1641 = vshrl.u32 %v1640, 7
        %v1642 = vsub.s32 %v1639, %v1641
        %v1643 = vrot.slane %v1629, %v1642
        %v1644 = vcombine.low %v795, %v801
        %v1645 = vcombine.high %v795, %v801
        %v1647 = vunpack.c.l.s4 1983009808
        %v1648 = vunpack.c.0.s8 %v1647
        %v1649 = vlaneseq
        %v1650 = vshrl.u32 %v1649, 7
        %v1651 = vsub.s32 %v1648, %v1650
        %v1652 = vrot.slane %v1644, %v1651
        %v1654 = vunpack.c.l.s4 1983009808
        %v1655 = vunpack.c.0.s8 %v1654
        %v1656 = vlaneseq
        %v1657 = vshrl.u32 %v1656, 7
        %v1658 = vsub.s32 %v1655, %v1657
        %v1659 = vrot.slane %v1645, %v1658
        %v1660 = vcombine.low %v798, %v804
        %v1661 = vcombine.high %v798, %v804
        %v1663 = vunpack.c.l.s4 1983009808
        %v1664 = vunpack.c.0.s8 %v1663
        %v1665 = vlaneseq
        %v1666 = vshrl.u32 %v1665, 7
        %v1667 = vsub.s32 %v1664, %v1666
        %v1668 = vrot.slane %v1660, %v1667
        %v1670 = vunpack.c.l.s4 1983009808
        %v1671 = vunpack.c.0.s8 %v1670
        %v1672 = vlaneseq
        %v1673 = vshrl.u32 %v1672, 7
        %v1674 = vsub.s32 %v1671, %v1673
        %v1675 = vrot.slane %v1661, %v1674
        %v1676 = vcombine.low %v1620, %v1636
        %v1677 = vcombine.high %v1620, %v1636
        %v1679 = vunpack.c.l.s4 1934713408
        %v1680 = vunpack.c.0.s8 %v1679
        %v1681 = vlaneseq
        %v1682 = vshrl.u32 %v1681, 7
        %v1683 = vsub.s32 %v1680, %v1682
        %v1684 = vrot.slane %v1676, %v1683
        %v1686 = vunpack.c.l.s4 1934713408
        %v1687 = vunpack.c.0.s8 %v1686
        %v1688 = vlaneseq
        %v1689 = vshrl.u32 %v1688, 7
        %v1690 = vsub.s32 %v1687, %v1689
        %v1691 = vrot.slane %v1677, %v1690
        %v1692 = vcombine.low %v1627, %v1643
        %v1693 = vcombine.high %v1627, %v1643
        %v1695 = vunpack.c.l.s4 1934713408
        %v1696 = vunpack.c.0.s8 %v1695
        %v1697 = vlaneseq
        %v1698 = vshrl.u32 %v1697, 7
        %v1699 = vsub.s32 %v1696, %v1698
        %v1700 = vrot.slane %v1692, %v1699
        %v1702 = vunpack.c.l.s4 1934713408
        %v1703 = vunpack.c.0.s8 %v1702
        %v1704 = vlaneseq
        %v1705 = vshrl.u32 %v1704, 7
        %v1706 = vsub.s32 %v1703, %v1705
        %v1707 = vrot.slane %v1693, %v1706
        %v1708 = vcombine.low %v1652, %v1668
        %v1709 = vcombine.high %v1652, %v1668
        %v1711 = vunpack.c.l.s4 1934713408
        %v1712 = vunpack.c.0.s8 %v1711
        %v1713 = vlaneseq
        %v1714 = vshrl.u32 %v1713, 7
        %v1715 = vsub.s32 %v1712, %v1714
        %v1716 = vrot.slane %v1708, %v1715
        %v1718 = vunpack.c.l.s4 1934713408
        %v1719 = vunpack.c.0.s8 %v1718
        %v1720 = vlaneseq
        %v1721 = vshrl.u32 %v1720, 7
        %v1722 = vsub.s32 %v1719, %v1721
        %v1723 = vrot.slane %v1709, %v1722
        %v1724 = vcombine.low %v1659, %v1675
        %v1725 = vcombine.high %v1659, %v1675
        %v1727 = vunpack.c.l.s4 1934713408
        %v1728 = vunpack.c.0.s8 %v1727
        %v1729 = vlaneseq
        %v1730 = vshrl.u32 %v1729, 7
        %v1731 = vsub.s32 %v1728, %v1730
        %v1732 = vrot.slane %v1724, %v1731
        %v1734 = vunpack.c.l.s4 1934713408
        %v1735 = vunpack.c.0.s8 %v1734
        %v1736 = vlaneseq
        %v1737 = vshrl.u32 %v1736, 7
        %v1738 = vsub.s32 %v1735, %v1737
        %v1739 = vrot.slane %v1725, %v1738
        %v1740 = vcombine.low %v1684, %v1716
        %v1741 = vcombine.high %v1684, %v1716
        %v1742 = vcombine.low %v1691, %v1723
        %v1743 = vcombine.high %v1691, %v1723
        %v1744 = vcombine.low %v1700, %v1732
        %v1745 = vcombine.high %v1700, %v1732
        %v1746 = vcombine.low %v1707, %v1739
        %v1747 = vcombine.high %v1707, %v1739
        %v1748 = vcombine.low %v807, %v813
        %v1749 = vcombine.high %v807, %v813
        %v1751 = vunpack.c.l.s4 1983009808
        %v1752 = vunpack.c.0.s8 %v1751
        %v1753 = vlaneseq
        %v1754 = vshrl.u32 %v1753, 7
        %v1755 = vsub.s32 %v1752, %v1754
        %v1756 = vrot.slane %v1748, %v1755
        %v1758 = vunpack.c.l.s4 1983009808
        %v1759 = vunpack.c.0.s8 %v1758
        %v1760 = vlaneseq
        %v1761 = vshrl.u32 %v1760, 7
        %v1762 = vsub.s32 %v1759, %v1761
        %v1763 = vrot.slane %v1749, %v1762
        %v1764 = vcombine.low %v810, %v816
        %v1765 = vcombine.high %v810, %v816
        %v1767 = vunpack.c.l.s4 1983009808
        %v1768 = vunpack.c.0.s8 %v1767
        %v1769 = vlaneseq
        %v1770 = vshrl.u32 %v1769, 7
        %v1771 = vsub.s32 %v1768, %v1770
        %v1772 = vrot.slane %v1764, %v1771
        %v1774 = vunpack.c.l.s4 1983009808
        %v1775 = vunpack.c.0.s8 %v1774
        %v1776 = vlaneseq
        %v1777 = vshrl.u32 %v1776, 7
        %v1778 = vsub.s32 %v1775, %v1777
        %v1779 = vrot.slane %v1765, %v1778
        %v1780 = vcombine.low %v819, %v825
        %v1781 = vcombine.high %v819, %v825
        %v1783 = vunpack.c.l.s4 1983009808
        %v1784 = vunpack.c.0.s8 %v1783
        %v1785 = vlaneseq
        %v1786 = vshrl.u32 %v1785, 7
        %v1787 = vsub.s32 %v1784, %v1786
        %v1788 = vrot.slane %v1780, %v1787
        %v1790 = vunpack.c.l.s4 1983009808
        %v1791 = vunpack.c.0.s8 %v1790
        %v1792 = vlaneseq
        %v1793 = vshrl.u32 %v1792, 7
        %v1794 = vsub.s32 %v1791, %v1793
        %v1795 = vrot.slane %v1781, %v1794
        %v1796 = vcombine.low %v822, %v828
        %v1797 = vcombine.high %v822, %v828
        %v1799 = vunpack.c.l.s4 1983009808
        %v1800 = vunpack.c.0.s8 %v1799
        %v1801 = vlaneseq
        %v1802 = vshrl.u32 %v1801, 7
        %v1803 = vsub.s32 %v1800, %v1802
        %v1804 = vrot.slane %v1796, %v1803
        %v1806 = vunpack.c.l.s4 1983009808
        %v1807 = vunpack.c.0.s8 %v1806
        %v1808 = vlaneseq
        %v1809 = vshrl.u32 %v1808, 7
        %v1810 = vsub.s32 %v1807, %v1809
        %v1811 = vrot.slane %v1797, %v1810
        %v1812 = vcombine.low %v1756, %v1772
        %v1813 = vcombine.high %v1756, %v1772
        %v1815 = vunpack.c.l.s4 1934713408
        %v1816 = vunpack.c.0.s8 %v1815
        %v1817 = vlaneseq
        %v1818 = vshrl.u32 %v1817, 7
        %v1819 = vsub.s32 %v1816, %v1818
        %v1820 = vrot.slane %v1812, %v1819
        %v1822 = vunpack.c.l.s4 1934713408
        %v1823 = vunpack.c.0.s8 %v1822
        %v1824 = vlaneseq
        %v1825 = vshrl.u32 %v1824, 7
        %v1826 = vsub.s32 %v1823, %v1825
        %v1827 = vrot.slane %v1813, %v1826
        %v1828 = vcombine.low %v1763, %v1779
        %v1829 = vcombine.high %v1763, %v1779
        %v1831 = vunpack.c.l.s4 1934713408
        %v1832 = vunpack.c.0.s8 %v1831
        %v1833 = vlaneseq
        %v1834 = vshrl.u32 %v1833, 7
        %v1835 = vsub.s32 %v1832, %v1834
        %v1836 = vrot.slane %v1828, %v1835
        %v1838 = vunpack.c.l.s4 1934713408
        %v1839 = vunpack.c.0.s8 %v1838
        %v1840 = vlaneseq
        %v1841 = vshrl.u32 %v1840, 7
        %v1842 = vsub.s32 %v1839, %v1841
        %v1843 = vrot.slane %v1829, %v1842
        %v1844 = vcombine.low %v1788, %v1804
        %v1845 = vcombine.high %v1788, %v1804
        %v1847 = vunpack.c.l.s4 1934713408
        %v1848 = vunpack.c.0.s8 %v1847
        %v1849 = vlaneseq
        %v1850 = vshrl.u32 %v1849, 7
        %v1851 = vsub.s32 %v1848, %v1850
        %v1852 = vrot.slane %v1844, %v1851
        %v1854 = vunpack.c.l.s4 1934713408
        %v1855 = vunpack.c.0.s8 %v1854
        %v1856 = vlaneseq
        %v1857 = vshrl.u32 %v1856, 7
        %v1858 = vsub.s32 %v1855, %v1857
        %v1859 = vrot.slane %v1845, %v1858
        %v1860 = vcombine.low %v1795, %v1811
        %v1861 = vcombine.high %v1795, %v1811
        %v1863 = vunpack.c.l.s4 1934713408
        %v1864 = vunpack.c.0.s8 %v1863
        %v1865 = vlaneseq
        %v1866 = vshrl.u32 %v1865, 7
        %v1867 = vsub.s32 %v1864, %v1866
        %v1868 = vrot.slane %v1860, %v1867
        %v1870 = vunpack.c.l.s4 1934713408
        %v1871 = vunpack.c.0.s8 %v1870
        %v1872 = vlaneseq
        %v1873 = vshrl.u32 %v1872, 7
        %v1874 = vsub.s32 %v1871, %v1873
        %v1875 = vrot.slane %v1861, %v1874
        %v1876 = vcombine.low %v1820, %v1852
        %v1877 = vcombine.high %v1820, %v1852
        %v1878 = vcombine.low %v1827, %v1859
        %v1879 = vcombine.high %v1827, %v1859
        %v1880 = vcombine.low %v1836, %v1868
        %v1881 = vcombine.high %v1836, %v1868
        %v1882 = vcombine.low %v1843, %v1875
        %v1883 = vcombine.high %v1843, %v1875
        %v1884 = vcombine.low %v831, %v837
        %v1885 = vcombine.high %v831, %v837
        %v1887 = vunpack.c.l.s4 1983009808
        %v1888 = vunpack.c.0.s8 %v1887
        %v1889 = vlaneseq
        %v1890 = vshrl.u32 %v1889, 7
        %v1891 = vsub.s32 %v1888, %v1890
        %v1892 = vrot.slane %v1884, %v1891
        %v1894 = vunpack.c.l.s4 1983009808
        %v1895 = vunpack.c.0.s8 %v1894
        %v1896 = vlaneseq
        %v1897 = vshrl.u32 %v1896, 7
        %v1898 = vsub.s32 %v1895, %v1897
        %v1899 = vrot.slane %v1885, %v1898
        %v1900 = vcombine.low %v834, %v840
        %v1901 = vcombine.high %v834, %v840
        %v1903 = vunpack.c.l.s4 1983009808
        %v1904 = vunpack.c.0.s8 %v1903
        %v1905 = vlaneseq
        %v1906 = vshrl.u32 %v1905, 7
        %v1907 = vsub.s32 %v1904, %v1906
        %v1908 = vrot.slane %v1900, %v1907
        %v1910 = vunpack.c.l.s4 1983009808
        %v1911 = vunpack.c.0.s8 %v1910
        %v1912 = vlaneseq
        %v1913 = vshrl.u32 %v1912, 7
        %v1914 = vsub.s32 %v1911, %v1913
        %v1915 = vrot.slane %v1901, %v1914
        %v1916 = vcombine.low %v843, %v849
        %v1917 = vcombine.high %v843, %v849
        %v1919 = vunpack.c.l.s4 1983009808
        %v1920 = vunpack.c.0.s8 %v1919
        %v1921 = vlaneseq
        %v1922 = vshrl.u32 %v1921, 7
        %v1923 = vsub.s32 %v1920, %v1922
        %v1924 = vrot.slane %v1916, %v1923
        %v1926 = vunpack.c.l.s4 1983009808
        %v1927 = vunpack.c.0.s8 %v1926
        %v1928 = vlaneseq
        %v1929 = vshrl.u32 %v1928, 7
        %v1930 = vsub.s32 %v1927, %v1929
        %v1931 = vrot.slane %v1917, %v1930
        %v1932 = vcombine.low %v846, %v852
        %v1933 = vcombine.high %v846, %v852
        %v1935 = vunpack.c.l.s4 1983009808
        %v1936 = vunpack.c.0.s8 %v1935
        %v1937 = vlaneseq
        %v1938 = vshrl.u32 %v1937, 7
        %v1939 = vsub.s32 %v1936, %v1938
        %v1940 = vrot.slane %v1932, %v1939
        %v1942 = vunpack.c.l.s4 1983009808
        %v1943 = vunpack.c.0.s8 %v1942
        %v1944 = vlaneseq
        %v1945 = vshrl.u32 %v1944, 7
        %v1946 = vsub.s32 %v1943, %v1945
        %v1947 = vrot.slane %v1933, %v1946
        %v1948 = vcombine.low %v1892, %v1908
        %v1949 = vcombine.high %v1892, %v1908
        %v1951 = vunpack.c.l.s4 1934713408
        %v1952 = vunpack.c.0.s8 %v1951
        %v1953 = vlaneseq
        %v1954 = vshrl.u32 %v1953, 7
        %v1955 = vsub.s32 %v1952, %v1954
        %v1956 = vrot.slane %v1948, %v1955
        %v1958 = vunpack.c.l.s4 1934713408
        %v1959 = vunpack.c.0.s8 %v1958
        %v1960 = vlaneseq
        %v1961 = vshrl.u32 %v1960, 7
        %v1962 = vsub.s32 %v1959, %v1961
        %v1963 = vrot.slane %v1949, %v1962
        %v1964 = vcombine.low %v1899, %v1915
        %v1965 = vcombine.high %v1899, %v1915
        %v1967 = vunpack.c.l.s4 1934713408
        %v1968 = vunpack.c.0.s8 %v1967
        %v1969 = vlaneseq
        %v1970 = vshrl.u32 %v1969, 7
        %v1971 = vsub.s32 %v1968, %v1970
        %v1972 = vrot.slane %v1964, %v1971
        %v1974 = vunpack.c.l.s4 1934713408
        %v1975 = vunpack.c.0.s8 %v1974
        %v1976 = vlaneseq
        %v1977 = vshrl.u32 %v1976, 7
        %v1978 = vsub.s32 %v1975, %v1977
        %v1979 = vrot.slane %v1965, %v1978
        %v1980 = vcombine.low %v1924, %v1940
        %v1981 = vcombine.high %v1924, %v1940
        %v1983 = vunpack.c.l.s4 1934713408
        %v1984 = vunpack.c.0.s8 %v1983
        %v1985 = vlaneseq
        %v1986 = vshrl.u32 %v1985, 7
        %v1987 = vsub.s32 %v1984, %v1986
        %v1988 = vrot.slane %v1980, %v1987
        %v1990 = vunpack.c.l.s4 1934713408
        %v1991 = vunpack.c.0.s8 %v1990
        %v1992 = vlaneseq
        %v1993 = vshrl.u32 %v1992, 7
        %v1994 = vsub.s32 %v1991, %v1993
        %v1995 = vrot.slane %v1981, %v1994
        %v1996 = vcombine.low %v1931, %v1947
        %v1997 = vcombine.high %v1931, %v1947
        %v1999 = vunpack.c.l.s4 1934713408
        %v2000 = vunpack.c.0.s8 %v1999
        %v2001 = vlaneseq
        %v2002 = vshrl.u32 %v2001, 7
        %v2003 = vsub.s32 %v2000, %v2002
        %v2004 = vrot.slane %v1996, %v2003
        %v2006 = vunpack.c.l.s4 1934713408
        %v2007 = vunpack.c.0.s8 %v2006
        %v2008 = vlaneseq
        %v2009 = vshrl.u32 %v2008, 7
        %v2010 = vsub.s32 %v2007, %v2009
        %v2011 = vrot.slane %v1997, %v2010
        %v2012 = vcombine.low %v1956, %v1988
        %v2013 = vcombine.high %v1956, %v1988
        %v2014 = vcombine.low %v1963, %v1995
        %v2015 = vcombine.high %v1963, %v1995
        %v2016 = vcombine.low %v1972, %v2004
        %v2017 = vcombine.high %v1972, %v2004
        %v2018 = vcombine.low %v1979, %v2011
        %v2019 = vcombine.high %v1979, %v2011
        %v2020 = vcombine.low %v855, %v861
        %v2021 = vcombine.high %v855, %v861
        %v2023 = vunpack.c.l.s4 1983009808
        %v2024 = vunpack.c.0.s8 %v2023
        %v2025 = vlaneseq
        %v2026 = vshrl.u32 %v2025, 7
        %v2027 = vsub.s32 %v2024, %v2026
        %v2028 = vrot.slane %v2020, %v2027
        %v2030 = vunpack.c.l.s4 1983009808
        %v2031 = vunpack.c.0.s8 %v2030
        %v2032 = vlaneseq
        %v2033 = vshrl.u32 %v2032, 7
        %v2034 = vsub.s32 %v2031, %v2033
        %v2035 = vrot.slane %v2021, %v2034
        %v2036 = vcombine.low %v858, %v864
        %v2037 = vcombine.high %v858, %v864
        %v2039 = vunpack.c.l.s4 1983009808
        %v2040 = vunpack.c.0.s8 %v2039
        %v2041 = vlaneseq
        %v2042 = vshrl.u32 %v2041, 7
        %v2043 = vsub.s32 %v2040, %v2042
        %v2044 = vrot.slane %v2036, %v2043
        %v2046 = vunpack.c.l.s4 1983009808
        %v2047 = vunpack.c.0.s8 %v2046
        %v2048 = vlaneseq
        %v2049 = vshrl.u32 %v2048, 7
        %v2050 = vsub.s32 %v2047, %v2049
        %v2051 = vrot.slane %v2037, %v2050
        %v2052 = vcombine.low %v867, %v873
        %v2053 = vcombine.high %v867, %v873
        %v2055 = vunpack.c.l.s4 1983009808
        %v2056 = vunpack.c.0.s8 %v2055
        %v2057 = vlaneseq
        %v2058 = vshrl.u32 %v2057, 7
        %v2059 = vsub.s32 %v2056, %v2058
        %v2060 = vrot.slane %v2052, %v2059
        %v2062 = vunpack.c.l.s4 1983009808
        %v2063 = vunpack.c.0.s8 %v2062
        %v2064 = vlaneseq
        %v2065 = vshrl.u32 %v2064, 7
        %v2066 = vsub.s32 %v2063, %v2065
        %v2067 = vrot.slane %v2053, %v2066
        %v2068 = vcombine.low %v870, %v876
        %v2069 = vcombine.high %v870, %v876
        %v2071 = vunpack.c.l.s4 1983009808
        %v2072 = vunpack.c.0.s8 %v2071
        %v2073 = vlaneseq
        %v2074 = vshrl.u32 %v2073, 7
        %v2075 = vsub.s32 %v2072, %v2074
        %v2076 = vrot.slane %v2068, %v2075
        %v2078 = vunpack.c.l.s4 1983009808
        %v2079 = vunpack.c.0.s8 %v2078
        %v2080 = vlaneseq
        %v2081 = vshrl.u32 %v2080, 7
        %v2082 = vsub.s32 %v2079, %v2081
        %v2083 = vrot.slane %v2069, %v2082
        %v2084 = vcombine.low %v2028, %v2044
        %v2085 = vcombine.high %v2028, %v2044
        %v2087 = vunpack.c.l.s4 1934713408
        %v2088 = vunpack.c.0.s8 %v2087
        %v2089 = vlaneseq
        %v2090 = vshrl.u32 %v2089, 7
        %v2091 = vsub.s32 %v2088, %v2090
        %v2092 = vrot.slane %v2084, %v2091
        %v2094 = vunpack.c.l.s4 1934713408
        %v2095 = vunpack.c.0.s8 %v2094
        %v2096 = vlaneseq
        %v2097 = vshrl.u32 %v2096, 7
        %v2098 = vsub.s32 %v2095, %v2097
        %v2099 = vrot.slane %v2085, %v2098
        %v2100 = vcombine.low %v2035, %v2051
        %v2101 = vcombine.high %v2035, %v2051
        %v2103 = vunpack.c.l.s4 1934713408
        %v2104 = vunpack.c.0.s8 %v2103
        %v2105 = vlaneseq
        %v2106 = vshrl.u32 %v2105, 7
        %v2107 = vsub.s32 %v2104, %v2106
        %v2108 = vrot.slane %v2100, %v2107
        %v2110 = vunpack.c.l.s4 1934713408
        %v2111 = vunpack.c.0.s8 %v2110
        %v2112 = vlaneseq
        %v2113 = vshrl.u32 %v2112, 7
        %v2114 = vsub.s32 %v2111, %v2113
        %v2115 = vrot.slane %v2101, %v2114
        %v2116 = vcombine.low %v2060, %v2076
        %v2117 = vcombine.high %v2060, %v2076
        %v2119 = vunpack.c.l.s4 1934713408
        %v2120 = vunpack.c.0.s8 %v2119
        %v2121 = vlaneseq
        %v2122 = vshrl.u32 %v2121, 7
        %v2123 = vsub.s32 %v2120, %v2122
        %v2124 = vrot.slane %v2116, %v2123
        %v2126 = vunpack.c.l.s4 1934713408
        %v2127 = vunpack.c.0.s8 %v2126
        %v2128 = vlaneseq
        %v2129 = vshrl.u32 %v2128, 7
        %v2130 = vsub.s32 %v2127, %v2129
        %v2131 = vrot.slane %v2117, %v2130
        %v2132 = vcombine.low %v2067, %v2083
        %v2133 = vcombine.high %v2067, %v2083
        %v2135 = vunpack.c.l.s4 1934713408
        %v2136 = vunpack.c.0.s8 %v2135
        %v2137 = vlaneseq
        %v2138 = vshrl.u32 %v2137, 7
        %v2139 = vsub.s32 %v2136, %v2138
        %v2140 = vrot.slane %v2132, %v2139
        %v2142 = vunpack.c.l.s4 1934713408
        %v2143 = vunpack.c.0.s8 %v2142
        %v2144 = vlaneseq
        %v2145 = vshrl.u32 %v2144, 7
        %v2146 = vsub.s32 %v2143, %v2145
        %v2147 = vrot.slane %v2133, %v2146
        %v2148 = vcombine.low %v2092, %v2124
        %v2149 = vcombine.high %v2092, %v2124
        %v2150 = vcombine.low %v2099, %v2131
        %v2151 = vcombine.high %v2099, %v2131
        %v2152 = vcombine.low %v2108, %v2140
        %v2153 = vcombine.high %v2108, %v2140
        %v2154 = vcombine.low %v2115, %v2147
        %v2155 = vcombine.high %v2115, %v2147
        %v2156 = vcombine.low %v687, %v883
        %v2157 = vcombine.high %v687, %v883
        %v2159 = vunpack.c.l.s4 1983009808
        %v2160 = vunpack.c.0.s8 %v2159
        %v2161 = vlaneseq
        %v2162 = vshrl.u32 %v2161, 7
        %v2163 = vsub.s32 %v2160, %v2162
        %v2164 = vrot.slane %v2156, %v2163
        %v2166 = vunpack.c.l.s4 1983009808
        %v2167 = vunpack.c.0.s8 %v2166
        %v2168 = vlaneseq
        %v2169 = vshrl.u32 %v2168, 7
        %v2170 = vsub.s32 %v2167, %v2169
        %v2171 = vrot.slane %v2157, %v2170
        %v2172 = vcombine.low %v880, %v886
        %v2173 = vcombine.high %v880, %v886
        %v2175 = vunpack.c.l.s4 1983009808
        %v2176 = vunpack.c.0.s8 %v2175
        %v2177 = vlaneseq
        %v2178 = vshrl.u32 %v2177, 7
        %v2179 = vsub.s32 %v2176, %v2178
        %v2180 = vrot.slane %v2172, %v2179
        %v2182 = vunpack.c.l.s4 1983009808
        %v2183 = vunpack.c.0.s8 %v2182
        %v2184 = vlaneseq
        %v2185 = vshrl.u32 %v2184, 7
        %v2186 = vsub.s32 %v2183, %v2185
        %v2187 = vrot.slane %v2173, %v2186
        %v2188 = vcombine.low %v889, %v895
        %v2189 = vcombine.high %v889, %v895
        %v2191 = vunpack.c.l.s4 1983009808
        %v2192 = vunpack.c.0.s8 %v2191
        %v2193 = vlaneseq
        %v2194 = vshrl.u32 %v2193, 7
        %v2195 = vsub.s32 %v2192, %v2194
        %v2196 = vrot.slane %v2188, %v2195
        %v2198 = vunpack.c.l.s4 1983009808
        %v2199 = vunpack.c.0.s8 %v2198
        %v2200 = vlaneseq
        %v2201 = vshrl.u32 %v2200, 7
        %v2202 = vsub.s32 %v2199, %v2201
        %v2203 = vrot.slane %v2189, %v2202
        %v2204 = vcombine.low %v892, %v898
        %v2205 = vcombine.high %v892, %v898
        %v2207 = vunpack.c.l.s4 1983009808
        %v2208 = vunpack.c.0.s8 %v2207
        %v2209 = vlaneseq
        %v2210 = vshrl.u32 %v2209, 7
        %v2211 = vsub.s32 %v2208, %v2210
        %v2212 = vrot.slane %v2204, %v2211
        %v2214 = vunpack.c.l.s4 1983009808
        %v2215 = vunpack.c.0.s8 %v2214
        %v2216 = vlaneseq
        %v2217 = vshrl.u32 %v2216, 7
        %v2218 = vsub.s32 %v2215, %v2217
        %v2219 = vrot.slane %v2205, %v2218
        %v2220 = vcombine.low %v2164, %v2180
        %v2221 = vcombine.high %v2164, %v2180
        %v2223 = vunpack.c.l.s4 1934713408
        %v2224 = vunpack.c.0.s8 %v2223
        %v2225 = vlaneseq
        %v2226 = vshrl.u32 %v2225, 7
        %v2227 = vsub.s32 %v2224, %v2226
        %v2228 = vrot.slane %v2220, %v2227
        %v2230 = vunpack.c.l.s4 1934713408
        %v2231 = vunpack.c.0.s8 %v2230
        %v2232 = vlaneseq
        %v2233 = vshrl.u32 %v2232, 7
        %v2234 = vsub.s32 %v2231, %v2233
        %v2235 = vrot.slane %v2221, %v2234
        %v2236 = vcombine.low %v2171, %v2187
        %v2237 = vcombine.high %v2171, %v2187
        %v2239 = vunpack.c.l.s4 1934713408
        %v2240 = vunpack.c.0.s8 %v2239
        %v2241 = vlaneseq
        %v2242 = vshrl.u32 %v2241, 7
        %v2243 = vsub.s32 %v2240, %v2242
        %v2244 = vrot.slane %v2236, %v2243
        %v2246 = vunpack.c.l.s4 1934713408
        %v2247 = vunpack.c.0.s8 %v2246
        %v2248 = vlaneseq
        %v2249 = vshrl.u32 %v2248, 7
        %v2250 = vsub.s32 %v2247, %v2249
        %v2251 = vrot.slane %v2237, %v2250
        %v2252 = vcombine.low %v2196, %v2212
        %v2253 = vcombine.high %v2196, %v2212
        %v2255 = vunpack.c.l.s4 1934713408
        %v2256 = vunpack.c.0.s8 %v2255
        %v2257 = vlaneseq
        %v2258 = vshrl.u32 %v2257, 7
        %v2259 = vsub.s32 %v2256, %v2258
        %v2260 = vrot.slane %v2252, %v2259
        %v2262 = vunpack.c.l.s4 1934713408
        %v2263 = vunpack.c.0.s8 %v2262
        %v2264 = vlaneseq
        %v2265 = vshrl.u32 %v2264, 7
        %v2266 = vsub.s32 %v2263, %v2265
        %v2267 = vrot.slane %v2253, %v2266
        %v2268 = vcombine.low %v2203, %v2219
        %v2269 = vcombine.high %v2203, %v2219
        %v2271 = vunpack.c.l.s4 1934713408
        %v2272 = vunpack.c.0.s8 %v2271
        %v2273 = vlaneseq
        %v2274 = vshrl.u32 %v2273, 7
        %v2275 = vsub.s32 %v2272, %v2274
        %v2276 = vrot.slane %v2268, %v2275
        %v2278 = vunpack.c.l.s4 1934713408
        %v2279 = vunpack.c.0.s8 %v2278
        %v2280 = vlaneseq
        %v2281 = vshrl.u32 %v2280, 7
        %v2282 = vsub.s32 %v2279, %v2281
        %v2283 = vrot.slane %v2269, %v2282
        %v2284 = vcombine.low %v2228, %v2260
        %v2285 = vcombine.high %v2228, %v2260
        %v2286 = vcombine.low %v2235, %v2267
        %v2287 = vcombine.high %v2235, %v2267
        %v2288 = vcombine.low %v2244, %v2276
        %v2289 = vcombine.high %v2244, %v2276
        %v2290 = vcombine.low %v2251, %v2283
        %v2291 = vcombine.high %v2251, %v2283
        %v2292 = vcombine.low %v901, %v907
        %v2293 = vcombine.high %v901, %v907
        %v2295 = vunpack.c.l.s4 1983009808
        %v2296 = vunpack.c.0.s8 %v2295
        %v2297 = vlaneseq
        %v2298 = vshrl.u32 %v2297, 7
        %v2299 = vsub.s32 %v2296, %v2298
        %v2300 = vrot.slane %v2292, %v2299
        %v2302 = vunpack.c.l.s4 1983009808
        %v2303 = vunpack.c.0.s8 %v2302
        %v2304 = vlaneseq
        %v2305 = vshrl.u32 %v2304, 7
        %v2306 = vsub.s32 %v2303, %v2305
        %v2307 = vrot.slane %v2293, %v2306
        %v2308 = vcombine.low %v904, %v910
        %v2309 = vcombine.high %v904, %v910
        %v2311 = vunpack.c.l.s4 1983009808
        %v2312 = vunpack.c.0.s8 %v2311
        %v2313 = vlaneseq
        %v2314 = vshrl.u32 %v2313, 7
        %v2315 = vsub.s32 %v2312, %v2314
        %v2316 = vrot.slane %v2308, %v2315
        %v2318 = vunpack.c.l.s4 1983009808
        %v2319 = vunpack.c.0.s8 %v2318
        %v2320 = vlaneseq
        %v2321 = vshrl.u32 %v2320, 7
        %v2322 = vsub.s32 %v2319, %v2321
        %v2323 = vrot.slane %v2309, %v2322
        %v2324 = vcombine.low %v913, %v919
        %v2325 = vcombine.high %v913, %v919
        %v2327 = vunpack.c.l.s4 1983009808
        %v2328 = vunpack.c.0.s8 %v2327
        %v2329 = vlaneseq
        %v2330 = vshrl.u32 %v2329, 7
        %v2331 = vsub.s32 %v2328, %v2330
        %v2332 = vrot.slane %v2324, %v2331
        %v2334 = vunpack.c.l.s4 1983009808
        %v2335 = vunpack.c.0.s8 %v2334
        %v2336 = vlaneseq
        %v2337 = vshrl.u32 %v2336, 7
        %v2338 = vsub.s32 %v2335, %v2337
        %v2339 = vrot.slane %v2325, %v2338
        %v2340 = vcombine.low %v916, %v922
        %v2341 = vcombine.high %v916, %v922
        %v2343 = vunpack.c.l.s4 1983009808
        %v2344 = vunpack.c.0.s8 %v2343
        %v2345 = vlaneseq
        %v2346 = vshrl.u32 %v2345, 7
        %v2347 = vsub.s32 %v2344, %v2346
        %v2348 = vrot.slane %v2340, %v2347
        %v2350 = vunpack.c.l.s4 1983009808
        %v2351 = vunpack.c.0.s8 %v2350
        %v2352 = vlaneseq
        %v2353 = vshrl.u32 %v2352, 7
        %v2354 = vsub.s32 %v2351, %v2353
        %v2355 = vrot.slane %v2341, %v2354
        %v2356 = vcombine.low %v2300, %v2316
        %v2357 = vcombine.high %v2300, %v2316
        %v2359 = vunpack.c.l.s4 1934713408
        %v2360 = vunpack.c.0.s8 %v2359
        %v2361 = vlaneseq
        %v2362 = vshrl.u32 %v2361, 7
        %v2363 = vsub.s32 %v2360, %v2362
        %v2364 = vrot.slane %v2356, %v2363
        %v2366 = vunpack.c.l.s4 1934713408
        %v2367 = vunpack.c.0.s8 %v2366
        %v2368 = vlaneseq
        %v2369 = vshrl.u32 %v2368, 7
        %v2370 = vsub.s32 %v2367, %v2369
        %v2371 = vrot.slane %v2357, %v2370
        %v2372 = vcombine.low %v2307, %v2323
        %v2373 = vcombine.high %v2307, %v2323
        %v2375 = vunpack.c.l.s4 1934713408
        %v2376 = vunpack.c.0.s8 %v2375
        %v2377 = vlaneseq
        %v2378 = vshrl.u32 %v2377, 7
        %v2379 = vsub.s32 %v2376, %v2378
        %v2380 = vrot.slane %v2372, %v2379
        %v2382 = vunpack.c.l.s4 1934713408
        %v2383 = vunpack.c.0.s8 %v2382
        %v2384 = vlaneseq
        %v2385 = vshrl.u32 %v2384, 7
        %v2386 = vsub.s32 %v2383, %v2385
        %v2387 = vrot.slane %v2373, %v2386
        %v2388 = vcombine.low %v2332, %v2348
        %v2389 = vcombine.high %v2332, %v2348
        %v2391 = vunpack.c.l.s4 1934713408
        %v2392 = vunpack.c.0.s8 %v2391
        %v2393 = vlaneseq
        %v2394 = vshrl.u32 %v2393, 7
        %v2395 = vsub.s32 %v2392, %v2394
        %v2396 = vrot.slane %v2388, %v2395
        %v2398 = vunpack.c.l.s4 1934713408
        %v2399 = vunpack.c.0.s8 %v2398
        %v2400 = vlaneseq
        %v2401 = vshrl.u32 %v2400, 7
        %v2402 = vsub.s32 %v2399, %v2401
        %v2403 = vrot.slane %v2389, %v2402
        %v2404 = vcombine.low %v2339, %v2355
        %v2405 = vcombine.high %v2339, %v2355
        %v2407 = vunpack.c.l.s4 1934713408
        %v2408 = vunpack.c.0.s8 %v2407
        %v2409 = vlaneseq
        %v2410 = vshrl.u32 %v2409, 7
        %v2411 = vsub.s32 %v2408, %v2410
        %v2412 = vrot.slane %v2404, %v2411
        %v2414 = vunpack.c.l.s4 1934713408
        %v2415 = vunpack.c.0.s8 %v2414
        %v2416 = vlaneseq
        %v2417 = vshrl.u32 %v2416, 7
        %v2418 = vsub.s32 %v2415, %v2417
        %v2419 = vrot.slane %v2405, %v2418
        %v2420 = vcombine.low %v2364, %v2396
        %v2421 = vcombine.high %v2364, %v2396
        %v2422 = vcombine.low %v2371, %v2403
        %v2423 = vcombine.high %v2371, %v2403
        %v2424 = vcombine.low %v2380, %v2412
        %v2425 = vcombine.high %v2380, %v2412
        %v2426 = vcombine.low %v2387, %v2419
        %v2427 = vcombine.high %v2387, %v2419
        %v2428 = vcombine.low %v925, %v931
        %v2429 = vcombine.high %v925, %v931
        %v2431 = vunpack.c.l.s4 1983009808
        %v2432 = vunpack.c.0.s8 %v2431
        %v2433 = vlaneseq
        %v2434 = vshrl.u32 %v2433, 7
        %v2435 = vsub.s32 %v2432, %v2434
        %v2436 = vrot.slane %v2428, %v2435
        %v2438 = vunpack.c.l.s4 1983009808
        %v2439 = vunpack.c.0.s8 %v2438
        %v2440 = vlaneseq
        %v2441 = vshrl.u32 %v2440, 7
        %v2442 = vsub.s32 %v2439, %v2441
        %v2443 = vrot.slane %v2429, %v2442
        %v2444 = vcombine.low %v928, %v934
        %v2445 = vcombine.high %v928, %v934
        %v2447 = vunpack.c.l.s4 1983009808
        %v2448 = vunpack.c.0.s8 %v2447
        %v2449 = vlaneseq
        %v2450 = vshrl.u32 %v2449, 7
        %v2451 = vsub.s32 %v2448, %v2450
        %v2452 = vrot.slane %v2444, %v2451
        %v2454 = vunpack.c.l.s4 1983009808
        %v2455 = vunpack.c.0.s8 %v2454
        %v2456 = vlaneseq
        %v2457 = vshrl.u32 %v2456, 7
        %v2458 = vsub.s32 %v2455, %v2457
        %v2459 = vrot.slane %v2445, %v2458
        %v2460 = vcombine.low %v937, %v943
        %v2461 = vcombine.high %v937, %v943
        %v2463 = vunpack.c.l.s4 1983009808
        %v2464 = vunpack.c.0.s8 %v2463
        %v2465 = vlaneseq
        %v2466 = vshrl.u32 %v2465, 7
        %v2467 = vsub.s32 %v2464, %v2466
        %v2468 = vrot.slane %v2460, %v2467
        %v2470 = vunpack.c.l.s4 1983009808
        %v2471 = vunpack.c.0.s8 %v2470
        %v2472 = vlaneseq
        %v2473 = vshrl.u32 %v2472, 7
        %v2474 = vsub.s32 %v2471, %v2473
        %v2475 = vrot.slane %v2461, %v2474
        %v2476 = vcombine.low %v940, %v946
        %v2477 = vcombine.high %v940, %v946
        %v2479 = vunpack.c.l.s4 1983009808
        %v2480 = vunpack.c.0.s8 %v2479
        %v2481 = vlaneseq
        %v2482 = vshrl.u32 %v2481, 7
        %v2483 = vsub.s32 %v2480, %v2482
        %v2484 = vrot.slane %v2476, %v2483
        %v2486 = vunpack.c.l.s4 1983009808
        %v2487 = vunpack.c.0.s8 %v2486
        %v2488 = vlaneseq
        %v2489 = vshrl.u32 %v2488, 7
        %v2490 = vsub.s32 %v2487, %v2489
        %v2491 = vrot.slane %v2477, %v2490
        %v2492 = vcombine.low %v2436, %v2452
        %v2493 = vcombine.high %v2436, %v2452
        %v2495 = vunpack.c.l.s4 1934713408
        %v2496 = vunpack.c.0.s8 %v2495
        %v2497 = vlaneseq
        %v2498 = vshrl.u32 %v2497, 7
        %v2499 = vsub.s32 %v2496, %v2498
        %v2500 = vrot.slane %v2492, %v2499
        %v2502 = vunpack.c.l.s4 1934713408
        %v2503 = vunpack.c.0.s8 %v2502
        %v2504 = vlaneseq
        %v2505 = vshrl.u32 %v2504, 7
        %v2506 = vsub.s32 %v2503, %v2505
        %v2507 = vrot.slane %v2493, %v2506
        %v2508 = vcombine.low %v2443, %v2459
        %v2509 = vcombine.high %v2443, %v2459
        %v2511 = vunpack.c.l.s4 1934713408
        %v2512 = vunpack.c.0.s8 %v2511
        %v2513 = vlaneseq
        %v2514 = vshrl.u32 %v2513, 7
        %v2515 = vsub.s32 %v2512, %v2514
        %v2516 = vrot.slane %v2508, %v2515
        %v2518 = vunpack.c.l.s4 1934713408
        %v2519 = vunpack.c.0.s8 %v2518
        %v2520 = vlaneseq
        %v2521 = vshrl.u32 %v2520, 7
        %v2522 = vsub.s32 %v2519, %v2521
        %v2523 = vrot.slane %v2509, %v2522
        %v2524 = vcombine.low %v2468, %v2484
        %v2525 = vcombine.high %v2468, %v2484
        %v2527 = vunpack.c.l.s4 1934713408
        %v2528 = vunpack.c.0.s8 %v2527
        %v2529 = vlaneseq
        %v2530 = vshrl.u32 %v2529, 7
        %v2531 = vsub.s32 %v2528, %v2530
        %v2532 = vrot.slane %v2524, %v2531
        %v2534 = vunpack.c.l.s4 1934713408
        %v2535 = vunpack.c.0.s8 %v2534
        %v2536 = vlaneseq
        %v2537 = vshrl.u32 %v2536, 7
        %v2538 = vsub.s32 %v2535, %v2537
        %v2539 = vrot.slane %v2525, %v2538
        %v2540 = vcombine.low %v2475, %v2491
        %v2541 = vcombine.high %v2475, %v2491
        %v2543 = vunpack.c.l.s4 1934713408
        %v2544 = vunpack.c.0.s8 %v2543
        %v2545 = vlaneseq
        %v2546 = vshrl.u32 %v2545, 7
        %v2547 = vsub.s32 %v2544, %v2546
        %v2548 = vrot.slane %v2540, %v2547
        %v2550 = vunpack.c.l.s4 1934713408
        %v2551 = vunpack.c.0.s8 %v2550
        %v2552 = vlaneseq
        %v2553 = vshrl.u32 %v2552, 7
        %v2554 = vsub.s32 %v2551, %v2553
        %v2555 = vrot.slane %v2541, %v2554
        %v2556 = vcombine.low %v2500, %v2532
        %v2557 = vcombine.high %v2500, %v2532
        %v2558 = vcombine.low %v2507, %v2539
        %v2559 = vcombine.high %v2507, %v2539
        %v2560 = vcombine.low %v2516, %v2548
        %v2561 = vcombine.high %v2516, %v2548
        %v2562 = vcombine.low %v2523, %v2555
        %v2563 = vcombine.high %v2523, %v2555
        %v2564 = vcombine.low %v949, %v955
        %v2565 = vcombine.high %v949, %v955
        %v2567 = vunpack.c.l.s4 1983009808
        %v2568 = vunpack.c.0.s8 %v2567
        %v2569 = vlaneseq
        %v2570 = vshrl.u32 %v2569, 7
        %v2571 = vsub.s32 %v2568, %v2570
        %v2572 = vrot.slane %v2564, %v2571
        %v2574 = vunpack.c.l.s4 1983009808
        %v2575 = vunpack.c.0.s8 %v2574
        %v2576 = vlaneseq
        %v2577 = vshrl.u32 %v2576, 7
        %v2578 = vsub.s32 %v2575, %v2577
        %v2579 = vrot.slane %v2565, %v2578
        %v2580 = vcombine.low %v952, %v958
        %v2581 = vcombine.high %v952, %v958
        %v2583 = vunpack.c.l.s4 1983009808
        %v2584 = vunpack.c.0.s8 %v2583
        %v2585 = vlaneseq
        %v2586 = vshrl.u32 %v2585, 7
        %v2587 = vsub.s32 %v2584, %v2586
        %v2588 = vrot.slane %v2580, %v2587
        %v2590 = vunpack.c.l.s4 1983009808
        %v2591 = vunpack.c.0.s8 %v2590
        %v2592 = vlaneseq
        %v2593 = vshrl.u32 %v2592, 7
        %v2594 = vsub.s32 %v2591, %v2593
        %v2595 = vrot.slane %v2581, %v2594
        %v2596 = vcombine.low %v961, %v967
        %v2597 = vcombine.high %v961, %v967
        %v2599 = vunpack.c.l.s4 1983009808
        %v2600 = vunpack.c.0.s8 %v2599
        %v2601 = vlaneseq
        %v2602 = vshrl.u32 %v2601, 7
        %v2603 = vsub.s32 %v2600, %v2602
        %v2604 = vrot.slane %v2596, %v2603
        %v2606 = vunpack.c.l.s4 1983009808
        %v2607 = vunpack.c.0.s8 %v2606
        %v2608 = vlaneseq
        %v2609 = vshrl.u32 %v2608, 7
        %v2610 = vsub.s32 %v2607, %v2609
        %v2611 = vrot.slane %v2597, %v2610
        %v2612 = vcombine.low %v964, %v970
        %v2613 = vcombine.high %v964, %v970
        %v2615 = vunpack.c.l.s4 1983009808
        %v2616 = vunpack.c.0.s8 %v2615
        %v2617 = vlaneseq
        %v2618 = vshrl.u32 %v2617, 7
        %v2619 = vsub.s32 %v2616, %v2618
        %v2620 = vrot.slane %v2612, %v2619
        %v2622 = vunpack.c.l.s4 1983009808
        %v2623 = vunpack.c.0.s8 %v2622
        %v2624 = vlaneseq
        %v2625 = vshrl.u32 %v2624, 7
        %v2626 = vsub.s32 %v2623, %v2625
        %v2627 = vrot.slane %v2613, %v2626
        %v2628 = vcombine.low %v2572, %v2588
        %v2629 = vcombine.high %v2572, %v2588
        %v2631 = vunpack.c.l.s4 1934713408
        %v2632 = vunpack.c.0.s8 %v2631
        %v2633 = vlaneseq
        %v2634 = vshrl.u32 %v2633, 7
        %v2635 = vsub.s32 %v2632, %v2634
        %v2636 = vrot.slane %v2628, %v2635
        %v2638 = vunpack.c.l.s4 1934713408
        %v2639 = vunpack.c.0.s8 %v2638
        %v2640 = vlaneseq
        %v2641 = vshrl.u32 %v2640, 7
        %v2642 = vsub.s32 %v2639, %v2641
        %v2643 = vrot.slane %v2629, %v2642
        %v2644 = vcombine.low %v2579, %v2595
        %v2645 = vcombine.high %v2579, %v2595
        %v2647 = vunpack.c.l.s4 1934713408
        %v2648 = vunpack.c.0.s8 %v2647
        %v2649 = vlaneseq
        %v2650 = vshrl.u32 %v2649, 7
        %v2651 = vsub.s32 %v2648, %v2650
        %v2652 = vrot.slane %v2644, %v2651
        %v2654 = vunpack.c.l.s4 1934713408
        %v2655 = vunpack.c.0.s8 %v2654
        %v2656 = vlaneseq
        %v2657 = vshrl.u32 %v2656, 7
        %v2658 = vsub.s32 %v2655, %v2657
        %v2659 = vrot.slane %v2645, %v2658
        %v2660 = vcombine.low %v2604, %v2620
        %v2661 = vcombine.high %v2604, %v2620
        %v2663 = vunpack.c.l.s4 1934713408
        %v2664 = vunpack.c.0.s8 %v2663
        %v2665 = vlaneseq
        %v2666 = vshrl.u32 %v2665, 7
        %v2667 = vsub.s32 %v2664, %v2666
        %v2668 = vrot.slane %v2660, %v2667
        %v2670 = vunpack.c.l.s4 1934713408
        %v2671 = vunpack.c.0.s8 %v2670
        %v2672 = vlaneseq
        %v2673 = vshrl.u32 %v2672, 7
        %v2674 = vsub.s32 %v2671, %v2673
        %v2675 = vrot.slane %v2661, %v2674
        %v2676 = vcombine.low %v2611, %v2627
        %v2677 = vcombine.high %v2611, %v2627
        %v2679 = vunpack.c.l.s4 1934713408
        %v2680 = vunpack.c.0.s8 %v2679
        %v2681 = vlaneseq
        %v2682 = vshrl.u32 %v2681, 7
        %v2683 = vsub.s32 %v2680, %v2682
        %v2684 = vrot.slane %v2676, %v2683
        %v2686 = vunpack.c.l.s4 1934713408
        %v2687 = vunpack.c.0.s8 %v2686
        %v2688 = vlaneseq
        %v2689 = vshrl.u32 %v2688, 7
        %v2690 = vsub.s32 %v2687, %v2689
        %v2691 = vrot.slane %v2677, %v2690
        %v2692 = vcombine.low %v2636, %v2668
        %v2693 = vcombine.high %v2636, %v2668
        %v2694 = vcombine.low %v2643, %v2675
        %v2695 = vcombine.high %v2643, %v2675
        %v2696 = vcombine.low %v2652, %v2684
        %v2697 = vcombine.high %v2652, %v2684
        %v2698 = vcombine.low %v2659, %v2691
        %v2699 = vcombine.high %v2659, %v2691
        %v2700 = vcombine.low %v973, %v979
        %v2701 = vcombine.high %v973, %v979
        %v2703 = vunpack.c.l.s4 1983009808
        %v2704 = vunpack.c.0.s8 %v2703
        %v2705 = vlaneseq
        %v2706 = vshrl.u32 %v2705, 7
        %v2707 = vsub.s32 %v2704, %v2706
        %v2708 = vrot.slane %v2700, %v2707
        %v2710 = vunpack.c.l.s4 1983009808
        %v2711 = vunpack.c.0.s8 %v2710
        %v2712 = vlaneseq
        %v2713 = vshrl.u32 %v2712, 7
        %v2714 = vsub.s32 %v2711, %v2713
        %v2715 = vrot.slane %v2701, %v2714
        %v2716 = vcombine.low %v976, %v982
        %v2717 = vcombine.high %v976, %v982
        %v2719 = vunpack.c.l.s4 1983009808
        %v2720 = vunpack.c.0.s8 %v2719
        %v2721 = vlaneseq
        %v2722 = vshrl.u32 %v2721, 7
        %v2723 = vsub.s32 %v2720, %v2722
        %v2724 = vrot.slane %v2716, %v2723
        %v2726 = vunpack.c.l.s4 1983009808
        %v2727 = vunpack.c.0.s8 %v2726
        %v2728 = vlaneseq
        %v2729 = vshrl.u32 %v2728, 7
        %v2730 = vsub.s32 %v2727, %v2729
        %v2731 = vrot.slane %v2717, %v2730
        %v2732 = vcombine.low %v985, %v991
        %v2733 = vcombine.high %v985, %v991
        %v2735 = vunpack.c.l.s4 1983009808
        %v2736 = vunpack.c.0.s8 %v2735
        %v2737 = vlaneseq
        %v2738 = vshrl.u32 %v2737, 7
        %v2739 = vsub.s32 %v2736, %v2738
        %v2740 = vrot.slane %v2732, %v2739
        %v2742 = vunpack.c.l.s4 1983009808
        %v2743 = vunpack.c.0.s8 %v2742
        %v2744 = vlaneseq
        %v2745 = vshrl.u32 %v2744, 7
        %v2746 = vsub.s32 %v2743, %v2745
        %v2747 = vrot.slane %v2733, %v2746
        %v2748 = vcombine.low %v988, %v994
        %v2749 = vcombine.high %v988, %v994
        %v2751 = vunpack.c.l.s4 1983009808
        %v2752 = vunpack.c.0.s8 %v2751
        %v2753 = vlaneseq
        %v2754 = vshrl.u32 %v2753, 7
        %v2755 = vsub.s32 %v2752, %v2754
        %v2756 = vrot.slane %v2748, %v2755
        %v2758 = vunpack.c.l.s4 1983009808
        %v2759 = vunpack.c.0.s8 %v2758
        %v2760 = vlaneseq
        %v2761 = vshrl.u32 %v2760, 7
        %v2762 = vsub.s32 %v2759, %v2761
        %v2763 = vrot.slane %v2749, %v2762
        %v2764 = vcombine.low %v2708, %v2724
        %v2765 = vcombine.high %v2708, %v2724
        %v2767 = vunpack.c.l.s4 1934713408
        %v2768 = vunpack.c.0.s8 %v2767
        %v2769 = vlaneseq
        %v2770 = vshrl.u32 %v2769, 7
        %v2771 = vsub.s32 %v2768, %v2770
        %v2772 = vrot.slane %v2764, %v2771
        %v2774 = vunpack.c.l.s4 1934713408
        %v2775 = vunpack.c.0.s8 %v2774
        %v2776 = vlaneseq
        %v2777 = vshrl.u32 %v2776, 7
        %v2778 = vsub.s32 %v2775, %v2777
        %v2779 = vrot.slane %v2765, %v2778
        %v2780 = vcombine.low %v2715, %v2731
        %v2781 = vcombine.high %v2715, %v2731
        %v2783 = vunpack.c.l.s4 1934713408
        %v2784 = vunpack.c.0.s8 %v2783
        %v2785 = vlaneseq
        %v2786 = vshrl.u32 %v2785, 7
        %v2787 = vsub.s32 %v2784, %v2786
        %v2788 = vrot.slane %v2780, %v2787
        %v2790 = vunpack.c.l.s4 1934713408
        %v2791 = vunpack.c.0.s8 %v2790
        %v2792 = vlaneseq
        %v2793 = vshrl.u32 %v2792, 7
        %v2794 = vsub.s32 %v2791, %v2793
        %v2795 = vrot.slane %v2781, %v2794
        %v2796 = vcombine.low %v2740, %v2756
        %v2797 = vcombine.high %v2740, %v2756
        %v2799 = vunpack.c.l.s4 1934713408
        %v2800 = vunpack.c.0.s8 %v2799
        %v2801 = vlaneseq
        %v2802 = vshrl.u32 %v2801, 7
        %v2803 = vsub.s32 %v2800, %v2802
        %v2804 = vrot.slane %v2796, %v2803
        %v2806 = vunpack.c.l.s4 1934713408
        %v2807 = vunpack.c.0.s8 %v2806
        %v2808 = vlaneseq
        %v2809 = vshrl.u32 %v2808, 7
        %v2810 = vsub.s32 %v2807, %v2809
        %v2811 = vrot.slane %v2797, %v2810
        %v2812 = vcombine.low %v2747, %v2763
        %v2813 = vcombine.high %v2747, %v2763
        %v2815 = vunpack.c.l.s4 1934713408
        %v2816 = vunpack.c.0.s8 %v2815
        %v2817 = vlaneseq
        %v2818 = vshrl.u32 %v2817, 7
        %v2819 = vsub.s32 %v2816, %v2818
        %v2820 = vrot.slane %v2812, %v2819
        %v2822 = vunpack.c.l.s4 1934713408
        %v2823 = vunpack.c.0.s8 %v2822
        %v2824 = vlaneseq
        %v2825 = vshrl.u32 %v2824, 7
        %v2826 = vsub.s32 %v2823, %v2825
        %v2827 = vrot.slane %v2813, %v2826
        %v2828 = vcombine.low %v2772, %v2804
        %v2829 = vcombine.high %v2772, %v2804
        %v2830 = vcombine.low %v2779, %v2811
        %v2831 = vcombine.high %v2779, %v2811
        %v2832 = vcombine.low %v2788, %v2820
        %v2833 = vcombine.high %v2788, %v2820
        %v2834 = vcombine.low %v2795, %v2827
        %v2835 = vcombine.high %v2795, %v2827
        %v2836 = vcombine.low %v997, %v1003
        %v2837 = vcombine.high %v997, %v1003
        %v2839 = vunpack.c.l.s4 1983009808
        %v2840 = vunpack.c.0.s8 %v2839
        %v2841 = vlaneseq
        %v2842 = vshrl.u32 %v2841, 7
        %v2843 = vsub.s32 %v2840, %v2842
        %v2844 = vrot.slane %v2836, %v2843
        %v2846 = vunpack.c.l.s4 1983009808
        %v2847 = vunpack.c.0.s8 %v2846
        %v2848 = vlaneseq
        %v2849 = vshrl.u32 %v2848, 7
        %v2850 = vsub.s32 %v2847, %v2849
        %v2851 = vrot.slane %v2837, %v2850
        %v2852 = vcombine.low %v1000, %v1006
        %v2853 = vcombine.high %v1000, %v1006
        %v2855 = vunpack.c.l.s4 1983009808
        %v2856 = vunpack.c.0.s8 %v2855
        %v2857 = vlaneseq
        %v2858 = vshrl.u32 %v2857, 7
        %v2859 = vsub.s32 %v2856, %v2858
        %v2860 = vrot.slane %v2852, %v2859
        %v2862 = vunpack.c.l.s4 1983009808
        %v2863 = vunpack.c.0.s8 %v2862
        %v2864 = vlaneseq
        %v2865 = vshrl.u32 %v2864, 7
        %v2866 = vsub.s32 %v2863, %v2865
        %v2867 = vrot.slane %v2853, %v2866
        %v2868 = vcombine.low %v1009, %v1015
        %v2869 = vcombine.high %v1009, %v1015
        %v2871 = vunpack.c.l.s4 1983009808
        %v2872 = vunpack.c.0.s8 %v2871
        %v2873 = vlaneseq
        %v2874 = vshrl.u32 %v2873, 7
        %v2875 = vsub.s32 %v2872, %v2874
        %v2876 = vrot.slane %v2868, %v2875
        %v2878 = vunpack.c.l.s4 1983009808
        %v2879 = vunpack.c.0.s8 %v2878
        %v2880 = vlaneseq
        %v2881 = vshrl.u32 %v2880, 7
        %v2882 = vsub.s32 %v2879, %v2881
        %v2883 = vrot.slane %v2869, %v2882
        %v2884 = vcombine.low %v1012, %v1018
        %v2885 = vcombine.high %v1012, %v1018
        %v2887 = vunpack.c.l.s4 1983009808
        %v2888 = vunpack.c.0.s8 %v2887
        %v2889 = vlaneseq
        %v2890 = vshrl.u32 %v2889, 7
        %v2891 = vsub.s32 %v2888, %v2890
        %v2892 = vrot.slane %v2884, %v2891
        %v2894 = vunpack.c.l.s4 1983009808
        %v2895 = vunpack.c.0.s8 %v2894
        %v2896 = vlaneseq
        %v2897 = vshrl.u32 %v2896, 7
        %v2898 = vsub.s32 %v2895, %v2897
        %v2899 = vrot.slane %v2885, %v2898
        %v2900 = vcombine.low %v2844, %v2860
        %v2901 = vcombine.high %v2844, %v2860
        %v2903 = vunpack.c.l.s4 1934713408
        %v2904 = vunpack.c.0.s8 %v2903
        %v2905 = vlaneseq
        %v2906 = vshrl.u32 %v2905, 7
        %v2907 = vsub.s32 %v2904, %v2906
        %v2908 = vrot.slane %v2900, %v2907
        %v2910 = vunpack.c.l.s4 1934713408
        %v2911 = vunpack.c.0.s8 %v2910
        %v2912 = vlaneseq
        %v2913 = vshrl.u32 %v2912, 7
        %v2914 = vsub.s32 %v2911, %v2913
        %v2915 = vrot.slane %v2901, %v2914
        %v2916 = vcombine.low %v2851, %v2867
        %v2917 = vcombine.high %v2851, %v2867
        %v2919 = vunpack.c.l.s4 1934713408
        %v2920 = vunpack.c.0.s8 %v2919
        %v2921 = vlaneseq
        %v2922 = vshrl.u32 %v2921, 7
        %v2923 = vsub.s32 %v2920, %v2922
        %v2924 = vrot.slane %v2916, %v2923
        %v2926 = vunpack.c.l.s4 1934713408
        %v2927 = vunpack.c.0.s8 %v2926
        %v2928 = vlaneseq
        %v2929 = vshrl.u32 %v2928, 7
        %v2930 = vsub.s32 %v2927, %v2929
        %v2931 = vrot.slane %v2917, %v2930
        %v2932 = vcombine.low %v2876, %v2892
        %v2933 = vcombine.high %v2876, %v2892
        %v2935 = vunpack.c.l.s4 1934713408
        %v2936 = vunpack.c.0.s8 %v2935
        %v2937 = vlaneseq
        %v2938 = vshrl.u32 %v2937, 7
        %v2939 = vsub.s32 %v2936, %v2938
        %v2940 = vrot.slane %v2932, %v2939
        %v2942 = vunpack.c.l.s4 1934713408
        %v2943 = vunpack.c.0.s8 %v2942
        %v2944 = vlaneseq
        %v2945 = vshrl.u32 %v2944, 7
        %v2946 = vsub.s32 %v2943, %v2945
        %v2947 = vrot.slane %v2933, %v2946
        %v2948 = vcombine.low %v2883, %v2899
        %v2949 = vcombine.high %v2883, %v2899
        %v2951 = vunpack.c.l.s4 1934713408
        %v2952 = vunpack.c.0.s8 %v2951
        %v2953 = vlaneseq
        %v2954 = vshrl.u32 %v2953, 7
        %v2955 = vsub.s32 %v2952, %v2954
        %v2956 = vrot.slane %v2948, %v2955
        %v2958 = vunpack.c.l.s4 1934713408
        %v2959 = vunpack.c.0.s8 %v2958
        %v2960 = vlaneseq
        %v2961 = vshrl.u32 %v2960, 7
        %v2962 = vsub.s32 %v2959, %v2961
        %v2963 = vrot.slane %v2949, %v2962
        %v2964 = vcombine.low %v2908, %v2940
        %v2965 = vcombine.high %v2908, %v2940
        %v2966 = vcombine.low %v2915, %v2947
        %v2967 = vcombine.high %v2915, %v2947
        %v2968 = vcombine.low %v2924, %v2956
        %v2969 = vcombine.high %v2924, %v2956
        %v2970 = vcombine.low %v2931, %v2963
        %v2971 = vcombine.high %v2931, %v2963
        %v2972 = vcombine.low %v1021, %v1027
        %v2973 = vcombine.high %v1021, %v1027
        %v2975 = vunpack.c.l.s4 1983009808
        %v2976 = vunpack.c.0.s8 %v2975
        %v2977 = vlaneseq
        %v2978 = vshrl.u32 %v2977, 7
        %v2979 = vsub.s32 %v2976, %v2978
        %v2980 = vrot.slane %v2972, %v2979
        %v2982 = vunpack.c.l.s4 1983009808
        %v2983 = vunpack.c.0.s8 %v2982
        %v2984 = vlaneseq
        %v2985 = vshrl.u32 %v2984, 7
        %v2986 = vsub.s32 %v2983, %v2985
        %v2987 = vrot.slane %v2973, %v2986
        %v2988 = vcombine.low %v1024, %v1030
        %v2989 = vcombine.high %v1024, %v1030
        %v2991 = vunpack.c.l.s4 1983009808
        %v2992 = vunpack.c.0.s8 %v2991
        %v2993 = vlaneseq
        %v2994 = vshrl.u32 %v2993, 7
        %v2995 = vsub.s32 %v2992, %v2994
        %v2996 = vrot.slane %v2988, %v2995
        %v2998 = vunpack.c.l.s4 1983009808
        %v2999 = vunpack.c.0.s8 %v2998
        %v3000 = vlaneseq
        %v3001 = vshrl.u32 %v3000, 7
        %v3002 = vsub.s32 %v2999, %v3001
        %v3003 = vrot.slane %v2989, %v3002
        %v3004 = vcombine.low %v1033, %v1039
        %v3005 = vcombine.high %v1033, %v1039
        %v3007 = vunpack.c.l.s4 1983009808
        %v3008 = vunpack.c.0.s8 %v3007
        %v3009 = vlaneseq
        %v3010 = vshrl.u32 %v3009, 7
        %v3011 = vsub.s32 %v3008, %v3010
        %v3012 = vrot.slane %v3004, %v3011
        %v3014 = vunpack.c.l.s4 1983009808
        %v3015 = vunpack.c.0.s8 %v3014
        %v3016 = vlaneseq
        %v3017 = vshrl.u32 %v3016, 7
        %v3018 = vsub.s32 %v3015, %v3017
        %v3019 = vrot.slane %v3005, %v3018
        %v3020 = vcombine.low %v1036, %v1042
        %v3021 = vcombine.high %v1036, %v1042
        %v3023 = vunpack.c.l.s4 1983009808
        %v3024 = vunpack.c.0.s8 %v3023
        %v3025 = vlaneseq
        %v3026 = vshrl.u32 %v3025, 7
        %v3027 = vsub.s32 %v3024, %v3026
        %v3028 = vrot.slane %v3020, %v3027
        %v3030 = vunpack.c.l.s4 1983009808
        %v3031 = vunpack.c.0.s8 %v3030
        %v3032 = vlaneseq
        %v3033 = vshrl.u32 %v3032, 7
        %v3034 = vsub.s32 %v3031, %v3033
        %v3035 = vrot.slane %v3021, %v3034
        %v3036 = vcombine.low %v2980, %v2996
        %v3037 = vcombine.high %v2980, %v2996
        %v3039 = vunpack.c.l.s4 1934713408
        %v3040 = vunpack.c.0.s8 %v3039
        %v3041 = vlaneseq
        %v3042 = vshrl.u32 %v3041, 7
        %v3043 = vsub.s32 %v3040, %v3042
        %v3044 = vrot.slane %v3036, %v3043
        %v3046 = vunpack.c.l.s4 1934713408
        %v3047 = vunpack.c.0.s8 %v3046
        %v3048 = vlaneseq
        %v3049 = vshrl.u32 %v3048, 7
        %v3050 = vsub.s32 %v3047, %v3049
        %v3051 = vrot.slane %v3037, %v3050
        %v3052 = vcombine.low %v2987, %v3003
        %v3053 = vcombine.high %v2987, %v3003
        %v3055 = vunpack.c.l.s4 1934713408
        %v3056 = vunpack.c.0.s8 %v3055
        %v3057 = vlaneseq
        %v3058 = vshrl.u32 %v3057, 7
        %v3059 = vsub.s32 %v3056, %v3058
        %v3060 = vrot.slane %v3052, %v3059
        %v3062 = vunpack.c.l.s4 1934713408
        %v3063 = vunpack.c.0.s8 %v3062
        %v3064 = vlaneseq
        %v3065 = vshrl.u32 %v3064, 7
        %v3066 = vsub.s32 %v3063, %v3065
        %v3067 = vrot.slane %v3053, %v3066
        %v3068 = vcombine.low %v3012, %v3028
        %v3069 = vcombine.high %v3012, %v3028
        %v3071 = vunpack.c.l.s4 1934713408
        %v3072 = vunpack.c.0.s8 %v3071
        %v3073 = vlaneseq
        %v3074 = vshrl.u32 %v3073, 7
        %v3075 = vsub.s32 %v3072, %v3074
        %v3076 = vrot.slane %v3068, %v3075
        %v3078 = vunpack.c.l.s4 1934713408
        %v3079 = vunpack.c.0.s8 %v3078
        %v3080 = vlaneseq
        %v3081 = vshrl.u32 %v3080, 7
        %v3082 = vsub.s32 %v3079, %v3081
        %v3083 = vrot.slane %v3069, %v3082
        %v3084 = vcombine.low %v3019, %v3035
        %v3085 = vcombine.high %v3019, %v3035
        %v3087 = vunpack.c.l.s4 1934713408
        %v3088 = vunpack.c.0.s8 %v3087
        %v3089 = vlaneseq
        %v3090 = vshrl.u32 %v3089, 7
        %v3091 = vsub.s32 %v3088, %v3090
        %v3092 = vrot.slane %v3084, %v3091
        %v3094 = vunpack.c.l.s4 1934713408
        %v3095 = vunpack.c.0.s8 %v3094
        %v3096 = vlaneseq
        %v3097 = vshrl.u32 %v3096, 7
        %v3098 = vsub.s32 %v3095, %v3097
        %v3099 = vrot.slane %v3085, %v3098
        %v3100 = vcombine.low %v3044, %v3076
        %v3101 = vcombine.high %v3044, %v3076
        %v3102 = vcombine.low %v3051, %v3083
        %v3103 = vcombine.high %v3051, %v3083
        %v3104 = vcombine.low %v3060, %v3092
        %v3105 = vcombine.high %v3060, %v3092
        %v3106 = vcombine.low %v3067, %v3099
        %v3107 = vcombine.high %v3067, %v3099
        %v3108 = vcombine.low %v1045, %v1051
        %v3109 = vcombine.high %v1045, %v1051
        %v3111 = vunpack.c.l.s4 1983009808
        %v3112 = vunpack.c.0.s8 %v3111
        %v3113 = vlaneseq
        %v3114 = vshrl.u32 %v3113, 7
        %v3115 = vsub.s32 %v3112, %v3114
        %v3116 = vrot.slane %v3108, %v3115
        %v3118 = vunpack.c.l.s4 1983009808
        %v3119 = vunpack.c.0.s8 %v3118
        %v3120 = vlaneseq
        %v3121 = vshrl.u32 %v3120, 7
        %v3122 = vsub.s32 %v3119, %v3121
        %v3123 = vrot.slane %v3109, %v3122
        %v3124 = vcombine.low %v1048, %v1054
        %v3125 = vcombine.high %v1048, %v1054
        %v3127 = vunpack.c.l.s4 1983009808
        %v3128 = vunpack.c.0.s8 %v3127
        %v3129 = vlaneseq
        %v3130 = vshrl.u32 %v3129, 7
        %v3131 = vsub.s32 %v3128, %v3130
        %v3132 = vrot.slane %v3124, %v3131
        %v3134 = vunpack.c.l.s4 1983009808
        %v3135 = vunpack.c.0.s8 %v3134
        %v3136 = vlaneseq
        %v3137 = vshrl.u32 %v3136, 7
        %v3138 = vsub.s32 %v3135, %v3137
        %v3139 = vrot.slane %v3125, %v3138
        %v3140 = vcombine.low %v1057, %v1063
        %v3141 = vcombine.high %v1057, %v1063
        %v3143 = vunpack.c.l.s4 1983009808
        %v3144 = vunpack.c.0.s8 %v3143
        %v3145 = vlaneseq
        %v3146 = vshrl.u32 %v3145, 7
        %v3147 = vsub.s32 %v3144, %v3146
        %v3148 = vrot.slane %v3140, %v3147
        %v3150 = vunpack.c.l.s4 1983009808
        %v3151 = vunpack.c.0.s8 %v3150
        %v3152 = vlaneseq
        %v3153 = vshrl.u32 %v3152, 7
        %v3154 = vsub.s32 %v3151, %v3153
        %v3155 = vrot.slane %v3141, %v3154
        %v3156 = vcombine.low %v1060, %v1066
        %v3157 = vcombine.high %v1060, %v1066
        %v3159 = vunpack.c.l.s4 1983009808
        %v3160 = vunpack.c.0.s8 %v3159
        %v3161 = vlaneseq
        %v3162 = vshrl.u32 %v3161, 7
        %v3163 = vsub.s32 %v3160, %v3162
        %v3164 = vrot.slane %v3156, %v3163
        %v3166 = vunpack.c.l.s4 1983009808
        %v3167 = vunpack.c.0.s8 %v3166
        %v3168 = vlaneseq
        %v3169 = vshrl.u32 %v3168, 7
        %v3170 = vsub.s32 %v3167, %v3169
        %v3171 = vrot.slane %v3157, %v3170
        %v3172 = vcombine.low %v3116, %v3132
        %v3173 = vcombine.high %v3116, %v3132
        %v3175 = vunpack.c.l.s4 1934713408
        %v3176 = vunpack.c.0.s8 %v3175
        %v3177 = vlaneseq
        %v3178 = vshrl.u32 %v3177, 7
        %v3179 = vsub.s32 %v3176, %v3178
        %v3180 = vrot.slane %v3172, %v3179
        %v3182 = vunpack.c.l.s4 1934713408
        %v3183 = vunpack.c.0.s8 %v3182
        %v3184 = vlaneseq
        %v3185 = vshrl.u32 %v3184, 7
        %v3186 = vsub.s32 %v3183, %v3185
        %v3187 = vrot.slane %v3173, %v3186
        %v3188 = vcombine.low %v3123, %v3139
        %v3189 = vcombine.high %v3123, %v3139
        %v3191 = vunpack.c.l.s4 1934713408
        %v3192 = vunpack.c.0.s8 %v3191
        %v3193 = vlaneseq
        %v3194 = vshrl.u32 %v3193, 7
        %v3195 = vsub.s32 %v3192, %v3194
        %v3196 = vrot.slane %v3188, %v3195
        %v3198 = vunpack.c.l.s4 1934713408
        %v3199 = vunpack.c.0.s8 %v3198
        %v3200 = vlaneseq
        %v3201 = vshrl.u32 %v3200, 7
        %v3202 = vsub.s32 %v3199, %v3201
        %v3203 = vrot.slane %v3189, %v3202
        %v3204 = vcombine.low %v3148, %v3164
        %v3205 = vcombine.high %v3148, %v3164
        %v3207 = vunpack.c.l.s4 1934713408
        %v3208 = vunpack.c.0.s8 %v3207
        %v3209 = vlaneseq
        %v3210 = vshrl.u32 %v3209, 7
        %v3211 = vsub.s32 %v3208, %v3210
        %v3212 = vrot.slane %v3204, %v3211
        %v3214 = vunpack.c.l.s4 1934713408
        %v3215 = vunpack.c.0.s8 %v3214
        %v3216 = vlaneseq
        %v3217 = vshrl.u32 %v3216, 7
        %v3218 = vsub.s32 %v3215, %v3217
        %v3219 = vrot.slane %v3205, %v3218
        %v3220 = vcombine.low %v3155, %v3171
        %v3221 = vcombine.high %v3155, %v3171
        %v3223 = vunpack.c.l.s4 1934713408
        %v3224 = vunpack.c.0.s8 %v3223
        %v3225 = vlaneseq
        %v3226 = vshrl.u32 %v3225, 7
        %v3227 = vsub.s32 %v3224, %v3226
        %v3228 = vrot.slane %v3220, %v3227
        %v3230 = vunpack.c.l.s4 1934713408
        %v3231 = vunpack.c.0.s8 %v3230
        %v3232 = vlaneseq
        %v3233 = vshrl.u32 %v3232, 7
        %v3234 = vsub.s32 %v3231, %v3233
        %v3235 = vrot.slane %v3221, %v3234
        %v3236 = vcombine.low %v3180, %v3212
        %v3237 = vcombine.high %v3180, %v3212
        %v3238 = vcombine.low %v3187, %v3219
        %v3239 = vcombine.high %v3187, %v3219
        %v3240 = vcombine.low %v3196, %v3228
        %v3241 = vcombine.high %v3196, %v3228
        %v3242 = vcombine.low %v3203, %v3235
        %v3243 = vcombine.high %v3203, %v3235
        %vm3244 = vcmask 15360
        %v3245 = vsel %vm3244, %v1196, -inf
        %3246 = vmax.xlane.f32.xlu0 %v3245
        %v3247 = vpop.xlane.xlu0 %3246
        %v3248 = vsel %vm3244, %v1332, -inf
        %3249 = vmax.xlane.f32.xlu0 %v3248
        %v3250 = vpop.xlane.xlu0 %3249
        %v3251 = vsel %vm3244, %v1468, -inf
        %3252 = vmax.xlane.f32.xlu0 %v3251
        %v3253 = vpop.xlane.xlu0 %3252
        %v3254 = vsel %vm3244, %v1604, -inf
        %3255 = vmax.xlane.f32.xlu0 %v3254
        %v3256 = vpop.xlane.xlu0 %3255
        %v3257 = vsel %vm3244, %v1740, -inf
        %3258 = vmax.xlane.f32.xlu0 %v3257
        %v3259 = vpop.xlane.xlu0 %3258
        %v3260 = vsel %vm3244, %v1876, -inf
        %3261 = vmax.xlane.f32.xlu0 %v3260
        %v3262 = vpop.xlane.xlu0 %3261
        %v3263 = vsel %vm3244, %v2012, -inf
        %3264 = vmax.xlane.f32.xlu0 %v3263
        %v3265 = vpop.xlane.xlu0 %3264
        %v3266 = vsel %vm3244, %v2148, -inf
        %3267 = vmax.xlane.f32.xlu0 %v3266
        %v3268 = vpop.xlane.xlu0 %3267
        %v3269 = vsel %vm3244, %v2284, -inf
        %3270 = vmax.xlane.f32.xlu0 %v3269
        %v3271 = vpop.xlane.xlu0 %3270
        %v3272 = vsel %vm3244, %v2420, -inf
        %3273 = vmax.xlane.f32.xlu0 %v3272
        %v3274 = vpop.xlane.xlu0 %3273
        %v3275 = vsel %vm3244, %v2556, -inf
        %3276 = vmax.xlane.f32.xlu0 %v3275
        %v3277 = vpop.xlane.xlu0 %3276
        %v3278 = vsel %vm3244, %v2692, -inf
        %3279 = vmax.xlane.f32.xlu0 %v3278
        %v3280 = vpop.xlane.xlu0 %3279
        %v3281 = vsel %vm3244, %v2828, -inf
        %3282 = vmax.xlane.f32.xlu0 %v3281
        %v3283 = vpop.xlane.xlu0 %3282
        %v3284 = vsel %vm3244, %v2964, -inf
        %3285 = vmax.xlane.f32.xlu0 %v3284
        %v3286 = vpop.xlane.xlu0 %3285
        %v3287 = vsel %vm3244, %v3100, -inf
        %3288 = vmax.xlane.f32.xlu0 %v3287
        %v3289 = vpop.xlane.xlu0 %3288
        %v3290 = vsel %vm3244, %v3236, -inf
        %3291 = vmax.xlane.f32.xlu0 %v3290
        %v3292 = vpop.xlane.xlu0 %3291
        %v3293 = vsel %vm3244, %v1197, -inf
        %3294 = vmax.xlane.f32.xlu0 %v3293
        %v3295 = vpop.xlane.xlu0 %3294
        %v3296 = vsel %vm3244, %v1333, -inf
        %3297 = vmax.xlane.f32.xlu0 %v3296
        %v3298 = vpop.xlane.xlu0 %3297
        %v3299 = vsel %vm3244, %v1469, -inf
        %3300 = vmax.xlane.f32.xlu0 %v3299
        %v3301 = vpop.xlane.xlu0 %3300
        %v3302 = vsel %vm3244, %v1605, -inf
        %3303 = vmax.xlane.f32.xlu0 %v3302
        %v3304 = vpop.xlane.xlu0 %3303
        %v3305 = vsel %vm3244, %v1741, -inf
        %3306 = vmax.xlane.f32.xlu0 %v3305
        %v3307 = vpop.xlane.xlu0 %3306
        %v3308 = vsel %vm3244, %v1877, -inf
        %3309 = vmax.xlane.f32.xlu0 %v3308
        %v3310 = vpop.xlane.xlu0 %3309
        %v3311 = vsel %vm3244, %v2013, -inf
        %3312 = vmax.xlane.f32.xlu0 %v3311
        %v3313 = vpop.xlane.xlu0 %3312
        %v3314 = vsel %vm3244, %v2149, -inf
        %3315 = vmax.xlane.f32.xlu0 %v3314
        %v3316 = vpop.xlane.xlu0 %3315
        %v3317 = vsel %vm3244, %v2285, -inf
        %3318 = vmax.xlane.f32.xlu0 %v3317
        %v3319 = vpop.xlane.xlu0 %3318
        %v3320 = vsel %vm3244, %v2421, -inf
        %3321 = vmax.xlane.f32.xlu0 %v3320
        %v3322 = vpop.xlane.xlu0 %3321
        %v3323 = vsel %vm3244, %v2557, -inf
        %3324 = vmax.xlane.f32.xlu0 %v3323
        %v3325 = vpop.xlane.xlu0 %3324
        %v3326 = vsel %vm3244, %v2693, -inf
        %3327 = vmax.xlane.f32.xlu0 %v3326
        %v3328 = vpop.xlane.xlu0 %3327
        %v3329 = vsel %vm3244, %v2829, -inf
        %3330 = vmax.xlane.f32.xlu0 %v3329
        %v3331 = vpop.xlane.xlu0 %3330
        %v3332 = vsel %vm3244, %v2965, -inf
        %3333 = vmax.xlane.f32.xlu0 %v3332
        %v3334 = vpop.xlane.xlu0 %3333
        %v3335 = vsel %vm3244, %v3101, -inf
        %3336 = vmax.xlane.f32.xlu0 %v3335
        %v3337 = vpop.xlane.xlu0 %3336
        %v3338 = vsel %vm3244, %v3237, -inf
        %3339 = vmax.xlane.f32.xlu0 %v3338
        %v3340 = vpop.xlane.xlu0 %3339
        %v3341 = vsel %vm3244, %v1198, -inf
        %3342 = vmax.xlane.f32.xlu0 %v3341
        %v3343 = vpop.xlane.xlu0 %3342
        %v3344 = vsel %vm3244, %v1334, -inf
        %3345 = vmax.xlane.f32.xlu0 %v3344
        %v3346 = vpop.xlane.xlu0 %3345
        %v3347 = vsel %vm3244, %v1470, -inf
        %3348 = vmax.xlane.f32.xlu0 %v3347
        %v3349 = vpop.xlane.xlu0 %3348
        %v3350 = vsel %vm3244, %v1606, -inf
        %3351 = vmax.xlane.f32.xlu0 %v3350
        %v3352 = vpop.xlane.xlu0 %3351
        %v3353 = vsel %vm3244, %v1742, -inf
        %3354 = vmax.xlane.f32.xlu0 %v3353
        %v3355 = vpop.xlane.xlu0 %3354
        %v3356 = vsel %vm3244, %v1878, -inf
        %3357 = vmax.xlane.f32.xlu0 %v3356
        %v3358 = vpop.xlane.xlu0 %3357
        %v3359 = vsel %vm3244, %v2014, -inf
        %3360 = vmax.xlane.f32.xlu0 %v3359
        %v3361 = vpop.xlane.xlu0 %3360
        %v3362 = vsel %vm3244, %v2150, -inf
        %3363 = vmax.xlane.f32.xlu0 %v3362
        %v3364 = vpop.xlane.xlu0 %3363
        %v3365 = vsel %vm3244, %v2286, -inf
        %3366 = vmax.xlane.f32.xlu0 %v3365
        %v3367 = vpop.xlane.xlu0 %3366
        %v3368 = vsel %vm3244, %v2422, -inf
        %3369 = vmax.xlane.f32.xlu0 %v3368
        %v3370 = vpop.xlane.xlu0 %3369
        %v3371 = vsel %vm3244, %v2558, -inf
        %3372 = vmax.xlane.f32.xlu0 %v3371
        %v3373 = vpop.xlane.xlu0 %3372
        %v3374 = vsel %vm3244, %v2694, -inf
        %3375 = vmax.xlane.f32.xlu0 %v3374
        %v3376 = vpop.xlane.xlu0 %3375
        %v3377 = vsel %vm3244, %v2830, -inf
        %3378 = vmax.xlane.f32.xlu0 %v3377
        %v3379 = vpop.xlane.xlu0 %3378
        %v3380 = vsel %vm3244, %v2966, -inf
        %3381 = vmax.xlane.f32.xlu0 %v3380
        %v3382 = vpop.xlane.xlu0 %3381
        %v3383 = vsel %vm3244, %v3102, -inf
        %3384 = vmax.xlane.f32.xlu0 %v3383
        %v3385 = vpop.xlane.xlu0 %3384
        %v3386 = vsel %vm3244, %v3238, -inf
        %3387 = vmax.xlane.f32.xlu0 %v3386
        %v3388 = vpop.xlane.xlu0 %3387
        %v3389 = vsel %vm3244, %v1199, -inf
        %3390 = vmax.xlane.f32.xlu0 %v3389
        %v3391 = vpop.xlane.xlu0 %3390
        %v3392 = vsel %vm3244, %v1335, -inf
        %3393 = vmax.xlane.f32.xlu0 %v3392
        %v3394 = vpop.xlane.xlu0 %3393
        %v3395 = vsel %vm3244, %v1471, -inf
        %3396 = vmax.xlane.f32.xlu0 %v3395
        %v3397 = vpop.xlane.xlu0 %3396
        %v3398 = vsel %vm3244, %v1607, -inf
        %3399 = vmax.xlane.f32.xlu0 %v3398
        %v3400 = vpop.xlane.xlu0 %3399
        %v3401 = vsel %vm3244, %v1743, -inf
        %3402 = vmax.xlane.f32.xlu0 %v3401
        %v3403 = vpop.xlane.xlu0 %3402
        %v3404 = vsel %vm3244, %v1879, -inf
        %3405 = vmax.xlane.f32.xlu0 %v3404
        %v3406 = vpop.xlane.xlu0 %3405
        %v3407 = vsel %vm3244, %v2015, -inf
        %3408 = vmax.xlane.f32.xlu0 %v3407
        %v3409 = vpop.xlane.xlu0 %3408
        %v3410 = vsel %vm3244, %v2151, -inf
        %3411 = vmax.xlane.f32.xlu0 %v3410
        %v3412 = vpop.xlane.xlu0 %3411
        %v3413 = vsel %vm3244, %v2287, -inf
        %3414 = vmax.xlane.f32.xlu0 %v3413
        %v3415 = vpop.xlane.xlu0 %3414
        %v3416 = vsel %vm3244, %v2423, -inf
        %3417 = vmax.xlane.f32.xlu0 %v3416
        %v3418 = vpop.xlane.xlu0 %3417
        %v3419 = vsel %vm3244, %v2559, -inf
        %3420 = vmax.xlane.f32.xlu0 %v3419
        %v3421 = vpop.xlane.xlu0 %3420
        %v3422 = vsel %vm3244, %v2695, -inf
        %3423 = vmax.xlane.f32.xlu0 %v3422
        %v3424 = vpop.xlane.xlu0 %3423
        %v3425 = vsel %vm3244, %v2831, -inf
        %3426 = vmax.xlane.f32.xlu0 %v3425
        %v3427 = vpop.xlane.xlu0 %3426
        %v3428 = vsel %vm3244, %v2967, -inf
        %3429 = vmax.xlane.f32.xlu0 %v3428
        %v3430 = vpop.xlane.xlu0 %3429
        %v3431 = vsel %vm3244, %v3103, -inf
        %3432 = vmax.xlane.f32.xlu0 %v3431
        %v3433 = vpop.xlane.xlu0 %3432
        %v3434 = vsel %vm3244, %v3239, -inf
        %3435 = vmax.xlane.f32.xlu0 %v3434
        %v3436 = vpop.xlane.xlu0 %3435
        %v3437 = vsel %vm3244, %v1200, -inf
        %3438 = vmax.xlane.f32.xlu0 %v3437
        %v3439 = vpop.xlane.xlu0 %3438
        %v3440 = vsel %vm3244, %v1336, -inf
        %3441 = vmax.xlane.f32.xlu0 %v3440
        %v3442 = vpop.xlane.xlu0 %3441
        %v3443 = vsel %vm3244, %v1472, -inf
        %3444 = vmax.xlane.f32.xlu0 %v3443
        %v3445 = vpop.xlane.xlu0 %3444
        %v3446 = vsel %vm3244, %v1608, -inf
        %3447 = vmax.xlane.f32.xlu0 %v3446
        %v3448 = vpop.xlane.xlu0 %3447
        %v3449 = vsel %vm3244, %v1744, -inf
        %3450 = vmax.xlane.f32.xlu0 %v3449
        %v3451 = vpop.xlane.xlu0 %3450
        %v3452 = vsel %vm3244, %v1880, -inf
        %3453 = vmax.xlane.f32.xlu0 %v3452
        %v3454 = vpop.xlane.xlu0 %3453
        %v3455 = vsel %vm3244, %v2016, -inf
        %3456 = vmax.xlane.f32.xlu0 %v3455
        %v3457 = vpop.xlane.xlu0 %3456
        %v3458 = vsel %vm3244, %v2152, -inf
        %3459 = vmax.xlane.f32.xlu0 %v3458
        %v3460 = vpop.xlane.xlu0 %3459
        %v3461 = vsel %vm3244, %v2288, -inf
        %3462 = vmax.xlane.f32.xlu0 %v3461
        %v3463 = vpop.xlane.xlu0 %3462
        %v3464 = vsel %vm3244, %v2424, -inf
        %3465 = vmax.xlane.f32.xlu0 %v3464
        %v3466 = vpop.xlane.xlu0 %3465
        %v3467 = vsel %vm3244, %v2560, -inf
        %3468 = vmax.xlane.f32.xlu0 %v3467
        %v3469 = vpop.xlane.xlu0 %3468
        %v3470 = vsel %vm3244, %v2696, -inf
        %3471 = vmax.xlane.f32.xlu0 %v3470
        %v3472 = vpop.xlane.xlu0 %3471
        %v3473 = vsel %vm3244, %v2832, -inf
        %3474 = vmax.xlane.f32.xlu0 %v3473
        %v3475 = vpop.xlane.xlu0 %3474
        %v3476 = vsel %vm3244, %v2968, -inf
        %3477 = vmax.xlane.f32.xlu0 %v3476
        %v3478 = vpop.xlane.xlu0 %3477
        %v3479 = vsel %vm3244, %v3104, -inf
        %3480 = vmax.xlane.f32.xlu0 %v3479
        %v3481 = vpop.xlane.xlu0 %3480
        %v3482 = vsel %vm3244, %v3240, -inf
        %3483 = vmax.xlane.f32.xlu0 %v3482
        %v3484 = vpop.xlane.xlu0 %3483
        %v3485 = vsel %vm3244, %v1201, -inf
        %3486 = vmax.xlane.f32.xlu0 %v3485
        %v3487 = vpop.xlane.xlu0 %3486
        %v3488 = vsel %vm3244, %v1337, -inf
        %3489 = vmax.xlane.f32.xlu0 %v3488
        %v3490 = vpop.xlane.xlu0 %3489
        %v3491 = vsel %vm3244, %v1473, -inf
        %3492 = vmax.xlane.f32.xlu0 %v3491
        %v3493 = vpop.xlane.xlu0 %3492
        %v3494 = vsel %vm3244, %v1609, -inf
        %3495 = vmax.xlane.f32.xlu0 %v3494
        %v3496 = vpop.xlane.xlu0 %3495
        %v3497 = vsel %vm3244, %v1745, -inf
        %3498 = vmax.xlane.f32.xlu0 %v3497
        %v3499 = vpop.xlane.xlu0 %3498
        %v3500 = vsel %vm3244, %v1881, -inf
        %3501 = vmax.xlane.f32.xlu0 %v3500
        %v3502 = vpop.xlane.xlu0 %3501
        %v3503 = vsel %vm3244, %v2017, -inf
        %3504 = vmax.xlane.f32.xlu0 %v3503
        %v3505 = vpop.xlane.xlu0 %3504
        %v3506 = vsel %vm3244, %v2153, -inf
        %3507 = vmax.xlane.f32.xlu0 %v3506
        %v3508 = vpop.xlane.xlu0 %3507
        %v3509 = vsel %vm3244, %v2289, -inf
        %3510 = vmax.xlane.f32.xlu0 %v3509
        %v3511 = vpop.xlane.xlu0 %3510
        %v3512 = vsel %vm3244, %v2425, -inf
        %3513 = vmax.xlane.f32.xlu0 %v3512
        %v3514 = vpop.xlane.xlu0 %3513
        %v3515 = vsel %vm3244, %v2561, -inf
        %3516 = vmax.xlane.f32.xlu0 %v3515
        %v3517 = vpop.xlane.xlu0 %3516
        %v3518 = vsel %vm3244, %v2697, -inf
        %3519 = vmax.xlane.f32.xlu0 %v3518
        %v3520 = vpop.xlane.xlu0 %3519
        %v3521 = vsel %vm3244, %v2833, -inf
        %3522 = vmax.xlane.f32.xlu0 %v3521
        %v3523 = vpop.xlane.xlu0 %3522
        %v3524 = vsel %vm3244, %v2969, -inf
        %3525 = vmax.xlane.f32.xlu0 %v3524
        %v3526 = vpop.xlane.xlu0 %3525
        %v3527 = vsel %vm3244, %v3105, -inf
        %3528 = vmax.xlane.f32.xlu0 %v3527
        %v3529 = vpop.xlane.xlu0 %3528
        %v3530 = vsel %vm3244, %v3241, -inf
        %3531 = vmax.xlane.f32.xlu0 %v3530
        %v3532 = vpop.xlane.xlu0 %3531
        %v3533 = vsel %vm3244, %v1202, -inf
        %3534 = vmax.xlane.f32.xlu0 %v3533
        %v3535 = vpop.xlane.xlu0 %3534
        %v3536 = vsel %vm3244, %v1338, -inf
        %3537 = vmax.xlane.f32.xlu0 %v3536
        %v3538 = vpop.xlane.xlu0 %3537
        %v3539 = vsel %vm3244, %v1474, -inf
        %3540 = vmax.xlane.f32.xlu0 %v3539
        %v3541 = vpop.xlane.xlu0 %3540
        %v3542 = vsel %vm3244, %v1610, -inf
        %3543 = vmax.xlane.f32.xlu0 %v3542
        %v3544 = vpop.xlane.xlu0 %3543
        %v3545 = vsel %vm3244, %v1746, -inf
        %3546 = vmax.xlane.f32.xlu0 %v3545
        %v3547 = vpop.xlane.xlu0 %3546
        %v3548 = vsel %vm3244, %v1882, -inf
        %3549 = vmax.xlane.f32.xlu0 %v3548
        %v3550 = vpop.xlane.xlu0 %3549
        %v3551 = vsel %vm3244, %v2018, -inf
        %3552 = vmax.xlane.f32.xlu0 %v3551
        %v3553 = vpop.xlane.xlu0 %3552
        %v3554 = vsel %vm3244, %v2154, -inf
        %3555 = vmax.xlane.f32.xlu0 %v3554
        %v3556 = vpop.xlane.xlu0 %3555
        %v3557 = vsel %vm3244, %v2290, -inf
        %3558 = vmax.xlane.f32.xlu0 %v3557
        %v3559 = vpop.xlane.xlu0 %3558
        %v3560 = vsel %vm3244, %v2426, -inf
        %3561 = vmax.xlane.f32.xlu0 %v3560
        %v3562 = vpop.xlane.xlu0 %3561
        %v3563 = vsel %vm3244, %v2562, -inf
        %3564 = vmax.xlane.f32.xlu0 %v3563
        %v3565 = vpop.xlane.xlu0 %3564
        %v3566 = vsel %vm3244, %v2698, -inf
        %3567 = vmax.xlane.f32.xlu0 %v3566
        %v3568 = vpop.xlane.xlu0 %3567
        %v3569 = vsel %vm3244, %v2834, -inf
        %3570 = vmax.xlane.f32.xlu0 %v3569
        %v3571 = vpop.xlane.xlu0 %3570
        %v3572 = vsel %vm3244, %v2970, -inf
        %3573 = vmax.xlane.f32.xlu0 %v3572
        %v3574 = vpop.xlane.xlu0 %3573
        %v3575 = vsel %vm3244, %v3106, -inf
        %3576 = vmax.xlane.f32.xlu0 %v3575
        %v3577 = vpop.xlane.xlu0 %3576
        %v3578 = vsel %vm3244, %v3242, -inf
        %3579 = vmax.xlane.f32.xlu0 %v3578
        %v3580 = vpop.xlane.xlu0 %3579
        %v3581 = vsel %vm3244, %v1203, -inf
        %3582 = vmax.xlane.f32.xlu0 %v3581
        %v3583 = vpop.xlane.xlu0 %3582
        %v3584 = vsel %vm3244, %v1339, -inf
        %3585 = vmax.xlane.f32.xlu0 %v3584
        %v3586 = vpop.xlane.xlu0 %3585
        %v3587 = vsel %vm3244, %v1475, -inf
        %3588 = vmax.xlane.f32.xlu0 %v3587
        %v3589 = vpop.xlane.xlu0 %3588
        %v3590 = vsel %vm3244, %v1611, -inf
        %3591 = vmax.xlane.f32.xlu0 %v3590
        %v3592 = vpop.xlane.xlu0 %3591
        %v3593 = vsel %vm3244, %v1747, -inf
        %3594 = vmax.xlane.f32.xlu0 %v3593
        %v3595 = vpop.xlane.xlu0 %3594
        %v3596 = vsel %vm3244, %v1883, -inf
        %3597 = vmax.xlane.f32.xlu0 %v3596
        %v3598 = vpop.xlane.xlu0 %3597
        %v3599 = vsel %vm3244, %v2019, -inf
        %3600 = vmax.xlane.f32.xlu0 %v3599
        %v3601 = vpop.xlane.xlu0 %3600
        %v3602 = vsel %vm3244, %v2155, -inf
        %3603 = vmax.xlane.f32.xlu0 %v3602
        %v3604 = vpop.xlane.xlu0 %3603
        %v3605 = vsel %vm3244, %v2291, -inf
        %3606 = vmax.xlane.f32.xlu0 %v3605
        %v3607 = vpop.xlane.xlu0 %3606
        %v3608 = vsel %vm3244, %v2427, -inf
        %3609 = vmax.xlane.f32.xlu0 %v3608
        %v3610 = vpop.xlane.xlu0 %3609
        %v3611 = vsel %vm3244, %v2563, -inf
        %3612 = vmax.xlane.f32.xlu0 %v3611
        %v3613 = vpop.xlane.xlu0 %3612
        %v3614 = vsel %vm3244, %v2699, -inf
        %3615 = vmax.xlane.f32.xlu0 %v3614
        %v3616 = vpop.xlane.xlu0 %3615
        %v3617 = vsel %vm3244, %v2835, -inf
        %3618 = vmax.xlane.f32.xlu0 %v3617
        %v3619 = vpop.xlane.xlu0 %3618
        %v3620 = vsel %vm3244, %v2971, -inf
        %3621 = vmax.xlane.f32.xlu0 %v3620
        %v3622 = vpop.xlane.xlu0 %3621
        %v3623 = vsel %vm3244, %v3107, -inf
        %3624 = vmax.xlane.f32.xlu0 %v3623
        %v3625 = vpop.xlane.xlu0 %3624
        %v3626 = vsel %vm3244, %v3243, -inf
        %3627 = vmax.xlane.f32.xlu0 %v3626
        %v3628 = vpop.xlane.xlu0 %3627
        %v3757 = vlaneseq
        %v3758 = vand.u32 %v3757, 127
        %v3759 = vadd.s32 %v3758, 4294967294
        %v3760 = vlaneseq
        %v3761 = vshrl.u32 %v3760, 7
        %v3762 = vsub.s32 %v3759, %v3761
        %v3763 = vrot.slane %v3247, %v3762
        %v3764 = vadd.s32 %v3758, 4294967286
        %v3765 = vlaneseq
        %v3766 = vshrl.u32 %v3765, 7
        %v3767 = vsub.s32 %v3764, %v3766
        %v3768 = vrot.slane %v3250, %v3767
        %vm3769 = vcmask 146512
        %v3770 = vsel %vm3769, %v3768, %v3763
        %v3771 = vadd.s32 %v3758, 4294967278
        %v3772 = vlaneseq
        %v3773 = vshrl.u32 %v3772, 7
        %v3774 = vsub.s32 %v3771, %v3773
        %v3775 = vrot.slane %v3253, %v3774
        %vm3776 = vcmask 212112
        %v3777 = vsel %vm3776, %v3775, %v3770
        %v3778 = vadd.s32 %v3758, 4294967270
        %v3779 = vlaneseq
        %v3780 = vshrl.u32 %v3779, 7
        %v3781 = vsub.s32 %v3778, %v3780
        %v3782 = vrot.slane %v3256, %v3781
        %vm3783 = vcmask 277712
        %v3784 = vsel %vm3783, %v3782, %v3777
        %v3785 = vadd.s32 %v3758, 4294967262
        %v3786 = vlaneseq
        %v3787 = vshrl.u32 %v3786, 7
        %v3788 = vsub.s32 %v3785, %v3787
        %v3789 = vrot.slane %v3259, %v3788
        %vm3790 = vcmask 343312
        %v3791 = vsel %vm3790, %v3789, %v3784
        %v3792 = vadd.s32 %v3758, 4294967254
        %v3793 = vlaneseq
        %v3794 = vshrl.u32 %v3793, 7
        %v3795 = vsub.s32 %v3792, %v3794
        %v3796 = vrot.slane %v3262, %v3795
        %vm3797 = vcmask 408912
        %v3798 = vsel %vm3797, %v3796, %v3791
        %v3799 = vadd.s32 %v3758, 4294967246
        %v3800 = vlaneseq
        %v3801 = vshrl.u32 %v3800, 7
        %v3802 = vsub.s32 %v3799, %v3801
        %v3803 = vrot.slane %v3265, %v3802
        %vm3804 = vcmask 474512
        %v3805 = vsel %vm3804, %v3803, %v3798
        %v3806 = vadd.s32 %v3758, 4294967238
        %v3807 = vlaneseq
        %v3808 = vshrl.u32 %v3807, 7
        %v3809 = vsub.s32 %v3806, %v3808
        %v3810 = vrot.slane %v3268, %v3809
        %vm3811 = vcmask 540112
        %v3812 = vsel %vm3811, %v3810, %v3805
        %v3813 = vadd.s32 %v3758, 4294967230
        %v3814 = vlaneseq
        %v3815 = vshrl.u32 %v3814, 7
        %v3816 = vsub.s32 %v3813, %v3815
        %v3817 = vrot.slane %v3271, %v3816
        %vm3818 = vcmask 605712
        %v3819 = vsel %vm3818, %v3817, %v3812
        %v3820 = vadd.s32 %v3758, 4294967222
        %v3821 = vlaneseq
        %v3822 = vshrl.u32 %v3821, 7
        %v3823 = vsub.s32 %v3820, %v3822
        %v3824 = vrot.slane %v3274, %v3823
        %vm3825 = vcmask 671312
        %v3826 = vsel %vm3825, %v3824, %v3819
        %v3827 = vadd.s32 %v3758, 4294967214
        %v3828 = vlaneseq
        %v3829 = vshrl.u32 %v3828, 7
        %v3830 = vsub.s32 %v3827, %v3829
        %v3831 = vrot.slane %v3277, %v3830
        %vm3832 = vcmask 736912
        %v3833 = vsel %vm3832, %v3831, %v3826
        %v3834 = vadd.s32 %v3758, 4294967206
        %v3835 = vlaneseq
        %v3836 = vshrl.u32 %v3835, 7
        %v3837 = vsub.s32 %v3834, %v3836
        %v3838 = vrot.slane %v3280, %v3837
        %vm3839 = vcmask 802512
        %v3840 = vsel %vm3839, %v3838, %v3833
        %v3841 = vadd.s32 %v3758, 4294967198
        %v3842 = vlaneseq
        %v3843 = vshrl.u32 %v3842, 7
        %v3844 = vsub.s32 %v3841, %v3843
        %v3845 = vrot.slane %v3283, %v3844
        %vm3846 = vcmask 868112
        %v3847 = vsel %vm3846, %v3845, %v3840
        %v3848 = vadd.s32 %v3758, 4294967190
        %v3849 = vlaneseq
        %v3850 = vshrl.u32 %v3849, 7
        %v3851 = vsub.s32 %v3848, %v3850
        %v3852 = vrot.slane %v3286, %v3851
        %vm3853 = vcmask 933712
        %v3854 = vsel %vm3853, %v3852, %v3847
        %v3855 = vadd.s32 %v3758, 4294967182
        %v3856 = vlaneseq
        %v3857 = vshrl.u32 %v3856, 7
        %v3858 = vsub.s32 %v3855, %v3857
        %v3859 = vrot.slane %v3289, %v3858
        %vm3860 = vcmask 999312
        %v3861 = vsel %vm3860, %v3859, %v3854
        %v3862 = vadd.s32 %v3758, 4294967174
        %v3863 = vlaneseq
        %v3864 = vshrl.u32 %v3863, 7
        %v3865 = vsub.s32 %v3862, %v3864
        %v3866 = vrot.slane %v3292, %v3865
        %vm3867 = vcmask 1048528
        %v3868 = vsel %vm3867, %v3866, %v3861
        %v3869 = vlaneseq
        %v3870 = vshrl.u32 %v3869, 7
        %v3871 = vsub.s32 %v3759, %v3870
        %v3872 = vrot.slane %v3295, %v3871
        %v3873 = vlaneseq
        %v3874 = vshrl.u32 %v3873, 7
        %v3875 = vsub.s32 %v3764, %v3874
        %v3876 = vrot.slane %v3298, %v3875
        %v3877 = vsel %vm3769, %v3876, %v3872
        %v3878 = vlaneseq
        %v3879 = vshrl.u32 %v3878, 7
        %v3880 = vsub.s32 %v3771, %v3879
        %v3881 = vrot.slane %v3301, %v3880
        %v3882 = vsel %vm3776, %v3881, %v3877
        %v3883 = vlaneseq
        %v3884 = vshrl.u32 %v3883, 7
        %v3885 = vsub.s32 %v3778, %v3884
        %v3886 = vrot.slane %v3304, %v3885
        %v3887 = vsel %vm3783, %v3886, %v3882
        %v3888 = vlaneseq
        %v3889 = vshrl.u32 %v3888, 7
        %v3890 = vsub.s32 %v3785, %v3889
        %v3891 = vrot.slane %v3307, %v3890
        %v3892 = vsel %vm3790, %v3891, %v3887
        %v3893 = vlaneseq
        %v3894 = vshrl.u32 %v3893, 7
        %v3895 = vsub.s32 %v3792, %v3894
        %v3896 = vrot.slane %v3310, %v3895
        %v3897 = vsel %vm3797, %v3896, %v3892
        %v3898 = vlaneseq
        %v3899 = vshrl.u32 %v3898, 7
        %v3900 = vsub.s32 %v3799, %v3899
        %v3901 = vrot.slane %v3313, %v3900
        %v3902 = vsel %vm3804, %v3901, %v3897
        %v3903 = vlaneseq
        %v3904 = vshrl.u32 %v3903, 7
        %v3905 = vsub.s32 %v3806, %v3904
        %v3906 = vrot.slane %v3316, %v3905
        %v3907 = vsel %vm3811, %v3906, %v3902
        %v3908 = vlaneseq
        %v3909 = vshrl.u32 %v3908, 7
        %v3910 = vsub.s32 %v3813, %v3909
        %v3911 = vrot.slane %v3319, %v3910
        %v3912 = vsel %vm3818, %v3911, %v3907
        %v3913 = vlaneseq
        %v3914 = vshrl.u32 %v3913, 7
        %v3915 = vsub.s32 %v3820, %v3914
        %v3916 = vrot.slane %v3322, %v3915
        %v3917 = vsel %vm3825, %v3916, %v3912
        %v3918 = vlaneseq
        %v3919 = vshrl.u32 %v3918, 7
        %v3920 = vsub.s32 %v3827, %v3919
        %v3921 = vrot.slane %v3325, %v3920
        %v3922 = vsel %vm3832, %v3921, %v3917
        %v3923 = vlaneseq
        %v3924 = vshrl.u32 %v3923, 7
        %v3925 = vsub.s32 %v3834, %v3924
        %v3926 = vrot.slane %v3328, %v3925
        %v3927 = vsel %vm3839, %v3926, %v3922
        %v3928 = vlaneseq
        %v3929 = vshrl.u32 %v3928, 7
        %v3930 = vsub.s32 %v3841, %v3929
        %v3931 = vrot.slane %v3331, %v3930
        %v3932 = vsel %vm3846, %v3931, %v3927
        %v3933 = vlaneseq
        %v3934 = vshrl.u32 %v3933, 7
        %v3935 = vsub.s32 %v3848, %v3934
        %v3936 = vrot.slane %v3334, %v3935
        %v3937 = vsel %vm3853, %v3936, %v3932
        %v3938 = vlaneseq
        %v3939 = vshrl.u32 %v3938, 7
        %v3940 = vsub.s32 %v3855, %v3939
        %v3941 = vrot.slane %v3337, %v3940
        %v3942 = vsel %vm3860, %v3941, %v3937
        %v3943 = vlaneseq
        %v3944 = vshrl.u32 %v3943, 7
        %v3945 = vsub.s32 %v3862, %v3944
        %v3946 = vrot.slane %v3340, %v3945
        %v3947 = vsel %vm3867, %v3946, %v3942
        %v3948 = vlaneseq
        %v3949 = vshrl.u32 %v3948, 7
        %v3950 = vsub.s32 %v3759, %v3949
        %v3951 = vrot.slane %v3343, %v3950
        %v3952 = vlaneseq
        %v3953 = vshrl.u32 %v3952, 7
        %v3954 = vsub.s32 %v3764, %v3953
        %v3955 = vrot.slane %v3346, %v3954
        %v3956 = vsel %vm3769, %v3955, %v3951
        %v3957 = vlaneseq
        %v3958 = vshrl.u32 %v3957, 7
        %v3959 = vsub.s32 %v3771, %v3958
        %v3960 = vrot.slane %v3349, %v3959
        %v3961 = vsel %vm3776, %v3960, %v3956
        %v3962 = vlaneseq
        %v3963 = vshrl.u32 %v3962, 7
        %v3964 = vsub.s32 %v3778, %v3963
        %v3965 = vrot.slane %v3352, %v3964
        %v3966 = vsel %vm3783, %v3965, %v3961
        %v3967 = vlaneseq
        %v3968 = vshrl.u32 %v3967, 7
        %v3969 = vsub.s32 %v3785, %v3968
        %v3970 = vrot.slane %v3355, %v3969
        %v3971 = vsel %vm3790, %v3970, %v3966
        %v3972 = vlaneseq
        %v3973 = vshrl.u32 %v3972, 7
        %v3974 = vsub.s32 %v3792, %v3973
        %v3975 = vrot.slane %v3358, %v3974
        %v3976 = vsel %vm3797, %v3975, %v3971
        %v3977 = vlaneseq
        %v3978 = vshrl.u32 %v3977, 7
        %v3979 = vsub.s32 %v3799, %v3978
        %v3980 = vrot.slane %v3361, %v3979
        %v3981 = vsel %vm3804, %v3980, %v3976
        %v3982 = vlaneseq
        %v3983 = vshrl.u32 %v3982, 7
        %v3984 = vsub.s32 %v3806, %v3983
        %v3985 = vrot.slane %v3364, %v3984
        %v3986 = vsel %vm3811, %v3985, %v3981
        %v3987 = vlaneseq
        %v3988 = vshrl.u32 %v3987, 7
        %v3989 = vsub.s32 %v3813, %v3988
        %v3990 = vrot.slane %v3367, %v3989
        %v3991 = vsel %vm3818, %v3990, %v3986
        %v3992 = vlaneseq
        %v3993 = vshrl.u32 %v3992, 7
        %v3994 = vsub.s32 %v3820, %v3993
        %v3995 = vrot.slane %v3370, %v3994
        %v3996 = vsel %vm3825, %v3995, %v3991
        %v3997 = vlaneseq
        %v3998 = vshrl.u32 %v3997, 7
        %v3999 = vsub.s32 %v3827, %v3998
        %v4000 = vrot.slane %v3373, %v3999
        %v4001 = vsel %vm3832, %v4000, %v3996
        %v4002 = vlaneseq
        %v4003 = vshrl.u32 %v4002, 7
        %v4004 = vsub.s32 %v3834, %v4003
        %v4005 = vrot.slane %v3376, %v4004
        %v4006 = vsel %vm3839, %v4005, %v4001
        %v4007 = vlaneseq
        %v4008 = vshrl.u32 %v4007, 7
        %v4009 = vsub.s32 %v3841, %v4008
        %v4010 = vrot.slane %v3379, %v4009
        %v4011 = vsel %vm3846, %v4010, %v4006
        %v4012 = vlaneseq
        %v4013 = vshrl.u32 %v4012, 7
        %v4014 = vsub.s32 %v3848, %v4013
        %v4015 = vrot.slane %v3382, %v4014
        %v4016 = vsel %vm3853, %v4015, %v4011
        %v4017 = vlaneseq
        %v4018 = vshrl.u32 %v4017, 7
        %v4019 = vsub.s32 %v3855, %v4018
        %v4020 = vrot.slane %v3385, %v4019
        %v4021 = vsel %vm3860, %v4020, %v4016
        %v4022 = vlaneseq
        %v4023 = vshrl.u32 %v4022, 7
        %v4024 = vsub.s32 %v3862, %v4023
        %v4025 = vrot.slane %v3388, %v4024
        %v4026 = vsel %vm3867, %v4025, %v4021
        %v4027 = vlaneseq
        %v4028 = vshrl.u32 %v4027, 7
        %v4029 = vsub.s32 %v3759, %v4028
        %v4030 = vrot.slane %v3391, %v4029
        %v4031 = vlaneseq
        %v4032 = vshrl.u32 %v4031, 7
        %v4033 = vsub.s32 %v3764, %v4032
        %v4034 = vrot.slane %v3394, %v4033
        %v4035 = vsel %vm3769, %v4034, %v4030
        %v4036 = vlaneseq
        %v4037 = vshrl.u32 %v4036, 7
        %v4038 = vsub.s32 %v3771, %v4037
        %v4039 = vrot.slane %v3397, %v4038
        %v4040 = vsel %vm3776, %v4039, %v4035
        %v4041 = vlaneseq
        %v4042 = vshrl.u32 %v4041, 7
        %v4043 = vsub.s32 %v3778, %v4042
        %v4044 = vrot.slane %v3400, %v4043
        %v4045 = vsel %vm3783, %v4044, %v4040
        %v4046 = vlaneseq
        %v4047 = vshrl.u32 %v4046, 7
        %v4048 = vsub.s32 %v3785, %v4047
        %v4049 = vrot.slane %v3403, %v4048
        %v4050 = vsel %vm3790, %v4049, %v4045
        %v4051 = vlaneseq
        %v4052 = vshrl.u32 %v4051, 7
        %v4053 = vsub.s32 %v3792, %v4052
        %v4054 = vrot.slane %v3406, %v4053
        %v4055 = vsel %vm3797, %v4054, %v4050
        %v4056 = vlaneseq
        %v4057 = vshrl.u32 %v4056, 7
        %v4058 = vsub.s32 %v3799, %v4057
        %v4059 = vrot.slane %v3409, %v4058
        %v4060 = vsel %vm3804, %v4059, %v4055
        %v4061 = vlaneseq
        %v4062 = vshrl.u32 %v4061, 7
        %v4063 = vsub.s32 %v3806, %v4062
        %v4064 = vrot.slane %v3412, %v4063
        %v4065 = vsel %vm3811, %v4064, %v4060
        %v4066 = vlaneseq
        %v4067 = vshrl.u32 %v4066, 7
        %v4068 = vsub.s32 %v3813, %v4067
        %v4069 = vrot.slane %v3415, %v4068
        %v4070 = vsel %vm3818, %v4069, %v4065
        %v4071 = vlaneseq
        %v4072 = vshrl.u32 %v4071, 7
        %v4073 = vsub.s32 %v3820, %v4072
        %v4074 = vrot.slane %v3418, %v4073
        %v4075 = vsel %vm3825, %v4074, %v4070
        %v4076 = vlaneseq
        %v4077 = vshrl.u32 %v4076, 7
        %v4078 = vsub.s32 %v3827, %v4077
        %v4079 = vrot.slane %v3421, %v4078
        %v4080 = vsel %vm3832, %v4079, %v4075
        %v4081 = vlaneseq
        %v4082 = vshrl.u32 %v4081, 7
        %v4083 = vsub.s32 %v3834, %v4082
        %v4084 = vrot.slane %v3424, %v4083
        %v4085 = vsel %vm3839, %v4084, %v4080
        %v4086 = vlaneseq
        %v4087 = vshrl.u32 %v4086, 7
        %v4088 = vsub.s32 %v3841, %v4087
        %v4089 = vrot.slane %v3427, %v4088
        %v4090 = vsel %vm3846, %v4089, %v4085
        %v4091 = vlaneseq
        %v4092 = vshrl.u32 %v4091, 7
        %v4093 = vsub.s32 %v3848, %v4092
        %v4094 = vrot.slane %v3430, %v4093
        %v4095 = vsel %vm3853, %v4094, %v4090
        %v4096 = vlaneseq
        %v4097 = vshrl.u32 %v4096, 7
        %v4098 = vsub.s32 %v3855, %v4097
        %v4099 = vrot.slane %v3433, %v4098
        %v4100 = vsel %vm3860, %v4099, %v4095
        %v4101 = vlaneseq
        %v4102 = vshrl.u32 %v4101, 7
        %v4103 = vsub.s32 %v3862, %v4102
        %v4104 = vrot.slane %v3436, %v4103
        %v4105 = vsel %vm3867, %v4104, %v4100
        %v4106 = vlaneseq
        %v4107 = vshrl.u32 %v4106, 7
        %v4108 = vsub.s32 %v3759, %v4107
        %v4109 = vrot.slane %v3439, %v4108
        %v4110 = vlaneseq
        %v4111 = vshrl.u32 %v4110, 7
        %v4112 = vsub.s32 %v3764, %v4111
        %v4113 = vrot.slane %v3442, %v4112
        %v4114 = vsel %vm3769, %v4113, %v4109
        %v4115 = vlaneseq
        %v4116 = vshrl.u32 %v4115, 7
        %v4117 = vsub.s32 %v3771, %v4116
        %v4118 = vrot.slane %v3445, %v4117
        %v4119 = vsel %vm3776, %v4118, %v4114
        %v4120 = vlaneseq
        %v4121 = vshrl.u32 %v4120, 7
        %v4122 = vsub.s32 %v3778, %v4121
        %v4123 = vrot.slane %v3448, %v4122
        %v4124 = vsel %vm3783, %v4123, %v4119
        %v4125 = vlaneseq
        %v4126 = vshrl.u32 %v4125, 7
        %v4127 = vsub.s32 %v3785, %v4126
        %v4128 = vrot.slane %v3451, %v4127
        %v4129 = vsel %vm3790, %v4128, %v4124
        %v4130 = vlaneseq
        %v4131 = vshrl.u32 %v4130, 7
        %v4132 = vsub.s32 %v3792, %v4131
        %v4133 = vrot.slane %v3454, %v4132
        %v4134 = vsel %vm3797, %v4133, %v4129
        %v4135 = vlaneseq
        %v4136 = vshrl.u32 %v4135, 7
        %v4137 = vsub.s32 %v3799, %v4136
        %v4138 = vrot.slane %v3457, %v4137
        %v4139 = vsel %vm3804, %v4138, %v4134
        %v4140 = vlaneseq
        %v4141 = vshrl.u32 %v4140, 7
        %v4142 = vsub.s32 %v3806, %v4141
        %v4143 = vrot.slane %v3460, %v4142
        %v4144 = vsel %vm3811, %v4143, %v4139
        %v4145 = vlaneseq
        %v4146 = vshrl.u32 %v4145, 7
        %v4147 = vsub.s32 %v3813, %v4146
        %v4148 = vrot.slane %v3463, %v4147
        %v4149 = vsel %vm3818, %v4148, %v4144
        %v4150 = vlaneseq
        %v4151 = vshrl.u32 %v4150, 7
        %v4152 = vsub.s32 %v3820, %v4151
        %v4153 = vrot.slane %v3466, %v4152
        %v4154 = vsel %vm3825, %v4153, %v4149
        %v4155 = vlaneseq
        %v4156 = vshrl.u32 %v4155, 7
        %v4157 = vsub.s32 %v3827, %v4156
        %v4158 = vrot.slane %v3469, %v4157
        %v4159 = vsel %vm3832, %v4158, %v4154
        %v4160 = vlaneseq
        %v4161 = vshrl.u32 %v4160, 7
        %v4162 = vsub.s32 %v3834, %v4161
        %v4163 = vrot.slane %v3472, %v4162
        %v4164 = vsel %vm3839, %v4163, %v4159
        %v4165 = vlaneseq
        %v4166 = vshrl.u32 %v4165, 7
        %v4167 = vsub.s32 %v3841, %v4166
        %v4168 = vrot.slane %v3475, %v4167
        %v4169 = vsel %vm3846, %v4168, %v4164
        %v4170 = vlaneseq
        %v4171 = vshrl.u32 %v4170, 7
        %v4172 = vsub.s32 %v3848, %v4171
        %v4173 = vrot.slane %v3478, %v4172
        %v4174 = vsel %vm3853, %v4173, %v4169
        %v4175 = vlaneseq
        %v4176 = vshrl.u32 %v4175, 7
        %v4177 = vsub.s32 %v3855, %v4176
        %v4178 = vrot.slane %v3481, %v4177
        %v4179 = vsel %vm3860, %v4178, %v4174
        %v4180 = vlaneseq
        %v4181 = vshrl.u32 %v4180, 7
        %v4182 = vsub.s32 %v3862, %v4181
        %v4183 = vrot.slane %v3484, %v4182
        %v4184 = vsel %vm3867, %v4183, %v4179
        %v4185 = vlaneseq
        %v4186 = vshrl.u32 %v4185, 7
        %v4187 = vsub.s32 %v3759, %v4186
        %v4188 = vrot.slane %v3487, %v4187
        %v4189 = vlaneseq
        %v4190 = vshrl.u32 %v4189, 7
        %v4191 = vsub.s32 %v3764, %v4190
        %v4192 = vrot.slane %v3490, %v4191
        %v4193 = vsel %vm3769, %v4192, %v4188
        %v4194 = vlaneseq
        %v4195 = vshrl.u32 %v4194, 7
        %v4196 = vsub.s32 %v3771, %v4195
        %v4197 = vrot.slane %v3493, %v4196
        %v4198 = vsel %vm3776, %v4197, %v4193
        %v4199 = vlaneseq
        %v4200 = vshrl.u32 %v4199, 7
        %v4201 = vsub.s32 %v3778, %v4200
        %v4202 = vrot.slane %v3496, %v4201
        %v4203 = vsel %vm3783, %v4202, %v4198
        %v4204 = vlaneseq
        %v4205 = vshrl.u32 %v4204, 7
        %v4206 = vsub.s32 %v3785, %v4205
        %v4207 = vrot.slane %v3499, %v4206
        %v4208 = vsel %vm3790, %v4207, %v4203
        %v4209 = vlaneseq
        %v4210 = vshrl.u32 %v4209, 7
        %v4211 = vsub.s32 %v3792, %v4210
        %v4212 = vrot.slane %v3502, %v4211
        %v4213 = vsel %vm3797, %v4212, %v4208
        %v4214 = vlaneseq
        %v4215 = vshrl.u32 %v4214, 7
        %v4216 = vsub.s32 %v3799, %v4215
        %v4217 = vrot.slane %v3505, %v4216
        %v4218 = vsel %vm3804, %v4217, %v4213
        %v4219 = vlaneseq
        %v4220 = vshrl.u32 %v4219, 7
        %v4221 = vsub.s32 %v3806, %v4220
        %v4222 = vrot.slane %v3508, %v4221
        %v4223 = vsel %vm3811, %v4222, %v4218
        %v4224 = vlaneseq
        %v4225 = vshrl.u32 %v4224, 7
        %v4226 = vsub.s32 %v3813, %v4225
        %v4227 = vrot.slane %v3511, %v4226
        %v4228 = vsel %vm3818, %v4227, %v4223
        %v4229 = vlaneseq
        %v4230 = vshrl.u32 %v4229, 7
        %v4231 = vsub.s32 %v3820, %v4230
        %v4232 = vrot.slane %v3514, %v4231
        %v4233 = vsel %vm3825, %v4232, %v4228
        %v4234 = vlaneseq
        %v4235 = vshrl.u32 %v4234, 7
        %v4236 = vsub.s32 %v3827, %v4235
        %v4237 = vrot.slane %v3517, %v4236
        %v4238 = vsel %vm3832, %v4237, %v4233
        %v4239 = vlaneseq
        %v4240 = vshrl.u32 %v4239, 7
        %v4241 = vsub.s32 %v3834, %v4240
        %v4242 = vrot.slane %v3520, %v4241
        %v4243 = vsel %vm3839, %v4242, %v4238
        %v4244 = vlaneseq
        %v4245 = vshrl.u32 %v4244, 7
        %v4246 = vsub.s32 %v3841, %v4245
        %v4247 = vrot.slane %v3523, %v4246
        %v4248 = vsel %vm3846, %v4247, %v4243
        %v4249 = vlaneseq
        %v4250 = vshrl.u32 %v4249, 7
        %v4251 = vsub.s32 %v3848, %v4250
        %v4252 = vrot.slane %v3526, %v4251
        %v4253 = vsel %vm3853, %v4252, %v4248
        %v4254 = vlaneseq
        %v4255 = vshrl.u32 %v4254, 7
        %v4256 = vsub.s32 %v3855, %v4255
        %v4257 = vrot.slane %v3529, %v4256
        %v4258 = vsel %vm3860, %v4257, %v4253
        %v4259 = vlaneseq
        %v4260 = vshrl.u32 %v4259, 7
        %v4261 = vsub.s32 %v3862, %v4260
        %v4262 = vrot.slane %v3532, %v4261
        %v4263 = vsel %vm3867, %v4262, %v4258
        %v4264 = vlaneseq
        %v4265 = vshrl.u32 %v4264, 7
        %v4266 = vsub.s32 %v3759, %v4265
        %v4267 = vrot.slane %v3535, %v4266
        %v4268 = vlaneseq
        %v4269 = vshrl.u32 %v4268, 7
        %v4270 = vsub.s32 %v3764, %v4269
        %v4271 = vrot.slane %v3538, %v4270
        %v4272 = vsel %vm3769, %v4271, %v4267
        %v4273 = vlaneseq
        %v4274 = vshrl.u32 %v4273, 7
        %v4275 = vsub.s32 %v3771, %v4274
        %v4276 = vrot.slane %v3541, %v4275
        %v4277 = vsel %vm3776, %v4276, %v4272
        %v4278 = vlaneseq
        %v4279 = vshrl.u32 %v4278, 7
        %v4280 = vsub.s32 %v3778, %v4279
        %v4281 = vrot.slane %v3544, %v4280
        %v4282 = vsel %vm3783, %v4281, %v4277
        %v4283 = vlaneseq
        %v4284 = vshrl.u32 %v4283, 7
        %v4285 = vsub.s32 %v3785, %v4284
        %v4286 = vrot.slane %v3547, %v4285
        %v4287 = vsel %vm3790, %v4286, %v4282
        %v4288 = vlaneseq
        %v4289 = vshrl.u32 %v4288, 7
        %v4290 = vsub.s32 %v3792, %v4289
        %v4291 = vrot.slane %v3550, %v4290
        %v4292 = vsel %vm3797, %v4291, %v4287
        %v4293 = vlaneseq
        %v4294 = vshrl.u32 %v4293, 7
        %v4295 = vsub.s32 %v3799, %v4294
        %v4296 = vrot.slane %v3553, %v4295
        %v4297 = vsel %vm3804, %v4296, %v4292
        %v4298 = vlaneseq
        %v4299 = vshrl.u32 %v4298, 7
        %v4300 = vsub.s32 %v3806, %v4299
        %v4301 = vrot.slane %v3556, %v4300
        %v4302 = vsel %vm3811, %v4301, %v4297
        %v4303 = vlaneseq
        %v4304 = vshrl.u32 %v4303, 7
        %v4305 = vsub.s32 %v3813, %v4304
        %v4306 = vrot.slane %v3559, %v4305
        %v4307 = vsel %vm3818, %v4306, %v4302
        %v4308 = vlaneseq
        %v4309 = vshrl.u32 %v4308, 7
        %v4310 = vsub.s32 %v3820, %v4309
        %v4311 = vrot.slane %v3562, %v4310
        %v4312 = vsel %vm3825, %v4311, %v4307
        %v4313 = vlaneseq
        %v4314 = vshrl.u32 %v4313, 7
        %v4315 = vsub.s32 %v3827, %v4314
        %v4316 = vrot.slane %v3565, %v4315
        %v4317 = vsel %vm3832, %v4316, %v4312
        %v4318 = vlaneseq
        %v4319 = vshrl.u32 %v4318, 7
        %v4320 = vsub.s32 %v3834, %v4319
        %v4321 = vrot.slane %v3568, %v4320
        %v4322 = vsel %vm3839, %v4321, %v4317
        %v4323 = vlaneseq
        %v4324 = vshrl.u32 %v4323, 7
        %v4325 = vsub.s32 %v3841, %v4324
        %v4326 = vrot.slane %v3571, %v4325
        %v4327 = vsel %vm3846, %v4326, %v4322
        %v4328 = vlaneseq
        %v4329 = vshrl.u32 %v4328, 7
        %v4330 = vsub.s32 %v3848, %v4329
        %v4331 = vrot.slane %v3574, %v4330
        %v4332 = vsel %vm3853, %v4331, %v4327
        %v4333 = vlaneseq
        %v4334 = vshrl.u32 %v4333, 7
        %v4335 = vsub.s32 %v3855, %v4334
        %v4336 = vrot.slane %v3577, %v4335
        %v4337 = vsel %vm3860, %v4336, %v4332
        %v4338 = vlaneseq
        %v4339 = vshrl.u32 %v4338, 7
        %v4340 = vsub.s32 %v3862, %v4339
        %v4341 = vrot.slane %v3580, %v4340
        %v4342 = vsel %vm3867, %v4341, %v4337
        %v4343 = vlaneseq
        %v4344 = vshrl.u32 %v4343, 7
        %v4345 = vsub.s32 %v3759, %v4344
        %v4346 = vrot.slane %v3583, %v4345
        %v4347 = vlaneseq
        %v4348 = vshrl.u32 %v4347, 7
        %v4349 = vsub.s32 %v3764, %v4348
        %v4350 = vrot.slane %v3586, %v4349
        %v4351 = vsel %vm3769, %v4350, %v4346
        %v4352 = vlaneseq
        %v4353 = vshrl.u32 %v4352, 7
        %v4354 = vsub.s32 %v3771, %v4353
        %v4355 = vrot.slane %v3589, %v4354
        %v4356 = vsel %vm3776, %v4355, %v4351
        %v4357 = vlaneseq
        %v4358 = vshrl.u32 %v4357, 7
        %v4359 = vsub.s32 %v3778, %v4358
        %v4360 = vrot.slane %v3592, %v4359
        %v4361 = vsel %vm3783, %v4360, %v4356
        %v4362 = vlaneseq
        %v4363 = vshrl.u32 %v4362, 7
        %v4364 = vsub.s32 %v3785, %v4363
        %v4365 = vrot.slane %v3595, %v4364
        %v4366 = vsel %vm3790, %v4365, %v4361
        %v4367 = vlaneseq
        %v4368 = vshrl.u32 %v4367, 7
        %v4369 = vsub.s32 %v3792, %v4368
        %v4370 = vrot.slane %v3598, %v4369
        %v4371 = vsel %vm3797, %v4370, %v4366
        %v4372 = vlaneseq
        %v4373 = vshrl.u32 %v4372, 7
        %v4374 = vsub.s32 %v3799, %v4373
        %v4375 = vrot.slane %v3601, %v4374
        %v4376 = vsel %vm3804, %v4375, %v4371
        %v4377 = vlaneseq
        %v4378 = vshrl.u32 %v4377, 7
        %v4379 = vsub.s32 %v3806, %v4378
        %v4380 = vrot.slane %v3604, %v4379
        %v4381 = vsel %vm3811, %v4380, %v4376
        %v4382 = vlaneseq
        %v4383 = vshrl.u32 %v4382, 7
        %v4384 = vsub.s32 %v3813, %v4383
        %v4385 = vrot.slane %v3607, %v4384
        %v4386 = vsel %vm3818, %v4385, %v4381
        %v4387 = vlaneseq
        %v4388 = vshrl.u32 %v4387, 7
        %v4389 = vsub.s32 %v3820, %v4388
        %v4390 = vrot.slane %v3610, %v4389
        %v4391 = vsel %vm3825, %v4390, %v4386
        %v4392 = vlaneseq
        %v4393 = vshrl.u32 %v4392, 7
        %v4394 = vsub.s32 %v3827, %v4393
        %v4395 = vrot.slane %v3613, %v4394
        %v4396 = vsel %vm3832, %v4395, %v4391
        %v4397 = vlaneseq
        %v4398 = vshrl.u32 %v4397, 7
        %v4399 = vsub.s32 %v3834, %v4398
        %v4400 = vrot.slane %v3616, %v4399
        %v4401 = vsel %vm3839, %v4400, %v4396
        %v4402 = vlaneseq
        %v4403 = vshrl.u32 %v4402, 7
        %v4404 = vsub.s32 %v3841, %v4403
        %v4405 = vrot.slane %v3619, %v4404
        %v4406 = vsel %vm3846, %v4405, %v4401
        %v4407 = vlaneseq
        %v4408 = vshrl.u32 %v4407, 7
        %v4409 = vsub.s32 %v3848, %v4408
        %v4410 = vrot.slane %v3622, %v4409
        %v4411 = vsel %vm3853, %v4410, %v4406
        %v4412 = vlaneseq
        %v4413 = vshrl.u32 %v4412, 7
        %v4414 = vsub.s32 %v3855, %v4413
        %v4415 = vrot.slane %v3625, %v4414
        %v4416 = vsel %vm3860, %v4415, %v4411
        %v4417 = vlaneseq
        %v4418 = vshrl.u32 %v4417, 7
        %v4419 = vsub.s32 %v3862, %v4418
        %v4420 = vrot.slane %v3628, %v4419
        %v4421 = vsel %vm3867, %v4420, %v4416
        %vm4422 = vcmask 1041409
        %v4423 = vsel %vm4422, %v3947, %v3868
        %vm4424 = vcmask 1042434
        %v4425 = vsel %vm4424, %v4026, %v4423
        %vm4426 = vcmask 1043459
        %v4427 = vsel %vm4426, %v4105, %v4425
        %vm4428 = vcmask 1044484
        %v4429 = vsel %vm4428, %v4184, %v4427
        %vm4430 = vcmask 1045509
        %v4431 = vsel %vm4430, %v4263, %v4429
        %vm4432 = vcmask 1046534
        %v4433 = vsel %vm4432, %v4342, %v4431
        %vm4434 = vcmask 1047559
        %v4435 = vsel %vm4434, %v4421, %v4433
        %v4437 = vsel %vm3244, 0.0, %v4435
        %v4438 = vld [vmem:[#allocation5 + $0x82] ss:$0 sm:$0xff]
        %v4439 = vmul.f32 %v4437, %v4438
        %v4440 = vadd.s32 %v3758, 2
        %v4441 = vlaneseq
        %v4442 = vshrl.u32 %v4441, 7
        %v4443 = vsub.s32 %v4440, %v4442
        %v4444 = vrot.slane %v3247, %v4443
        %v4445 = vadd.s32 %v3758, 4294967290
        %v4446 = vlaneseq
        %v4447 = vshrl.u32 %v4446, 7
        %v4448 = vsub.s32 %v4445, %v4447
        %v4449 = vrot.slane %v3250, %v4448
        %vm4450 = vcmask 113712
        %v4451 = vsel %vm4450, %v4449, %v4444
        %v4452 = vadd.s32 %v3758, 4294967282
        %v4453 = vlaneseq
        %v4454 = vshrl.u32 %v4453, 7
        %v4455 = vsub.s32 %v4452, %v4454
        %v4456 = vrot.slane %v3253, %v4455
        %vm4457 = vcmask 179312
        %v4458 = vsel %vm4457, %v4456, %v4451
        %v4459 = vadd.s32 %v3758, 4294967274
        %v4460 = vlaneseq
        %v4461 = vshrl.u32 %v4460, 7
        %v4462 = vsub.s32 %v4459, %v4461
        %v4463 = vrot.slane %v3256, %v4462
        %vm4464 = vcmask 244912
        %v4465 = vsel %vm4464, %v4463, %v4458
        %v4466 = vadd.s32 %v3758, 4294967266
        %v4467 = vlaneseq
        %v4468 = vshrl.u32 %v4467, 7
        %v4469 = vsub.s32 %v4466, %v4468
        %v4470 = vrot.slane %v3259, %v4469
        %vm4471 = vcmask 310512
        %v4472 = vsel %vm4471, %v4470, %v4465
        %v4473 = vadd.s32 %v3758, 4294967258
        %v4474 = vlaneseq
        %v4475 = vshrl.u32 %v4474, 7
        %v4476 = vsub.s32 %v4473, %v4475
        %v4477 = vrot.slane %v3262, %v4476
        %vm4478 = vcmask 376112
        %v4479 = vsel %vm4478, %v4477, %v4472
        %v4480 = vadd.s32 %v3758, 4294967250
        %v4481 = vlaneseq
        %v4482 = vshrl.u32 %v4481, 7
        %v4483 = vsub.s32 %v4480, %v4482
        %v4484 = vrot.slane %v3265, %v4483
        %vm4485 = vcmask 441712
        %v4486 = vsel %vm4485, %v4484, %v4479
        %v4487 = vadd.s32 %v3758, 4294967242
        %v4488 = vlaneseq
        %v4489 = vshrl.u32 %v4488, 7
        %v4490 = vsub.s32 %v4487, %v4489
        %v4491 = vrot.slane %v3268, %v4490
        %vm4492 = vcmask 507312
        %v4493 = vsel %vm4492, %v4491, %v4486
        %v4494 = vadd.s32 %v3758, 4294967234
        %v4495 = vlaneseq
        %v4496 = vshrl.u32 %v4495, 7
        %v4497 = vsub.s32 %v4494, %v4496
        %v4498 = vrot.slane %v3271, %v4497
        %vm4499 = vcmask 572912
        %v4500 = vsel %vm4499, %v4498, %v4493
        %v4501 = vadd.s32 %v3758, 4294967226
        %v4502 = vlaneseq
        %v4503 = vshrl.u32 %v4502, 7
        %v4504 = vsub.s32 %v4501, %v4503
        %v4505 = vrot.slane %v3274, %v4504
        %vm4506 = vcmask 638512
        %v4507 = vsel %vm4506, %v4505, %v4500
        %v4508 = vadd.s32 %v3758, 4294967218
        %v4509 = vlaneseq
        %v4510 = vshrl.u32 %v4509, 7
        %v4511 = vsub.s32 %v4508, %v4510
        %v4512 = vrot.slane %v3277, %v4511
        %vm4513 = vcmask 704112
        %v4514 = vsel %vm4513, %v4512, %v4507
        %v4515 = vadd.s32 %v3758, 4294967210
        %v4516 = vlaneseq
        %v4517 = vshrl.u32 %v4516, 7
        %v4518 = vsub.s32 %v4515, %v4517
        %v4519 = vrot.slane %v3280, %v4518
        %vm4520 = vcmask 769712
        %v4521 = vsel %vm4520, %v4519, %v4514
        %v4522 = vadd.s32 %v3758, 4294967202
        %v4523 = vlaneseq
        %v4524 = vshrl.u32 %v4523, 7
        %v4525 = vsub.s32 %v4522, %v4524
        %v4526 = vrot.slane %v3283, %v4525
        %vm4527 = vcmask 835312
        %v4528 = vsel %vm4527, %v4526, %v4521
        %v4529 = vadd.s32 %v3758, 4294967194
        %v4530 = vlaneseq
        %v4531 = vshrl.u32 %v4530, 7
        %v4532 = vsub.s32 %v4529, %v4531
        %v4533 = vrot.slane %v3286, %v4532
        %vm4534 = vcmask 900912
        %v4535 = vsel %vm4534, %v4533, %v4528
        %v4536 = vadd.s32 %v3758, 4294967186
        %v4537 = vlaneseq
        %v4538 = vshrl.u32 %v4537, 7
        %v4539 = vsub.s32 %v4536, %v4538
        %v4540 = vrot.slane %v3289, %v4539
        %vm4541 = vcmask 966512
        %v4542 = vsel %vm4541, %v4540, %v4535
        %v4543 = vadd.s32 %v3758, 4294967178
        %v4544 = vlaneseq
        %v4545 = vshrl.u32 %v4544, 7
        %v4546 = vsub.s32 %v4543, %v4545
        %v4547 = vrot.slane %v3292, %v4546
        %vm4548 = vcmask 1032112
        %v4549 = vsel %vm4548, %v4547, %v4542
        %v4550 = vlaneseq
        %v4551 = vshrl.u32 %v4550, 7
        %v4552 = vsub.s32 %v4440, %v4551
        %v4553 = vrot.slane %v3295, %v4552
        %v4554 = vlaneseq
        %v4555 = vshrl.u32 %v4554, 7
        %v4556 = vsub.s32 %v4445, %v4555
        %v4557 = vrot.slane %v3298, %v4556
        %v4558 = vsel %vm4450, %v4557, %v4553
        %v4559 = vlaneseq
        %v4560 = vshrl.u32 %v4559, 7
        %v4561 = vsub.s32 %v4452, %v4560
        %v4562 = vrot.slane %v3301, %v4561
        %v4563 = vsel %vm4457, %v4562, %v4558
        %v4564 = vlaneseq
        %v4565 = vshrl.u32 %v4564, 7
        %v4566 = vsub.s32 %v4459, %v4565
        %v4567 = vrot.slane %v3304, %v4566
        %v4568 = vsel %vm4464, %v4567, %v4563
        %v4569 = vlaneseq
        %v4570 = vshrl.u32 %v4569, 7
        %v4571 = vsub.s32 %v4466, %v4570
        %v4572 = vrot.slane %v3307, %v4571
        %v4573 = vsel %vm4471, %v4572, %v4568
        %v4574 = vlaneseq
        %v4575 = vshrl.u32 %v4574, 7
        %v4576 = vsub.s32 %v4473, %v4575
        %v4577 = vrot.slane %v3310, %v4576
        %v4578 = vsel %vm4478, %v4577, %v4573
        %v4579 = vlaneseq
        %v4580 = vshrl.u32 %v4579, 7
        %v4581 = vsub.s32 %v4480, %v4580
        %v4582 = vrot.slane %v3313, %v4581
        %v4583 = vsel %vm4485, %v4582, %v4578
        %v4584 = vlaneseq
        %v4585 = vshrl.u32 %v4584, 7
        %v4586 = vsub.s32 %v4487, %v4585
        %v4587 = vrot.slane %v3316, %v4586
        %v4588 = vsel %vm4492, %v4587, %v4583
        %v4589 = vlaneseq
        %v4590 = vshrl.u32 %v4589, 7
        %v4591 = vsub.s32 %v4494, %v4590
        %v4592 = vrot.slane %v3319, %v4591
        %v4593 = vsel %vm4499, %v4592, %v4588
        %v4594 = vlaneseq
        %v4595 = vshrl.u32 %v4594, 7
        %v4596 = vsub.s32 %v4501, %v4595
        %v4597 = vrot.slane %v3322, %v4596
        %v4598 = vsel %vm4506, %v4597, %v4593
        %v4599 = vlaneseq
        %v4600 = vshrl.u32 %v4599, 7
        %v4601 = vsub.s32 %v4508, %v4600
        %v4602 = vrot.slane %v3325, %v4601
        %v4603 = vsel %vm4513, %v4602, %v4598
        %v4604 = vlaneseq
        %v4605 = vshrl.u32 %v4604, 7
        %v4606 = vsub.s32 %v4515, %v4605
        %v4607 = vrot.slane %v3328, %v4606
        %v4608 = vsel %vm4520, %v4607, %v4603
        %v4609 = vlaneseq
        %v4610 = vshrl.u32 %v4609, 7
        %v4611 = vsub.s32 %v4522, %v4610
        %v4612 = vrot.slane %v3331, %v4611
        %v4613 = vsel %vm4527, %v4612, %v4608
        %v4614 = vlaneseq
        %v4615 = vshrl.u32 %v4614, 7
        %v4616 = vsub.s32 %v4529, %v4615
        %v4617 = vrot.slane %v3334, %v4616
        %v4618 = vsel %vm4534, %v4617, %v4613
        %v4619 = vlaneseq
        %v4620 = vshrl.u32 %v4619, 7
        %v4621 = vsub.s32 %v4536, %v4620
        %v4622 = vrot.slane %v3337, %v4621
        %v4623 = vsel %vm4541, %v4622, %v4618
        %v4624 = vlaneseq
        %v4625 = vshrl.u32 %v4624, 7
        %v4626 = vsub.s32 %v4543, %v4625
        %v4627 = vrot.slane %v3340, %v4626
        %v4628 = vsel %vm4548, %v4627, %v4623
        %v4629 = vlaneseq
        %v4630 = vshrl.u32 %v4629, 7
        %v4631 = vsub.s32 %v4440, %v4630
        %v4632 = vrot.slane %v3343, %v4631
        %v4633 = vlaneseq
        %v4634 = vshrl.u32 %v4633, 7
        %v4635 = vsub.s32 %v4445, %v4634
        %v4636 = vrot.slane %v3346, %v4635
        %v4637 = vsel %vm4450, %v4636, %v4632
        %v4638 = vlaneseq
        %v4639 = vshrl.u32 %v4638, 7
        %v4640 = vsub.s32 %v4452, %v4639
        %v4641 = vrot.slane %v3349, %v4640
        %v4642 = vsel %vm4457, %v4641, %v4637
        %v4643 = vlaneseq
        %v4644 = vshrl.u32 %v4643, 7
        %v4645 = vsub.s32 %v4459, %v4644
        %v4646 = vrot.slane %v3352, %v4645
        %v4647 = vsel %vm4464, %v4646, %v4642
        %v4648 = vlaneseq
        %v4649 = vshrl.u32 %v4648, 7
        %v4650 = vsub.s32 %v4466, %v4649
        %v4651 = vrot.slane %v3355, %v4650
        %v4652 = vsel %vm4471, %v4651, %v4647
        %v4653 = vlaneseq
        %v4654 = vshrl.u32 %v4653, 7
        %v4655 = vsub.s32 %v4473, %v4654
        %v4656 = vrot.slane %v3358, %v4655
        %v4657 = vsel %vm4478, %v4656, %v4652
        %v4658 = vlaneseq
        %v4659 = vshrl.u32 %v4658, 7
        %v4660 = vsub.s32 %v4480, %v4659
        %v4661 = vrot.slane %v3361, %v4660
        %v4662 = vsel %vm4485, %v4661, %v4657
        %v4663 = vlaneseq
        %v4664 = vshrl.u32 %v4663, 7
        %v4665 = vsub.s32 %v4487, %v4664
        %v4666 = vrot.slane %v3364, %v4665
        %v4667 = vsel %vm4492, %v4666, %v4662
        %v4668 = vlaneseq
        %v4669 = vshrl.u32 %v4668, 7
        %v4670 = vsub.s32 %v4494, %v4669
        %v4671 = vrot.slane %v3367, %v4670
        %v4672 = vsel %vm4499, %v4671, %v4667
        %v4673 = vlaneseq
        %v4674 = vshrl.u32 %v4673, 7
        %v4675 = vsub.s32 %v4501, %v4674
        %v4676 = vrot.slane %v3370, %v4675
        %v4677 = vsel %vm4506, %v4676, %v4672
        %v4678 = vlaneseq
        %v4679 = vshrl.u32 %v4678, 7
        %v4680 = vsub.s32 %v4508, %v4679
        %v4681 = vrot.slane %v3373, %v4680
        %v4682 = vsel %vm4513, %v4681, %v4677
        %v4683 = vlaneseq
        %v4684 = vshrl.u32 %v4683, 7
        %v4685 = vsub.s32 %v4515, %v4684
        %v4686 = vrot.slane %v3376, %v4685
        %v4687 = vsel %vm4520, %v4686, %v4682
        %v4688 = vlaneseq
        %v4689 = vshrl.u32 %v4688, 7
        %v4690 = vsub.s32 %v4522, %v4689
        %v4691 = vrot.slane %v3379, %v4690
        %v4692 = vsel %vm4527, %v4691, %v4687
        %v4693 = vlaneseq
        %v4694 = vshrl.u32 %v4693, 7
        %v4695 = vsub.s32 %v4529, %v4694
        %v4696 = vrot.slane %v3382, %v4695
        %v4697 = vsel %vm4534, %v4696, %v4692
        %v4698 = vlaneseq
        %v4699 = vshrl.u32 %v4698, 7
        %v4700 = vsub.s32 %v4536, %v4699
        %v4701 = vrot.slane %v3385, %v4700
        %v4702 = vsel %vm4541, %v4701, %v4697
        %v4703 = vlaneseq
        %v4704 = vshrl.u32 %v4703, 7
        %v4705 = vsub.s32 %v4543, %v4704
        %v4706 = vrot.slane %v3388, %v4705
        %v4707 = vsel %vm4548, %v4706, %v4702
        %v4708 = vlaneseq
        %v4709 = vshrl.u32 %v4708, 7
        %v4710 = vsub.s32 %v4440, %v4709
        %v4711 = vrot.slane %v3391, %v4710
        %v4712 = vlaneseq
        %v4713 = vshrl.u32 %v4712, 7
        %v4714 = vsub.s32 %v4445, %v4713
        %v4715 = vrot.slane %v3394, %v4714
        %v4716 = vsel %vm4450, %v4715, %v4711
        %v4717 = vlaneseq
        %v4718 = vshrl.u32 %v4717, 7
        %v4719 = vsub.s32 %v4452, %v4718
        %v4720 = vrot.slane %v3397, %v4719
        %v4721 = vsel %vm4457, %v4720, %v4716
        %v4722 = vlaneseq
        %v4723 = vshrl.u32 %v4722, 7
        %v4724 = vsub.s32 %v4459, %v4723
        %v4725 = vrot.slane %v3400, %v4724
        %v4726 = vsel %vm4464, %v4725, %v4721
        %v4727 = vlaneseq
        %v4728 = vshrl.u32 %v4727, 7
        %v4729 = vsub.s32 %v4466, %v4728
        %v4730 = vrot.slane %v3403, %v4729
        %v4731 = vsel %vm4471, %v4730, %v4726
        %v4732 = vlaneseq
        %v4733 = vshrl.u32 %v4732, 7
        %v4734 = vsub.s32 %v4473, %v4733
        %v4735 = vrot.slane %v3406, %v4734
        %v4736 = vsel %vm4478, %v4735, %v4731
        %v4737 = vlaneseq
        %v4738 = vshrl.u32 %v4737, 7
        %v4739 = vsub.s32 %v4480, %v4738
        %v4740 = vrot.slane %v3409, %v4739
        %v4741 = vsel %vm4485, %v4740, %v4736
        %v4742 = vlaneseq
        %v4743 = vshrl.u32 %v4742, 7
        %v4744 = vsub.s32 %v4487, %v4743
        %v4745 = vrot.slane %v3412, %v4744
        %v4746 = vsel %vm4492, %v4745, %v4741
        %v4747 = vlaneseq
        %v4748 = vshrl.u32 %v4747, 7
        %v4749 = vsub.s32 %v4494, %v4748
        %v4750 = vrot.slane %v3415, %v4749
        %v4751 = vsel %vm4499, %v4750, %v4746
        %v4752 = vlaneseq
        %v4753 = vshrl.u32 %v4752, 7
        %v4754 = vsub.s32 %v4501, %v4753
        %v4755 = vrot.slane %v3418, %v4754
        %v4756 = vsel %vm4506, %v4755, %v4751
        %v4757 = vlaneseq
        %v4758 = vshrl.u32 %v4757, 7
        %v4759 = vsub.s32 %v4508, %v4758
        %v4760 = vrot.slane %v3421, %v4759
        %v4761 = vsel %vm4513, %v4760, %v4756
        %v4762 = vlaneseq
        %v4763 = vshrl.u32 %v4762, 7
        %v4764 = vsub.s32 %v4515, %v4763
        %v4765 = vrot.slane %v3424, %v4764
        %v4766 = vsel %vm4520, %v4765, %v4761
        %v4767 = vlaneseq
        %v4768 = vshrl.u32 %v4767, 7
        %v4769 = vsub.s32 %v4522, %v4768
        %v4770 = vrot.slane %v3427, %v4769
        %v4771 = vsel %vm4527, %v4770, %v4766
        %v4772 = vlaneseq
        %v4773 = vshrl.u32 %v4772, 7
        %v4774 = vsub.s32 %v4529, %v4773
        %v4775 = vrot.slane %v3430, %v4774
        %v4776 = vsel %vm4534, %v4775, %v4771
        %v4777 = vlaneseq
        %v4778 = vshrl.u32 %v4777, 7
        %v4779 = vsub.s32 %v4536, %v4778
        %v4780 = vrot.slane %v3433, %v4779
        %v4781 = vsel %vm4541, %v4780, %v4776
        %v4782 = vlaneseq
        %v4783 = vshrl.u32 %v4782, 7
        %v4784 = vsub.s32 %v4543, %v4783
        %v4785 = vrot.slane %v3436, %v4784
        %v4786 = vsel %vm4548, %v4785, %v4781
        %v4787 = vlaneseq
        %v4788 = vshrl.u32 %v4787, 7
        %v4789 = vsub.s32 %v4440, %v4788
        %v4790 = vrot.slane %v3439, %v4789
        %v4791 = vlaneseq
        %v4792 = vshrl.u32 %v4791, 7
        %v4793 = vsub.s32 %v4445, %v4792
        %v4794 = vrot.slane %v3442, %v4793
        %v4795 = vsel %vm4450, %v4794, %v4790
        %v4796 = vlaneseq
        %v4797 = vshrl.u32 %v4796, 7
        %v4798 = vsub.s32 %v4452, %v4797
        %v4799 = vrot.slane %v3445, %v4798
        %v4800 = vsel %vm4457, %v4799, %v4795
        %v4801 = vlaneseq
        %v4802 = vshrl.u32 %v4801, 7
        %v4803 = vsub.s32 %v4459, %v4802
        %v4804 = vrot.slane %v3448, %v4803
        %v4805 = vsel %vm4464, %v4804, %v4800
        %v4806 = vlaneseq
        %v4807 = vshrl.u32 %v4806, 7
        %v4808 = vsub.s32 %v4466, %v4807
        %v4809 = vrot.slane %v3451, %v4808
        %v4810 = vsel %vm4471, %v4809, %v4805
        %v4811 = vlaneseq
        %v4812 = vshrl.u32 %v4811, 7
        %v4813 = vsub.s32 %v4473, %v4812
        %v4814 = vrot.slane %v3454, %v4813
        %v4815 = vsel %vm4478, %v4814, %v4810
        %v4816 = vlaneseq
        %v4817 = vshrl.u32 %v4816, 7
        %v4818 = vsub.s32 %v4480, %v4817
        %v4819 = vrot.slane %v3457, %v4818
        %v4820 = vsel %vm4485, %v4819, %v4815
        %v4821 = vlaneseq
        %v4822 = vshrl.u32 %v4821, 7
        %v4823 = vsub.s32 %v4487, %v4822
        %v4824 = vrot.slane %v3460, %v4823
        %v4825 = vsel %vm4492, %v4824, %v4820
        %v4826 = vlaneseq
        %v4827 = vshrl.u32 %v4826, 7
        %v4828 = vsub.s32 %v4494, %v4827
        %v4829 = vrot.slane %v3463, %v4828
        %v4830 = vsel %vm4499, %v4829, %v4825
        %v4831 = vlaneseq
        %v4832 = vshrl.u32 %v4831, 7
        %v4833 = vsub.s32 %v4501, %v4832
        %v4834 = vrot.slane %v3466, %v4833
        %v4835 = vsel %vm4506, %v4834, %v4830
        %v4836 = vlaneseq
        %v4837 = vshrl.u32 %v4836, 7
        %v4838 = vsub.s32 %v4508, %v4837
        %v4839 = vrot.slane %v3469, %v4838
        %v4840 = vsel %vm4513, %v4839, %v4835
        %v4841 = vlaneseq
        %v4842 = vshrl.u32 %v4841, 7
        %v4843 = vsub.s32 %v4515, %v4842
        %v4844 = vrot.slane %v3472, %v4843
        %v4845 = vsel %vm4520, %v4844, %v4840
        %v4846 = vlaneseq
        %v4847 = vshrl.u32 %v4846, 7
        %v4848 = vsub.s32 %v4522, %v4847
        %v4849 = vrot.slane %v3475, %v4848
        %v4850 = vsel %vm4527, %v4849, %v4845
        %v4851 = vlaneseq
        %v4852 = vshrl.u32 %v4851, 7
        %v4853 = vsub.s32 %v4529, %v4852
        %v4854 = vrot.slane %v3478, %v4853
        %v4855 = vsel %vm4534, %v4854, %v4850
        %v4856 = vlaneseq
        %v4857 = vshrl.u32 %v4856, 7
        %v4858 = vsub.s32 %v4536, %v4857
        %v4859 = vrot.slane %v3481, %v4858
        %v4860 = vsel %vm4541, %v4859, %v4855
        %v4861 = vlaneseq
        %v4862 = vshrl.u32 %v4861, 7
        %v4863 = vsub.s32 %v4543, %v4862
        %v4864 = vrot.slane %v3484, %v4863
        %v4865 = vsel %vm4548, %v4864, %v4860
        %v4866 = vlaneseq
        %v4867 = vshrl.u32 %v4866, 7
        %v4868 = vsub.s32 %v4440, %v4867
        %v4869 = vrot.slane %v3487, %v4868
        %v4870 = vlaneseq
        %v4871 = vshrl.u32 %v4870, 7
        %v4872 = vsub.s32 %v4445, %v4871
        %v4873 = vrot.slane %v3490, %v4872
        %v4874 = vsel %vm4450, %v4873, %v4869
        %v4875 = vlaneseq
        %v4876 = vshrl.u32 %v4875, 7
        %v4877 = vsub.s32 %v4452, %v4876
        %v4878 = vrot.slane %v3493, %v4877
        %v4879 = vsel %vm4457, %v4878, %v4874
        %v4880 = vlaneseq
        %v4881 = vshrl.u32 %v4880, 7
        %v4882 = vsub.s32 %v4459, %v4881
        %v4883 = vrot.slane %v3496, %v4882
        %v4884 = vsel %vm4464, %v4883, %v4879
        %v4885 = vlaneseq
        %v4886 = vshrl.u32 %v4885, 7
        %v4887 = vsub.s32 %v4466, %v4886
        %v4888 = vrot.slane %v3499, %v4887
        %v4889 = vsel %vm4471, %v4888, %v4884
        %v4890 = vlaneseq
        %v4891 = vshrl.u32 %v4890, 7
        %v4892 = vsub.s32 %v4473, %v4891
        %v4893 = vrot.slane %v3502, %v4892
        %v4894 = vsel %vm4478, %v4893, %v4889
        %v4895 = vlaneseq
        %v4896 = vshrl.u32 %v4895, 7
        %v4897 = vsub.s32 %v4480, %v4896
        %v4898 = vrot.slane %v3505, %v4897
        %v4899 = vsel %vm4485, %v4898, %v4894
        %v4900 = vlaneseq
        %v4901 = vshrl.u32 %v4900, 7
        %v4902 = vsub.s32 %v4487, %v4901
        %v4903 = vrot.slane %v3508, %v4902
        %v4904 = vsel %vm4492, %v4903, %v4899
        %v4905 = vlaneseq
        %v4906 = vshrl.u32 %v4905, 7
        %v4907 = vsub.s32 %v4494, %v4906
        %v4908 = vrot.slane %v3511, %v4907
        %v4909 = vsel %vm4499, %v4908, %v4904
        %v4910 = vlaneseq
        %v4911 = vshrl.u32 %v4910, 7
        %v4912 = vsub.s32 %v4501, %v4911
        %v4913 = vrot.slane %v3514, %v4912
        %v4914 = vsel %vm4506, %v4913, %v4909
        %v4915 = vlaneseq
        %v4916 = vshrl.u32 %v4915, 7
        %v4917 = vsub.s32 %v4508, %v4916
        %v4918 = vrot.slane %v3517, %v4917
        %v4919 = vsel %vm4513, %v4918, %v4914
        %v4920 = vlaneseq
        %v4921 = vshrl.u32 %v4920, 7
        %v4922 = vsub.s32 %v4515, %v4921
        %v4923 = vrot.slane %v3520, %v4922
        %v4924 = vsel %vm4520, %v4923, %v4919
        %v4925 = vlaneseq
        %v4926 = vshrl.u32 %v4925, 7
        %v4927 = vsub.s32 %v4522, %v4926
        %v4928 = vrot.slane %v3523, %v4927
        %v4929 = vsel %vm4527, %v4928, %v4924
        %v4930 = vlaneseq
        %v4931 = vshrl.u32 %v4930, 7
        %v4932 = vsub.s32 %v4529, %v4931
        %v4933 = vrot.slane %v3526, %v4932
        %v4934 = vsel %vm4534, %v4933, %v4929
        %v4935 = vlaneseq
        %v4936 = vshrl.u32 %v4935, 7
        %v4937 = vsub.s32 %v4536, %v4936
        %v4938 = vrot.slane %v3529, %v4937
        %v4939 = vsel %vm4541, %v4938, %v4934
        %v4940 = vlaneseq
        %v4941 = vshrl.u32 %v4940, 7
        %v4942 = vsub.s32 %v4543, %v4941
        %v4943 = vrot.slane %v3532, %v4942
        %v4944 = vsel %vm4548, %v4943, %v4939
        %v4945 = vlaneseq
        %v4946 = vshrl.u32 %v4945, 7
        %v4947 = vsub.s32 %v4440, %v4946
        %v4948 = vrot.slane %v3535, %v4947
        %v4949 = vlaneseq
        %v4950 = vshrl.u32 %v4949, 7
        %v4951 = vsub.s32 %v4445, %v4950
        %v4952 = vrot.slane %v3538, %v4951
        %v4953 = vsel %vm4450, %v4952, %v4948
        %v4954 = vlaneseq
        %v4955 = vshrl.u32 %v4954, 7
        %v4956 = vsub.s32 %v4452, %v4955
        %v4957 = vrot.slane %v3541, %v4956
        %v4958 = vsel %vm4457, %v4957, %v4953
        %v4959 = vlaneseq
        %v4960 = vshrl.u32 %v4959, 7
        %v4961 = vsub.s32 %v4459, %v4960
        %v4962 = vrot.slane %v3544, %v4961
        %v4963 = vsel %vm4464, %v4962, %v4958
        %v4964 = vlaneseq
        %v4965 = vshrl.u32 %v4964, 7
        %v4966 = vsub.s32 %v4466, %v4965
        %v4967 = vrot.slane %v3547, %v4966
        %v4968 = vsel %vm4471, %v4967, %v4963
        %v4969 = vlaneseq
        %v4970 = vshrl.u32 %v4969, 7
        %v4971 = vsub.s32 %v4473, %v4970
        %v4972 = vrot.slane %v3550, %v4971
        %v4973 = vsel %vm4478, %v4972, %v4968
        %v4974 = vlaneseq
        %v4975 = vshrl.u32 %v4974, 7
        %v4976 = vsub.s32 %v4480, %v4975
        %v4977 = vrot.slane %v3553, %v4976
        %v4978 = vsel %vm4485, %v4977, %v4973
        %v4979 = vlaneseq
        %v4980 = vshrl.u32 %v4979, 7
        %v4981 = vsub.s32 %v4487, %v4980
        %v4982 = vrot.slane %v3556, %v4981
        %v4983 = vsel %vm4492, %v4982, %v4978
        %v4984 = vlaneseq
        %v4985 = vshrl.u32 %v4984, 7
        %v4986 = vsub.s32 %v4494, %v4985
        %v4987 = vrot.slane %v3559, %v4986
        %v4988 = vsel %vm4499, %v4987, %v4983
        %v4989 = vlaneseq
        %v4990 = vshrl.u32 %v4989, 7
        %v4991 = vsub.s32 %v4501, %v4990
        %v4992 = vrot.slane %v3562, %v4991
        %v4993 = vsel %vm4506, %v4992, %v4988
        %v4994 = vlaneseq
        %v4995 = vshrl.u32 %v4994, 7
        %v4996 = vsub.s32 %v4508, %v4995
        %v4997 = vrot.slane %v3565, %v4996
        %v4998 = vsel %vm4513, %v4997, %v4993
        %v4999 = vlaneseq
        %v5000 = vshrl.u32 %v4999, 7
        %v5001 = vsub.s32 %v4515, %v5000
        %v5002 = vrot.slane %v3568, %v5001
        %v5003 = vsel %vm4520, %v5002, %v4998
        %v5004 = vlaneseq
        %v5005 = vshrl.u32 %v5004, 7
        %v5006 = vsub.s32 %v4522, %v5005
        %v5007 = vrot.slane %v3571, %v5006
        %v5008 = vsel %vm4527, %v5007, %v5003
        %v5009 = vlaneseq
        %v5010 = vshrl.u32 %v5009, 7
        %v5011 = vsub.s32 %v4529, %v5010
        %v5012 = vrot.slane %v3574, %v5011
        %v5013 = vsel %vm4534, %v5012, %v5008
        %v5014 = vlaneseq
        %v5015 = vshrl.u32 %v5014, 7
        %v5016 = vsub.s32 %v4536, %v5015
        %v5017 = vrot.slane %v3577, %v5016
        %v5018 = vsel %vm4541, %v5017, %v5013
        %v5019 = vlaneseq
        %v5020 = vshrl.u32 %v5019, 7
        %v5021 = vsub.s32 %v4543, %v5020
        %v5022 = vrot.slane %v3580, %v5021
        %v5023 = vsel %vm4548, %v5022, %v5018
        %v5024 = vlaneseq
        %v5025 = vshrl.u32 %v5024, 7
        %v5026 = vsub.s32 %v4440, %v5025
        %v5027 = vrot.slane %v3583, %v5026
        %v5028 = vlaneseq
        %v5029 = vshrl.u32 %v5028, 7
        %v5030 = vsub.s32 %v4445, %v5029
        %v5031 = vrot.slane %v3586, %v5030
        %v5032 = vsel %vm4450, %v5031, %v5027
        %v5033 = vlaneseq
        %v5034 = vshrl.u32 %v5033, 7
        %v5035 = vsub.s32 %v4452, %v5034
        %v5036 = vrot.slane %v3589, %v5035
        %v5037 = vsel %vm4457, %v5036, %v5032
        %v5038 = vlaneseq
        %v5039 = vshrl.u32 %v5038, 7
        %v5040 = vsub.s32 %v4459, %v5039
        %v5041 = vrot.slane %v3592, %v5040
        %v5042 = vsel %vm4464, %v5041, %v5037
        %v5043 = vlaneseq
        %v5044 = vshrl.u32 %v5043, 7
        %v5045 = vsub.s32 %v4466, %v5044
        %v5046 = vrot.slane %v3595, %v5045
        %v5047 = vsel %vm4471, %v5046, %v5042
        %v5048 = vlaneseq
        %v5049 = vshrl.u32 %v5048, 7
        %v5050 = vsub.s32 %v4473, %v5049
        %v5051 = vrot.slane %v3598, %v5050
        %v5052 = vsel %vm4478, %v5051, %v5047
        %v5053 = vlaneseq
        %v5054 = vshrl.u32 %v5053, 7
        %v5055 = vsub.s32 %v4480, %v5054
        %v5056 = vrot.slane %v3601, %v5055
        %v5057 = vsel %vm4485, %v5056, %v5052
        %v5058 = vlaneseq
        %v5059 = vshrl.u32 %v5058, 7
        %v5060 = vsub.s32 %v4487, %v5059
        %v5061 = vrot.slane %v3604, %v5060
        %v5062 = vsel %vm4492, %v5061, %v5057
        %v5063 = vlaneseq
        %v5064 = vshrl.u32 %v5063, 7
        %v5065 = vsub.s32 %v4494, %v5064
        %v5066 = vrot.slane %v3607, %v5065
        %v5067 = vsel %vm4499, %v5066, %v5062
        %v5068 = vlaneseq
        %v5069 = vshrl.u32 %v5068, 7
        %v5070 = vsub.s32 %v4501, %v5069
        %v5071 = vrot.slane %v3610, %v5070
        %v5072 = vsel %vm4506, %v5071, %v5067
        %v5073 = vlaneseq
        %v5074 = vshrl.u32 %v5073, 7
        %v5075 = vsub.s32 %v4508, %v5074
        %v5076 = vrot.slane %v3613, %v5075
        %v5077 = vsel %vm4513, %v5076, %v5072
        %v5078 = vlaneseq
        %v5079 = vshrl.u32 %v5078, 7
        %v5080 = vsub.s32 %v4515, %v5079
        %v5081 = vrot.slane %v3616, %v5080
        %v5082 = vsel %vm4520, %v5081, %v5077
        %v5083 = vlaneseq
        %v5084 = vshrl.u32 %v5083, 7
        %v5085 = vsub.s32 %v4522, %v5084
        %v5086 = vrot.slane %v3619, %v5085
        %v5087 = vsel %vm4527, %v5086, %v5082
        %v5088 = vlaneseq
        %v5089 = vshrl.u32 %v5088, 7
        %v5090 = vsub.s32 %v4529, %v5089
        %v5091 = vrot.slane %v3622, %v5090
        %v5092 = vsel %vm4534, %v5091, %v5087
        %v5093 = vlaneseq
        %v5094 = vshrl.u32 %v5093, 7
        %v5095 = vsub.s32 %v4536, %v5094
        %v5096 = vrot.slane %v3625, %v5095
        %v5097 = vsel %vm4541, %v5096, %v5092
        %v5098 = vlaneseq
        %v5099 = vshrl.u32 %v5098, 7
        %v5100 = vsub.s32 %v4543, %v5099
        %v5101 = vrot.slane %v3628, %v5100
        %v5102 = vsel %vm4548, %v5101, %v5097
        %v5103 = vsel %vm4426, %v4628, %v4549
        %v5104 = vsel %vm4428, %v4707, %v5103
        %v5105 = vsel %vm4430, %v4786, %v5104
        %v5106 = vsel %vm4432, %v4865, %v5105
        %v5107 = vsel %vm4434, %v4944, %v5106
        %v5108 = vsel %vm4422, %v5102, %v5023
        %vm5111 = vcmask 1031168
        %v5112 = vsel %vm5111, %v5107, 0.0
        %v5113 = vsel %vm5111, %v5108, 0.0
        %v5114 = vld [vmem:[#allocation5 + $0x83] ss:$0 sm:$0xff]
        %v5115 = vmul.f32 %v5112, %v5114
        %v5116 = vmul.f32 %v5113, %v5114
        %v5117 = vlaneseq
        %v5118 = vshrl.u32 %v5117, 7
        %v5119 = vsub.s32 %v3758, %v5118
        %v5120 = vrot.slane %v3247, %v5119
        %v5121 = vadd.s32 %v3758, 4294967288
        %v5122 = vlaneseq
        %v5123 = vshrl.u32 %v5122, 7
        %v5124 = vsub.s32 %v5121, %v5123
        %v5125 = vrot.slane %v3250, %v5124
        %vm5126 = vcmask 130112
        %v5127 = vsel %vm5126, %v5125, %v5120
        %v5128 = vadd.s32 %v3758, 4294967280
        %v5129 = vlaneseq
        %v5130 = vshrl.u32 %v5129, 7
        %v5131 = vsub.s32 %v5128, %v5130
        %v5132 = vrot.slane %v3253, %v5131
        %vm5133 = vcmask 195712
        %v5134 = vsel %vm5133, %v5132, %v5127
        %v5135 = vadd.s32 %v3758, 4294967272
        %v5136 = vlaneseq
        %v5137 = vshrl.u32 %v5136, 7
        %v5138 = vsub.s32 %v5135, %v5137
        %v5139 = vrot.slane %v3256, %v5138
        %vm5140 = vcmask 261312
        %v5141 = vsel %vm5140, %v5139, %v5134
        %v5142 = vadd.s32 %v3758, 4294967264
        %v5143 = vlaneseq
        %v5144 = vshrl.u32 %v5143, 7
        %v5145 = vsub.s32 %v5142, %v5144
        %v5146 = vrot.slane %v3259, %v5145
        %vm5147 = vcmask 326912
        %v5148 = vsel %vm5147, %v5146, %v5141
        %v5149 = vadd.s32 %v3758, 4294967256
        %v5150 = vlaneseq
        %v5151 = vshrl.u32 %v5150, 7
        %v5152 = vsub.s32 %v5149, %v5151
        %v5153 = vrot.slane %v3262, %v5152
        %vm5154 = vcmask 392512
        %v5155 = vsel %vm5154, %v5153, %v5148
        %v5156 = vadd.s32 %v3758, 4294967248
        %v5157 = vlaneseq
        %v5158 = vshrl.u32 %v5157, 7
        %v5159 = vsub.s32 %v5156, %v5158
        %v5160 = vrot.slane %v3265, %v5159
        %vm5161 = vcmask 458112
        %v5162 = vsel %vm5161, %v5160, %v5155
        %v5163 = vadd.s32 %v3758, 4294967240
        %v5164 = vlaneseq
        %v5165 = vshrl.u32 %v5164, 7
        %v5166 = vsub.s32 %v5163, %v5165
        %v5167 = vrot.slane %v3268, %v5166
        %vm5168 = vcmask 523712
        %v5169 = vsel %vm5168, %v5167, %v5162
        %v5170 = vadd.s32 %v3758, 4294967232
        %v5171 = vlaneseq
        %v5172 = vshrl.u32 %v5171, 7
        %v5173 = vsub.s32 %v5170, %v5172
        %v5174 = vrot.slane %v3271, %v5173
        %vm5175 = vcmask 589312
        %v5176 = vsel %vm5175, %v5174, %v5169
        %v5177 = vadd.s32 %v3758, 4294967224
        %v5178 = vlaneseq
        %v5179 = vshrl.u32 %v5178, 7
        %v5180 = vsub.s32 %v5177, %v5179
        %v5181 = vrot.slane %v3274, %v5180
        %vm5182 = vcmask 654912
        %v5183 = vsel %vm5182, %v5181, %v5176
        %v5184 = vadd.s32 %v3758, 4294967216
        %v5185 = vlaneseq
        %v5186 = vshrl.u32 %v5185, 7
        %v5187 = vsub.s32 %v5184, %v5186
        %v5188 = vrot.slane %v3277, %v5187
        %vm5189 = vcmask 720512
        %v5190 = vsel %vm5189, %v5188, %v5183
        %v5191 = vadd.s32 %v3758, 4294967208
        %v5192 = vlaneseq
        %v5193 = vshrl.u32 %v5192, 7
        %v5194 = vsub.s32 %v5191, %v5193
        %v5195 = vrot.slane %v3280, %v5194
        %vm5196 = vcmask 786112
        %v5197 = vsel %vm5196, %v5195, %v5190
        %v5198 = vadd.s32 %v3758, 4294967200
        %v5199 = vlaneseq
        %v5200 = vshrl.u32 %v5199, 7
        %v5201 = vsub.s32 %v5198, %v5200
        %v5202 = vrot.slane %v3283, %v5201
        %vm5203 = vcmask 851712
        %v5204 = vsel %vm5203, %v5202, %v5197
        %v5205 = vadd.s32 %v3758, 4294967192
        %v5206 = vlaneseq
        %v5207 = vshrl.u32 %v5206, 7
        %v5208 = vsub.s32 %v5205, %v5207
        %v5209 = vrot.slane %v3286, %v5208
        %vm5210 = vcmask 917312
        %v5211 = vsel %vm5210, %v5209, %v5204
        %v5212 = vadd.s32 %v3758, 4294967184
        %v5213 = vlaneseq
        %v5214 = vshrl.u32 %v5213, 7
        %v5215 = vsub.s32 %v5212, %v5214
        %v5216 = vrot.slane %v3289, %v5215
        %vm5217 = vcmask 982912
        %v5218 = vsel %vm5217, %v5216, %v5211
        %v5219 = vadd.s32 %v3758, 4294967176
        %v5220 = vlaneseq
        %v5221 = vshrl.u32 %v5220, 7
        %v5222 = vsub.s32 %v5219, %v5221
        %v5223 = vrot.slane %v3292, %v5222
        %vm5224 = vcmask 1048512
        %v5225 = vsel %vm5224, %v5223, %v5218
        %v5226 = vlaneseq
        %v5227 = vshrl.u32 %v5226, 7
        %v5228 = vsub.s32 %v3758, %v5227
        %v5229 = vrot.slane %v3295, %v5228
        %v5230 = vlaneseq
        %v5231 = vshrl.u32 %v5230, 7
        %v5232 = vsub.s32 %v5121, %v5231
        %v5233 = vrot.slane %v3298, %v5232
        %v5234 = vsel %vm5126, %v5233, %v5229
        %v5235 = vlaneseq
        %v5236 = vshrl.u32 %v5235, 7
        %v5237 = vsub.s32 %v5128, %v5236
        %v5238 = vrot.slane %v3301, %v5237
        %v5239 = vsel %vm5133, %v5238, %v5234
        %v5240 = vlaneseq
        %v5241 = vshrl.u32 %v5240, 7
        %v5242 = vsub.s32 %v5135, %v5241
        %v5243 = vrot.slane %v3304, %v5242
        %v5244 = vsel %vm5140, %v5243, %v5239
        %v5245 = vlaneseq
        %v5246 = vshrl.u32 %v5245, 7
        %v5247 = vsub.s32 %v5142, %v5246
        %v5248 = vrot.slane %v3307, %v5247
        %v5249 = vsel %vm5147, %v5248, %v5244
        %v5250 = vlaneseq
        %v5251 = vshrl.u32 %v5250, 7
        %v5252 = vsub.s32 %v5149, %v5251
        %v5253 = vrot.slane %v3310, %v5252
        %v5254 = vsel %vm5154, %v5253, %v5249
        %v5255 = vlaneseq
        %v5256 = vshrl.u32 %v5255, 7
        %v5257 = vsub.s32 %v5156, %v5256
        %v5258 = vrot.slane %v3313, %v5257
        %v5259 = vsel %vm5161, %v5258, %v5254
        %v5260 = vlaneseq
        %v5261 = vshrl.u32 %v5260, 7
        %v5262 = vsub.s32 %v5163, %v5261
        %v5263 = vrot.slane %v3316, %v5262
        %v5264 = vsel %vm5168, %v5263, %v5259
        %v5265 = vlaneseq
        %v5266 = vshrl.u32 %v5265, 7
        %v5267 = vsub.s32 %v5170, %v5266
        %v5268 = vrot.slane %v3319, %v5267
        %v5269 = vsel %vm5175, %v5268, %v5264
        %v5270 = vlaneseq
        %v5271 = vshrl.u32 %v5270, 7
        %v5272 = vsub.s32 %v5177, %v5271
        %v5273 = vrot.slane %v3322, %v5272
        %v5274 = vsel %vm5182, %v5273, %v5269
        %v5275 = vlaneseq
        %v5276 = vshrl.u32 %v5275, 7
        %v5277 = vsub.s32 %v5184, %v5276
        %v5278 = vrot.slane %v3325, %v5277
        %v5279 = vsel %vm5189, %v5278, %v5274
        %v5280 = vlaneseq
        %v5281 = vshrl.u32 %v5280, 7
        %v5282 = vsub.s32 %v5191, %v5281
        %v5283 = vrot.slane %v3328, %v5282
        %v5284 = vsel %vm5196, %v5283, %v5279
        %v5285 = vlaneseq
        %v5286 = vshrl.u32 %v5285, 7
        %v5287 = vsub.s32 %v5198, %v5286
        %v5288 = vrot.slane %v3331, %v5287
        %v5289 = vsel %vm5203, %v5288, %v5284
        %v5290 = vlaneseq
        %v5291 = vshrl.u32 %v5290, 7
        %v5292 = vsub.s32 %v5205, %v5291
        %v5293 = vrot.slane %v3334, %v5292
        %v5294 = vsel %vm5210, %v5293, %v5289
        %v5295 = vlaneseq
        %v5296 = vshrl.u32 %v5295, 7
        %v5297 = vsub.s32 %v5212, %v5296
        %v5298 = vrot.slane %v3337, %v5297
        %v5299 = vsel %vm5217, %v5298, %v5294
        %v5300 = vlaneseq
        %v5301 = vshrl.u32 %v5300, 7
        %v5302 = vsub.s32 %v5219, %v5301
        %v5303 = vrot.slane %v3340, %v5302
        %v5304 = vsel %vm5224, %v5303, %v5299
        %v5305 = vlaneseq
        %v5306 = vshrl.u32 %v5305, 7
        %v5307 = vsub.s32 %v3758, %v5306
        %v5308 = vrot.slane %v3343, %v5307
        %v5309 = vlaneseq
        %v5310 = vshrl.u32 %v5309, 7
        %v5311 = vsub.s32 %v5121, %v5310
        %v5312 = vrot.slane %v3346, %v5311
        %v5313 = vsel %vm5126, %v5312, %v5308
        %v5314 = vlaneseq
        %v5315 = vshrl.u32 %v5314, 7
        %v5316 = vsub.s32 %v5128, %v5315
        %v5317 = vrot.slane %v3349, %v5316
        %v5318 = vsel %vm5133, %v5317, %v5313
        %v5319 = vlaneseq
        %v5320 = vshrl.u32 %v5319, 7
        %v5321 = vsub.s32 %v5135, %v5320
        %v5322 = vrot.slane %v3352, %v5321
        %v5323 = vsel %vm5140, %v5322, %v5318
        %v5324 = vlaneseq
        %v5325 = vshrl.u32 %v5324, 7
        %v5326 = vsub.s32 %v5142, %v5325
        %v5327 = vrot.slane %v3355, %v5326
        %v5328 = vsel %vm5147, %v5327, %v5323
        %v5329 = vlaneseq
        %v5330 = vshrl.u32 %v5329, 7
        %v5331 = vsub.s32 %v5149, %v5330
        %v5332 = vrot.slane %v3358, %v5331
        %v5333 = vsel %vm5154, %v5332, %v5328
        %v5334 = vlaneseq
        %v5335 = vshrl.u32 %v5334, 7
        %v5336 = vsub.s32 %v5156, %v5335
        %v5337 = vrot.slane %v3361, %v5336
        %v5338 = vsel %vm5161, %v5337, %v5333
        %v5339 = vlaneseq
        %v5340 = vshrl.u32 %v5339, 7
        %v5341 = vsub.s32 %v5163, %v5340
        %v5342 = vrot.slane %v3364, %v5341
        %v5343 = vsel %vm5168, %v5342, %v5338
        %v5344 = vlaneseq
        %v5345 = vshrl.u32 %v5344, 7
        %v5346 = vsub.s32 %v5170, %v5345
        %v5347 = vrot.slane %v3367, %v5346
        %v5348 = vsel %vm5175, %v5347, %v5343
        %v5349 = vlaneseq
        %v5350 = vshrl.u32 %v5349, 7
        %v5351 = vsub.s32 %v5177, %v5350
        %v5352 = vrot.slane %v3370, %v5351
        %v5353 = vsel %vm5182, %v5352, %v5348
        %v5354 = vlaneseq
        %v5355 = vshrl.u32 %v5354, 7
        %v5356 = vsub.s32 %v5184, %v5355
        %v5357 = vrot.slane %v3373, %v5356
        %v5358 = vsel %vm5189, %v5357, %v5353
        %v5359 = vlaneseq
        %v5360 = vshrl.u32 %v5359, 7
        %v5361 = vsub.s32 %v5191, %v5360
        %v5362 = vrot.slane %v3376, %v5361
        %v5363 = vsel %vm5196, %v5362, %v5358
        %v5364 = vlaneseq
        %v5365 = vshrl.u32 %v5364, 7
        %v5366 = vsub.s32 %v5198, %v5365
        %v5367 = vrot.slane %v3379, %v5366
        %v5368 = vsel %vm5203, %v5367, %v5363
        %v5369 = vlaneseq
        %v5370 = vshrl.u32 %v5369, 7
        %v5371 = vsub.s32 %v5205, %v5370
        %v5372 = vrot.slane %v3382, %v5371
        %v5373 = vsel %vm5210, %v5372, %v5368
        %v5374 = vlaneseq
        %v5375 = vshrl.u32 %v5374, 7
        %v5376 = vsub.s32 %v5212, %v5375
        %v5377 = vrot.slane %v3385, %v5376
        %v5378 = vsel %vm5217, %v5377, %v5373
        %v5379 = vlaneseq
        %v5380 = vshrl.u32 %v5379, 7
        %v5381 = vsub.s32 %v5219, %v5380
        %v5382 = vrot.slane %v3388, %v5381
        %v5383 = vsel %vm5224, %v5382, %v5378
        %v5384 = vlaneseq
        %v5385 = vshrl.u32 %v5384, 7
        %v5386 = vsub.s32 %v3758, %v5385
        %v5387 = vrot.slane %v3391, %v5386
        %v5388 = vlaneseq
        %v5389 = vshrl.u32 %v5388, 7
        %v5390 = vsub.s32 %v5121, %v5389
        %v5391 = vrot.slane %v3394, %v5390
        %v5392 = vsel %vm5126, %v5391, %v5387
        %v5393 = vlaneseq
        %v5394 = vshrl.u32 %v5393, 7
        %v5395 = vsub.s32 %v5128, %v5394
        %v5396 = vrot.slane %v3397, %v5395
        %v5397 = vsel %vm5133, %v5396, %v5392
        %v5398 = vlaneseq
        %v5399 = vshrl.u32 %v5398, 7
        %v5400 = vsub.s32 %v5135, %v5399
        %v5401 = vrot.slane %v3400, %v5400
        %v5402 = vsel %vm5140, %v5401, %v5397
        %v5403 = vlaneseq
        %v5404 = vshrl.u32 %v5403, 7
        %v5405 = vsub.s32 %v5142, %v5404
        %v5406 = vrot.slane %v3403, %v5405
        %v5407 = vsel %vm5147, %v5406, %v5402
        %v5408 = vlaneseq
        %v5409 = vshrl.u32 %v5408, 7
        %v5410 = vsub.s32 %v5149, %v5409
        %v5411 = vrot.slane %v3406, %v5410
        %v5412 = vsel %vm5154, %v5411, %v5407
        %v5413 = vlaneseq
        %v5414 = vshrl.u32 %v5413, 7
        %v5415 = vsub.s32 %v5156, %v5414
        %v5416 = vrot.slane %v3409, %v5415
        %v5417 = vsel %vm5161, %v5416, %v5412
        %v5418 = vlaneseq
        %v5419 = vshrl.u32 %v5418, 7
        %v5420 = vsub.s32 %v5163, %v5419
        %v5421 = vrot.slane %v3412, %v5420
        %v5422 = vsel %vm5168, %v5421, %v5417
        %v5423 = vlaneseq
        %v5424 = vshrl.u32 %v5423, 7
        %v5425 = vsub.s32 %v5170, %v5424
        %v5426 = vrot.slane %v3415, %v5425
        %v5427 = vsel %vm5175, %v5426, %v5422
        %v5428 = vlaneseq
        %v5429 = vshrl.u32 %v5428, 7
        %v5430 = vsub.s32 %v5177, %v5429
        %v5431 = vrot.slane %v3418, %v5430
        %v5432 = vsel %vm5182, %v5431, %v5427
        %v5433 = vlaneseq
        %v5434 = vshrl.u32 %v5433, 7
        %v5435 = vsub.s32 %v5184, %v5434
        %v5436 = vrot.slane %v3421, %v5435
        %v5437 = vsel %vm5189, %v5436, %v5432
        %v5438 = vlaneseq
        %v5439 = vshrl.u32 %v5438, 7
        %v5440 = vsub.s32 %v5191, %v5439
        %v5441 = vrot.slane %v3424, %v5440
        %v5442 = vsel %vm5196, %v5441, %v5437
        %v5443 = vlaneseq
        %v5444 = vshrl.u32 %v5443, 7
        %v5445 = vsub.s32 %v5198, %v5444
        %v5446 = vrot.slane %v3427, %v5445
        %v5447 = vsel %vm5203, %v5446, %v5442
        %v5448 = vlaneseq
        %v5449 = vshrl.u32 %v5448, 7
        %v5450 = vsub.s32 %v5205, %v5449
        %v5451 = vrot.slane %v3430, %v5450
        %v5452 = vsel %vm5210, %v5451, %v5447
        %v5453 = vlaneseq
        %v5454 = vshrl.u32 %v5453, 7
        %v5455 = vsub.s32 %v5212, %v5454
        %v5456 = vrot.slane %v3433, %v5455
        %v5457 = vsel %vm5217, %v5456, %v5452
        %v5458 = vlaneseq
        %v5459 = vshrl.u32 %v5458, 7
        %v5460 = vsub.s32 %v5219, %v5459
        %v5461 = vrot.slane %v3436, %v5460
        %v5462 = vsel %vm5224, %v5461, %v5457
        %v5463 = vlaneseq
        %v5464 = vshrl.u32 %v5463, 7
        %v5465 = vsub.s32 %v3758, %v5464
        %v5466 = vrot.slane %v3439, %v5465
        %v5467 = vlaneseq
        %v5468 = vshrl.u32 %v5467, 7
        %v5469 = vsub.s32 %v5121, %v5468
        %v5470 = vrot.slane %v3442, %v5469
        %v5471 = vsel %vm5126, %v5470, %v5466
        %v5472 = vlaneseq
        %v5473 = vshrl.u32 %v5472, 7
        %v5474 = vsub.s32 %v5128, %v5473
        %v5475 = vrot.slane %v3445, %v5474
        %v5476 = vsel %vm5133, %v5475, %v5471
        %v5477 = vlaneseq
        %v5478 = vshrl.u32 %v5477, 7
        %v5479 = vsub.s32 %v5135, %v5478
        %v5480 = vrot.slane %v3448, %v5479
        %v5481 = vsel %vm5140, %v5480, %v5476
        %v5482 = vlaneseq
        %v5483 = vshrl.u32 %v5482, 7
        %v5484 = vsub.s32 %v5142, %v5483
        %v5485 = vrot.slane %v3451, %v5484
        %v5486 = vsel %vm5147, %v5485, %v5481
        %v5487 = vlaneseq
        %v5488 = vshrl.u32 %v5487, 7
        %v5489 = vsub.s32 %v5149, %v5488
        %v5490 = vrot.slane %v3454, %v5489
        %v5491 = vsel %vm5154, %v5490, %v5486
        %v5492 = vlaneseq
        %v5493 = vshrl.u32 %v5492, 7
        %v5494 = vsub.s32 %v5156, %v5493
        %v5495 = vrot.slane %v3457, %v5494
        %v5496 = vsel %vm5161, %v5495, %v5491
        %v5497 = vlaneseq
        %v5498 = vshrl.u32 %v5497, 7
        %v5499 = vsub.s32 %v5163, %v5498
        %v5500 = vrot.slane %v3460, %v5499
        %v5501 = vsel %vm5168, %v5500, %v5496
        %v5502 = vlaneseq
        %v5503 = vshrl.u32 %v5502, 7
        %v5504 = vsub.s32 %v5170, %v5503
        %v5505 = vrot.slane %v3463, %v5504
        %v5506 = vsel %vm5175, %v5505, %v5501
        %v5507 = vlaneseq
        %v5508 = vshrl.u32 %v5507, 7
        %v5509 = vsub.s32 %v5177, %v5508
        %v5510 = vrot.slane %v3466, %v5509
        %v5511 = vsel %vm5182, %v5510, %v5506
        %v5512 = vlaneseq
        %v5513 = vshrl.u32 %v5512, 7
        %v5514 = vsub.s32 %v5184, %v5513
        %v5515 = vrot.slane %v3469, %v5514
        %v5516 = vsel %vm5189, %v5515, %v5511
        %v5517 = vlaneseq
        %v5518 = vshrl.u32 %v5517, 7
        %v5519 = vsub.s32 %v5191, %v5518
        %v5520 = vrot.slane %v3472, %v5519
        %v5521 = vsel %vm5196, %v5520, %v5516
        %v5522 = vlaneseq
        %v5523 = vshrl.u32 %v5522, 7
        %v5524 = vsub.s32 %v5198, %v5523
        %v5525 = vrot.slane %v3475, %v5524
        %v5526 = vsel %vm5203, %v5525, %v5521
        %v5527 = vlaneseq
        %v5528 = vshrl.u32 %v5527, 7
        %v5529 = vsub.s32 %v5205, %v5528
        %v5530 = vrot.slane %v3478, %v5529
        %v5531 = vsel %vm5210, %v5530, %v5526
        %v5532 = vlaneseq
        %v5533 = vshrl.u32 %v5532, 7
        %v5534 = vsub.s32 %v5212, %v5533
        %v5535 = vrot.slane %v3481, %v5534
        %v5536 = vsel %vm5217, %v5535, %v5531
        %v5537 = vlaneseq
        %v5538 = vshrl.u32 %v5537, 7
        %v5539 = vsub.s32 %v5219, %v5538
        %v5540 = vrot.slane %v3484, %v5539
        %v5541 = vsel %vm5224, %v5540, %v5536
        %v5542 = vlaneseq
        %v5543 = vshrl.u32 %v5542, 7
        %v5544 = vsub.s32 %v3758, %v5543
        %v5545 = vrot.slane %v3487, %v5544
        %v5546 = vlaneseq
        %v5547 = vshrl.u32 %v5546, 7
        %v5548 = vsub.s32 %v5121, %v5547
        %v5549 = vrot.slane %v3490, %v5548
        %v5550 = vsel %vm5126, %v5549, %v5545
        %v5551 = vlaneseq
        %v5552 = vshrl.u32 %v5551, 7
        %v5553 = vsub.s32 %v5128, %v5552
        %v5554 = vrot.slane %v3493, %v5553
        %v5555 = vsel %vm5133, %v5554, %v5550
        %v5556 = vlaneseq
        %v5557 = vshrl.u32 %v5556, 7
        %v5558 = vsub.s32 %v5135, %v5557
        %v5559 = vrot.slane %v3496, %v5558
        %v5560 = vsel %vm5140, %v5559, %v5555
        %v5561 = vlaneseq
        %v5562 = vshrl.u32 %v5561, 7
        %v5563 = vsub.s32 %v5142, %v5562
        %v5564 = vrot.slane %v3499, %v5563
        %v5565 = vsel %vm5147, %v5564, %v5560
        %v5566 = vlaneseq
        %v5567 = vshrl.u32 %v5566, 7
        %v5568 = vsub.s32 %v5149, %v5567
        %v5569 = vrot.slane %v3502, %v5568
        %v5570 = vsel %vm5154, %v5569, %v5565
        %v5571 = vlaneseq
        %v5572 = vshrl.u32 %v5571, 7
        %v5573 = vsub.s32 %v5156, %v5572
        %v5574 = vrot.slane %v3505, %v5573
        %v5575 = vsel %vm5161, %v5574, %v5570
        %v5576 = vlaneseq
        %v5577 = vshrl.u32 %v5576, 7
        %v5578 = vsub.s32 %v5163, %v5577
        %v5579 = vrot.slane %v3508, %v5578
        %v5580 = vsel %vm5168, %v5579, %v5575
        %v5581 = vlaneseq
        %v5582 = vshrl.u32 %v5581, 7
        %v5583 = vsub.s32 %v5170, %v5582
        %v5584 = vrot.slane %v3511, %v5583
        %v5585 = vsel %vm5175, %v5584, %v5580
        %v5586 = vlaneseq
        %v5587 = vshrl.u32 %v5586, 7
        %v5588 = vsub.s32 %v5177, %v5587
        %v5589 = vrot.slane %v3514, %v5588
        %v5590 = vsel %vm5182, %v5589, %v5585
        %v5591 = vlaneseq
        %v5592 = vshrl.u32 %v5591, 7
        %v5593 = vsub.s32 %v5184, %v5592
        %v5594 = vrot.slane %v3517, %v5593
        %v5595 = vsel %vm5189, %v5594, %v5590
        %v5596 = vlaneseq
        %v5597 = vshrl.u32 %v5596, 7
        %v5598 = vsub.s32 %v5191, %v5597
        %v5599 = vrot.slane %v3520, %v5598
        %v5600 = vsel %vm5196, %v5599, %v5595
        %v5601 = vlaneseq
        %v5602 = vshrl.u32 %v5601, 7
        %v5603 = vsub.s32 %v5198, %v5602
        %v5604 = vrot.slane %v3523, %v5603
        %v5605 = vsel %vm5203, %v5604, %v5600
        %v5606 = vlaneseq
        %v5607 = vshrl.u32 %v5606, 7
        %v5608 = vsub.s32 %v5205, %v5607
        %v5609 = vrot.slane %v3526, %v5608
        %v5610 = vsel %vm5210, %v5609, %v5605
        %v5611 = vlaneseq
        %v5612 = vshrl.u32 %v5611, 7
        %v5613 = vsub.s32 %v5212, %v5612
        %v5614 = vrot.slane %v3529, %v5613
        %v5615 = vsel %vm5217, %v5614, %v5610
        %v5616 = vlaneseq
        %v5617 = vshrl.u32 %v5616, 7
        %v5618 = vsub.s32 %v5219, %v5617
        %v5619 = vrot.slane %v3532, %v5618
        %v5620 = vsel %vm5224, %v5619, %v5615
        %v5621 = vlaneseq
        %v5622 = vshrl.u32 %v5621, 7
        %v5623 = vsub.s32 %v3758, %v5622
        %v5624 = vrot.slane %v3535, %v5623
        %v5625 = vlaneseq
        %v5626 = vshrl.u32 %v5625, 7
        %v5627 = vsub.s32 %v5121, %v5626
        %v5628 = vrot.slane %v3538, %v5627
        %v5629 = vsel %vm5126, %v5628, %v5624
        %v5630 = vlaneseq
        %v5631 = vshrl.u32 %v5630, 7
        %v5632 = vsub.s32 %v5128, %v5631
        %v5633 = vrot.slane %v3541, %v5632
        %v5634 = vsel %vm5133, %v5633, %v5629
        %v5635 = vlaneseq
        %v5636 = vshrl.u32 %v5635, 7
        %v5637 = vsub.s32 %v5135, %v5636
        %v5638 = vrot.slane %v3544, %v5637
        %v5639 = vsel %vm5140, %v5638, %v5634
        %v5640 = vlaneseq
        %v5641 = vshrl.u32 %v5640, 7
        %v5642 = vsub.s32 %v5142, %v5641
        %v5643 = vrot.slane %v3547, %v5642
        %v5644 = vsel %vm5147, %v5643, %v5639
        %v5645 = vlaneseq
        %v5646 = vshrl.u32 %v5645, 7
        %v5647 = vsub.s32 %v5149, %v5646
        %v5648 = vrot.slane %v3550, %v5647
        %v5649 = vsel %vm5154, %v5648, %v5644
        %v5650 = vlaneseq
        %v5651 = vshrl.u32 %v5650, 7
        %v5652 = vsub.s32 %v5156, %v5651
        %v5653 = vrot.slane %v3553, %v5652
        %v5654 = vsel %vm5161, %v5653, %v5649
        %v5655 = vlaneseq
        %v5656 = vshrl.u32 %v5655, 7
        %v5657 = vsub.s32 %v5163, %v5656
        %v5658 = vrot.slane %v3556, %v5657
        %v5659 = vsel %vm5168, %v5658, %v5654
        %v5660 = vlaneseq
        %v5661 = vshrl.u32 %v5660, 7
        %v5662 = vsub.s32 %v5170, %v5661
        %v5663 = vrot.slane %v3559, %v5662
        %v5664 = vsel %vm5175, %v5663, %v5659
        %v5665 = vlaneseq
        %v5666 = vshrl.u32 %v5665, 7
        %v5667 = vsub.s32 %v5177, %v5666
        %v5668 = vrot.slane %v3562, %v5667
        %v5669 = vsel %vm5182, %v5668, %v5664
        %v5670 = vlaneseq
        %v5671 = vshrl.u32 %v5670, 7
        %v5672 = vsub.s32 %v5184, %v5671
        %v5673 = vrot.slane %v3565, %v5672
        %v5674 = vsel %vm5189, %v5673, %v5669
        %v5675 = vlaneseq
        %v5676 = vshrl.u32 %v5675, 7
        %v5677 = vsub.s32 %v5191, %v5676
        %v5678 = vrot.slane %v3568, %v5677
        %v5679 = vsel %vm5196, %v5678, %v5674
        %v5680 = vlaneseq
        %v5681 = vshrl.u32 %v5680, 7
        %v5682 = vsub.s32 %v5198, %v5681
        %v5683 = vrot.slane %v3571, %v5682
        %v5684 = vsel %vm5203, %v5683, %v5679
        %v5685 = vlaneseq
        %v5686 = vshrl.u32 %v5685, 7
        %v5687 = vsub.s32 %v5205, %v5686
        %v5688 = vrot.slane %v3574, %v5687
        %v5689 = vsel %vm5210, %v5688, %v5684
        %v5690 = vlaneseq
        %v5691 = vshrl.u32 %v5690, 7
        %v5692 = vsub.s32 %v5212, %v5691
        %v5693 = vrot.slane %v3577, %v5692
        %v5694 = vsel %vm5217, %v5693, %v5689
        %v5695 = vlaneseq
        %v5696 = vshrl.u32 %v5695, 7
        %v5697 = vsub.s32 %v5219, %v5696
        %v5698 = vrot.slane %v3580, %v5697
        %v5699 = vsel %vm5224, %v5698, %v5694
        %v5700 = vlaneseq
        %v5701 = vshrl.u32 %v5700, 7
        %v5702 = vsub.s32 %v3758, %v5701
        %v5703 = vrot.slane %v3583, %v5702
        %v5704 = vlaneseq
        %v5705 = vshrl.u32 %v5704, 7
        %v5706 = vsub.s32 %v5121, %v5705
        %v5707 = vrot.slane %v3586, %v5706
        %v5708 = vsel %vm5126, %v5707, %v5703
        %v5709 = vlaneseq
        %v5710 = vshrl.u32 %v5709, 7
        %v5711 = vsub.s32 %v5128, %v5710
        %v5712 = vrot.slane %v3589, %v5711
        %v5713 = vsel %vm5133, %v5712, %v5708
        %v5714 = vlaneseq
        %v5715 = vshrl.u32 %v5714, 7
        %v5716 = vsub.s32 %v5135, %v5715
        %v5717 = vrot.slane %v3592, %v5716
        %v5718 = vsel %vm5140, %v5717, %v5713
        %v5719 = vlaneseq
        %v5720 = vshrl.u32 %v5719, 7
        %v5721 = vsub.s32 %v5142, %v5720
        %v5722 = vrot.slane %v3595, %v5721
        %v5723 = vsel %vm5147, %v5722, %v5718
        %v5724 = vlaneseq
        %v5725 = vshrl.u32 %v5724, 7
        %v5726 = vsub.s32 %v5149, %v5725
        %v5727 = vrot.slane %v3598, %v5726
        %v5728 = vsel %vm5154, %v5727, %v5723
        %v5729 = vlaneseq
        %v5730 = vshrl.u32 %v5729, 7
        %v5731 = vsub.s32 %v5156, %v5730
        %v5732 = vrot.slane %v3601, %v5731
        %v5733 = vsel %vm5161, %v5732, %v5728
        %v5734 = vlaneseq
        %v5735 = vshrl.u32 %v5734, 7
        %v5736 = vsub.s32 %v5163, %v5735
        %v5737 = vrot.slane %v3604, %v5736
        %v5738 = vsel %vm5168, %v5737, %v5733
        %v5739 = vlaneseq
        %v5740 = vshrl.u32 %v5739, 7
        %v5741 = vsub.s32 %v5170, %v5740
        %v5742 = vrot.slane %v3607, %v5741
        %v5743 = vsel %vm5175, %v5742, %v5738
        %v5744 = vlaneseq
        %v5745 = vshrl.u32 %v5744, 7
        %v5746 = vsub.s32 %v5177, %v5745
        %v5747 = vrot.slane %v3610, %v5746
        %v5748 = vsel %vm5182, %v5747, %v5743
        %v5749 = vlaneseq
        %v5750 = vshrl.u32 %v5749, 7
        %v5751 = vsub.s32 %v5184, %v5750
        %v5752 = vrot.slane %v3613, %v5751
        %v5753 = vsel %vm5189, %v5752, %v5748
        %v5754 = vlaneseq
        %v5755 = vshrl.u32 %v5754, 7
        %v5756 = vsub.s32 %v5191, %v5755
        %v5757 = vrot.slane %v3616, %v5756
        %v5758 = vsel %vm5196, %v5757, %v5753
        %v5759 = vlaneseq
        %v5760 = vshrl.u32 %v5759, 7
        %v5761 = vsub.s32 %v5198, %v5760
        %v5762 = vrot.slane %v3619, %v5761
        %v5763 = vsel %vm5203, %v5762, %v5758
        %v5764 = vlaneseq
        %v5765 = vshrl.u32 %v5764, 7
        %v5766 = vsub.s32 %v5205, %v5765
        %v5767 = vrot.slane %v3622, %v5766
        %v5768 = vsel %vm5210, %v5767, %v5763
        %v5769 = vlaneseq
        %v5770 = vshrl.u32 %v5769, 7
        %v5771 = vsub.s32 %v5212, %v5770
        %v5772 = vrot.slane %v3625, %v5771
        %v5773 = vsel %vm5217, %v5772, %v5768
        %v5774 = vlaneseq
        %v5775 = vshrl.u32 %v5774, 7
        %v5776 = vsub.s32 %v5219, %v5775
        %v5777 = vrot.slane %v3628, %v5776
        %v5778 = vsel %vm5224, %v5777, %v5773
        %v5779 = vsel %vm4422, %v5304, %v5225
        %v5780 = vsel %vm4424, %v5383, %v5779
        %v5781 = vsel %vm4426, %v5462, %v5780
        %v5782 = vsel %vm4428, %v5541, %v5781
        %v5783 = vsel %vm4430, %v5620, %v5782
        %v5784 = vsel %vm4432, %v5699, %v5783
        %v5785 = vsel %vm4434, %v5778, %v5784
        %vm5789 = vcmask 1045504
        %v5790 = vrot.slane %v5115, 2
        %v5791 = vrot.slane %v5116, 2
        %v5792 = vsel %vm5789, %v5790, %v5791
        %v5794 = vld [vmem:[#allocation5 + $0x40] sm:$0xff]
        %v5795 = vld [vmem:[#allocation5 + $0x50] sm:$0xff]
        %v5796 = vld [vmem:[#allocation5 + $0x60] sm:$0xff]
        %v5797 = vld [vmem:[#allocation5 + $0x70] sm:$0xff]
        %5799 = vset.pattern.permute.xlu0 24
        %5800 = vperm.xlu0 %5799, %v5794
        %v5801 = vpop.permute.xlu0 %5800
        %5804 = vset.pattern.permute.xlu0 24
        %5805 = vperm.xlu0 %5804, %v5795
        %v5806 = vpop.permute.xlu0 %5805
        %5809 = vset.pattern.permute.xlu0 24
        %5810 = vperm.xlu0 %5809, %v5796
        %v5811 = vpop.permute.xlu0 %5810
        %5814 = vset.pattern.permute.xlu0 24
        %5815 = vperm.xlu0 %5814, %v5797
        %v5816 = vpop.permute.xlu0 %5815
        %v5818 = vsel %vm240, %v5794, 0
        %v5820 = vsel %vm240, %v5795, 0
        %v5822 = vsel %vm240, %v5796, 0
        %v5824 = vsel %vm240, %v5797, 0
        %5826 = vmatprep.subr.mxu0 0.0
        %5827 = vmatpush1.msra.mxu0 0.0
        %5828 = vmatprep.subr.mxu0 0.0
        %5829 = vmatpush1.msra.mxu0 0.0
        %5830 = vmatprep.subr.mxu0 0.0
        %5831 = vmatpush1.msra.mxu0 0.0
        %5832 = vmatprep.subr.mxu0 0.0
        %5833 = vmatpush1.msra.mxu0 0.0
        %5834 = vmatprep.subr.mxu0 0.0
        %5835 = vmatpush1.msra.mxu0 0.0
        %5836 = vmatprep.subr.mxu0 0.0
        %5837 = vmatpush1.msra.mxu0 0.0
        %5838 = vmatprep.subr.mxu0 0.0
        %5839 = vmatpush1.msra.mxu0 0.0
        %5840 = vmatprep.subr.mxu0 0.0
        %5841 = vmatpush1.msra.mxu0 0.0
        %5842 = vmatprep.subr.mxu0 0.0
        %5843 = vmatpush1.msra.mxu0 0.0
        %5844 = vmatprep.subr.mxu0 0.0
        %5845 = vmatpush1.msra.mxu0 0.0
        %5846 = vmatprep.subr.mxu0 0.0
        %5847 = vmatpush1.msra.mxu0 0.0
        %5848 = vmatprep.subr.mxu0 0.0
        %5849 = vmatpush1.msra.mxu0 0.0
        %5850 = vmatprep.subr.mxu0 0.0
        %5851 = vmatpush1.msra.mxu0 0.0
        %5852 = vmatprep.subr.mxu0 0.0
        %5853 = vmatpush1.msra.mxu0 %v5792
        %5854 = vmatprep.subr.mxu0 0.0
        %5855 = vmatpush1.msra.mxu0 %v5785
        %5856 = vmatprep.subr.mxu0 0.0
        %5857 = vmatpush1.msra.mxu0 %v4439
        %5858 = vmatprep.subr.mxu0 0.0
        %5859 = vmatpush2.msra.mxu0 0.0
        %5860 = vmatprep.subr.mxu0 0.0
        %5861 = vmatpush2.msra.mxu0 0.0
        %5862 = vmatprep.subr.mxu0 0.0
        %5863 = vmatpush2.msra.mxu0 0.0
        %5864 = vmatprep.subr.mxu0 0.0
        %5865 = vmatpush2.msra.mxu0 0.0
        %5866 = vmatprep.subr.mxu0 0.0
        %5867 = vmatpush2.msra.mxu0 0.0
        %5868 = vmatprep.subr.mxu0 0.0
        %5869 = vmatpush2.msra.mxu0 0.0
        %5870 = vmatprep.subr.mxu0 0.0
        %5871 = vmatpush2.msra.mxu0 0.0
        %5872 = vmatprep.subr.mxu0 0.0
        %5873 = vmatpush2.msra.mxu0 0.0
        %5874 = vmatprep.subr.mxu0 0.0
        %5875 = vmatpush2.msra.mxu0 0.0
        %5876 = vmatprep.subr.mxu0 0.0
        %5877 = vmatpush2.msra.mxu0 0.0
        %5878 = vmatprep.subr.mxu0 0.0
        %5879 = vmatpush2.msra.mxu0 0.0
        %5880 = vmatprep.subr.mxu0 0.0
        %5881 = vmatpush2.msra.mxu0 0.0
        %5882 = vmatprep.subr.mxu0 0.0
        %5883 = vmatpush2.msra.mxu0 0.0
        %5884 = vmatprep.subr.mxu0 0.0
        %5885 = vmatpush2.msra.mxu0 0.0
        %5886 = vmatprep.subr.mxu0 0.0
        %5887 = vmatpush2.msra.mxu0 0.0
        %5888 = vmatprep.subr.mxu0 0.0
        %5889 = vmatpush2.msra.mxu0 0.0
        %5890 = vmatprep.mubr.f32.mxu0 0.0
        %5891 = vmatmul.mubr.f32.gmra.mxu0 %v5818
        %v5892 = vpop.f32.mrf.mxu0
        %v5893 = vadd.f32 %v5801, %v5892
        %v5894 = vpop.f32.mrf.mxu0
        %5895 = vmatprep.mubr.f32.mxu0 0.0
        %5896 = vmatmul.mubr.f32.gmra.mxu0 %v5820
        %v5897 = vpop.f32.mrf.mxu0
        %v5898 = vadd.f32 %v5806, %v5897
        %v5899 = vpop.f32.mrf.mxu0
        %5900 = vmatprep.mubr.f32.mxu0 0.0
        %5901 = vmatmul.mubr.f32.gmra.mxu0 %v5822
        %v5902 = vpop.f32.mrf.mxu0
        %v5903 = vadd.f32 %v5811, %v5902
        %v5904 = vpop.f32.mrf.mxu0
        %5905 = vmatprep.mubr.f32.mxu0 0.0
        %5906 = vmatmul.mubr.f32.gmra.mxu0 %v5824
        %v5907 = vpop.f32.mrf.mxu0
        %v5908 = vadd.f32 %v5816, %v5907
        %v5909 = vpop.f32.mrf.mxu0
        %5910 = vdwg.mxu0
        %v5911 = vld [vmem:[#allocation5 + $0x80] sm:$0xf0]
        %v5912 = vld [vmem:[#allocation5 + $0x90] sm:$0xf]
        %v5915 = vrot.slane %v5911, 4
        %v5916 = vrot.slane %v5912, 4
        %v5917 = vsel %vm330, %v5915, %v5916
        %5919 = vmatprep.subr.mxu0 0.0
        %5920 = vmatpush1.xpose.msra.mxu0 0.0
        %5921 = vmatprep.subr.mxu0 0.0
        %5922 = vmatpush1.xpose.msra.mxu0 0.0
        %5923 = vmatprep.subr.mxu0 0.0
        %5924 = vmatpush1.xpose.msra.mxu0 0.0
        %5925 = vmatprep.subr.mxu0 0.0
        %5926 = vmatpush1.xpose.msra.mxu0 0.0
        %5927 = vmatprep.subr.mxu0 0.0
        %5928 = vmatpush1.xpose.msra.mxu0 0.0
        %5929 = vmatprep.subr.mxu0 0.0
        %5930 = vmatpush1.xpose.msra.mxu0 0.0
        %5931 = vmatprep.subr.mxu0 0.0
        %5932 = vmatpush1.xpose.msra.mxu0 0.0
        %5933 = vmatprep.subr.mxu0 0.0
        %5934 = vmatpush1.xpose.msra.mxu0 0.0
        %5935 = vmatprep.subr.mxu0 0.0
        %5936 = vmatpush1.xpose.msra.mxu0 0.0
        %5937 = vmatprep.subr.mxu0 0.0
        %5938 = vmatpush1.xpose.msra.mxu0 0.0
        %5939 = vmatprep.subr.mxu0 0.0
        %5940 = vmatpush1.xpose.msra.mxu0 0.0
        %5941 = vmatprep.subr.mxu0 0.0
        %5942 = vmatpush1.xpose.msra.mxu0 0.0
        %5943 = vmatprep.subr.mxu0 0.0
        %5944 = vmatpush1.xpose.msra.mxu0 0.0
        %5945 = vmatprep.subr.mxu0 0.0
        %5946 = vmatpush1.xpose.msra.mxu0 0.0
        %5947 = vmatprep.subr.mxu0 0.0
        %5948 = vmatpush1.xpose.msra.mxu0 0.0
        %5949 = vmatprep.subr.mxu0 0.0
        %5950 = vmatpush1.xpose.msra.mxu0 %v5917
        %5951 = vmatprep.subr.mxu0 0.0
        %5952 = vmatpush2.xpose.msra.mxu0 0.0
        %5953 = vmatprep.subr.mxu0 0.0
        %5954 = vmatpush2.xpose.msra.mxu0 0.0
        %5955 = vmatprep.subr.mxu0 0.0
        %5956 = vmatpush2.xpose.msra.mxu0 0.0
        %5957 = vmatprep.subr.mxu0 0.0
        %5958 = vmatpush2.xpose.msra.mxu0 0.0
        %5959 = vmatprep.subr.mxu0 0.0
        %5960 = vmatpush2.xpose.msra.mxu0 0.0
        %5961 = vmatprep.subr.mxu0 0.0
        %5962 = vmatpush2.xpose.msra.mxu0 0.0
        %5963 = vmatprep.subr.mxu0 0.0
        %5964 = vmatpush2.xpose.msra.mxu0 0.0
        %5965 = vmatprep.subr.mxu0 0.0
        %5966 = vmatpush2.xpose.msra.mxu0 0.0
        %5967 = vmatprep.subr.mxu0 0.0
        %5968 = vmatpush2.xpose.msra.mxu0 0.0
        %5969 = vmatprep.subr.mxu0 0.0
        %5970 = vmatpush2.xpose.msra.mxu0 0.0
        %5971 = vmatprep.subr.mxu0 0.0
        %5972 = vmatpush2.xpose.msra.mxu0 0.0
        %5973 = vmatprep.subr.mxu0 0.0
        %5974 = vmatpush2.xpose.msra.mxu0 0.0
        %5975 = vmatprep.subr.mxu0 0.0
        %5976 = vmatpush2.xpose.msra.mxu0 0.0
        %5977 = vmatprep.subr.mxu0 0.0
        %5978 = vmatpush2.xpose.msra.mxu0 0.0
        %5979 = vmatprep.subr.mxu0 0.0
        %5980 = vmatpush2.xpose.msra.mxu0 0.0
        %5981 = vmatprep.subr.mxu0 0.0
        %5982 = vmatpush2.xpose.msra.mxu0 0.0
        %5983 = vmatprep.mubr.f32.mxu0 0.0
        %5984 = vmatmul.mubr.f32.gmra.mxu0 %v5893
        %v5985 = vpop.f32.mrf.mxu0
        %v5986 = vadd.f32 0.0, %v5985
        %v5987 = vpop.f32.mrf.mxu0
        %5988 = vmatprep.mubr.f32.mxu0 0.0
        %5989 = vmatmul.mubr.f32.gmra.mxu0 %v5898
        %v5990 = vpop.f32.mrf.mxu0
        %v5991 = vadd.f32 0.0, %v5990
        %v5992 = vpop.f32.mrf.mxu0
        %5993 = vdwg.mxu0
        %v5994 = vmul.f32 %v5986, 0.0625
        %v5995 = vmul.f32 %v5991, 0.0625
        %v5997 = vsel %vm410, %v5994, 0
        %v6000 = vsel %vm410, %v5995, 0
        %6002 = vmatprep.subr.mxu0 0.0
        %6003 = vmatpush1.msra.mxu0 0.0
        %6004 = vmatprep.subr.mxu0 0.0
        %6005 = vmatpush1.msra.mxu0 0.0
        %6006 = vmatprep.subr.mxu0 0.0
        %6007 = vmatpush1.msra.mxu0 0.0
        %6008 = vmatprep.subr.mxu0 0.0
        %6009 = vmatpush1.msra.mxu0 0.0
        %6010 = vmatprep.subr.mxu0 0.0
        %6011 = vmatpush1.msra.mxu0 0.0
        %6012 = vmatprep.subr.mxu0 0.0
        %6013 = vmatpush1.msra.mxu0 0.0
        %6014 = vmatprep.subr.mxu0 0.0
        %6015 = vmatpush1.msra.mxu0 0.0
        %6016 = vmatprep.subr.mxu0 0.0
        %6017 = vmatpush1.msra.mxu0 0.0
        %6018 = vmatprep.subr.mxu0 0.0
        %6019 = vmatpush1.msra.mxu0 0.0
        %6020 = vmatprep.subr.mxu0 0.0
        %6021 = vmatpush1.msra.mxu0 0.0
        %6022 = vmatprep.subr.mxu0 0.0
        %6023 = vmatpush1.msra.mxu0 0.0
        %6024 = vmatprep.subr.mxu0 0.0
        %6025 = vmatpush1.msra.mxu0 0.0
        %6026 = vmatprep.subr.mxu0 0.0
        %6027 = vmatpush1.msra.mxu0 0.0
        %6028 = vmatprep.subr.mxu0 0.0
        %6029 = vmatpush1.msra.mxu0 0.0
        %6030 = vmatprep.subr.mxu0 0.0
        %6031 = vmatpush1.msra.mxu0 0.0
        %6032 = vmatprep.subr.mxu0 0.0
        %6033 = vmatpush1.msra.mxu0 %v5917
        %6034 = vmatprep.subr.mxu0 0.0
        %6035 = vmatpush2.msra.mxu0 0.0
        %6036 = vmatprep.subr.mxu0 0.0
        %6037 = vmatpush2.msra.mxu0 0.0
        %6038 = vmatprep.subr.mxu0 0.0
        %6039 = vmatpush2.msra.mxu0 0.0
        %6040 = vmatprep.subr.mxu0 0.0
        %6041 = vmatpush2.msra.mxu0 0.0
        %6042 = vmatprep.subr.mxu0 0.0
        %6043 = vmatpush2.msra.mxu0 0.0
        %6044 = vmatprep.subr.mxu0 0.0
        %6045 = vmatpush2.msra.mxu0 0.0
        %6046 = vmatprep.subr.mxu0 0.0
        %6047 = vmatpush2.msra.mxu0 0.0
        %6048 = vmatprep.subr.mxu0 0.0
        %6049 = vmatpush2.msra.mxu0 0.0
        %6050 = vmatprep.subr.mxu0 0.0
        %6051 = vmatpush2.msra.mxu0 0.0
        %6052 = vmatprep.subr.mxu0 0.0
        %6053 = vmatpush2.msra.mxu0 0.0
        %6054 = vmatprep.subr.mxu0 0.0
        %6055 = vmatpush2.msra.mxu0 0.0
        %6056 = vmatprep.subr.mxu0 0.0
        %6057 = vmatpush2.msra.mxu0 0.0
        %6058 = vmatprep.subr.mxu0 0.0
        %6059 = vmatpush2.msra.mxu0 0.0
        %6060 = vmatprep.subr.mxu0 0.0
        %6061 = vmatpush2.msra.mxu0 0.0
        %6062 = vmatprep.subr.mxu0 0.0
        %6063 = vmatpush2.msra.mxu0 0.0
        %6064 = vmatprep.subr.mxu0 0.0
        %6065 = vmatpush2.msra.mxu0 0.0
        %6066 = vmatprep.mubr.f32.mxu0 0.0
        %6067 = vmatmul.mubr.f32.gmra.mxu0 %v5997
        %v6068 = vpop.f32.mrf.mxu0
        %v6069 = vadd.f32 0.0, %v6068
        %v6070 = vpop.f32.mrf.mxu0
        %6071 = vmatprep.mubr.f32.mxu0 0.0
        %6072 = vmatmul.mubr.f32.gmra.mxu0 %v6000
        %v6073 = vpop.f32.mrf.mxu0
        %v6074 = vadd.f32 0.0, %v6073
        %v6075 = vpop.f32.mrf.mxu0
        %6076 = vdwg.mxu0
        %v6077 = vsub.f32 %v5893, %v6069
        %v6078 = vsub.f32 %v5898, %v6074
        %v6079 = vmul.f32 %v6077, %v6077
        %v6080 = vmul.f32 %v6078, %v6078
        %6081 = vmatprep.subr.mxu0 0.0
        %6082 = vmatpush1.xpose.msra.mxu0 0.0
        %6083 = vmatprep.subr.mxu0 0.0
        %6084 = vmatpush1.xpose.msra.mxu0 0.0
        %6085 = vmatprep.subr.mxu0 0.0
        %6086 = vmatpush1.xpose.msra.mxu0 0.0
        %6087 = vmatprep.subr.mxu0 0.0
        %6088 = vmatpush1.xpose.msra.mxu0 0.0
        %6089 = vmatprep.subr.mxu0 0.0
        %6090 = vmatpush1.xpose.msra.mxu0 0.0
        %6091 = vmatprep.subr.mxu0 0.0
        %6092 = vmatpush1.xpose.msra.mxu0 0.0
        %6093 = vmatprep.subr.mxu0 0.0
        %6094 = vmatpush1.xpose.msra.mxu0 0.0
        %6095 = vmatprep.subr.mxu0 0.0
        %6096 = vmatpush1.xpose.msra.mxu0 0.0
        %6097 = vmatprep.subr.mxu0 0.0
        %6098 = vmatpush1.xpose.msra.mxu0 0.0
        %6099 = vmatprep.subr.mxu0 0.0
        %6100 = vmatpush1.xpose.msra.mxu0 0.0
        %6101 = vmatprep.subr.mxu0 0.0
        %6102 = vmatpush1.xpose.msra.mxu0 0.0
        %6103 = vmatprep.subr.mxu0 0.0
        %6104 = vmatpush1.xpose.msra.mxu0 0.0
        %6105 = vmatprep.subr.mxu0 0.0
        %6106 = vmatpush1.xpose.msra.mxu0 0.0
        %6107 = vmatprep.subr.mxu0 0.0
        %6108 = vmatpush1.xpose.msra.mxu0 0.0
        %6109 = vmatprep.subr.mxu0 0.0
        %6110 = vmatpush1.xpose.msra.mxu0 0.0
        %6111 = vmatprep.subr.mxu0 0.0
        %6112 = vmatpush1.xpose.msra.mxu0 %v5917
        %6113 = vmatprep.subr.mxu0 0.0
        %6114 = vmatpush2.xpose.msra.mxu0 0.0
        %6115 = vmatprep.subr.mxu0 0.0
        %6116 = vmatpush2.xpose.msra.mxu0 0.0
        %6117 = vmatprep.subr.mxu0 0.0
        %6118 = vmatpush2.xpose.msra.mxu0 0.0
        %6119 = vmatprep.subr.mxu0 0.0
        %6120 = vmatpush2.xpose.msra.mxu0 0.0
        %6121 = vmatprep.subr.mxu0 0.0
        %6122 = vmatpush2.xpose.msra.mxu0 0.0
        %6123 = vmatprep.subr.mxu0 0.0
        %6124 = vmatpush2.xpose.msra.mxu0 0.0
        %6125 = vmatprep.subr.mxu0 0.0
        %6126 = vmatpush2.xpose.msra.mxu0 0.0
        %6127 = vmatprep.subr.mxu0 0.0
        %6128 = vmatpush2.xpose.msra.mxu0 0.0
        %6129 = vmatprep.subr.mxu0 0.0
        %6130 = vmatpush2.xpose.msra.mxu0 0.0
        %6131 = vmatprep.subr.mxu0 0.0
        %6132 = vmatpush2.xpose.msra.mxu0 0.0
        %6133 = vmatprep.subr.mxu0 0.0
        %6134 = vmatpush2.xpose.msra.mxu0 0.0
        %6135 = vmatprep.subr.mxu0 0.0
        %6136 = vmatpush2.xpose.msra.mxu0 0.0
        %6137 = vmatprep.subr.mxu0 0.0
        %6138 = vmatpush2.xpose.msra.mxu0 0.0
        %6139 = vmatprep.subr.mxu0 0.0
        %6140 = vmatpush2.xpose.msra.mxu0 0.0
        %6141 = vmatprep.subr.mxu0 0.0
        %6142 = vmatpush2.xpose.msra.mxu0 0.0
        %6143 = vmatprep.subr.mxu0 0.0
        %6144 = vmatpush2.xpose.msra.mxu0 0.0
        %6145 = vmatprep.mubr.f32.mxu0 0.0
        %6146 = vmatmul.mubr.f32.gmra.mxu0 %v6079
        %v6147 = vpop.f32.mrf.mxu0
        %v6148 = vadd.f32 0.0, %v6147
        %v6149 = vpop.f32.mrf.mxu0
        %6150 = vmatprep.mubr.f32.mxu0 0.0
        %6151 = vmatmul.mubr.f32.gmra.mxu0 %v6080
        %v6152 = vpop.f32.mrf.mxu0
        %v6153 = vadd.f32 0.0, %v6152
        %v6154 = vpop.f32.mrf.mxu0
        %6155 = vdwg.mxu0
        %v6156 = vmul.f32 %v6148, 0.0625
        %v6157 = vmul.f32 %v6153, 0.0625
        %v6158 = vadd.f32 %v6156, 1e-05
        %v6159 = vadd.f32 %v6157, 1e-05
        %v6160 = vrsqrt.pop %v6158
        %v6161 = vrsqrt.pop %v6159
        %v6163 = vsel %vm410, %v6160, 0
        %v6166 = vsel %vm410, %v6161, 0
        %6168 = vmatprep.subr.mxu0 0.0
        %6169 = vmatpush1.msra.mxu0 0.0
        %6170 = vmatprep.subr.mxu0 0.0
        %6171 = vmatpush1.msra.mxu0 0.0
        %6172 = vmatprep.subr.mxu0 0.0
        %6173 = vmatpush1.msra.mxu0 0.0
        %6174 = vmatprep.subr.mxu0 0.0
        %6175 = vmatpush1.msra.mxu0 0.0
        %6176 = vmatprep.subr.mxu0 0.0
        %6177 = vmatpush1.msra.mxu0 0.0
        %6178 = vmatprep.subr.mxu0 0.0
        %6179 = vmatpush1.msra.mxu0 0.0
        %6180 = vmatprep.subr.mxu0 0.0
        %6181 = vmatpush1.msra.mxu0 0.0
        %6182 = vmatprep.subr.mxu0 0.0
        %6183 = vmatpush1.msra.mxu0 0.0
        %6184 = vmatprep.subr.mxu0 0.0
        %6185 = vmatpush1.msra.mxu0 0.0
        %6186 = vmatprep.subr.mxu0 0.0
        %6187 = vmatpush1.msra.mxu0 0.0
        %6188 = vmatprep.subr.mxu0 0.0
        %6189 = vmatpush1.msra.mxu0 0.0
        %6190 = vmatprep.subr.mxu0 0.0
        %6191 = vmatpush1.msra.mxu0 0.0
        %6192 = vmatprep.subr.mxu0 0.0
        %6193 = vmatpush1.msra.mxu0 0.0
        %6194 = vmatprep.subr.mxu0 0.0
        %6195 = vmatpush1.msra.mxu0 0.0
        %6196 = vmatprep.subr.mxu0 0.0
        %6197 = vmatpush1.msra.mxu0 0.0
        %6198 = vmatprep.subr.mxu0 0.0
        %6199 = vmatpush1.msra.mxu0 %v5917
        %6200 = vmatprep.subr.mxu0 0.0
        %6201 = vmatpush2.msra.mxu0 0.0
        %6202 = vmatprep.subr.mxu0 0.0
        %6203 = vmatpush2.msra.mxu0 0.0
        %6204 = vmatprep.subr.mxu0 0.0
        %6205 = vmatpush2.msra.mxu0 0.0
        %6206 = vmatprep.subr.mxu0 0.0
        %6207 = vmatpush2.msra.mxu0 0.0
        %6208 = vmatprep.subr.mxu0 0.0
        %6209 = vmatpush2.msra.mxu0 0.0
        %6210 = vmatprep.subr.mxu0 0.0
        %6211 = vmatpush2.msra.mxu0 0.0
        %6212 = vmatprep.subr.mxu0 0.0
        %6213 = vmatpush2.msra.mxu0 0.0
        %6214 = vmatprep.subr.mxu0 0.0
        %6215 = vmatpush2.msra.mxu0 0.0
        %6216 = vmatprep.subr.mxu0 0.0
        %6217 = vmatpush2.msra.mxu0 0.0
        %6218 = vmatprep.subr.mxu0 0.0
        %6219 = vmatpush2.msra.mxu0 0.0
        %6220 = vmatprep.subr.mxu0 0.0
        %6221 = vmatpush2.msra.mxu0 0.0
        %6222 = vmatprep.subr.mxu0 0.0
        %6223 = vmatpush2.msra.mxu0 0.0
        %6224 = vmatprep.subr.mxu0 0.0
        %6225 = vmatpush2.msra.mxu0 0.0
        %6226 = vmatprep.subr.mxu0 0.0
        %6227 = vmatpush2.msra.mxu0 0.0
        %6228 = vmatprep.subr.mxu0 0.0
        %6229 = vmatpush2.msra.mxu0 0.0
        %6230 = vmatprep.subr.mxu0 0.0
        %6231 = vmatpush2.msra.mxu0 0.0
        %6232 = vmatprep.mubr.f32.mxu0 0.0
        %6233 = vmatmul.mubr.f32.gmra.mxu0 %v6163
        %v6234 = vpop.f32.mrf.mxu0
        %v6235 = vadd.f32 0.0, %v6234
        %v6236 = vpop.f32.mrf.mxu0
        %6237 = vmatprep.mubr.f32.mxu0 0.0
        %6238 = vmatmul.mubr.f32.gmra.mxu0 %v6166
        %v6239 = vpop.f32.mrf.mxu0
        %v6240 = vadd.f32 0.0, %v6239
        %v6241 = vpop.f32.mrf.mxu0
        %6242 = vdwg.mxu0
        %v6243 = vld [vmem:[#allocation5 + $0x80] ss:$0 sm:$0xff]
        %v6244 = vld [vmem:[#allocation5 + $0x81] ss:$0 sm:$0xff]
        %v6245 = vmul.f32 %v6077, %v6235
        %v6246 = vmul.f32 %v6078, %v6240
        %v6247 = vmul.f32 %v6245, %v6243
        %v6248 = vmul.f32 %v6246, %v6243
        %v6249 = vadd.f32 %v6247, %v6244
        %v6250 = vadd.f32 %v6248, %v6244
        %v6251 = vmul.f32 %v6249, %v6249
        %v6252 = vmul.f32 %v6250, %v6250
        %v6253 = vmul.f32 %v6249, %v6251
        %v6254 = vmul.f32 %v6250, %v6252
        %v6255 = vmul.f32 %v6253, 0.044715
        %v6256 = vmul.f32 %v6254, 0.044715
        %v6257 = vadd.f32 %v6249, %v6255
        %v6258 = vadd.f32 %v6250, %v6256
        %v6259 = vmul.f32 %v6257, 0.7978846
        %v6260 = vmul.f32 %v6258, 0.7978846
        %v6261 = vtanh.pop %v6259
        %v6262 = vtanh.pop %v6260
        %v6263 = vadd.f32 %v6261, 1.0
        %v6264 = vadd.f32 %v6262, 1.0
        %v6265 = vmul.f32 %v6263, 0.5
        %v6266 = vmul.f32 %v6264, 0.5
        %v6267 = vmul.f32 %v6249, %v6265
        %v6268 = vmul.f32 %v6250, %v6266
        %v6269 = vadd.f32 %v6267, %v5903
        %v6270 = vadd.f32 %v6268, %v5908
        %6273 = vrot.lane.b32.xlu0 %v6269, 126
        %v6274 = vpop.permute.xlu0 %6273
        %6275 = vrot.lane.b32.xlu0 %v6270, 126
        %v6276 = vpop.permute.xlu0 %6275
        %6279 = vrot.lane.b32.xlu0 %v6269, 124
        %v6280 = vpop.permute.xlu0 %6279
        %6281 = vrot.lane.b32.xlu0 %v6270, 124
        %v6282 = vpop.permute.xlu0 %6281
        %6285 = vrot.lane.b32.xlu0 %v6269, 122
        %v6286 = vpop.permute.xlu0 %6285
        %6287 = vrot.lane.b32.xlu0 %v6270, 122
        %v6288 = vpop.permute.xlu0 %6287
        %6291 = vrot.lane.b32.xlu0 %v6269, 120
        %v6292 = vpop.permute.xlu0 %6291
        %6293 = vrot.lane.b32.xlu0 %v6270, 120
        %v6294 = vpop.permute.xlu0 %6293
        %6297 = vrot.lane.b32.xlu0 %v6269, 118
        %v6298 = vpop.permute.xlu0 %6297
        %6299 = vrot.lane.b32.xlu0 %v6270, 118
        %v6300 = vpop.permute.xlu0 %6299
        %6303 = vrot.lane.b32.xlu0 %v6269, 116
        %v6304 = vpop.permute.xlu0 %6303
        %6305 = vrot.lane.b32.xlu0 %v6270, 116
        %v6306 = vpop.permute.xlu0 %6305
        %6309 = vrot.lane.b32.xlu0 %v6269, 114
        %v6310 = vpop.permute.xlu0 %6309
        %6311 = vrot.lane.b32.xlu0 %v6270, 114
        %v6312 = vpop.permute.xlu0 %6311
        %6315 = vrot.lane.b32.xlu0 %v6269, 112
        %v6316 = vpop.permute.xlu0 %6315
        %6317 = vrot.lane.b32.xlu0 %v6270, 112
        %v6318 = vpop.permute.xlu0 %6317
        %6321 = vrot.lane.b32.xlu0 %v6269, 110
        %v6322 = vpop.permute.xlu0 %6321
        %6323 = vrot.lane.b32.xlu0 %v6270, 110
        %v6324 = vpop.permute.xlu0 %6323
        %6327 = vrot.lane.b32.xlu0 %v6269, 108
        %v6328 = vpop.permute.xlu0 %6327
        %6329 = vrot.lane.b32.xlu0 %v6270, 108
        %v6330 = vpop.permute.xlu0 %6329
        %6333 = vrot.lane.b32.xlu0 %v6269, 106
        %v6334 = vpop.permute.xlu0 %6333
        %6335 = vrot.lane.b32.xlu0 %v6270, 106
        %v6336 = vpop.permute.xlu0 %6335
        %6339 = vrot.lane.b32.xlu0 %v6269, 104
        %v6340 = vpop.permute.xlu0 %6339
        %6341 = vrot.lane.b32.xlu0 %v6270, 104
        %v6342 = vpop.permute.xlu0 %6341
        %6345 = vrot.lane.b32.xlu0 %v6269, 102
        %v6346 = vpop.permute.xlu0 %6345
        %6347 = vrot.lane.b32.xlu0 %v6270, 102
        %v6348 = vpop.permute.xlu0 %6347
        %6351 = vrot.lane.b32.xlu0 %v6269, 100
        %v6352 = vpop.permute.xlu0 %6351
        %6353 = vrot.lane.b32.xlu0 %v6270, 100
        %v6354 = vpop.permute.xlu0 %6353
        %6357 = vrot.lane.b32.xlu0 %v6269, 98
        %v6358 = vpop.permute.xlu0 %6357
        %6359 = vrot.lane.b32.xlu0 %v6270, 98
        %v6360 = vpop.permute.xlu0 %6359
        %6363 = vrot.lane.b32.xlu0 %v6269, 96
        %v6364 = vpop.permute.xlu0 %6363
        %6365 = vrot.lane.b32.xlu0 %v6270, 96
        %v6366 = vpop.permute.xlu0 %6365
        %6369 = vrot.lane.b32.xlu0 %v6269, 94
        %v6370 = vpop.permute.xlu0 %6369
        %6371 = vrot.lane.b32.xlu0 %v6270, 94
        %v6372 = vpop.permute.xlu0 %6371
        %6375 = vrot.lane.b32.xlu0 %v6269, 92
        %v6376 = vpop.permute.xlu0 %6375
        %6377 = vrot.lane.b32.xlu0 %v6270, 92
        %v6378 = vpop.permute.xlu0 %6377
        %6381 = vrot.lane.b32.xlu0 %v6269, 90
        %v6382 = vpop.permute.xlu0 %6381
        %6383 = vrot.lane.b32.xlu0 %v6270, 90
        %v6384 = vpop.permute.xlu0 %6383
        %6387 = vrot.lane.b32.xlu0 %v6269, 88
        %v6388 = vpop.permute.xlu0 %6387
        %6389 = vrot.lane.b32.xlu0 %v6270, 88
        %v6390 = vpop.permute.xlu0 %6389
        %6393 = vrot.lane.b32.xlu0 %v6269, 86
        %v6394 = vpop.permute.xlu0 %6393
        %6395 = vrot.lane.b32.xlu0 %v6270, 86
        %v6396 = vpop.permute.xlu0 %6395
        %6399 = vrot.lane.b32.xlu0 %v6269, 84
        %v6400 = vpop.permute.xlu0 %6399
        %6401 = vrot.lane.b32.xlu0 %v6270, 84
        %v6402 = vpop.permute.xlu0 %6401
        %6405 = vrot.lane.b32.xlu0 %v6269, 82
        %v6406 = vpop.permute.xlu0 %6405
        %6407 = vrot.lane.b32.xlu0 %v6270, 82
        %v6408 = vpop.permute.xlu0 %6407
        %6411 = vrot.lane.b32.xlu0 %v6269, 80
        %v6412 = vpop.permute.xlu0 %6411
        %6413 = vrot.lane.b32.xlu0 %v6270, 80
        %v6414 = vpop.permute.xlu0 %6413
        %6417 = vrot.lane.b32.xlu0 %v6269, 78
        %v6418 = vpop.permute.xlu0 %6417
        %6419 = vrot.lane.b32.xlu0 %v6270, 78
        %v6420 = vpop.permute.xlu0 %6419
        %6423 = vrot.lane.b32.xlu0 %v6269, 76
        %v6424 = vpop.permute.xlu0 %6423
        %6425 = vrot.lane.b32.xlu0 %v6270, 76
        %v6426 = vpop.permute.xlu0 %6425
        %6429 = vrot.lane.b32.xlu0 %v6269, 74
        %v6430 = vpop.permute.xlu0 %6429
        %6431 = vrot.lane.b32.xlu0 %v6270, 74
        %v6432 = vpop.permute.xlu0 %6431
        %6435 = vrot.lane.b32.xlu0 %v6269, 72
        %v6436 = vpop.permute.xlu0 %6435
        %6437 = vrot.lane.b32.xlu0 %v6270, 72
        %v6438 = vpop.permute.xlu0 %6437
        %6441 = vrot.lane.b32.xlu0 %v6269, 70
        %v6442 = vpop.permute.xlu0 %6441
        %6443 = vrot.lane.b32.xlu0 %v6270, 70
        %v6444 = vpop.permute.xlu0 %6443
        %6447 = vrot.lane.b32.xlu0 %v6269, 68
        %v6448 = vpop.permute.xlu0 %6447
        %6449 = vrot.lane.b32.xlu0 %v6270, 68
        %v6450 = vpop.permute.xlu0 %6449
        %6453 = vrot.lane.b32.xlu0 %v6269, 66
        %v6454 = vpop.permute.xlu0 %6453
        %6455 = vrot.lane.b32.xlu0 %v6270, 66
        %v6456 = vpop.permute.xlu0 %6455
        %6459 = vrot.lane.b32.xlu0 %v6269, 64
        %v6460 = vpop.permute.xlu0 %6459
        %6461 = vrot.lane.b32.xlu0 %v6270, 64
        %v6462 = vpop.permute.xlu0 %6461
        %6465 = vrot.lane.b32.xlu0 %v6269, 62
        %v6466 = vpop.permute.xlu0 %6465
        %6467 = vrot.lane.b32.xlu0 %v6270, 62
        %v6468 = vpop.permute.xlu0 %6467
        %6471 = vrot.lane.b32.xlu0 %v6269, 60
        %v6472 = vpop.permute.xlu0 %6471
        %6473 = vrot.lane.b32.xlu0 %v6270, 60
        %v6474 = vpop.permute.xlu0 %6473
        %6477 = vrot.lane.b32.xlu0 %v6269, 58
        %v6478 = vpop.permute.xlu0 %6477
        %6479 = vrot.lane.b32.xlu0 %v6270, 58
        %v6480 = vpop.permute.xlu0 %6479
        %6483 = vrot.lane.b32.xlu0 %v6269, 56
        %v6484 = vpop.permute.xlu0 %6483
        %6485 = vrot.lane.b32.xlu0 %v6270, 56
        %v6486 = vpop.permute.xlu0 %6485
        %6489 = vrot.lane.b32.xlu0 %v6269, 54
        %v6490 = vpop.permute.xlu0 %6489
        %6491 = vrot.lane.b32.xlu0 %v6270, 54
        %v6492 = vpop.permute.xlu0 %6491
        %6495 = vrot.lane.b32.xlu0 %v6269, 52
        %v6496 = vpop.permute.xlu0 %6495
        %6497 = vrot.lane.b32.xlu0 %v6270, 52
        %v6498 = vpop.permute.xlu0 %6497
        %6501 = vrot.lane.b32.xlu0 %v6269, 50
        %v6502 = vpop.permute.xlu0 %6501
        %6503 = vrot.lane.b32.xlu0 %v6270, 50
        %v6504 = vpop.permute.xlu0 %6503
        %6507 = vrot.lane.b32.xlu0 %v6269, 48
        %v6508 = vpop.permute.xlu0 %6507
        %6509 = vrot.lane.b32.xlu0 %v6270, 48
        %v6510 = vpop.permute.xlu0 %6509
        %6513 = vrot.lane.b32.xlu0 %v6269, 46
        %v6514 = vpop.permute.xlu0 %6513
        %6515 = vrot.lane.b32.xlu0 %v6270, 46
        %v6516 = vpop.permute.xlu0 %6515
        %6519 = vrot.lane.b32.xlu0 %v6269, 44
        %v6520 = vpop.permute.xlu0 %6519
        %6521 = vrot.lane.b32.xlu0 %v6270, 44
        %v6522 = vpop.permute.xlu0 %6521
        %6525 = vrot.lane.b32.xlu0 %v6269, 42
        %v6526 = vpop.permute.xlu0 %6525
        %6527 = vrot.lane.b32.xlu0 %v6270, 42
        %v6528 = vpop.permute.xlu0 %6527
        %6531 = vrot.lane.b32.xlu0 %v6269, 40
        %v6532 = vpop.permute.xlu0 %6531
        %6533 = vrot.lane.b32.xlu0 %v6270, 40
        %v6534 = vpop.permute.xlu0 %6533
        %6537 = vrot.lane.b32.xlu0 %v6269, 38
        %v6538 = vpop.permute.xlu0 %6537
        %6539 = vrot.lane.b32.xlu0 %v6270, 38
        %v6540 = vpop.permute.xlu0 %6539
        %6543 = vrot.lane.b32.xlu0 %v6269, 36
        %v6544 = vpop.permute.xlu0 %6543
        %6545 = vrot.lane.b32.xlu0 %v6270, 36
        %v6546 = vpop.permute.xlu0 %6545
        %6549 = vrot.lane.b32.xlu0 %v6269, 34
        %v6550 = vpop.permute.xlu0 %6549
        %6551 = vrot.lane.b32.xlu0 %v6270, 34
        %v6552 = vpop.permute.xlu0 %6551
        %6555 = vrot.lane.b32.xlu0 %v6269, 32
        %v6556 = vpop.permute.xlu0 %6555
        %6557 = vrot.lane.b32.xlu0 %v6270, 32
        %v6558 = vpop.permute.xlu0 %6557
        %6561 = vrot.lane.b32.xlu0 %v6269, 30
        %v6562 = vpop.permute.xlu0 %6561
        %6563 = vrot.lane.b32.xlu0 %v6270, 30
        %v6564 = vpop.permute.xlu0 %6563
        %6567 = vrot.lane.b32.xlu0 %v6269, 28
        %v6568 = vpop.permute.xlu0 %6567
        %6569 = vrot.lane.b32.xlu0 %v6270, 28
        %v6570 = vpop.permute.xlu0 %6569
        %6573 = vrot.lane.b32.xlu0 %v6269, 26
        %v6574 = vpop.permute.xlu0 %6573
        %6575 = vrot.lane.b32.xlu0 %v6270, 26
        %v6576 = vpop.permute.xlu0 %6575
        %6579 = vrot.lane.b32.xlu0 %v6269, 24
        %v6580 = vpop.permute.xlu0 %6579
        %6581 = vrot.lane.b32.xlu0 %v6270, 24
        %v6582 = vpop.permute.xlu0 %6581
        %6585 = vrot.lane.b32.xlu0 %v6269, 22
        %v6586 = vpop.permute.xlu0 %6585
        %6587 = vrot.lane.b32.xlu0 %v6270, 22
        %v6588 = vpop.permute.xlu0 %6587
        %6591 = vrot.lane.b32.xlu0 %v6269, 20
        %v6592 = vpop.permute.xlu0 %6591
        %6593 = vrot.lane.b32.xlu0 %v6270, 20
        %v6594 = vpop.permute.xlu0 %6593
        %6597 = vrot.lane.b32.xlu0 %v6269, 18
        %v6598 = vpop.permute.xlu0 %6597
        %6599 = vrot.lane.b32.xlu0 %v6270, 18
        %v6600 = vpop.permute.xlu0 %6599
        %6603 = vrot.lane.b32.xlu0 %v6269, 16
        %v6604 = vpop.permute.xlu0 %6603
        %6605 = vrot.lane.b32.xlu0 %v6270, 16
        %v6606 = vpop.permute.xlu0 %6605
        %6609 = vrot.lane.b32.xlu0 %v6269, 14
        %v6610 = vpop.permute.xlu0 %6609
        %6611 = vrot.lane.b32.xlu0 %v6270, 14
        %v6612 = vpop.permute.xlu0 %6611
        %6615 = vrot.lane.b32.xlu0 %v6269, 12
        %v6616 = vpop.permute.xlu0 %6615
        %6617 = vrot.lane.b32.xlu0 %v6270, 12
        %v6618 = vpop.permute.xlu0 %6617
        %6621 = vrot.lane.b32.xlu0 %v6269, 10
        %v6622 = vpop.permute.xlu0 %6621
        %6623 = vrot.lane.b32.xlu0 %v6270, 10
        %v6624 = vpop.permute.xlu0 %6623
        %6627 = vrot.lane.b32.xlu0 %v6269, 8
        %v6628 = vpop.permute.xlu0 %6627
        %6629 = vrot.lane.b32.xlu0 %v6270, 8
        %v6630 = vpop.permute.xlu0 %6629
        %6633 = vrot.lane.b32.xlu0 %v6269, 6
        %v6634 = vpop.permute.xlu0 %6633
        %6635 = vrot.lane.b32.xlu0 %v6270, 6
        %v6636 = vpop.permute.xlu0 %6635
        %6639 = vrot.lane.b32.xlu0 %v6269, 4
        %v6640 = vpop.permute.xlu0 %6639
        %6641 = vrot.lane.b32.xlu0 %v6270, 4
        %v6642 = vpop.permute.xlu0 %6641
        %6645 = vrot.lane.b32.xlu0 %v6269, 2
        %v6646 = vpop.permute.xlu0 %6645
        %6647 = vrot.lane.b32.xlu0 %v6270, 2
        %v6648 = vpop.permute.xlu0 %6647
        %v6651 = vcombine.low %v6269, %v6280
        %v6652 = vcombine.high %v6269, %v6280
        %v6654 = vunpack.c.l.s4 1983009808
        %v6655 = vunpack.c.0.s8 %v6654
        %v6656 = vlaneseq
        %v6657 = vshrl.u32 %v6656, 7
        %v6658 = vsub.s32 %v6655, %v6657
        %v6659 = vrot.slane %v6651, %v6658
        %v6661 = vunpack.c.l.s4 1983009808
        %v6662 = vunpack.c.0.s8 %v6661
        %v6663 = vlaneseq
        %v6664 = vshrl.u32 %v6663, 7
        %v6665 = vsub.s32 %v6662, %v6664
        %v6666 = vrot.slane %v6652, %v6665
        %v6667 = vcombine.low %v6274, %v6286
        %v6668 = vcombine.high %v6274, %v6286
        %v6670 = vunpack.c.l.s4 1983009808
        %v6671 = vunpack.c.0.s8 %v6670
        %v6672 = vlaneseq
        %v6673 = vshrl.u32 %v6672, 7
        %v6674 = vsub.s32 %v6671, %v6673
        %v6675 = vrot.slane %v6667, %v6674
        %v6677 = vunpack.c.l.s4 1983009808
        %v6678 = vunpack.c.0.s8 %v6677
        %v6679 = vlaneseq
        %v6680 = vshrl.u32 %v6679, 7
        %v6681 = vsub.s32 %v6678, %v6680
        %v6682 = vrot.slane %v6668, %v6681
        %v6683 = vcombine.low %v6292, %v6304
        %v6684 = vcombine.high %v6292, %v6304
        %v6686 = vunpack.c.l.s4 1983009808
        %v6687 = vunpack.c.0.s8 %v6686
        %v6688 = vlaneseq
        %v6689 = vshrl.u32 %v6688, 7
        %v6690 = vsub.s32 %v6687, %v6689
        %v6691 = vrot.slane %v6683, %v6690
        %v6693 = vunpack.c.l.s4 1983009808
        %v6694 = vunpack.c.0.s8 %v6693
        %v6695 = vlaneseq
        %v6696 = vshrl.u32 %v6695, 7
        %v6697 = vsub.s32 %v6694, %v6696
        %v6698 = vrot.slane %v6684, %v6697
        %v6699 = vcombine.low %v6298, %v6310
        %v6700 = vcombine.high %v6298, %v6310
        %v6702 = vunpack.c.l.s4 1983009808
        %v6703 = vunpack.c.0.s8 %v6702
        %v6704 = vlaneseq
        %v6705 = vshrl.u32 %v6704, 7
        %v6706 = vsub.s32 %v6703, %v6705
        %v6707 = vrot.slane %v6699, %v6706
        %v6709 = vunpack.c.l.s4 1983009808
        %v6710 = vunpack.c.0.s8 %v6709
        %v6711 = vlaneseq
        %v6712 = vshrl.u32 %v6711, 7
        %v6713 = vsub.s32 %v6710, %v6712
        %v6714 = vrot.slane %v6700, %v6713
        %v6715 = vcombine.low %v6659, %v6675
        %v6716 = vcombine.high %v6659, %v6675
        %v6718 = vunpack.c.l.s4 1934713408
        %v6719 = vunpack.c.0.s8 %v6718
        %v6720 = vlaneseq
        %v6721 = vshrl.u32 %v6720, 7
        %v6722 = vsub.s32 %v6719, %v6721
        %v6723 = vrot.slane %v6715, %v6722
        %v6725 = vunpack.c.l.s4 1934713408
        %v6726 = vunpack.c.0.s8 %v6725
        %v6727 = vlaneseq
        %v6728 = vshrl.u32 %v6727, 7
        %v6729 = vsub.s32 %v6726, %v6728
        %v6730 = vrot.slane %v6716, %v6729
        %v6731 = vcombine.low %v6666, %v6682
        %v6732 = vcombine.high %v6666, %v6682
        %v6734 = vunpack.c.l.s4 1934713408
        %v6735 = vunpack.c.0.s8 %v6734
        %v6736 = vlaneseq
        %v6737 = vshrl.u32 %v6736, 7
        %v6738 = vsub.s32 %v6735, %v6737
        %v6739 = vrot.slane %v6731, %v6738
        %v6741 = vunpack.c.l.s4 1934713408
        %v6742 = vunpack.c.0.s8 %v6741
        %v6743 = vlaneseq
        %v6744 = vshrl.u32 %v6743, 7
        %v6745 = vsub.s32 %v6742, %v6744
        %v6746 = vrot.slane %v6732, %v6745
        %v6747 = vcombine.low %v6691, %v6707
        %v6748 = vcombine.high %v6691, %v6707
        %v6750 = vunpack.c.l.s4 1934713408
        %v6751 = vunpack.c.0.s8 %v6750
        %v6752 = vlaneseq
        %v6753 = vshrl.u32 %v6752, 7
        %v6754 = vsub.s32 %v6751, %v6753
        %v6755 = vrot.slane %v6747, %v6754
        %v6757 = vunpack.c.l.s4 1934713408
        %v6758 = vunpack.c.0.s8 %v6757
        %v6759 = vlaneseq
        %v6760 = vshrl.u32 %v6759, 7
        %v6761 = vsub.s32 %v6758, %v6760
        %v6762 = vrot.slane %v6748, %v6761
        %v6763 = vcombine.low %v6698, %v6714
        %v6764 = vcombine.high %v6698, %v6714
        %v6766 = vunpack.c.l.s4 1934713408
        %v6767 = vunpack.c.0.s8 %v6766
        %v6768 = vlaneseq
        %v6769 = vshrl.u32 %v6768, 7
        %v6770 = vsub.s32 %v6767, %v6769
        %v6771 = vrot.slane %v6763, %v6770
        %v6773 = vunpack.c.l.s4 1934713408
        %v6774 = vunpack.c.0.s8 %v6773
        %v6775 = vlaneseq
        %v6776 = vshrl.u32 %v6775, 7
        %v6777 = vsub.s32 %v6774, %v6776
        %v6778 = vrot.slane %v6764, %v6777
        %v6779 = vcombine.low %v6723, %v6755
        %v6780 = vcombine.high %v6723, %v6755
        %v6781 = vcombine.low %v6730, %v6762
        %v6782 = vcombine.high %v6730, %v6762
        %v6783 = vcombine.low %v6739, %v6771
        %v6784 = vcombine.high %v6739, %v6771
        %v6785 = vcombine.low %v6746, %v6778
        %v6786 = vcombine.high %v6746, %v6778
        %v6787 = vcombine.low %v6316, %v6328
        %v6788 = vcombine.high %v6316, %v6328
        %v6790 = vunpack.c.l.s4 1983009808
        %v6791 = vunpack.c.0.s8 %v6790
        %v6792 = vlaneseq
        %v6793 = vshrl.u32 %v6792, 7
        %v6794 = vsub.s32 %v6791, %v6793
        %v6795 = vrot.slane %v6787, %v6794
        %v6797 = vunpack.c.l.s4 1983009808
        %v6798 = vunpack.c.0.s8 %v6797
        %v6799 = vlaneseq
        %v6800 = vshrl.u32 %v6799, 7
        %v6801 = vsub.s32 %v6798, %v6800
        %v6802 = vrot.slane %v6788, %v6801
        %v6803 = vcombine.low %v6322, %v6334
        %v6804 = vcombine.high %v6322, %v6334
        %v6806 = vunpack.c.l.s4 1983009808
        %v6807 = vunpack.c.0.s8 %v6806
        %v6808 = vlaneseq
        %v6809 = vshrl.u32 %v6808, 7
        %v6810 = vsub.s32 %v6807, %v6809
        %v6811 = vrot.slane %v6803, %v6810
        %v6813 = vunpack.c.l.s4 1983009808
        %v6814 = vunpack.c.0.s8 %v6813
        %v6815 = vlaneseq
        %v6816 = vshrl.u32 %v6815, 7
        %v6817 = vsub.s32 %v6814, %v6816
        %v6818 = vrot.slane %v6804, %v6817
        %v6819 = vcombine.low %v6340, %v6352
        %v6820 = vcombine.high %v6340, %v6352
        %v6822 = vunpack.c.l.s4 1983009808
        %v6823 = vunpack.c.0.s8 %v6822
        %v6824 = vlaneseq
        %v6825 = vshrl.u32 %v6824, 7
        %v6826 = vsub.s32 %v6823, %v6825
        %v6827 = vrot.slane %v6819, %v6826
        %v6829 = vunpack.c.l.s4 1983009808
        %v6830 = vunpack.c.0.s8 %v6829
        %v6831 = vlaneseq
        %v6832 = vshrl.u32 %v6831, 7
        %v6833 = vsub.s32 %v6830, %v6832
        %v6834 = vrot.slane %v6820, %v6833
        %v6835 = vcombine.low %v6346, %v6358
        %v6836 = vcombine.high %v6346, %v6358
        %v6838 = vunpack.c.l.s4 1983009808
        %v6839 = vunpack.c.0.s8 %v6838
        %v6840 = vlaneseq
        %v6841 = vshrl.u32 %v6840, 7
        %v6842 = vsub.s32 %v6839, %v6841
        %v6843 = vrot.slane %v6835, %v6842
        %v6845 = vunpack.c.l.s4 1983009808
        %v6846 = vunpack.c.0.s8 %v6845
        %v6847 = vlaneseq
        %v6848 = vshrl.u32 %v6847, 7
        %v6849 = vsub.s32 %v6846, %v6848
        %v6850 = vrot.slane %v6836, %v6849
        %v6851 = vcombine.low %v6795, %v6811
        %v6852 = vcombine.high %v6795, %v6811
        %v6854 = vunpack.c.l.s4 1934713408
        %v6855 = vunpack.c.0.s8 %v6854
        %v6856 = vlaneseq
        %v6857 = vshrl.u32 %v6856, 7
        %v6858 = vsub.s32 %v6855, %v6857
        %v6859 = vrot.slane %v6851, %v6858
        %v6861 = vunpack.c.l.s4 1934713408
        %v6862 = vunpack.c.0.s8 %v6861
        %v6863 = vlaneseq
        %v6864 = vshrl.u32 %v6863, 7
        %v6865 = vsub.s32 %v6862, %v6864
        %v6866 = vrot.slane %v6852, %v6865
        %v6867 = vcombine.low %v6802, %v6818
        %v6868 = vcombine.high %v6802, %v6818
        %v6870 = vunpack.c.l.s4 1934713408
        %v6871 = vunpack.c.0.s8 %v6870
        %v6872 = vlaneseq
        %v6873 = vshrl.u32 %v6872, 7
        %v6874 = vsub.s32 %v6871, %v6873
        %v6875 = vrot.slane %v6867, %v6874
        %v6877 = vunpack.c.l.s4 1934713408
        %v6878 = vunpack.c.0.s8 %v6877
        %v6879 = vlaneseq
        %v6880 = vshrl.u32 %v6879, 7
        %v6881 = vsub.s32 %v6878, %v6880
        %v6882 = vrot.slane %v6868, %v6881
        %v6883 = vcombine.low %v6827, %v6843
        %v6884 = vcombine.high %v6827, %v6843
        %v6886 = vunpack.c.l.s4 1934713408
        %v6887 = vunpack.c.0.s8 %v6886
        %v6888 = vlaneseq
        %v6889 = vshrl.u32 %v6888, 7
        %v6890 = vsub.s32 %v6887, %v6889
        %v6891 = vrot.slane %v6883, %v6890
        %v6893 = vunpack.c.l.s4 1934713408
        %v6894 = vunpack.c.0.s8 %v6893
        %v6895 = vlaneseq
        %v6896 = vshrl.u32 %v6895, 7
        %v6897 = vsub.s32 %v6894, %v6896
        %v6898 = vrot.slane %v6884, %v6897
        %v6899 = vcombine.low %v6834, %v6850
        %v6900 = vcombine.high %v6834, %v6850
        %v6902 = vunpack.c.l.s4 1934713408
        %v6903 = vunpack.c.0.s8 %v6902
        %v6904 = vlaneseq
        %v6905 = vshrl.u32 %v6904, 7
        %v6906 = vsub.s32 %v6903, %v6905
        %v6907 = vrot.slane %v6899, %v6906
        %v6909 = vunpack.c.l.s4 1934713408
        %v6910 = vunpack.c.0.s8 %v6909
        %v6911 = vlaneseq
        %v6912 = vshrl.u32 %v6911, 7
        %v6913 = vsub.s32 %v6910, %v6912
        %v6914 = vrot.slane %v6900, %v6913
        %v6915 = vcombine.low %v6859, %v6891
        %v6916 = vcombine.high %v6859, %v6891
        %v6917 = vcombine.low %v6866, %v6898
        %v6918 = vcombine.high %v6866, %v6898
        %v6919 = vcombine.low %v6875, %v6907
        %v6920 = vcombine.high %v6875, %v6907
        %v6921 = vcombine.low %v6882, %v6914
        %v6922 = vcombine.high %v6882, %v6914
        %v6923 = vcombine.low %v6364, %v6376
        %v6924 = vcombine.high %v6364, %v6376
        %v6926 = vunpack.c.l.s4 1983009808
        %v6927 = vunpack.c.0.s8 %v6926
        %v6928 = vlaneseq
        %v6929 = vshrl.u32 %v6928, 7
        %v6930 = vsub.s32 %v6927, %v6929
        %v6931 = vrot.slane %v6923, %v6930
        %v6933 = vunpack.c.l.s4 1983009808
        %v6934 = vunpack.c.0.s8 %v6933
        %v6935 = vlaneseq
        %v6936 = vshrl.u32 %v6935, 7
        %v6937 = vsub.s32 %v6934, %v6936
        %v6938 = vrot.slane %v6924, %v6937
        %v6939 = vcombine.low %v6370, %v6382
        %v6940 = vcombine.high %v6370, %v6382
        %v6942 = vunpack.c.l.s4 1983009808
        %v6943 = vunpack.c.0.s8 %v6942
        %v6944 = vlaneseq
        %v6945 = vshrl.u32 %v6944, 7
        %v6946 = vsub.s32 %v6943, %v6945
        %v6947 = vrot.slane %v6939, %v6946
        %v6949 = vunpack.c.l.s4 1983009808
        %v6950 = vunpack.c.0.s8 %v6949
        %v6951 = vlaneseq
        %v6952 = vshrl.u32 %v6951, 7
        %v6953 = vsub.s32 %v6950, %v6952
        %v6954 = vrot.slane %v6940, %v6953
        %v6955 = vcombine.low %v6388, %v6400
        %v6956 = vcombine.high %v6388, %v6400
        %v6958 = vunpack.c.l.s4 1983009808
        %v6959 = vunpack.c.0.s8 %v6958
        %v6960 = vlaneseq
        %v6961 = vshrl.u32 %v6960, 7
        %v6962 = vsub.s32 %v6959, %v6961
        %v6963 = vrot.slane %v6955, %v6962
        %v6965 = vunpack.c.l.s4 1983009808
        %v6966 = vunpack.c.0.s8 %v6965
        %v6967 = vlaneseq
        %v6968 = vshrl.u32 %v6967, 7
        %v6969 = vsub.s32 %v6966, %v6968
        %v6970 = vrot.slane %v6956, %v6969
        %v6971 = vcombine.low %v6394, %v6406
        %v6972 = vcombine.high %v6394, %v6406
        %v6974 = vunpack.c.l.s4 1983009808
        %v6975 = vunpack.c.0.s8 %v6974
        %v6976 = vlaneseq
        %v6977 = vshrl.u32 %v6976, 7
        %v6978 = vsub.s32 %v6975, %v6977
        %v6979 = vrot.slane %v6971, %v6978
        %v6981 = vunpack.c.l.s4 1983009808
        %v6982 = vunpack.c.0.s8 %v6981
        %v6983 = vlaneseq
        %v6984 = vshrl.u32 %v6983, 7
        %v6985 = vsub.s32 %v6982, %v6984
        %v6986 = vrot.slane %v6972, %v6985
        %v6987 = vcombine.low %v6931, %v6947
        %v6988 = vcombine.high %v6931, %v6947
        %v6990 = vunpack.c.l.s4 1934713408
        %v6991 = vunpack.c.0.s8 %v6990
        %v6992 = vlaneseq
        %v6993 = vshrl.u32 %v6992, 7
        %v6994 = vsub.s32 %v6991, %v6993
        %v6995 = vrot.slane %v6987, %v6994
        %v6997 = vunpack.c.l.s4 1934713408
        %v6998 = vunpack.c.0.s8 %v6997
        %v6999 = vlaneseq
        %v7000 = vshrl.u32 %v6999, 7
        %v7001 = vsub.s32 %v6998, %v7000
        %v7002 = vrot.slane %v6988, %v7001
        %v7003 = vcombine.low %v6938, %v6954
        %v7004 = vcombine.high %v6938, %v6954
        %v7006 = vunpack.c.l.s4 1934713408
        %v7007 = vunpack.c.0.s8 %v7006
        %v7008 = vlaneseq
        %v7009 = vshrl.u32 %v7008, 7
        %v7010 = vsub.s32 %v7007, %v7009
        %v7011 = vrot.slane %v7003, %v7010
        %v7013 = vunpack.c.l.s4 1934713408
        %v7014 = vunpack.c.0.s8 %v7013
        %v7015 = vlaneseq
        %v7016 = vshrl.u32 %v7015, 7
        %v7017 = vsub.s32 %v7014, %v7016
        %v7018 = vrot.slane %v7004, %v7017
        %v7019 = vcombine.low %v6963, %v6979
        %v7020 = vcombine.high %v6963, %v6979
        %v7022 = vunpack.c.l.s4 1934713408
        %v7023 = vunpack.c.0.s8 %v7022
        %v7024 = vlaneseq
        %v7025 = vshrl.u32 %v7024, 7
        %v7026 = vsub.s32 %v7023, %v7025
        %v7027 = vrot.slane %v7019, %v7026
        %v7029 = vunpack.c.l.s4 1934713408
        %v7030 = vunpack.c.0.s8 %v7029
        %v7031 = vlaneseq
        %v7032 = vshrl.u32 %v7031, 7
        %v7033 = vsub.s32 %v7030, %v7032
        %v7034 = vrot.slane %v7020, %v7033
        %v7035 = vcombine.low %v6970, %v6986
        %v7036 = vcombine.high %v6970, %v6986
        %v7038 = vunpack.c.l.s4 1934713408
        %v7039 = vunpack.c.0.s8 %v7038
        %v7040 = vlaneseq
        %v7041 = vshrl.u32 %v7040, 7
        %v7042 = vsub.s32 %v7039, %v7041
        %v7043 = vrot.slane %v7035, %v7042
        %v7045 = vunpack.c.l.s4 1934713408
        %v7046 = vunpack.c.0.s8 %v7045
        %v7047 = vlaneseq
        %v7048 = vshrl.u32 %v7047, 7
        %v7049 = vsub.s32 %v7046, %v7048
        %v7050 = vrot.slane %v7036, %v7049
        %v7051 = vcombine.low %v6995, %v7027
        %v7052 = vcombine.high %v6995, %v7027
        %v7053 = vcombine.low %v7002, %v7034
        %v7054 = vcombine.high %v7002, %v7034
        %v7055 = vcombine.low %v7011, %v7043
        %v7056 = vcombine.high %v7011, %v7043
        %v7057 = vcombine.low %v7018, %v7050
        %v7058 = vcombine.high %v7018, %v7050
        %v7059 = vcombine.low %v6412, %v6424
        %v7060 = vcombine.high %v6412, %v6424
        %v7062 = vunpack.c.l.s4 1983009808
        %v7063 = vunpack.c.0.s8 %v7062
        %v7064 = vlaneseq
        %v7065 = vshrl.u32 %v7064, 7
        %v7066 = vsub.s32 %v7063, %v7065
        %v7067 = vrot.slane %v7059, %v7066
        %v7069 = vunpack.c.l.s4 1983009808
        %v7070 = vunpack.c.0.s8 %v7069
        %v7071 = vlaneseq
        %v7072 = vshrl.u32 %v7071, 7
        %v7073 = vsub.s32 %v7070, %v7072
        %v7074 = vrot.slane %v7060, %v7073
        %v7075 = vcombine.low %v6418, %v6430
        %v7076 = vcombine.high %v6418, %v6430
        %v7078 = vunpack.c.l.s4 1983009808
        %v7079 = vunpack.c.0.s8 %v7078
        %v7080 = vlaneseq
        %v7081 = vshrl.u32 %v7080, 7
        %v7082 = vsub.s32 %v7079, %v7081
        %v7083 = vrot.slane %v7075, %v7082
        %v7085 = vunpack.c.l.s4 1983009808
        %v7086 = vunpack.c.0.s8 %v7085
        %v7087 = vlaneseq
        %v7088 = vshrl.u32 %v7087, 7
        %v7089 = vsub.s32 %v7086, %v7088
        %v7090 = vrot.slane %v7076, %v7089
        %v7091 = vcombine.low %v6436, %v6448
        %v7092 = vcombine.high %v6436, %v6448
        %v7094 = vunpack.c.l.s4 1983009808
        %v7095 = vunpack.c.0.s8 %v7094
        %v7096 = vlaneseq
        %v7097 = vshrl.u32 %v7096, 7
        %v7098 = vsub.s32 %v7095, %v7097
        %v7099 = vrot.slane %v7091, %v7098
        %v7101 = vunpack.c.l.s4 1983009808
        %v7102 = vunpack.c.0.s8 %v7101
        %v7103 = vlaneseq
        %v7104 = vshrl.u32 %v7103, 7
        %v7105 = vsub.s32 %v7102, %v7104
        %v7106 = vrot.slane %v7092, %v7105
        %v7107 = vcombine.low %v6442, %v6454
        %v7108 = vcombine.high %v6442, %v6454
        %v7110 = vunpack.c.l.s4 1983009808
        %v7111 = vunpack.c.0.s8 %v7110
        %v7112 = vlaneseq
        %v7113 = vshrl.u32 %v7112, 7
        %v7114 = vsub.s32 %v7111, %v7113
        %v7115 = vrot.slane %v7107, %v7114
        %v7117 = vunpack.c.l.s4 1983009808
        %v7118 = vunpack.c.0.s8 %v7117
        %v7119 = vlaneseq
        %v7120 = vshrl.u32 %v7119, 7
        %v7121 = vsub.s32 %v7118, %v7120
        %v7122 = vrot.slane %v7108, %v7121
        %v7123 = vcombine.low %v7067, %v7083
        %v7124 = vcombine.high %v7067, %v7083
        %v7126 = vunpack.c.l.s4 1934713408
        %v7127 = vunpack.c.0.s8 %v7126
        %v7128 = vlaneseq
        %v7129 = vshrl.u32 %v7128, 7
        %v7130 = vsub.s32 %v7127, %v7129
        %v7131 = vrot.slane %v7123, %v7130
        %v7133 = vunpack.c.l.s4 1934713408
        %v7134 = vunpack.c.0.s8 %v7133
        %v7135 = vlaneseq
        %v7136 = vshrl.u32 %v7135, 7
        %v7137 = vsub.s32 %v7134, %v7136
        %v7138 = vrot.slane %v7124, %v7137
        %v7139 = vcombine.low %v7074, %v7090
        %v7140 = vcombine.high %v7074, %v7090
        %v7142 = vunpack.c.l.s4 1934713408
        %v7143 = vunpack.c.0.s8 %v7142
        %v7144 = vlaneseq
        %v7145 = vshrl.u32 %v7144, 7
        %v7146 = vsub.s32 %v7143, %v7145
        %v7147 = vrot.slane %v7139, %v7146
        %v7149 = vunpack.c.l.s4 1934713408
        %v7150 = vunpack.c.0.s8 %v7149
        %v7151 = vlaneseq
        %v7152 = vshrl.u32 %v7151, 7
        %v7153 = vsub.s32 %v7150, %v7152
        %v7154 = vrot.slane %v7140, %v7153
        %v7155 = vcombine.low %v7099, %v7115
        %v7156 = vcombine.high %v7099, %v7115
        %v7158 = vunpack.c.l.s4 1934713408
        %v7159 = vunpack.c.0.s8 %v7158
        %v7160 = vlaneseq
        %v7161 = vshrl.u32 %v7160, 7
        %v7162 = vsub.s32 %v7159, %v7161
        %v7163 = vrot.slane %v7155, %v7162
        %v7165 = vunpack.c.l.s4 1934713408
        %v7166 = vunpack.c.0.s8 %v7165
        %v7167 = vlaneseq
        %v7168 = vshrl.u32 %v7167, 7
        %v7169 = vsub.s32 %v7166, %v7168
        %v7170 = vrot.slane %v7156, %v7169
        %v7171 = vcombine.low %v7106, %v7122
        %v7172 = vcombine.high %v7106, %v7122
        %v7174 = vunpack.c.l.s4 1934713408
        %v7175 = vunpack.c.0.s8 %v7174
        %v7176 = vlaneseq
        %v7177 = vshrl.u32 %v7176, 7
        %v7178 = vsub.s32 %v7175, %v7177
        %v7179 = vrot.slane %v7171, %v7178
        %v7181 = vunpack.c.l.s4 1934713408
        %v7182 = vunpack.c.0.s8 %v7181
        %v7183 = vlaneseq
        %v7184 = vshrl.u32 %v7183, 7
        %v7185 = vsub.s32 %v7182, %v7184
        %v7186 = vrot.slane %v7172, %v7185
        %v7187 = vcombine.low %v7131, %v7163
        %v7188 = vcombine.high %v7131, %v7163
        %v7189 = vcombine.low %v7138, %v7170
        %v7190 = vcombine.high %v7138, %v7170
        %v7191 = vcombine.low %v7147, %v7179
        %v7192 = vcombine.high %v7147, %v7179
        %v7193 = vcombine.low %v7154, %v7186
        %v7194 = vcombine.high %v7154, %v7186
        %v7195 = vcombine.low %v6460, %v6472
        %v7196 = vcombine.high %v6460, %v6472
        %v7198 = vunpack.c.l.s4 1983009808
        %v7199 = vunpack.c.0.s8 %v7198
        %v7200 = vlaneseq
        %v7201 = vshrl.u32 %v7200, 7
        %v7202 = vsub.s32 %v7199, %v7201
        %v7203 = vrot.slane %v7195, %v7202
        %v7205 = vunpack.c.l.s4 1983009808
        %v7206 = vunpack.c.0.s8 %v7205
        %v7207 = vlaneseq
        %v7208 = vshrl.u32 %v7207, 7
        %v7209 = vsub.s32 %v7206, %v7208
        %v7210 = vrot.slane %v7196, %v7209
        %v7211 = vcombine.low %v6466, %v6478
        %v7212 = vcombine.high %v6466, %v6478
        %v7214 = vunpack.c.l.s4 1983009808
        %v7215 = vunpack.c.0.s8 %v7214
        %v7216 = vlaneseq
        %v7217 = vshrl.u32 %v7216, 7
        %v7218 = vsub.s32 %v7215, %v7217
        %v7219 = vrot.slane %v7211, %v7218
        %v7221 = vunpack.c.l.s4 1983009808
        %v7222 = vunpack.c.0.s8 %v7221
        %v7223 = vlaneseq
        %v7224 = vshrl.u32 %v7223, 7
        %v7225 = vsub.s32 %v7222, %v7224
        %v7226 = vrot.slane %v7212, %v7225
        %v7227 = vcombine.low %v6484, %v6496
        %v7228 = vcombine.high %v6484, %v6496
        %v7230 = vunpack.c.l.s4 1983009808
        %v7231 = vunpack.c.0.s8 %v7230
        %v7232 = vlaneseq
        %v7233 = vshrl.u32 %v7232, 7
        %v7234 = vsub.s32 %v7231, %v7233
        %v7235 = vrot.slane %v7227, %v7234
        %v7237 = vunpack.c.l.s4 1983009808
        %v7238 = vunpack.c.0.s8 %v7237
        %v7239 = vlaneseq
        %v7240 = vshrl.u32 %v7239, 7
        %v7241 = vsub.s32 %v7238, %v7240
        %v7242 = vrot.slane %v7228, %v7241
        %v7243 = vcombine.low %v6490, %v6502
        %v7244 = vcombine.high %v6490, %v6502
        %v7246 = vunpack.c.l.s4 1983009808
        %v7247 = vunpack.c.0.s8 %v7246
        %v7248 = vlaneseq
        %v7249 = vshrl.u32 %v7248, 7
        %v7250 = vsub.s32 %v7247, %v7249
        %v7251 = vrot.slane %v7243, %v7250
        %v7253 = vunpack.c.l.s4 1983009808
        %v7254 = vunpack.c.0.s8 %v7253
        %v7255 = vlaneseq
        %v7256 = vshrl.u32 %v7255, 7
        %v7257 = vsub.s32 %v7254, %v7256
        %v7258 = vrot.slane %v7244, %v7257
        %v7259 = vcombine.low %v7203, %v7219
        %v7260 = vcombine.high %v7203, %v7219
        %v7262 = vunpack.c.l.s4 1934713408
        %v7263 = vunpack.c.0.s8 %v7262
        %v7264 = vlaneseq
        %v7265 = vshrl.u32 %v7264, 7
        %v7266 = vsub.s32 %v7263, %v7265
        %v7267 = vrot.slane %v7259, %v7266
        %v7269 = vunpack.c.l.s4 1934713408
        %v7270 = vunpack.c.0.s8 %v7269
        %v7271 = vlaneseq
        %v7272 = vshrl.u32 %v7271, 7
        %v7273 = vsub.s32 %v7270, %v7272
        %v7274 = vrot.slane %v7260, %v7273
        %v7275 = vcombine.low %v7210, %v7226
        %v7276 = vcombine.high %v7210, %v7226
        %v7278 = vunpack.c.l.s4 1934713408
        %v7279 = vunpack.c.0.s8 %v7278
        %v7280 = vlaneseq
        %v7281 = vshrl.u32 %v7280, 7
        %v7282 = vsub.s32 %v7279, %v7281
        %v7283 = vrot.slane %v7275, %v7282
        %v7285 = vunpack.c.l.s4 1934713408
        %v7286 = vunpack.c.0.s8 %v7285
        %v7287 = vlaneseq
        %v7288 = vshrl.u32 %v7287, 7
        %v7289 = vsub.s32 %v7286, %v7288
        %v7290 = vrot.slane %v7276, %v7289
        %v7291 = vcombine.low %v7235, %v7251
        %v7292 = vcombine.high %v7235, %v7251
        %v7294 = vunpack.c.l.s4 1934713408
        %v7295 = vunpack.c.0.s8 %v7294
        %v7296 = vlaneseq
        %v7297 = vshrl.u32 %v7296, 7
        %v7298 = vsub.s32 %v7295, %v7297
        %v7299 = vrot.slane %v7291, %v7298
        %v7301 = vunpack.c.l.s4 1934713408
        %v7302 = vunpack.c.0.s8 %v7301
        %v7303 = vlaneseq
        %v7304 = vshrl.u32 %v7303, 7
        %v7305 = vsub.s32 %v7302, %v7304
        %v7306 = vrot.slane %v7292, %v7305
        %v7307 = vcombine.low %v7242, %v7258
        %v7308 = vcombine.high %v7242, %v7258
        %v7310 = vunpack.c.l.s4 1934713408
        %v7311 = vunpack.c.0.s8 %v7310
        %v7312 = vlaneseq
        %v7313 = vshrl.u32 %v7312, 7
        %v7314 = vsub.s32 %v7311, %v7313
        %v7315 = vrot.slane %v7307, %v7314
        %v7317 = vunpack.c.l.s4 1934713408
        %v7318 = vunpack.c.0.s8 %v7317
        %v7319 = vlaneseq
        %v7320 = vshrl.u32 %v7319, 7
        %v7321 = vsub.s32 %v7318, %v7320
        %v7322 = vrot.slane %v7308, %v7321
        %v7323 = vcombine.low %v7267, %v7299
        %v7324 = vcombine.high %v7267, %v7299
        %v7325 = vcombine.low %v7274, %v7306
        %v7326 = vcombine.high %v7274, %v7306
        %v7327 = vcombine.low %v7283, %v7315
        %v7328 = vcombine.high %v7283, %v7315
        %v7329 = vcombine.low %v7290, %v7322
        %v7330 = vcombine.high %v7290, %v7322
        %v7331 = vcombine.low %v6508, %v6520
        %v7332 = vcombine.high %v6508, %v6520
        %v7334 = vunpack.c.l.s4 1983009808
        %v7335 = vunpack.c.0.s8 %v7334
        %v7336 = vlaneseq
        %v7337 = vshrl.u32 %v7336, 7
        %v7338 = vsub.s32 %v7335, %v7337
        %v7339 = vrot.slane %v7331, %v7338
        %v7341 = vunpack.c.l.s4 1983009808
        %v7342 = vunpack.c.0.s8 %v7341
        %v7343 = vlaneseq
        %v7344 = vshrl.u32 %v7343, 7
        %v7345 = vsub.s32 %v7342, %v7344
        %v7346 = vrot.slane %v7332, %v7345
        %v7347 = vcombine.low %v6514, %v6526
        %v7348 = vcombine.high %v6514, %v6526
        %v7350 = vunpack.c.l.s4 1983009808
        %v7351 = vunpack.c.0.s8 %v7350
        %v7352 = vlaneseq
        %v7353 = vshrl.u32 %v7352, 7
        %v7354 = vsub.s32 %v7351, %v7353
        %v7355 = vrot.slane %v7347, %v7354
        %v7357 = vunpack.c.l.s4 1983009808
        %v7358 = vunpack.c.0.s8 %v7357
        %v7359 = vlaneseq
        %v7360 = vshrl.u32 %v7359, 7
        %v7361 = vsub.s32 %v7358, %v7360
        %v7362 = vrot.slane %v7348, %v7361
        %v7363 = vcombine.low %v6532, %v6544
        %v7364 = vcombine.high %v6532, %v6544
        %v7366 = vunpack.c.l.s4 1983009808
        %v7367 = vunpack.c.0.s8 %v7366
        %v7368 = vlaneseq
        %v7369 = vshrl.u32 %v7368, 7
        %v7370 = vsub.s32 %v7367, %v7369
        %v7371 = vrot.slane %v7363, %v7370
        %v7373 = vunpack.c.l.s4 1983009808
        %v7374 = vunpack.c.0.s8 %v7373
        %v7375 = vlaneseq
        %v7376 = vshrl.u32 %v7375, 7
        %v7377 = vsub.s32 %v7374, %v7376
        %v7378 = vrot.slane %v7364, %v7377
        %v7379 = vcombine.low %v6538, %v6550
        %v7380 = vcombine.high %v6538, %v6550
        %v7382 = vunpack.c.l.s4 1983009808
        %v7383 = vunpack.c.0.s8 %v7382
        %v7384 = vlaneseq
        %v7385 = vshrl.u32 %v7384, 7
        %v7386 = vsub.s32 %v7383, %v7385
        %v7387 = vrot.slane %v7379, %v7386
        %v7389 = vunpack.c.l.s4 1983009808
        %v7390 = vunpack.c.0.s8 %v7389
        %v7391 = vlaneseq
        %v7392 = vshrl.u32 %v7391, 7
        %v7393 = vsub.s32 %v7390, %v7392
        %v7394 = vrot.slane %v7380, %v7393
        %v7395 = vcombine.low %v7339, %v7355
        %v7396 = vcombine.high %v7339, %v7355
        %v7398 = vunpack.c.l.s4 1934713408
        %v7399 = vunpack.c.0.s8 %v7398
        %v7400 = vlaneseq
        %v7401 = vshrl.u32 %v7400, 7
        %v7402 = vsub.s32 %v7399, %v7401
        %v7403 = vrot.slane %v7395, %v7402
        %v7405 = vunpack.c.l.s4 1934713408
        %v7406 = vunpack.c.0.s8 %v7405
        %v7407 = vlaneseq
        %v7408 = vshrl.u32 %v7407, 7
        %v7409 = vsub.s32 %v7406, %v7408
        %v7410 = vrot.slane %v7396, %v7409
        %v7411 = vcombine.low %v7346, %v7362
        %v7412 = vcombine.high %v7346, %v7362
        %v7414 = vunpack.c.l.s4 1934713408
        %v7415 = vunpack.c.0.s8 %v7414
        %v7416 = vlaneseq
        %v7417 = vshrl.u32 %v7416, 7
        %v7418 = vsub.s32 %v7415, %v7417
        %v7419 = vrot.slane %v7411, %v7418
        %v7421 = vunpack.c.l.s4 1934713408
        %v7422 = vunpack.c.0.s8 %v7421
        %v7423 = vlaneseq
        %v7424 = vshrl.u32 %v7423, 7
        %v7425 = vsub.s32 %v7422, %v7424
        %v7426 = vrot.slane %v7412, %v7425
        %v7427 = vcombine.low %v7371, %v7387
        %v7428 = vcombine.high %v7371, %v7387
        %v7430 = vunpack.c.l.s4 1934713408
        %v7431 = vunpack.c.0.s8 %v7430
        %v7432 = vlaneseq
        %v7433 = vshrl.u32 %v7432, 7
        %v7434 = vsub.s32 %v7431, %v7433
        %v7435 = vrot.slane %v7427, %v7434
        %v7437 = vunpack.c.l.s4 1934713408
        %v7438 = vunpack.c.0.s8 %v7437
        %v7439 = vlaneseq
        %v7440 = vshrl.u32 %v7439, 7
        %v7441 = vsub.s32 %v7438, %v7440
        %v7442 = vrot.slane %v7428, %v7441
        %v7443 = vcombine.low %v7378, %v7394
        %v7444 = vcombine.high %v7378, %v7394
        %v7446 = vunpack.c.l.s4 1934713408
        %v7447 = vunpack.c.0.s8 %v7446
        %v7448 = vlaneseq
        %v7449 = vshrl.u32 %v7448, 7
        %v7450 = vsub.s32 %v7447, %v7449
        %v7451 = vrot.slane %v7443, %v7450
        %v7453 = vunpack.c.l.s4 1934713408
        %v7454 = vunpack.c.0.s8 %v7453
        %v7455 = vlaneseq
        %v7456 = vshrl.u32 %v7455, 7
        %v7457 = vsub.s32 %v7454, %v7456
        %v7458 = vrot.slane %v7444, %v7457
        %v7459 = vcombine.low %v7403, %v7435
        %v7460 = vcombine.high %v7403, %v7435
        %v7461 = vcombine.low %v7410, %v7442
        %v7462 = vcombine.high %v7410, %v7442
        %v7463 = vcombine.low %v7419, %v7451
        %v7464 = vcombine.high %v7419, %v7451
        %v7465 = vcombine.low %v7426, %v7458
        %v7466 = vcombine.high %v7426, %v7458
        %v7467 = vcombine.low %v6556, %v6568
        %v7468 = vcombine.high %v6556, %v6568
        %v7470 = vunpack.c.l.s4 1983009808
        %v7471 = vunpack.c.0.s8 %v7470
        %v7472 = vlaneseq
        %v7473 = vshrl.u32 %v7472, 7
        %v7474 = vsub.s32 %v7471, %v7473
        %v7475 = vrot.slane %v7467, %v7474
        %v7477 = vunpack.c.l.s4 1983009808
        %v7478 = vunpack.c.0.s8 %v7477
        %v7479 = vlaneseq
        %v7480 = vshrl.u32 %v7479, 7
        %v7481 = vsub.s32 %v7478, %v7480
        %v7482 = vrot.slane %v7468, %v7481
        %v7483 = vcombine.low %v6562, %v6574
        %v7484 = vcombine.high %v6562, %v6574
        %v7486 = vunpack.c.l.s4 1983009808
        %v7487 = vunpack.c.0.s8 %v7486
        %v7488 = vlaneseq
        %v7489 = vshrl.u32 %v7488, 7
        %v7490 = vsub.s32 %v7487, %v7489
        %v7491 = vrot.slane %v7483, %v7490
        %v7493 = vunpack.c.l.s4 1983009808
        %v7494 = vunpack.c.0.s8 %v7493
        %v7495 = vlaneseq
        %v7496 = vshrl.u32 %v7495, 7
        %v7497 = vsub.s32 %v7494, %v7496
        %v7498 = vrot.slane %v7484, %v7497
        %v7499 = vcombine.low %v6580, %v6592
        %v7500 = vcombine.high %v6580, %v6592
        %v7502 = vunpack.c.l.s4 1983009808
        %v7503 = vunpack.c.0.s8 %v7502
        %v7504 = vlaneseq
        %v7505 = vshrl.u32 %v7504, 7
        %v7506 = vsub.s32 %v7503, %v7505
        %v7507 = vrot.slane %v7499, %v7506
        %v7509 = vunpack.c.l.s4 1983009808
        %v7510 = vunpack.c.0.s8 %v7509
        %v7511 = vlaneseq
        %v7512 = vshrl.u32 %v7511, 7
        %v7513 = vsub.s32 %v7510, %v7512
        %v7514 = vrot.slane %v7500, %v7513
        %v7515 = vcombine.low %v6586, %v6598
        %v7516 = vcombine.high %v6586, %v6598
        %v7518 = vunpack.c.l.s4 1983009808
        %v7519 = vunpack.c.0.s8 %v7518
        %v7520 = vlaneseq
        %v7521 = vshrl.u32 %v7520, 7
        %v7522 = vsub.s32 %v7519, %v7521
        %v7523 = vrot.slane %v7515, %v7522
        %v7525 = vunpack.c.l.s4 1983009808
        %v7526 = vunpack.c.0.s8 %v7525
        %v7527 = vlaneseq
        %v7528 = vshrl.u32 %v7527, 7
        %v7529 = vsub.s32 %v7526, %v7528
        %v7530 = vrot.slane %v7516, %v7529
        %v7531 = vcombine.low %v7475, %v7491
        %v7532 = vcombine.high %v7475, %v7491
        %v7534 = vunpack.c.l.s4 1934713408
        %v7535 = vunpack.c.0.s8 %v7534
        %v7536 = vlaneseq
        %v7537 = vshrl.u32 %v7536, 7
        %v7538 = vsub.s32 %v7535, %v7537
        %v7539 = vrot.slane %v7531, %v7538
        %v7541 = vunpack.c.l.s4 1934713408
        %v7542 = vunpack.c.0.s8 %v7541
        %v7543 = vlaneseq
        %v7544 = vshrl.u32 %v7543, 7
        %v7545 = vsub.s32 %v7542, %v7544
        %v7546 = vrot.slane %v7532, %v7545
        %v7547 = vcombine.low %v7482, %v7498
        %v7548 = vcombine.high %v7482, %v7498
        %v7550 = vunpack.c.l.s4 1934713408
        %v7551 = vunpack.c.0.s8 %v7550
        %v7552 = vlaneseq
        %v7553 = vshrl.u32 %v7552, 7
        %v7554 = vsub.s32 %v7551, %v7553
        %v7555 = vrot.slane %v7547, %v7554
        %v7557 = vunpack.c.l.s4 1934713408
        %v7558 = vunpack.c.0.s8 %v7557
        %v7559 = vlaneseq
        %v7560 = vshrl.u32 %v7559, 7
        %v7561 = vsub.s32 %v7558, %v7560
        %v7562 = vrot.slane %v7548, %v7561
        %v7563 = vcombine.low %v7507, %v7523
        %v7564 = vcombine.high %v7507, %v7523
        %v7566 = vunpack.c.l.s4 1934713408
        %v7567 = vunpack.c.0.s8 %v7566
        %v7568 = vlaneseq
        %v7569 = vshrl.u32 %v7568, 7
        %v7570 = vsub.s32 %v7567, %v7569
        %v7571 = vrot.slane %v7563, %v7570
        %v7573 = vunpack.c.l.s4 1934713408
        %v7574 = vunpack.c.0.s8 %v7573
        %v7575 = vlaneseq
        %v7576 = vshrl.u32 %v7575, 7
        %v7577 = vsub.s32 %v7574, %v7576
        %v7578 = vrot.slane %v7564, %v7577
        %v7579 = vcombine.low %v7514, %v7530
        %v7580 = vcombine.high %v7514, %v7530
        %v7582 = vunpack.c.l.s4 1934713408
        %v7583 = vunpack.c.0.s8 %v7582
        %v7584 = vlaneseq
        %v7585 = vshrl.u32 %v7584, 7
        %v7586 = vsub.s32 %v7583, %v7585
        %v7587 = vrot.slane %v7579, %v7586
        %v7589 = vunpack.c.l.s4 1934713408
        %v7590 = vunpack.c.0.s8 %v7589
        %v7591 = vlaneseq
        %v7592 = vshrl.u32 %v7591, 7
        %v7593 = vsub.s32 %v7590, %v7592
        %v7594 = vrot.slane %v7580, %v7593
        %v7595 = vcombine.low %v7539, %v7571
        %v7596 = vcombine.high %v7539, %v7571
        %v7597 = vcombine.low %v7546, %v7578
        %v7598 = vcombine.high %v7546, %v7578
        %v7599 = vcombine.low %v7555, %v7587
        %v7600 = vcombine.high %v7555, %v7587
        %v7601 = vcombine.low %v7562, %v7594
        %v7602 = vcombine.high %v7562, %v7594
        %v7603 = vcombine.low %v6604, %v6616
        %v7604 = vcombine.high %v6604, %v6616
        %v7606 = vunpack.c.l.s4 1983009808
        %v7607 = vunpack.c.0.s8 %v7606
        %v7608 = vlaneseq
        %v7609 = vshrl.u32 %v7608, 7
        %v7610 = vsub.s32 %v7607, %v7609
        %v7611 = vrot.slane %v7603, %v7610
        %v7613 = vunpack.c.l.s4 1983009808
        %v7614 = vunpack.c.0.s8 %v7613
        %v7615 = vlaneseq
        %v7616 = vshrl.u32 %v7615, 7
        %v7617 = vsub.s32 %v7614, %v7616
        %v7618 = vrot.slane %v7604, %v7617
        %v7619 = vcombine.low %v6610, %v6622
        %v7620 = vcombine.high %v6610, %v6622
        %v7622 = vunpack.c.l.s4 1983009808
        %v7623 = vunpack.c.0.s8 %v7622
        %v7624 = vlaneseq
        %v7625 = vshrl.u32 %v7624, 7
        %v7626 = vsub.s32 %v7623, %v7625
        %v7627 = vrot.slane %v7619, %v7626
        %v7629 = vunpack.c.l.s4 1983009808
        %v7630 = vunpack.c.0.s8 %v7629
        %v7631 = vlaneseq
        %v7632 = vshrl.u32 %v7631, 7
        %v7633 = vsub.s32 %v7630, %v7632
        %v7634 = vrot.slane %v7620, %v7633
        %v7635 = vcombine.low %v6628, %v6640
        %v7636 = vcombine.high %v6628, %v6640
        %v7638 = vunpack.c.l.s4 1983009808
        %v7639 = vunpack.c.0.s8 %v7638
        %v7640 = vlaneseq
        %v7641 = vshrl.u32 %v7640, 7
        %v7642 = vsub.s32 %v7639, %v7641
        %v7643 = vrot.slane %v7635, %v7642
        %v7645 = vunpack.c.l.s4 1983009808
        %v7646 = vunpack.c.0.s8 %v7645
        %v7647 = vlaneseq
        %v7648 = vshrl.u32 %v7647, 7
        %v7649 = vsub.s32 %v7646, %v7648
        %v7650 = vrot.slane %v7636, %v7649
        %v7651 = vcombine.low %v6634, %v6646
        %v7652 = vcombine.high %v6634, %v6646
        %v7654 = vunpack.c.l.s4 1983009808
        %v7655 = vunpack.c.0.s8 %v7654
        %v7656 = vlaneseq
        %v7657 = vshrl.u32 %v7656, 7
        %v7658 = vsub.s32 %v7655, %v7657
        %v7659 = vrot.slane %v7651, %v7658
        %v7661 = vunpack.c.l.s4 1983009808
        %v7662 = vunpack.c.0.s8 %v7661
        %v7663 = vlaneseq
        %v7664 = vshrl.u32 %v7663, 7
        %v7665 = vsub.s32 %v7662, %v7664
        %v7666 = vrot.slane %v7652, %v7665
        %v7667 = vcombine.low %v7611, %v7627
        %v7668 = vcombine.high %v7611, %v7627
        %v7670 = vunpack.c.l.s4 1934713408
        %v7671 = vunpack.c.0.s8 %v7670
        %v7672 = vlaneseq
        %v7673 = vshrl.u32 %v7672, 7
        %v7674 = vsub.s32 %v7671, %v7673
        %v7675 = vrot.slane %v7667, %v7674
        %v7677 = vunpack.c.l.s4 1934713408
        %v7678 = vunpack.c.0.s8 %v7677
        %v7679 = vlaneseq
        %v7680 = vshrl.u32 %v7679, 7
        %v7681 = vsub.s32 %v7678, %v7680
        %v7682 = vrot.slane %v7668, %v7681
        %v7683 = vcombine.low %v7618, %v7634
        %v7684 = vcombine.high %v7618, %v7634
        %v7686 = vunpack.c.l.s4 1934713408
        %v7687 = vunpack.c.0.s8 %v7686
        %v7688 = vlaneseq
        %v7689 = vshrl.u32 %v7688, 7
        %v7690 = vsub.s32 %v7687, %v7689
        %v7691 = vrot.slane %v7683, %v7690
        %v7693 = vunpack.c.l.s4 1934713408
        %v7694 = vunpack.c.0.s8 %v7693
        %v7695 = vlaneseq
        %v7696 = vshrl.u32 %v7695, 7
        %v7697 = vsub.s32 %v7694, %v7696
        %v7698 = vrot.slane %v7684, %v7697
        %v7699 = vcombine.low %v7643, %v7659
        %v7700 = vcombine.high %v7643, %v7659
        %v7702 = vunpack.c.l.s4 1934713408
        %v7703 = vunpack.c.0.s8 %v7702
        %v7704 = vlaneseq
        %v7705 = vshrl.u32 %v7704, 7
        %v7706 = vsub.s32 %v7703, %v7705
        %v7707 = vrot.slane %v7699, %v7706
        %v7709 = vunpack.c.l.s4 1934713408
        %v7710 = vunpack.c.0.s8 %v7709
        %v7711 = vlaneseq
        %v7712 = vshrl.u32 %v7711, 7
        %v7713 = vsub.s32 %v7710, %v7712
        %v7714 = vrot.slane %v7700, %v7713
        %v7715 = vcombine.low %v7650, %v7666
        %v7716 = vcombine.high %v7650, %v7666
        %v7718 = vunpack.c.l.s4 1934713408
        %v7719 = vunpack.c.0.s8 %v7718
        %v7720 = vlaneseq
        %v7721 = vshrl.u32 %v7720, 7
        %v7722 = vsub.s32 %v7719, %v7721
        %v7723 = vrot.slane %v7715, %v7722
        %v7725 = vunpack.c.l.s4 1934713408
        %v7726 = vunpack.c.0.s8 %v7725
        %v7727 = vlaneseq
        %v7728 = vshrl.u32 %v7727, 7
        %v7729 = vsub.s32 %v7726, %v7728
        %v7730 = vrot.slane %v7716, %v7729
        %v7731 = vcombine.low %v7675, %v7707
        %v7732 = vcombine.high %v7675, %v7707
        %v7733 = vcombine.low %v7682, %v7714
        %v7734 = vcombine.high %v7682, %v7714
        %v7735 = vcombine.low %v7691, %v7723
        %v7736 = vcombine.high %v7691, %v7723
        %v7737 = vcombine.low %v7698, %v7730
        %v7738 = vcombine.high %v7698, %v7730
        %v7739 = vcombine.low %v6270, %v6282
        %v7740 = vcombine.high %v6270, %v6282
        %v7742 = vunpack.c.l.s4 1983009808
        %v7743 = vunpack.c.0.s8 %v7742
        %v7744 = vlaneseq
        %v7745 = vshrl.u32 %v7744, 7
        %v7746 = vsub.s32 %v7743, %v7745
        %v7747 = vrot.slane %v7739, %v7746
        %v7749 = vunpack.c.l.s4 1983009808
        %v7750 = vunpack.c.0.s8 %v7749
        %v7751 = vlaneseq
        %v7752 = vshrl.u32 %v7751, 7
        %v7753 = vsub.s32 %v7750, %v7752
        %v7754 = vrot.slane %v7740, %v7753
        %v7755 = vcombine.low %v6276, %v6288
        %v7756 = vcombine.high %v6276, %v6288
        %v7758 = vunpack.c.l.s4 1983009808
        %v7759 = vunpack.c.0.s8 %v7758
        %v7760 = vlaneseq
        %v7761 = vshrl.u32 %v7760, 7
        %v7762 = vsub.s32 %v7759, %v7761
        %v7763 = vrot.slane %v7755, %v7762
        %v7765 = vunpack.c.l.s4 1983009808
        %v7766 = vunpack.c.0.s8 %v7765
        %v7767 = vlaneseq
        %v7768 = vshrl.u32 %v7767, 7
        %v7769 = vsub.s32 %v7766, %v7768
        %v7770 = vrot.slane %v7756, %v7769
        %v7771 = vcombine.low %v6294, %v6306
        %v7772 = vcombine.high %v6294, %v6306
        %v7774 = vunpack.c.l.s4 1983009808
        %v7775 = vunpack.c.0.s8 %v7774
        %v7776 = vlaneseq
        %v7777 = vshrl.u32 %v7776, 7
        %v7778 = vsub.s32 %v7775, %v7777
        %v7779 = vrot.slane %v7771, %v7778
        %v7781 = vunpack.c.l.s4 1983009808
        %v7782 = vunpack.c.0.s8 %v7781
        %v7783 = vlaneseq
        %v7784 = vshrl.u32 %v7783, 7
        %v7785 = vsub.s32 %v7782, %v7784
        %v7786 = vrot.slane %v7772, %v7785
        %v7787 = vcombine.low %v6300, %v6312
        %v7788 = vcombine.high %v6300, %v6312
        %v7790 = vunpack.c.l.s4 1983009808
        %v7791 = vunpack.c.0.s8 %v7790
        %v7792 = vlaneseq
        %v7793 = vshrl.u32 %v7792, 7
        %v7794 = vsub.s32 %v7791, %v7793
        %v7795 = vrot.slane %v7787, %v7794
        %v7797 = vunpack.c.l.s4 1983009808
        %v7798 = vunpack.c.0.s8 %v7797
        %v7799 = vlaneseq
        %v7800 = vshrl.u32 %v7799, 7
        %v7801 = vsub.s32 %v7798, %v7800
        %v7802 = vrot.slane %v7788, %v7801
        %v7803 = vcombine.low %v7747, %v7763
        %v7804 = vcombine.high %v7747, %v7763
        %v7806 = vunpack.c.l.s4 1934713408
        %v7807 = vunpack.c.0.s8 %v7806
        %v7808 = vlaneseq
        %v7809 = vshrl.u32 %v7808, 7
        %v7810 = vsub.s32 %v7807, %v7809
        %v7811 = vrot.slane %v7803, %v7810
        %v7813 = vunpack.c.l.s4 1934713408
        %v7814 = vunpack.c.0.s8 %v7813
        %v7815 = vlaneseq
        %v7816 = vshrl.u32 %v7815, 7
        %v7817 = vsub.s32 %v7814, %v7816
        %v7818 = vrot.slane %v7804, %v7817
        %v7819 = vcombine.low %v7754, %v7770
        %v7820 = vcombine.high %v7754, %v7770
        %v7822 = vunpack.c.l.s4 1934713408
        %v7823 = vunpack.c.0.s8 %v7822
        %v7824 = vlaneseq
        %v7825 = vshrl.u32 %v7824, 7
        %v7826 = vsub.s32 %v7823, %v7825
        %v7827 = vrot.slane %v7819, %v7826
        %v7829 = vunpack.c.l.s4 1934713408
        %v7830 = vunpack.c.0.s8 %v7829
        %v7831 = vlaneseq
        %v7832 = vshrl.u32 %v7831, 7
        %v7833 = vsub.s32 %v7830, %v7832
        %v7834 = vrot.slane %v7820, %v7833
        %v7835 = vcombine.low %v7779, %v7795
        %v7836 = vcombine.high %v7779, %v7795
        %v7838 = vunpack.c.l.s4 1934713408
        %v7839 = vunpack.c.0.s8 %v7838
        %v7840 = vlaneseq
        %v7841 = vshrl.u32 %v7840, 7
        %v7842 = vsub.s32 %v7839, %v7841
        %v7843 = vrot.slane %v7835, %v7842
        %v7845 = vunpack.c.l.s4 1934713408
        %v7846 = vunpack.c.0.s8 %v7845
        %v7847 = vlaneseq
        %v7848 = vshrl.u32 %v7847, 7
        %v7849 = vsub.s32 %v7846, %v7848
        %v7850 = vrot.slane %v7836, %v7849
        %v7851 = vcombine.low %v7786, %v7802
        %v7852 = vcombine.high %v7786, %v7802
        %v7854 = vunpack.c.l.s4 1934713408
        %v7855 = vunpack.c.0.s8 %v7854
        %v7856 = vlaneseq
        %v7857 = vshrl.u32 %v7856, 7
        %v7858 = vsub.s32 %v7855, %v7857
        %v7859 = vrot.slane %v7851, %v7858
        %v7861 = vunpack.c.l.s4 1934713408
        %v7862 = vunpack.c.0.s8 %v7861
        %v7863 = vlaneseq
        %v7864 = vshrl.u32 %v7863, 7
        %v7865 = vsub.s32 %v7862, %v7864
        %v7866 = vrot.slane %v7852, %v7865
        %v7867 = vcombine.low %v7811, %v7843
        %v7868 = vcombine.high %v7811, %v7843
        %v7869 = vcombine.low %v7818, %v7850
        %v7870 = vcombine.high %v7818, %v7850
        %v7871 = vcombine.low %v7827, %v7859
        %v7872 = vcombine.high %v7827, %v7859
        %v7873 = vcombine.low %v7834, %v7866
        %v7874 = vcombine.high %v7834, %v7866
        %v7875 = vcombine.low %v6318, %v6330
        %v7876 = vcombine.high %v6318, %v6330
        %v7878 = vunpack.c.l.s4 1983009808
        %v7879 = vunpack.c.0.s8 %v7878
        %v7880 = vlaneseq
        %v7881 = vshrl.u32 %v7880, 7
        %v7882 = vsub.s32 %v7879, %v7881
        %v7883 = vrot.slane %v7875, %v7882
        %v7885 = vunpack.c.l.s4 1983009808
        %v7886 = vunpack.c.0.s8 %v7885
        %v7887 = vlaneseq
        %v7888 = vshrl.u32 %v7887, 7
        %v7889 = vsub.s32 %v7886, %v7888
        %v7890 = vrot.slane %v7876, %v7889
        %v7891 = vcombine.low %v6324, %v6336
        %v7892 = vcombine.high %v6324, %v6336
        %v7894 = vunpack.c.l.s4 1983009808
        %v7895 = vunpack.c.0.s8 %v7894
        %v7896 = vlaneseq
        %v7897 = vshrl.u32 %v7896, 7
        %v7898 = vsub.s32 %v7895, %v7897
        %v7899 = vrot.slane %v7891, %v7898
        %v7901 = vunpack.c.l.s4 1983009808
        %v7902 = vunpack.c.0.s8 %v7901
        %v7903 = vlaneseq
        %v7904 = vshrl.u32 %v7903, 7
        %v7905 = vsub.s32 %v7902, %v7904
        %v7906 = vrot.slane %v7892, %v7905
        %v7907 = vcombine.low %v6342, %v6354
        %v7908 = vcombine.high %v6342, %v6354
        %v7910 = vunpack.c.l.s4 1983009808
        %v7911 = vunpack.c.0.s8 %v7910
        %v7912 = vlaneseq
        %v7913 = vshrl.u32 %v7912, 7
        %v7914 = vsub.s32 %v7911, %v7913
        %v7915 = vrot.slane %v7907, %v7914
        %v7917 = vunpack.c.l.s4 1983009808
        %v7918 = vunpack.c.0.s8 %v7917
        %v7919 = vlaneseq
        %v7920 = vshrl.u32 %v7919, 7
        %v7921 = vsub.s32 %v7918, %v7920
        %v7922 = vrot.slane %v7908, %v7921
        %v7923 = vcombine.low %v6348, %v6360
        %v7924 = vcombine.high %v6348, %v6360
        %v7926 = vunpack.c.l.s4 1983009808
        %v7927 = vunpack.c.0.s8 %v7926
        %v7928 = vlaneseq
        %v7929 = vshrl.u32 %v7928, 7
        %v7930 = vsub.s32 %v7927, %v7929
        %v7931 = vrot.slane %v7923, %v7930
        %v7933 = vunpack.c.l.s4 1983009808
        %v7934 = vunpack.c.0.s8 %v7933
        %v7935 = vlaneseq
        %v7936 = vshrl.u32 %v7935, 7
        %v7937 = vsub.s32 %v7934, %v7936
        %v7938 = vrot.slane %v7924, %v7937
        %v7939 = vcombine.low %v7883, %v7899
        %v7940 = vcombine.high %v7883, %v7899
        %v7942 = vunpack.c.l.s4 1934713408
        %v7943 = vunpack.c.0.s8 %v7942
        %v7944 = vlaneseq
        %v7945 = vshrl.u32 %v7944, 7
        %v7946 = vsub.s32 %v7943, %v7945
        %v7947 = vrot.slane %v7939, %v7946
        %v7949 = vunpack.c.l.s4 1934713408
        %v7950 = vunpack.c.0.s8 %v7949
        %v7951 = vlaneseq
        %v7952 = vshrl.u32 %v7951, 7
        %v7953 = vsub.s32 %v7950, %v7952
        %v7954 = vrot.slane %v7940, %v7953
        %v7955 = vcombine.low %v7890, %v7906
        %v7956 = vcombine.high %v7890, %v7906
        %v7958 = vunpack.c.l.s4 1934713408
        %v7959 = vunpack.c.0.s8 %v7958
        %v7960 = vlaneseq
        %v7961 = vshrl.u32 %v7960, 7
        %v7962 = vsub.s32 %v7959, %v7961
        %v7963 = vrot.slane %v7955, %v7962
        %v7965 = vunpack.c.l.s4 1934713408
        %v7966 = vunpack.c.0.s8 %v7965
        %v7967 = vlaneseq
        %v7968 = vshrl.u32 %v7967, 7
        %v7969 = vsub.s32 %v7966, %v7968
        %v7970 = vrot.slane %v7956, %v7969
        %v7971 = vcombine.low %v7915, %v7931
        %v7972 = vcombine.high %v7915, %v7931
        %v7974 = vunpack.c.l.s4 1934713408
        %v7975 = vunpack.c.0.s8 %v7974
        %v7976 = vlaneseq
        %v7977 = vshrl.u32 %v7976, 7
        %v7978 = vsub.s32 %v7975, %v7977
        %v7979 = vrot.slane %v7971, %v7978
        %v7981 = vunpack.c.l.s4 1934713408
        %v7982 = vunpack.c.0.s8 %v7981
        %v7983 = vlaneseq
        %v7984 = vshrl.u32 %v7983, 7
        %v7985 = vsub.s32 %v7982, %v7984
        %v7986 = vrot.slane %v7972, %v7985
        %v7987 = vcombine.low %v7922, %v7938
        %v7988 = vcombine.high %v7922, %v7938
        %v7990 = vunpack.c.l.s4 1934713408
        %v7991 = vunpack.c.0.s8 %v7990
        %v7992 = vlaneseq
        %v7993 = vshrl.u32 %v7992, 7
        %v7994 = vsub.s32 %v7991, %v7993
        %v7995 = vrot.slane %v7987, %v7994
        %v7997 = vunpack.c.l.s4 1934713408
        %v7998 = vunpack.c.0.s8 %v7997
        %v7999 = vlaneseq
        %v8000 = vshrl.u32 %v7999, 7
        %v8001 = vsub.s32 %v7998, %v8000
        %v8002 = vrot.slane %v7988, %v8001
        %v8003 = vcombine.low %v7947, %v7979
        %v8004 = vcombine.high %v7947, %v7979
        %v8005 = vcombine.low %v7954, %v7986
        %v8006 = vcombine.high %v7954, %v7986
        %v8007 = vcombine.low %v7963, %v7995
        %v8008 = vcombine.high %v7963, %v7995
        %v8009 = vcombine.low %v7970, %v8002
        %v8010 = vcombine.high %v7970, %v8002
        %v8011 = vcombine.low %v6366, %v6378
        %v8012 = vcombine.high %v6366, %v6378
        %v8014 = vunpack.c.l.s4 1983009808
        %v8015 = vunpack.c.0.s8 %v8014
        %v8016 = vlaneseq
        %v8017 = vshrl.u32 %v8016, 7
        %v8018 = vsub.s32 %v8015, %v8017
        %v8019 = vrot.slane %v8011, %v8018
        %v8021 = vunpack.c.l.s4 1983009808
        %v8022 = vunpack.c.0.s8 %v8021
        %v8023 = vlaneseq
        %v8024 = vshrl.u32 %v8023, 7
        %v8025 = vsub.s32 %v8022, %v8024
        %v8026 = vrot.slane %v8012, %v8025
        %v8027 = vcombine.low %v6372, %v6384
        %v8028 = vcombine.high %v6372, %v6384
        %v8030 = vunpack.c.l.s4 1983009808
        %v8031 = vunpack.c.0.s8 %v8030
        %v8032 = vlaneseq
        %v8033 = vshrl.u32 %v8032, 7
        %v8034 = vsub.s32 %v8031, %v8033
        %v8035 = vrot.slane %v8027, %v8034
        %v8037 = vunpack.c.l.s4 1983009808
        %v8038 = vunpack.c.0.s8 %v8037
        %v8039 = vlaneseq
        %v8040 = vshrl.u32 %v8039, 7
        %v8041 = vsub.s32 %v8038, %v8040
        %v8042 = vrot.slane %v8028, %v8041
        %v8043 = vcombine.low %v6390, %v6402
        %v8044 = vcombine.high %v6390, %v6402
        %v8046 = vunpack.c.l.s4 1983009808
        %v8047 = vunpack.c.0.s8 %v8046
        %v8048 = vlaneseq
        %v8049 = vshrl.u32 %v8048, 7
        %v8050 = vsub.s32 %v8047, %v8049
        %v8051 = vrot.slane %v8043, %v8050
        %v8053 = vunpack.c.l.s4 1983009808
        %v8054 = vunpack.c.0.s8 %v8053
        %v8055 = vlaneseq
        %v8056 = vshrl.u32 %v8055, 7
        %v8057 = vsub.s32 %v8054, %v8056
        %v8058 = vrot.slane %v8044, %v8057
        %v8059 = vcombine.low %v6396, %v6408
        %v8060 = vcombine.high %v6396, %v6408
        %v8062 = vunpack.c.l.s4 1983009808
        %v8063 = vunpack.c.0.s8 %v8062
        %v8064 = vlaneseq
        %v8065 = vshrl.u32 %v8064, 7
        %v8066 = vsub.s32 %v8063, %v8065
        %v8067 = vrot.slane %v8059, %v8066
        %v8069 = vunpack.c.l.s4 1983009808
        %v8070 = vunpack.c.0.s8 %v8069
        %v8071 = vlaneseq
        %v8072 = vshrl.u32 %v8071, 7
        %v8073 = vsub.s32 %v8070, %v8072
        %v8074 = vrot.slane %v8060, %v8073
        %v8075 = vcombine.low %v8019, %v8035
        %v8076 = vcombine.high %v8019, %v8035
        %v8078 = vunpack.c.l.s4 1934713408
        %v8079 = vunpack.c.0.s8 %v8078
        %v8080 = vlaneseq
        %v8081 = vshrl.u32 %v8080, 7
        %v8082 = vsub.s32 %v8079, %v8081
        %v8083 = vrot.slane %v8075, %v8082
        %v8085 = vunpack.c.l.s4 1934713408
        %v8086 = vunpack.c.0.s8 %v8085
        %v8087 = vlaneseq
        %v8088 = vshrl.u32 %v8087, 7
        %v8089 = vsub.s32 %v8086, %v8088
        %v8090 = vrot.slane %v8076, %v8089
        %v8091 = vcombine.low %v8026, %v8042
        %v8092 = vcombine.high %v8026, %v8042
        %v8094 = vunpack.c.l.s4 1934713408
        %v8095 = vunpack.c.0.s8 %v8094
        %v8096 = vlaneseq
        %v8097 = vshrl.u32 %v8096, 7
        %v8098 = vsub.s32 %v8095, %v8097
        %v8099 = vrot.slane %v8091, %v8098
        %v8101 = vunpack.c.l.s4 1934713408
        %v8102 = vunpack.c.0.s8 %v8101
        %v8103 = vlaneseq
        %v8104 = vshrl.u32 %v8103, 7
        %v8105 = vsub.s32 %v8102, %v8104
        %v8106 = vrot.slane %v8092, %v8105
        %v8107 = vcombine.low %v8051, %v8067
        %v8108 = vcombine.high %v8051, %v8067
        %v8110 = vunpack.c.l.s4 1934713408
        %v8111 = vunpack.c.0.s8 %v8110
        %v8112 = vlaneseq
        %v8113 = vshrl.u32 %v8112, 7
        %v8114 = vsub.s32 %v8111, %v8113
        %v8115 = vrot.slane %v8107, %v8114
        %v8117 = vunpack.c.l.s4 1934713408
        %v8118 = vunpack.c.0.s8 %v8117
        %v8119 = vlaneseq
        %v8120 = vshrl.u32 %v8119, 7
        %v8121 = vsub.s32 %v8118, %v8120
        %v8122 = vrot.slane %v8108, %v8121
        %v8123 = vcombine.low %v8058, %v8074
        %v8124 = vcombine.high %v8058, %v8074
        %v8126 = vunpack.c.l.s4 1934713408
        %v8127 = vunpack.c.0.s8 %v8126
        %v8128 = vlaneseq
        %v8129 = vshrl.u32 %v8128, 7
        %v8130 = vsub.s32 %v8127, %v8129
        %v8131 = vrot.slane %v8123, %v8130
        %v8133 = vunpack.c.l.s4 1934713408
        %v8134 = vunpack.c.0.s8 %v8133
        %v8135 = vlaneseq
        %v8136 = vshrl.u32 %v8135, 7
        %v8137 = vsub.s32 %v8134, %v8136
        %v8138 = vrot.slane %v8124, %v8137
        %v8139 = vcombine.low %v8083, %v8115
        %v8140 = vcombine.high %v8083, %v8115
        %v8141 = vcombine.low %v8090, %v8122
        %v8142 = vcombine.high %v8090, %v8122
        %v8143 = vcombine.low %v8099, %v8131
        %v8144 = vcombine.high %v8099, %v8131
        %v8145 = vcombine.low %v8106, %v8138
        %v8146 = vcombine.high %v8106, %v8138
        %v8147 = vcombine.low %v6414, %v6426
        %v8148 = vcombine.high %v6414, %v6426
        %v8150 = vunpack.c.l.s4 1983009808
        %v8151 = vunpack.c.0.s8 %v8150
        %v8152 = vlaneseq
        %v8153 = vshrl.u32 %v8152, 7
        %v8154 = vsub.s32 %v8151, %v8153
        %v8155 = vrot.slane %v8147, %v8154
        %v8157 = vunpack.c.l.s4 1983009808
        %v8158 = vunpack.c.0.s8 %v8157
        %v8159 = vlaneseq
        %v8160 = vshrl.u32 %v8159, 7
        %v8161 = vsub.s32 %v8158, %v8160
        %v8162 = vrot.slane %v8148, %v8161
        %v8163 = vcombine.low %v6420, %v6432
        %v8164 = vcombine.high %v6420, %v6432
        %v8166 = vunpack.c.l.s4 1983009808
        %v8167 = vunpack.c.0.s8 %v8166
        %v8168 = vlaneseq
        %v8169 = vshrl.u32 %v8168, 7
        %v8170 = vsub.s32 %v8167, %v8169
        %v8171 = vrot.slane %v8163, %v8170
        %v8173 = vunpack.c.l.s4 1983009808
        %v8174 = vunpack.c.0.s8 %v8173
        %v8175 = vlaneseq
        %v8176 = vshrl.u32 %v8175, 7
        %v8177 = vsub.s32 %v8174, %v8176
        %v8178 = vrot.slane %v8164, %v8177
        %v8179 = vcombine.low %v6438, %v6450
        %v8180 = vcombine.high %v6438, %v6450
        %v8182 = vunpack.c.l.s4 1983009808
        %v8183 = vunpack.c.0.s8 %v8182
        %v8184 = vlaneseq
        %v8185 = vshrl.u32 %v8184, 7
        %v8186 = vsub.s32 %v8183, %v8185
        %v8187 = vrot.slane %v8179, %v8186
        %v8189 = vunpack.c.l.s4 1983009808
        %v8190 = vunpack.c.0.s8 %v8189
        %v8191 = vlaneseq
        %v8192 = vshrl.u32 %v8191, 7
        %v8193 = vsub.s32 %v8190, %v8192
        %v8194 = vrot.slane %v8180, %v8193
        %v8195 = vcombine.low %v6444, %v6456
        %v8196 = vcombine.high %v6444, %v6456
        %v8198 = vunpack.c.l.s4 1983009808
        %v8199 = vunpack.c.0.s8 %v8198
        %v8200 = vlaneseq
        %v8201 = vshrl.u32 %v8200, 7
        %v8202 = vsub.s32 %v8199, %v8201
        %v8203 = vrot.slane %v8195, %v8202
        %v8205 = vunpack.c.l.s4 1983009808
        %v8206 = vunpack.c.0.s8 %v8205
        %v8207 = vlaneseq
        %v8208 = vshrl.u32 %v8207, 7
        %v8209 = vsub.s32 %v8206, %v8208
        %v8210 = vrot.slane %v8196, %v8209
        %v8211 = vcombine.low %v8155, %v8171
        %v8212 = vcombine.high %v8155, %v8171
        %v8214 = vunpack.c.l.s4 1934713408
        %v8215 = vunpack.c.0.s8 %v8214
        %v8216 = vlaneseq
        %v8217 = vshrl.u32 %v8216, 7
        %v8218 = vsub.s32 %v8215, %v8217
        %v8219 = vrot.slane %v8211, %v8218
        %v8221 = vunpack.c.l.s4 1934713408
        %v8222 = vunpack.c.0.s8 %v8221
        %v8223 = vlaneseq
        %v8224 = vshrl.u32 %v8223, 7
        %v8225 = vsub.s32 %v8222, %v8224
        %v8226 = vrot.slane %v8212, %v8225
        %v8227 = vcombine.low %v8162, %v8178
        %v8228 = vcombine.high %v8162, %v8178
        %v8230 = vunpack.c.l.s4 1934713408
        %v8231 = vunpack.c.0.s8 %v8230
        %v8232 = vlaneseq
        %v8233 = vshrl.u32 %v8232, 7
        %v8234 = vsub.s32 %v8231, %v8233
        %v8235 = vrot.slane %v8227, %v8234
        %v8237 = vunpack.c.l.s4 1934713408
        %v8238 = vunpack.c.0.s8 %v8237
        %v8239 = vlaneseq
        %v8240 = vshrl.u32 %v8239, 7
        %v8241 = vsub.s32 %v8238, %v8240
        %v8242 = vrot.slane %v8228, %v8241
        %v8243 = vcombine.low %v8187, %v8203
        %v8244 = vcombine.high %v8187, %v8203
        %v8246 = vunpack.c.l.s4 1934713408
        %v8247 = vunpack.c.0.s8 %v8246
        %v8248 = vlaneseq
        %v8249 = vshrl.u32 %v8248, 7
        %v8250 = vsub.s32 %v8247, %v8249
        %v8251 = vrot.slane %v8243, %v8250
        %v8253 = vunpack.c.l.s4 1934713408
        %v8254 = vunpack.c.0.s8 %v8253
        %v8255 = vlaneseq
        %v8256 = vshrl.u32 %v8255, 7
        %v8257 = vsub.s32 %v8254, %v8256
        %v8258 = vrot.slane %v8244, %v8257
        %v8259 = vcombine.low %v8194, %v8210
        %v8260 = vcombine.high %v8194, %v8210
        %v8262 = vunpack.c.l.s4 1934713408
        %v8263 = vunpack.c.0.s8 %v8262
        %v8264 = vlaneseq
        %v8265 = vshrl.u32 %v8264, 7
        %v8266 = vsub.s32 %v8263, %v8265
        %v8267 = vrot.slane %v8259, %v8266
        %v8269 = vunpack.c.l.s4 1934713408
        %v8270 = vunpack.c.0.s8 %v8269
        %v8271 = vlaneseq
        %v8272 = vshrl.u32 %v8271, 7
        %v8273 = vsub.s32 %v8270, %v8272
        %v8274 = vrot.slane %v8260, %v8273
        %v8275 = vcombine.low %v8219, %v8251
        %v8276 = vcombine.high %v8219, %v8251
        %v8277 = vcombine.low %v8226, %v8258
        %v8278 = vcombine.high %v8226, %v8258
        %v8279 = vcombine.low %v8235, %v8267
        %v8280 = vcombine.high %v8235, %v8267
        %v8281 = vcombine.low %v8242, %v8274
        %v8282 = vcombine.high %v8242, %v8274
        %v8283 = vcombine.low %v6462, %v6474
        %v8284 = vcombine.high %v6462, %v6474
        %v8286 = vunpack.c.l.s4 1983009808
        %v8287 = vunpack.c.0.s8 %v8286
        %v8288 = vlaneseq
        %v8289 = vshrl.u32 %v8288, 7
        %v8290 = vsub.s32 %v8287, %v8289
        %v8291 = vrot.slane %v8283, %v8290
        %v8293 = vunpack.c.l.s4 1983009808
        %v8294 = vunpack.c.0.s8 %v8293
        %v8295 = vlaneseq
        %v8296 = vshrl.u32 %v8295, 7
        %v8297 = vsub.s32 %v8294, %v8296
        %v8298 = vrot.slane %v8284, %v8297
        %v8299 = vcombine.low %v6468, %v6480
        %v8300 = vcombine.high %v6468, %v6480
        %v8302 = vunpack.c.l.s4 1983009808
        %v8303 = vunpack.c.0.s8 %v8302
        %v8304 = vlaneseq
        %v8305 = vshrl.u32 %v8304, 7
        %v8306 = vsub.s32 %v8303, %v8305
        %v8307 = vrot.slane %v8299, %v8306
        %v8309 = vunpack.c.l.s4 1983009808
        %v8310 = vunpack.c.0.s8 %v8309
        %v8311 = vlaneseq
        %v8312 = vshrl.u32 %v8311, 7
        %v8313 = vsub.s32 %v8310, %v8312
        %v8314 = vrot.slane %v8300, %v8313
        %v8315 = vcombine.low %v6486, %v6498
        %v8316 = vcombine.high %v6486, %v6498
        %v8318 = vunpack.c.l.s4 1983009808
        %v8319 = vunpack.c.0.s8 %v8318
        %v8320 = vlaneseq
        %v8321 = vshrl.u32 %v8320, 7
        %v8322 = vsub.s32 %v8319, %v8321
        %v8323 = vrot.slane %v8315, %v8322
        %v8325 = vunpack.c.l.s4 1983009808
        %v8326 = vunpack.c.0.s8 %v8325
        %v8327 = vlaneseq
        %v8328 = vshrl.u32 %v8327, 7
        %v8329 = vsub.s32 %v8326, %v8328
        %v8330 = vrot.slane %v8316, %v8329
        %v8331 = vcombine.low %v6492, %v6504
        %v8332 = vcombine.high %v6492, %v6504
        %v8334 = vunpack.c.l.s4 1983009808
        %v8335 = vunpack.c.0.s8 %v8334
        %v8336 = vlaneseq
        %v8337 = vshrl.u32 %v8336, 7
        %v8338 = vsub.s32 %v8335, %v8337
        %v8339 = vrot.slane %v8331, %v8338
        %v8341 = vunpack.c.l.s4 1983009808
        %v8342 = vunpack.c.0.s8 %v8341
        %v8343 = vlaneseq
        %v8344 = vshrl.u32 %v8343, 7
        %v8345 = vsub.s32 %v8342, %v8344
        %v8346 = vrot.slane %v8332, %v8345
        %v8347 = vcombine.low %v8291, %v8307
        %v8348 = vcombine.high %v8291, %v8307
        %v8350 = vunpack.c.l.s4 1934713408
        %v8351 = vunpack.c.0.s8 %v8350
        %v8352 = vlaneseq
        %v8353 = vshrl.u32 %v8352, 7
        %v8354 = vsub.s32 %v8351, %v8353
        %v8355 = vrot.slane %v8347, %v8354
        %v8357 = vunpack.c.l.s4 1934713408
        %v8358 = vunpack.c.0.s8 %v8357
        %v8359 = vlaneseq
        %v8360 = vshrl.u32 %v8359, 7
        %v8361 = vsub.s32 %v8358, %v8360
        %v8362 = vrot.slane %v8348, %v8361
        %v8363 = vcombine.low %v8298, %v8314
        %v8364 = vcombine.high %v8298, %v8314
        %v8366 = vunpack.c.l.s4 1934713408
        %v8367 = vunpack.c.0.s8 %v8366
        %v8368 = vlaneseq
        %v8369 = vshrl.u32 %v8368, 7
        %v8370 = vsub.s32 %v8367, %v8369
        %v8371 = vrot.slane %v8363, %v8370
        %v8373 = vunpack.c.l.s4 1934713408
        %v8374 = vunpack.c.0.s8 %v8373
        %v8375 = vlaneseq
        %v8376 = vshrl.u32 %v8375, 7
        %v8377 = vsub.s32 %v8374, %v8376
        %v8378 = vrot.slane %v8364, %v8377
        %v8379 = vcombine.low %v8323, %v8339
        %v8380 = vcombine.high %v8323, %v8339
        %v8382 = vunpack.c.l.s4 1934713408
        %v8383 = vunpack.c.0.s8 %v8382
        %v8384 = vlaneseq
        %v8385 = vshrl.u32 %v8384, 7
        %v8386 = vsub.s32 %v8383, %v8385
        %v8387 = vrot.slane %v8379, %v8386
        %v8389 = vunpack.c.l.s4 1934713408
        %v8390 = vunpack.c.0.s8 %v8389
        %v8391 = vlaneseq
        %v8392 = vshrl.u32 %v8391, 7
        %v8393 = vsub.s32 %v8390, %v8392
        %v8394 = vrot.slane %v8380, %v8393
        %v8395 = vcombine.low %v8330, %v8346
        %v8396 = vcombine.high %v8330, %v8346
        %v8398 = vunpack.c.l.s4 1934713408
        %v8399 = vunpack.c.0.s8 %v8398
        %v8400 = vlaneseq
        %v8401 = vshrl.u32 %v8400, 7
        %v8402 = vsub.s32 %v8399, %v8401
        %v8403 = vrot.slane %v8395, %v8402
        %v8405 = vunpack.c.l.s4 1934713408
        %v8406 = vunpack.c.0.s8 %v8405
        %v8407 = vlaneseq
        %v8408 = vshrl.u32 %v8407, 7
        %v8409 = vsub.s32 %v8406, %v8408
        %v8410 = vrot.slane %v8396, %v8409
        %v8411 = vcombine.low %v8355, %v8387
        %v8412 = vcombine.high %v8355, %v8387
        %v8413 = vcombine.low %v8362, %v8394
        %v8414 = vcombine.high %v8362, %v8394
        %v8415 = vcombine.low %v8371, %v8403
        %v8416 = vcombine.high %v8371, %v8403
        %v8417 = vcombine.low %v8378, %v8410
        %v8418 = vcombine.high %v8378, %v8410
        %v8419 = vcombine.low %v6510, %v6522
        %v8420 = vcombine.high %v6510, %v6522
        %v8422 = vunpack.c.l.s4 1983009808
        %v8423 = vunpack.c.0.s8 %v8422
        %v8424 = vlaneseq
        %v8425 = vshrl.u32 %v8424, 7
        %v8426 = vsub.s32 %v8423, %v8425
        %v8427 = vrot.slane %v8419, %v8426
        %v8429 = vunpack.c.l.s4 1983009808
        %v8430 = vunpack.c.0.s8 %v8429
        %v8431 = vlaneseq
        %v8432 = vshrl.u32 %v8431, 7
        %v8433 = vsub.s32 %v8430, %v8432
        %v8434 = vrot.slane %v8420, %v8433
        %v8435 = vcombine.low %v6516, %v6528
        %v8436 = vcombine.high %v6516, %v6528
        %v8438 = vunpack.c.l.s4 1983009808
        %v8439 = vunpack.c.0.s8 %v8438
        %v8440 = vlaneseq
        %v8441 = vshrl.u32 %v8440, 7
        %v8442 = vsub.s32 %v8439, %v8441
        %v8443 = vrot.slane %v8435, %v8442
        %v8445 = vunpack.c.l.s4 1983009808
        %v8446 = vunpack.c.0.s8 %v8445
        %v8447 = vlaneseq
        %v8448 = vshrl.u32 %v8447, 7
        %v8449 = vsub.s32 %v8446, %v8448
        %v8450 = vrot.slane %v8436, %v8449
        %v8451 = vcombine.low %v6534, %v6546
        %v8452 = vcombine.high %v6534, %v6546
        %v8454 = vunpack.c.l.s4 1983009808
        %v8455 = vunpack.c.0.s8 %v8454
        %v8456 = vlaneseq
        %v8457 = vshrl.u32 %v8456, 7
        %v8458 = vsub.s32 %v8455, %v8457
        %v8459 = vrot.slane %v8451, %v8458
        %v8461 = vunpack.c.l.s4 1983009808
        %v8462 = vunpack.c.0.s8 %v8461
        %v8463 = vlaneseq
        %v8464 = vshrl.u32 %v8463, 7
        %v8465 = vsub.s32 %v8462, %v8464
        %v8466 = vrot.slane %v8452, %v8465
        %v8467 = vcombine.low %v6540, %v6552
        %v8468 = vcombine.high %v6540, %v6552
        %v8470 = vunpack.c.l.s4 1983009808
        %v8471 = vunpack.c.0.s8 %v8470
        %v8472 = vlaneseq
        %v8473 = vshrl.u32 %v8472, 7
        %v8474 = vsub.s32 %v8471, %v8473
        %v8475 = vrot.slane %v8467, %v8474
        %v8477 = vunpack.c.l.s4 1983009808
        %v8478 = vunpack.c.0.s8 %v8477
        %v8479 = vlaneseq
        %v8480 = vshrl.u32 %v8479, 7
        %v8481 = vsub.s32 %v8478, %v8480
        %v8482 = vrot.slane %v8468, %v8481
        %v8483 = vcombine.low %v8427, %v8443
        %v8484 = vcombine.high %v8427, %v8443
        %v8486 = vunpack.c.l.s4 1934713408
        %v8487 = vunpack.c.0.s8 %v8486
        %v8488 = vlaneseq
        %v8489 = vshrl.u32 %v8488, 7
        %v8490 = vsub.s32 %v8487, %v8489
        %v8491 = vrot.slane %v8483, %v8490
        %v8493 = vunpack.c.l.s4 1934713408
        %v8494 = vunpack.c.0.s8 %v8493
        %v8495 = vlaneseq
        %v8496 = vshrl.u32 %v8495, 7
        %v8497 = vsub.s32 %v8494, %v8496
        %v8498 = vrot.slane %v8484, %v8497
        %v8499 = vcombine.low %v8434, %v8450
        %v8500 = vcombine.high %v8434, %v8450
        %v8502 = vunpack.c.l.s4 1934713408
        %v8503 = vunpack.c.0.s8 %v8502
        %v8504 = vlaneseq
        %v8505 = vshrl.u32 %v8504, 7
        %v8506 = vsub.s32 %v8503, %v8505
        %v8507 = vrot.slane %v8499, %v8506
        %v8509 = vunpack.c.l.s4 1934713408
        %v8510 = vunpack.c.0.s8 %v8509
        %v8511 = vlaneseq
        %v8512 = vshrl.u32 %v8511, 7
        %v8513 = vsub.s32 %v8510, %v8512
        %v8514 = vrot.slane %v8500, %v8513
        %v8515 = vcombine.low %v8459, %v8475
        %v8516 = vcombine.high %v8459, %v8475
        %v8518 = vunpack.c.l.s4 1934713408
        %v8519 = vunpack.c.0.s8 %v8518
        %v8520 = vlaneseq
        %v8521 = vshrl.u32 %v8520, 7
        %v8522 = vsub.s32 %v8519, %v8521
        %v8523 = vrot.slane %v8515, %v8522
        %v8525 = vunpack.c.l.s4 1934713408
        %v8526 = vunpack.c.0.s8 %v8525
        %v8527 = vlaneseq
        %v8528 = vshrl.u32 %v8527, 7
        %v8529 = vsub.s32 %v8526, %v8528
        %v8530 = vrot.slane %v8516, %v8529
        %v8531 = vcombine.low %v8466, %v8482
        %v8532 = vcombine.high %v8466, %v8482
        %v8534 = vunpack.c.l.s4 1934713408
        %v8535 = vunpack.c.0.s8 %v8534
        %v8536 = vlaneseq
        %v8537 = vshrl.u32 %v8536, 7
        %v8538 = vsub.s32 %v8535, %v8537
        %v8539 = vrot.slane %v8531, %v8538
        %v8541 = vunpack.c.l.s4 1934713408
        %v8542 = vunpack.c.0.s8 %v8541
        %v8543 = vlaneseq
        %v8544 = vshrl.u32 %v8543, 7
        %v8545 = vsub.s32 %v8542, %v8544
        %v8546 = vrot.slane %v8532, %v8545
        %v8547 = vcombine.low %v8491, %v8523
        %v8548 = vcombine.high %v8491, %v8523
        %v8549 = vcombine.low %v8498, %v8530
        %v8550 = vcombine.high %v8498, %v8530
        %v8551 = vcombine.low %v8507, %v8539
        %v8552 = vcombine.high %v8507, %v8539
        %v8553 = vcombine.low %v8514, %v8546
        %v8554 = vcombine.high %v8514, %v8546
        %v8555 = vcombine.low %v6558, %v6570
        %v8556 = vcombine.high %v6558, %v6570
        %v8558 = vunpack.c.l.s4 1983009808
        %v8559 = vunpack.c.0.s8 %v8558
        %v8560 = vlaneseq
        %v8561 = vshrl.u32 %v8560, 7
        %v8562 = vsub.s32 %v8559, %v8561
        %v8563 = vrot.slane %v8555, %v8562
        %v8565 = vunpack.c.l.s4 1983009808
        %v8566 = vunpack.c.0.s8 %v8565
        %v8567 = vlaneseq
        %v8568 = vshrl.u32 %v8567, 7
        %v8569 = vsub.s32 %v8566, %v8568
        %v8570 = vrot.slane %v8556, %v8569
        %v8571 = vcombine.low %v6564, %v6576
        %v8572 = vcombine.high %v6564, %v6576
        %v8574 = vunpack.c.l.s4 1983009808
        %v8575 = vunpack.c.0.s8 %v8574
        %v8576 = vlaneseq
        %v8577 = vshrl.u32 %v8576, 7
        %v8578 = vsub.s32 %v8575, %v8577
        %v8579 = vrot.slane %v8571, %v8578
        %v8581 = vunpack.c.l.s4 1983009808
        %v8582 = vunpack.c.0.s8 %v8581
        %v8583 = vlaneseq
        %v8584 = vshrl.u32 %v8583, 7
        %v8585 = vsub.s32 %v8582, %v8584
        %v8586 = vrot.slane %v8572, %v8585
        %v8587 = vcombine.low %v6582, %v6594
        %v8588 = vcombine.high %v6582, %v6594
        %v8590 = vunpack.c.l.s4 1983009808
        %v8591 = vunpack.c.0.s8 %v8590
        %v8592 = vlaneseq
        %v8593 = vshrl.u32 %v8592, 7
        %v8594 = vsub.s32 %v8591, %v8593
        %v8595 = vrot.slane %v8587, %v8594
        %v8597 = vunpack.c.l.s4 1983009808
        %v8598 = vunpack.c.0.s8 %v8597
        %v8599 = vlaneseq
        %v8600 = vshrl.u32 %v8599, 7
        %v8601 = vsub.s32 %v8598, %v8600
        %v8602 = vrot.slane %v8588, %v8601
        %v8603 = vcombine.low %v6588, %v6600
        %v8604 = vcombine.high %v6588, %v6600
        %v8606 = vunpack.c.l.s4 1983009808
        %v8607 = vunpack.c.0.s8 %v8606
        %v8608 = vlaneseq
        %v8609 = vshrl.u32 %v8608, 7
        %v8610 = vsub.s32 %v8607, %v8609
        %v8611 = vrot.slane %v8603, %v8610
        %v8613 = vunpack.c.l.s4 1983009808
        %v8614 = vunpack.c.0.s8 %v8613
        %v8615 = vlaneseq
        %v8616 = vshrl.u32 %v8615, 7
        %v8617 = vsub.s32 %v8614, %v8616
        %v8618 = vrot.slane %v8604, %v8617
        %v8619 = vcombine.low %v8563, %v8579
        %v8620 = vcombine.high %v8563, %v8579
        %v8622 = vunpack.c.l.s4 1934713408
        %v8623 = vunpack.c.0.s8 %v8622
        %v8624 = vlaneseq
        %v8625 = vshrl.u32 %v8624, 7
        %v8626 = vsub.s32 %v8623, %v8625
        %v8627 = vrot.slane %v8619, %v8626
        %v8629 = vunpack.c.l.s4 1934713408
        %v8630 = vunpack.c.0.s8 %v8629
        %v8631 = vlaneseq
        %v8632 = vshrl.u32 %v8631, 7
        %v8633 = vsub.s32 %v8630, %v8632
        %v8634 = vrot.slane %v8620, %v8633
        %v8635 = vcombine.low %v8570, %v8586
        %v8636 = vcombine.high %v8570, %v8586
        %v8638 = vunpack.c.l.s4 1934713408
        %v8639 = vunpack.c.0.s8 %v8638
        %v8640 = vlaneseq
        %v8641 = vshrl.u32 %v8640, 7
        %v8642 = vsub.s32 %v8639, %v8641
        %v8643 = vrot.slane %v8635, %v8642
        %v8645 = vunpack.c.l.s4 1934713408
        %v8646 = vunpack.c.0.s8 %v8645
        %v8647 = vlaneseq
        %v8648 = vshrl.u32 %v8647, 7
        %v8649 = vsub.s32 %v8646, %v8648
        %v8650 = vrot.slane %v8636, %v8649
        %v8651 = vcombine.low %v8595, %v8611
        %v8652 = vcombine.high %v8595, %v8611
        %v8654 = vunpack.c.l.s4 1934713408
        %v8655 = vunpack.c.0.s8 %v8654
        %v8656 = vlaneseq
        %v8657 = vshrl.u32 %v8656, 7
        %v8658 = vsub.s32 %v8655, %v8657
        %v8659 = vrot.slane %v8651, %v8658
        %v8661 = vunpack.c.l.s4 1934713408
        %v8662 = vunpack.c.0.s8 %v8661
        %v8663 = vlaneseq
        %v8664 = vshrl.u32 %v8663, 7
        %v8665 = vsub.s32 %v8662, %v8664
        %v8666 = vrot.slane %v8652, %v8665
        %v8667 = vcombine.low %v8602, %v8618
        %v8668 = vcombine.high %v8602, %v8618
        %v8670 = vunpack.c.l.s4 1934713408
        %v8671 = vunpack.c.0.s8 %v8670
        %v8672 = vlaneseq
        %v8673 = vshrl.u32 %v8672, 7
        %v8674 = vsub.s32 %v8671, %v8673
        %v8675 = vrot.slane %v8667, %v8674
        %v8677 = vunpack.c.l.s4 1934713408
        %v8678 = vunpack.c.0.s8 %v8677
        %v8679 = vlaneseq
        %v8680 = vshrl.u32 %v8679, 7
        %v8681 = vsub.s32 %v8678, %v8680
        %v8682 = vrot.slane %v8668, %v8681
        %v8683 = vcombine.low %v8627, %v8659
        %v8684 = vcombine.high %v8627, %v8659
        %v8685 = vcombine.low %v8634, %v8666
        %v8686 = vcombine.high %v8634, %v8666
        %v8687 = vcombine.low %v8643, %v8675
        %v8688 = vcombine.high %v8643, %v8675
        %v8689 = vcombine.low %v8650, %v8682
        %v8690 = vcombine.high %v8650, %v8682
        %v8691 = vcombine.low %v6606, %v6618
        %v8692 = vcombine.high %v6606, %v6618
        %v8694 = vunpack.c.l.s4 1983009808
        %v8695 = vunpack.c.0.s8 %v8694
        %v8696 = vlaneseq
        %v8697 = vshrl.u32 %v8696, 7
        %v8698 = vsub.s32 %v8695, %v8697
        %v8699 = vrot.slane %v8691, %v8698
        %v8701 = vunpack.c.l.s4 1983009808
        %v8702 = vunpack.c.0.s8 %v8701
        %v8703 = vlaneseq
        %v8704 = vshrl.u32 %v8703, 7
        %v8705 = vsub.s32 %v8702, %v8704
        %v8706 = vrot.slane %v8692, %v8705
        %v8707 = vcombine.low %v6612, %v6624
        %v8708 = vcombine.high %v6612, %v6624
        %v8710 = vunpack.c.l.s4 1983009808
        %v8711 = vunpack.c.0.s8 %v8710
        %v8712 = vlaneseq
        %v8713 = vshrl.u32 %v8712, 7
        %v8714 = vsub.s32 %v8711, %v8713
        %v8715 = vrot.slane %v8707, %v8714
        %v8717 = vunpack.c.l.s4 1983009808
        %v8718 = vunpack.c.0.s8 %v8717
        %v8719 = vlaneseq
        %v8720 = vshrl.u32 %v8719, 7
        %v8721 = vsub.s32 %v8718, %v8720
        %v8722 = vrot.slane %v8708, %v8721
        %v8723 = vcombine.low %v6630, %v6642
        %v8724 = vcombine.high %v6630, %v6642
        %v8726 = vunpack.c.l.s4 1983009808
        %v8727 = vunpack.c.0.s8 %v8726
        %v8728 = vlaneseq
        %v8729 = vshrl.u32 %v8728, 7
        %v8730 = vsub.s32 %v8727, %v8729
        %v8731 = vrot.slane %v8723, %v8730
        %v8733 = vunpack.c.l.s4 1983009808
        %v8734 = vunpack.c.0.s8 %v8733
        %v8735 = vlaneseq
        %v8736 = vshrl.u32 %v8735, 7
        %v8737 = vsub.s32 %v8734, %v8736
        %v8738 = vrot.slane %v8724, %v8737
        %v8739 = vcombine.low %v6636, %v6648
        %v8740 = vcombine.high %v6636, %v6648
        %v8742 = vunpack.c.l.s4 1983009808
        %v8743 = vunpack.c.0.s8 %v8742
        %v8744 = vlaneseq
        %v8745 = vshrl.u32 %v8744, 7
        %v8746 = vsub.s32 %v8743, %v8745
        %v8747 = vrot.slane %v8739, %v8746
        %v8749 = vunpack.c.l.s4 1983009808
        %v8750 = vunpack.c.0.s8 %v8749
        %v8751 = vlaneseq
        %v8752 = vshrl.u32 %v8751, 7
        %v8753 = vsub.s32 %v8750, %v8752
        %v8754 = vrot.slane %v8740, %v8753
        %v8755 = vcombine.low %v8699, %v8715
        %v8756 = vcombine.high %v8699, %v8715
        %v8758 = vunpack.c.l.s4 1934713408
        %v8759 = vunpack.c.0.s8 %v8758
        %v8760 = vlaneseq
        %v8761 = vshrl.u32 %v8760, 7
        %v8762 = vsub.s32 %v8759, %v8761
        %v8763 = vrot.slane %v8755, %v8762
        %v8765 = vunpack.c.l.s4 1934713408
        %v8766 = vunpack.c.0.s8 %v8765
        %v8767 = vlaneseq
        %v8768 = vshrl.u32 %v8767, 7
        %v8769 = vsub.s32 %v8766, %v8768
        %v8770 = vrot.slane %v8756, %v8769
        %v8771 = vcombine.low %v8706, %v8722
        %v8772 = vcombine.high %v8706, %v8722
        %v8774 = vunpack.c.l.s4 1934713408
        %v8775 = vunpack.c.0.s8 %v8774
        %v8776 = vlaneseq
        %v8777 = vshrl.u32 %v8776, 7
        %v8778 = vsub.s32 %v8775, %v8777
        %v8779 = vrot.slane %v8771, %v8778
        %v8781 = vunpack.c.l.s4 1934713408
        %v8782 = vunpack.c.0.s8 %v8781
        %v8783 = vlaneseq
        %v8784 = vshrl.u32 %v8783, 7
        %v8785 = vsub.s32 %v8782, %v8784
        %v8786 = vrot.slane %v8772, %v8785
        %v8787 = vcombine.low %v8731, %v8747
        %v8788 = vcombine.high %v8731, %v8747
        %v8790 = vunpack.c.l.s4 1934713408
        %v8791 = vunpack.c.0.s8 %v8790
        %v8792 = vlaneseq
        %v8793 = vshrl.u32 %v8792, 7
        %v8794 = vsub.s32 %v8791, %v8793
        %v8795 = vrot.slane %v8787, %v8794
        %v8797 = vunpack.c.l.s4 1934713408
        %v8798 = vunpack.c.0.s8 %v8797
        %v8799 = vlaneseq
        %v8800 = vshrl.u32 %v8799, 7
        %v8801 = vsub.s32 %v8798, %v8800
        %v8802 = vrot.slane %v8788, %v8801
        %v8803 = vcombine.low %v8738, %v8754
        %v8804 = vcombine.high %v8738, %v8754
        %v8806 = vunpack.c.l.s4 1934713408
        %v8807 = vunpack.c.0.s8 %v8806
        %v8808 = vlaneseq
        %v8809 = vshrl.u32 %v8808, 7
        %v8810 = vsub.s32 %v8807, %v8809
        %v8811 = vrot.slane %v8803, %v8810
        %v8813 = vunpack.c.l.s4 1934713408
        %v8814 = vunpack.c.0.s8 %v8813
        %v8815 = vlaneseq
        %v8816 = vshrl.u32 %v8815, 7
        %v8817 = vsub.s32 %v8814, %v8816
        %v8818 = vrot.slane %v8804, %v8817
        %v8819 = vcombine.low %v8763, %v8795
        %v8820 = vcombine.high %v8763, %v8795
        %v8821 = vcombine.low %v8770, %v8802
        %v8822 = vcombine.high %v8770, %v8802
        %v8823 = vcombine.low %v8779, %v8811
        %v8824 = vcombine.high %v8779, %v8811
        %v8825 = vcombine.low %v8786, %v8818
        %v8826 = vcombine.high %v8786, %v8818
        %v8827 = vsel %vm3244, %v6779, -inf
        %8828 = vmax.xlane.f32.xlu0 %v8827
        %v8829 = vpop.xlane.xlu0 %8828
        %v8830 = vsel %vm3244, %v6915, -inf
        %8831 = vmax.xlane.f32.xlu0 %v8830
        %v8832 = vpop.xlane.xlu0 %8831
        %v8833 = vsel %vm3244, %v7051, -inf
        %8834 = vmax.xlane.f32.xlu0 %v8833
        %v8835 = vpop.xlane.xlu0 %8834
        %v8836 = vsel %vm3244, %v7187, -inf
        %8837 = vmax.xlane.f32.xlu0 %v8836
        %v8838 = vpop.xlane.xlu0 %8837
        %v8839 = vsel %vm3244, %v7323, -inf
        %8840 = vmax.xlane.f32.xlu0 %v8839
        %v8841 = vpop.xlane.xlu0 %8840
        %v8842 = vsel %vm3244, %v7459, -inf
        %8843 = vmax.xlane.f32.xlu0 %v8842
        %v8844 = vpop.xlane.xlu0 %8843
        %v8845 = vsel %vm3244, %v7595, -inf
        %8846 = vmax.xlane.f32.xlu0 %v8845
        %v8847 = vpop.xlane.xlu0 %8846
        %v8848 = vsel %vm3244, %v7731, -inf
        %8849 = vmax.xlane.f32.xlu0 %v8848
        %v8850 = vpop.xlane.xlu0 %8849
        %v8851 = vsel %vm3244, %v6780, -inf
        %8852 = vmax.xlane.f32.xlu0 %v8851
        %v8853 = vpop.xlane.xlu0 %8852
        %v8854 = vsel %vm3244, %v6916, -inf
        %8855 = vmax.xlane.f32.xlu0 %v8854
        %v8856 = vpop.xlane.xlu0 %8855
        %v8857 = vsel %vm3244, %v7052, -inf
        %8858 = vmax.xlane.f32.xlu0 %v8857
        %v8859 = vpop.xlane.xlu0 %8858
        %v8860 = vsel %vm3244, %v7188, -inf
        %8861 = vmax.xlane.f32.xlu0 %v8860
        %v8862 = vpop.xlane.xlu0 %8861
        %v8863 = vsel %vm3244, %v7324, -inf
        %8864 = vmax.xlane.f32.xlu0 %v8863
        %v8865 = vpop.xlane.xlu0 %8864
        %v8866 = vsel %vm3244, %v7460, -inf
        %8867 = vmax.xlane.f32.xlu0 %v8866
        %v8868 = vpop.xlane.xlu0 %8867
        %v8869 = vsel %vm3244, %v7596, -inf
        %8870 = vmax.xlane.f32.xlu0 %v8869
        %v8871 = vpop.xlane.xlu0 %8870
        %v8872 = vsel %vm3244, %v7732, -inf
        %8873 = vmax.xlane.f32.xlu0 %v8872
        %v8874 = vpop.xlane.xlu0 %8873
        %v8875 = vsel %vm3244, %v6781, -inf
        %8876 = vmax.xlane.f32.xlu0 %v8875
        %v8877 = vpop.xlane.xlu0 %8876
        %v8878 = vsel %vm3244, %v6917, -inf
        %8879 = vmax.xlane.f32.xlu0 %v8878
        %v8880 = vpop.xlane.xlu0 %8879
        %v8881 = vsel %vm3244, %v7053, -inf
        %8882 = vmax.xlane.f32.xlu0 %v8881
        %v8883 = vpop.xlane.xlu0 %8882
        %v8884 = vsel %vm3244, %v7189, -inf
        %8885 = vmax.xlane.f32.xlu0 %v8884
        %v8886 = vpop.xlane.xlu0 %8885
        %v8887 = vsel %vm3244, %v7325, -inf
        %8888 = vmax.xlane.f32.xlu0 %v8887
        %v8889 = vpop.xlane.xlu0 %8888
        %v8890 = vsel %vm3244, %v7461, -inf
        %8891 = vmax.xlane.f32.xlu0 %v8890
        %v8892 = vpop.xlane.xlu0 %8891
        %v8893 = vsel %vm3244, %v7597, -inf
        %8894 = vmax.xlane.f32.xlu0 %v8893
        %v8895 = vpop.xlane.xlu0 %8894
        %v8896 = vsel %vm3244, %v7733, -inf
        %8897 = vmax.xlane.f32.xlu0 %v8896
        %v8898 = vpop.xlane.xlu0 %8897
        %v8899 = vsel %vm3244, %v6782, -inf
        %8900 = vmax.xlane.f32.xlu0 %v8899
        %v8901 = vpop.xlane.xlu0 %8900
        %v8902 = vsel %vm3244, %v6918, -inf
        %8903 = vmax.xlane.f32.xlu0 %v8902
        %v8904 = vpop.xlane.xlu0 %8903
        %v8905 = vsel %vm3244, %v7054, -inf
        %8906 = vmax.xlane.f32.xlu0 %v8905
        %v8907 = vpop.xlane.xlu0 %8906
        %v8908 = vsel %vm3244, %v7190, -inf
        %8909 = vmax.xlane.f32.xlu0 %v8908
        %v8910 = vpop.xlane.xlu0 %8909
        %v8911 = vsel %vm3244, %v7326, -inf
        %8912 = vmax.xlane.f32.xlu0 %v8911
        %v8913 = vpop.xlane.xlu0 %8912
        %v8914 = vsel %vm3244, %v7462, -inf
        %8915 = vmax.xlane.f32.xlu0 %v8914
        %v8916 = vpop.xlane.xlu0 %8915
        %v8917 = vsel %vm3244, %v7598, -inf
        %8918 = vmax.xlane.f32.xlu0 %v8917
        %v8919 = vpop.xlane.xlu0 %8918
        %v8920 = vsel %vm3244, %v7734, -inf
        %8921 = vmax.xlane.f32.xlu0 %v8920
        %v8922 = vpop.xlane.xlu0 %8921
        %v8923 = vsel %vm3244, %v6783, -inf
        %8924 = vmax.xlane.f32.xlu0 %v8923
        %v8925 = vpop.xlane.xlu0 %8924
        %v8926 = vsel %vm3244, %v6919, -inf
        %8927 = vmax.xlane.f32.xlu0 %v8926
        %v8928 = vpop.xlane.xlu0 %8927
        %v8929 = vsel %vm3244, %v7055, -inf
        %8930 = vmax.xlane.f32.xlu0 %v8929
        %v8931 = vpop.xlane.xlu0 %8930
        %v8932 = vsel %vm3244, %v7191, -inf
        %8933 = vmax.xlane.f32.xlu0 %v8932
        %v8934 = vpop.xlane.xlu0 %8933
        %v8935 = vsel %vm3244, %v7327, -inf
        %8936 = vmax.xlane.f32.xlu0 %v8935
        %v8937 = vpop.xlane.xlu0 %8936
        %v8938 = vsel %vm3244, %v7463, -inf
        %8939 = vmax.xlane.f32.xlu0 %v8938
        %v8940 = vpop.xlane.xlu0 %8939
        %v8941 = vsel %vm3244, %v7599, -inf
        %8942 = vmax.xlane.f32.xlu0 %v8941
        %v8943 = vpop.xlane.xlu0 %8942
        %v8944 = vsel %vm3244, %v7735, -inf
        %8945 = vmax.xlane.f32.xlu0 %v8944
        %v8946 = vpop.xlane.xlu0 %8945
        %v8947 = vsel %vm3244, %v6784, -inf
        %8948 = vmax.xlane.f32.xlu0 %v8947
        %v8949 = vpop.xlane.xlu0 %8948
        %v8950 = vsel %vm3244, %v6920, -inf
        %8951 = vmax.xlane.f32.xlu0 %v8950
        %v8952 = vpop.xlane.xlu0 %8951
        %v8953 = vsel %vm3244, %v7056, -inf
        %8954 = vmax.xlane.f32.xlu0 %v8953
        %v8955 = vpop.xlane.xlu0 %8954
        %v8956 = vsel %vm3244, %v7192, -inf
        %8957 = vmax.xlane.f32.xlu0 %v8956
        %v8958 = vpop.xlane.xlu0 %8957
        %v8959 = vsel %vm3244, %v7328, -inf
        %8960 = vmax.xlane.f32.xlu0 %v8959
        %v8961 = vpop.xlane.xlu0 %8960
        %v8962 = vsel %vm3244, %v7464, -inf
        %8963 = vmax.xlane.f32.xlu0 %v8962
        %v8964 = vpop.xlane.xlu0 %8963
        %v8965 = vsel %vm3244, %v7600, -inf
        %8966 = vmax.xlane.f32.xlu0 %v8965
        %v8967 = vpop.xlane.xlu0 %8966
        %v8968 = vsel %vm3244, %v7736, -inf
        %8969 = vmax.xlane.f32.xlu0 %v8968
        %v8970 = vpop.xlane.xlu0 %8969
        %v8971 = vsel %vm3244, %v6785, -inf
        %8972 = vmax.xlane.f32.xlu0 %v8971
        %v8973 = vpop.xlane.xlu0 %8972
        %v8974 = vsel %vm3244, %v6921, -inf
        %8975 = vmax.xlane.f32.xlu0 %v8974
        %v8976 = vpop.xlane.xlu0 %8975
        %v8977 = vsel %vm3244, %v7057, -inf
        %8978 = vmax.xlane.f32.xlu0 %v8977
        %v8979 = vpop.xlane.xlu0 %8978
        %v8980 = vsel %vm3244, %v7193, -inf
        %8981 = vmax.xlane.f32.xlu0 %v8980
        %v8982 = vpop.xlane.xlu0 %8981
        %v8983 = vsel %vm3244, %v7329, -inf
        %8984 = vmax.xlane.f32.xlu0 %v8983
        %v8985 = vpop.xlane.xlu0 %8984
        %v8986 = vsel %vm3244, %v7465, -inf
        %8987 = vmax.xlane.f32.xlu0 %v8986
        %v8988 = vpop.xlane.xlu0 %8987
        %v8989 = vsel %vm3244, %v7601, -inf
        %8990 = vmax.xlane.f32.xlu0 %v8989
        %v8991 = vpop.xlane.xlu0 %8990
        %v8992 = vsel %vm3244, %v7737, -inf
        %8993 = vmax.xlane.f32.xlu0 %v8992
        %v8994 = vpop.xlane.xlu0 %8993
        %v8995 = vsel %vm3244, %v6786, -inf
        %8996 = vmax.xlane.f32.xlu0 %v8995
        %v8997 = vpop.xlane.xlu0 %8996
        %v8998 = vsel %vm3244, %v6922, -inf
        %8999 = vmax.xlane.f32.xlu0 %v8998
        %v9000 = vpop.xlane.xlu0 %8999
        %v9001 = vsel %vm3244, %v7058, -inf
        %9002 = vmax.xlane.f32.xlu0 %v9001
        %v9003 = vpop.xlane.xlu0 %9002
        %v9004 = vsel %vm3244, %v7194, -inf
        %9005 = vmax.xlane.f32.xlu0 %v9004
        %v9006 = vpop.xlane.xlu0 %9005
        %v9007 = vsel %vm3244, %v7330, -inf
        %9008 = vmax.xlane.f32.xlu0 %v9007
        %v9009 = vpop.xlane.xlu0 %9008
        %v9010 = vsel %vm3244, %v7466, -inf
        %9011 = vmax.xlane.f32.xlu0 %v9010
        %v9012 = vpop.xlane.xlu0 %9011
        %v9013 = vsel %vm3244, %v7602, -inf
        %9014 = vmax.xlane.f32.xlu0 %v9013
        %v9015 = vpop.xlane.xlu0 %9014
        %v9016 = vsel %vm3244, %v7738, -inf
        %9017 = vmax.xlane.f32.xlu0 %v9016
        %v9018 = vpop.xlane.xlu0 %9017
        %v9019 = vsel %vm3244, %v7867, -inf
        %9020 = vmax.xlane.f32.xlu0 %v9019
        %v9021 = vpop.xlane.xlu0 %9020
        %v9022 = vsel %vm3244, %v8003, -inf
        %9023 = vmax.xlane.f32.xlu0 %v9022
        %v9024 = vpop.xlane.xlu0 %9023
        %v9025 = vsel %vm3244, %v8139, -inf
        %9026 = vmax.xlane.f32.xlu0 %v9025
        %v9027 = vpop.xlane.xlu0 %9026
        %v9028 = vsel %vm3244, %v8275, -inf
        %9029 = vmax.xlane.f32.xlu0 %v9028
        %v9030 = vpop.xlane.xlu0 %9029
        %v9031 = vsel %vm3244, %v8411, -inf
        %9032 = vmax.xlane.f32.xlu0 %v9031
        %v9033 = vpop.xlane.xlu0 %9032
        %v9034 = vsel %vm3244, %v8547, -inf
        %9035 = vmax.xlane.f32.xlu0 %v9034
        %v9036 = vpop.xlane.xlu0 %9035
        %v9037 = vsel %vm3244, %v8683, -inf
        %9038 = vmax.xlane.f32.xlu0 %v9037
        %v9039 = vpop.xlane.xlu0 %9038
        %v9040 = vsel %vm3244, %v8819, -inf
        %9041 = vmax.xlane.f32.xlu0 %v9040
        %v9042 = vpop.xlane.xlu0 %9041
        %v9043 = vsel %vm3244, %v7868, -inf
        %9044 = vmax.xlane.f32.xlu0 %v9043
        %v9045 = vpop.xlane.xlu0 %9044
        %v9046 = vsel %vm3244, %v8004, -inf
        %9047 = vmax.xlane.f32.xlu0 %v9046
        %v9048 = vpop.xlane.xlu0 %9047
        %v9049 = vsel %vm3244, %v8140, -inf
        %9050 = vmax.xlane.f32.xlu0 %v9049
        %v9051 = vpop.xlane.xlu0 %9050
        %v9052 = vsel %vm3244, %v8276, -inf
        %9053 = vmax.xlane.f32.xlu0 %v9052
        %v9054 = vpop.xlane.xlu0 %9053
        %v9055 = vsel %vm3244, %v8412, -inf
        %9056 = vmax.xlane.f32.xlu0 %v9055
        %v9057 = vpop.xlane.xlu0 %9056
        %v9058 = vsel %vm3244, %v8548, -inf
        %9059 = vmax.xlane.f32.xlu0 %v9058
        %v9060 = vpop.xlane.xlu0 %9059
        %v9061 = vsel %vm3244, %v8684, -inf
        %9062 = vmax.xlane.f32.xlu0 %v9061
        %v9063 = vpop.xlane.xlu0 %9062
        %v9064 = vsel %vm3244, %v8820, -inf
        %9065 = vmax.xlane.f32.xlu0 %v9064
        %v9066 = vpop.xlane.xlu0 %9065
        %v9067 = vsel %vm3244, %v7869, -inf
        %9068 = vmax.xlane.f32.xlu0 %v9067
        %v9069 = vpop.xlane.xlu0 %9068
        %v9070 = vsel %vm3244, %v8005, -inf
        %9071 = vmax.xlane.f32.xlu0 %v9070
        %v9072 = vpop.xlane.xlu0 %9071
        %v9073 = vsel %vm3244, %v8141, -inf
        %9074 = vmax.xlane.f32.xlu0 %v9073
        %v9075 = vpop.xlane.xlu0 %9074
        %v9076 = vsel %vm3244, %v8277, -inf
        %9077 = vmax.xlane.f32.xlu0 %v9076
        %v9078 = vpop.xlane.xlu0 %9077
        %v9079 = vsel %vm3244, %v8413, -inf
        %9080 = vmax.xlane.f32.xlu0 %v9079
        %v9081 = vpop.xlane.xlu0 %9080
        %v9082 = vsel %vm3244, %v8549, -inf
        %9083 = vmax.xlane.f32.xlu0 %v9082
        %v9084 = vpop.xlane.xlu0 %9083
        %v9085 = vsel %vm3244, %v8685, -inf
        %9086 = vmax.xlane.f32.xlu0 %v9085
        %v9087 = vpop.xlane.xlu0 %9086
        %v9088 = vsel %vm3244, %v8821, -inf
        %9089 = vmax.xlane.f32.xlu0 %v9088
        %v9090 = vpop.xlane.xlu0 %9089
        %v9091 = vsel %vm3244, %v7870, -inf
        %9092 = vmax.xlane.f32.xlu0 %v9091
        %v9093 = vpop.xlane.xlu0 %9092
        %v9094 = vsel %vm3244, %v8006, -inf
        %9095 = vmax.xlane.f32.xlu0 %v9094
        %v9096 = vpop.xlane.xlu0 %9095
        %v9097 = vsel %vm3244, %v8142, -inf
        %9098 = vmax.xlane.f32.xlu0 %v9097
        %v9099 = vpop.xlane.xlu0 %9098
        %v9100 = vsel %vm3244, %v8278, -inf
        %9101 = vmax.xlane.f32.xlu0 %v9100
        %v9102 = vpop.xlane.xlu0 %9101
        %v9103 = vsel %vm3244, %v8414, -inf
        %9104 = vmax.xlane.f32.xlu0 %v9103
        %v9105 = vpop.xlane.xlu0 %9104
        %v9106 = vsel %vm3244, %v8550, -inf
        %9107 = vmax.xlane.f32.xlu0 %v9106
        %v9108 = vpop.xlane.xlu0 %9107
        %v9109 = vsel %vm3244, %v8686, -inf
        %9110 = vmax.xlane.f32.xlu0 %v9109
        %v9111 = vpop.xlane.xlu0 %9110
        %v9112 = vsel %vm3244, %v8822, -inf
        %9113 = vmax.xlane.f32.xlu0 %v9112
        %v9114 = vpop.xlane.xlu0 %9113
        %v9115 = vsel %vm3244, %v7871, -inf
        %9116 = vmax.xlane.f32.xlu0 %v9115
        %v9117 = vpop.xlane.xlu0 %9116
        %v9118 = vsel %vm3244, %v8007, -inf
        %9119 = vmax.xlane.f32.xlu0 %v9118
        %v9120 = vpop.xlane.xlu0 %9119
        %v9121 = vsel %vm3244, %v8143, -inf
        %9122 = vmax.xlane.f32.xlu0 %v9121
        %v9123 = vpop.xlane.xlu0 %9122
        %v9124 = vsel %vm3244, %v8279, -inf
        %9125 = vmax.xlane.f32.xlu0 %v9124
        %v9126 = vpop.xlane.xlu0 %9125
        %v9127 = vsel %vm3244, %v8415, -inf
        %9128 = vmax.xlane.f32.xlu0 %v9127
        %v9129 = vpop.xlane.xlu0 %9128
        %v9130 = vsel %vm3244, %v8551, -inf
        %9131 = vmax.xlane.f32.xlu0 %v9130
        %v9132 = vpop.xlane.xlu0 %9131
        %v9133 = vsel %vm3244, %v8687, -inf
        %9134 = vmax.xlane.f32.xlu0 %v9133
        %v9135 = vpop.xlane.xlu0 %9134
        %v9136 = vsel %vm3244, %v8823, -inf
        %9137 = vmax.xlane.f32.xlu0 %v9136
        %v9138 = vpop.xlane.xlu0 %9137
        %v9139 = vsel %vm3244, %v7872, -inf
        %9140 = vmax.xlane.f32.xlu0 %v9139
        %v9141 = vpop.xlane.xlu0 %9140
        %v9142 = vsel %vm3244, %v8008, -inf
        %9143 = vmax.xlane.f32.xlu0 %v9142
        %v9144 = vpop.xlane.xlu0 %9143
        %v9145 = vsel %vm3244, %v8144, -inf
        %9146 = vmax.xlane.f32.xlu0 %v9145
        %v9147 = vpop.xlane.xlu0 %9146
        %v9148 = vsel %vm3244, %v8280, -inf
        %9149 = vmax.xlane.f32.xlu0 %v9148
        %v9150 = vpop.xlane.xlu0 %9149
        %v9151 = vsel %vm3244, %v8416, -inf
        %9152 = vmax.xlane.f32.xlu0 %v9151
        %v9153 = vpop.xlane.xlu0 %9152
        %v9154 = vsel %vm3244, %v8552, -inf
        %9155 = vmax.xlane.f32.xlu0 %v9154
        %v9156 = vpop.xlane.xlu0 %9155
        %v9157 = vsel %vm3244, %v8688, -inf
        %9158 = vmax.xlane.f32.xlu0 %v9157
        %v9159 = vpop.xlane.xlu0 %9158
        %v9160 = vsel %vm3244, %v8824, -inf
        %9161 = vmax.xlane.f32.xlu0 %v9160
        %v9162 = vpop.xlane.xlu0 %9161
        %v9163 = vsel %vm3244, %v7873, -inf
        %9164 = vmax.xlane.f32.xlu0 %v9163
        %v9165 = vpop.xlane.xlu0 %9164
        %v9166 = vsel %vm3244, %v8009, -inf
        %9167 = vmax.xlane.f32.xlu0 %v9166
        %v9168 = vpop.xlane.xlu0 %9167
        %v9169 = vsel %vm3244, %v8145, -inf
        %9170 = vmax.xlane.f32.xlu0 %v9169
        %v9171 = vpop.xlane.xlu0 %9170
        %v9172 = vsel %vm3244, %v8281, -inf
        %9173 = vmax.xlane.f32.xlu0 %v9172
        %v9174 = vpop.xlane.xlu0 %9173
        %v9175 = vsel %vm3244, %v8417, -inf
        %9176 = vmax.xlane.f32.xlu0 %v9175
        %v9177 = vpop.xlane.xlu0 %9176
        %v9178 = vsel %vm3244, %v8553, -inf
        %9179 = vmax.xlane.f32.xlu0 %v9178
        %v9180 = vpop.xlane.xlu0 %9179
        %v9181 = vsel %vm3244, %v8689, -inf
        %9182 = vmax.xlane.f32.xlu0 %v9181
        %v9183 = vpop.xlane.xlu0 %9182
        %v9184 = vsel %vm3244, %v8825, -inf
        %9185 = vmax.xlane.f32.xlu0 %v9184
        %v9186 = vpop.xlane.xlu0 %9185
        %v9187 = vsel %vm3244, %v7874, -inf
        %9188 = vmax.xlane.f32.xlu0 %v9187
        %v9189 = vpop.xlane.xlu0 %9188
        %v9190 = vsel %vm3244, %v8010, -inf
        %9191 = vmax.xlane.f32.xlu0 %v9190
        %v9192 = vpop.xlane.xlu0 %9191
        %v9193 = vsel %vm3244, %v8146, -inf
        %9194 = vmax.xlane.f32.xlu0 %v9193
        %v9195 = vpop.xlane.xlu0 %9194
        %v9196 = vsel %vm3244, %v8282, -inf
        %9197 = vmax.xlane.f32.xlu0 %v9196
        %v9198 = vpop.xlane.xlu0 %9197
        %v9199 = vsel %vm3244, %v8418, -inf
        %9200 = vmax.xlane.f32.xlu0 %v9199
        %v9201 = vpop.xlane.xlu0 %9200
        %v9202 = vsel %vm3244, %v8554, -inf
        %9203 = vmax.xlane.f32.xlu0 %v9202
        %v9204 = vpop.xlane.xlu0 %9203
        %v9205 = vsel %vm3244, %v8690, -inf
        %9206 = vmax.xlane.f32.xlu0 %v9205
        %v9207 = vpop.xlane.xlu0 %9206
        %v9208 = vsel %vm3244, %v8826, -inf
        %9209 = vmax.xlane.f32.xlu0 %v9208
        %v9210 = vpop.xlane.xlu0 %9209
        %9339 = vset.pattern.permute.xlu0 0
        %9340 = vperm.xlu0 %9339, %v8829
        %v9341 = vpop.permute.xlu0 %9340
        %9342 = vset.pattern.permute.xlu0 0
        %9343 = vperm.xlu0 %9342, %v8853
        %v9344 = vpop.permute.xlu0 %9343
        %9345 = vset.pattern.permute.xlu0 0
        %9346 = vperm.xlu0 %9345, %v8877
        %v9347 = vpop.permute.xlu0 %9346
        %9348 = vset.pattern.permute.xlu0 0
        %9349 = vperm.xlu0 %9348, %v8901
        %v9350 = vpop.permute.xlu0 %9349
        %9351 = vset.pattern.permute.xlu0 0
        %9352 = vperm.xlu0 %9351, %v8925
        %v9353 = vpop.permute.xlu0 %9352
        %9354 = vset.pattern.permute.xlu0 0
        %9355 = vperm.xlu0 %9354, %v8949
        %v9356 = vpop.permute.xlu0 %9355
        %9357 = vset.pattern.permute.xlu0 0
        %9358 = vperm.xlu0 %9357, %v8973
        %v9359 = vpop.permute.xlu0 %9358
        %9360 = vset.pattern.permute.xlu0 0
        %9361 = vperm.xlu0 %9360, %v8997
        %v9362 = vpop.permute.xlu0 %9361
        %9363 = vset.pattern.permute.xlu0 0
        %9364 = vperm.xlu0 %9363, %v9021
        %v9365 = vpop.permute.xlu0 %9364
        %9366 = vset.pattern.permute.xlu0 0
        %9367 = vperm.xlu0 %9366, %v9045
        %v9368 = vpop.permute.xlu0 %9367
        %9369 = vset.pattern.permute.xlu0 0
        %9370 = vperm.xlu0 %9369, %v9069
        %v9371 = vpop.permute.xlu0 %9370
        %9372 = vset.pattern.permute.xlu0 0
        %9373 = vperm.xlu0 %9372, %v9093
        %v9374 = vpop.permute.xlu0 %9373
        %9375 = vset.pattern.permute.xlu0 0
        %9376 = vperm.xlu0 %9375, %v9117
        %v9377 = vpop.permute.xlu0 %9376
        %9378 = vset.pattern.permute.xlu0 0
        %9379 = vperm.xlu0 %9378, %v9141
        %v9380 = vpop.permute.xlu0 %9379
        %9381 = vset.pattern.permute.xlu0 0
        %9382 = vperm.xlu0 %9381, %v9165
        %v9383 = vpop.permute.xlu0 %9382
        %9384 = vset.pattern.permute.xlu0 0
        %9385 = vperm.xlu0 %9384, %v9189
        %v9386 = vpop.permute.xlu0 %9385
        %9387 = vset.pattern.permute.xlu0 0
        %9388 = vperm.xlu0 %9387, %v8832
        %v9389 = vpop.permute.xlu0 %9388
        %9390 = vset.pattern.permute.xlu0 0
        %9391 = vperm.xlu0 %9390, %v8856
        %v9392 = vpop.permute.xlu0 %9391
        %9393 = vset.pattern.permute.xlu0 0
        %9394 = vperm.xlu0 %9393, %v8880
        %v9395 = vpop.permute.xlu0 %9394
        %9396 = vset.pattern.permute.xlu0 0
        %9397 = vperm.xlu0 %9396, %v8904
        %v9398 = vpop.permute.xlu0 %9397
        %9399 = vset.pattern.permute.xlu0 0
        %9400 = vperm.xlu0 %9399, %v8928
        %v9401 = vpop.permute.xlu0 %9400
        %9402 = vset.pattern.permute.xlu0 0
        %9403 = vperm.xlu0 %9402, %v8952
        %v9404 = vpop.permute.xlu0 %9403
        %9405 = vset.pattern.permute.xlu0 0
        %9406 = vperm.xlu0 %9405, %v8976
        %v9407 = vpop.permute.xlu0 %9406
        %9408 = vset.pattern.permute.xlu0 0
        %9409 = vperm.xlu0 %9408, %v9000
        %v9410 = vpop.permute.xlu0 %9409
        %9411 = vset.pattern.permute.xlu0 0
        %9412 = vperm.xlu0 %9411, %v9024
        %v9413 = vpop.permute.xlu0 %9412
        %9414 = vset.pattern.permute.xlu0 0
        %9415 = vperm.xlu0 %9414, %v9048
        %v9416 = vpop.permute.xlu0 %9415
        %9417 = vset.pattern.permute.xlu0 0
        %9418 = vperm.xlu0 %9417, %v9072
        %v9419 = vpop.permute.xlu0 %9418
        %9420 = vset.pattern.permute.xlu0 0
        %9421 = vperm.xlu0 %9420, %v9096
        %v9422 = vpop.permute.xlu0 %9421
        %9423 = vset.pattern.permute.xlu0 0
        %9424 = vperm.xlu0 %9423, %v9120
        %v9425 = vpop.permute.xlu0 %9424
        %9426 = vset.pattern.permute.xlu0 0
        %9427 = vperm.xlu0 %9426, %v9144
        %v9428 = vpop.permute.xlu0 %9427
        %9429 = vset.pattern.permute.xlu0 0
        %9430 = vperm.xlu0 %9429, %v9168
        %v9431 = vpop.permute.xlu0 %9430
        %9432 = vset.pattern.permute.xlu0 0
        %9433 = vperm.xlu0 %9432, %v9192
        %v9434 = vpop.permute.xlu0 %9433
        %9435 = vset.pattern.permute.xlu0 0
        %9436 = vperm.xlu0 %9435, %v8835
        %v9437 = vpop.permute.xlu0 %9436
        %9438 = vset.pattern.permute.xlu0 0
        %9439 = vperm.xlu0 %9438, %v8859
        %v9440 = vpop.permute.xlu0 %9439
        %9441 = vset.pattern.permute.xlu0 0
        %9442 = vperm.xlu0 %9441, %v8883
        %v9443 = vpop.permute.xlu0 %9442
        %9444 = vset.pattern.permute.xlu0 0
        %9445 = vperm.xlu0 %9444, %v8907
        %v9446 = vpop.permute.xlu0 %9445
        %9447 = vset.pattern.permute.xlu0 0
        %9448 = vperm.xlu0 %9447, %v8931
        %v9449 = vpop.permute.xlu0 %9448
        %9450 = vset.pattern.permute.xlu0 0
        %9451 = vperm.xlu0 %9450, %v8955
        %v9452 = vpop.permute.xlu0 %9451
        %9453 = vset.pattern.permute.xlu0 0
        %9454 = vperm.xlu0 %9453, %v8979
        %v9455 = vpop.permute.xlu0 %9454
        %9456 = vset.pattern.permute.xlu0 0
        %9457 = vperm.xlu0 %9456, %v9003
        %v9458 = vpop.permute.xlu0 %9457
        %9459 = vset.pattern.permute.xlu0 0
        %9460 = vperm.xlu0 %9459, %v9027
        %v9461 = vpop.permute.xlu0 %9460
        %9462 = vset.pattern.permute.xlu0 0
        %9463 = vperm.xlu0 %9462, %v9051
        %v9464 = vpop.permute.xlu0 %9463
        %9465 = vset.pattern.permute.xlu0 0
        %9466 = vperm.xlu0 %9465, %v9075
        %v9467 = vpop.permute.xlu0 %9466
        %9468 = vset.pattern.permute.xlu0 0
        %9469 = vperm.xlu0 %9468, %v9099
        %v9470 = vpop.permute.xlu0 %9469
        %9471 = vset.pattern.permute.xlu0 0
        %9472 = vperm.xlu0 %9471, %v9123
        %v9473 = vpop.permute.xlu0 %9472
        %9474 = vset.pattern.permute.xlu0 0
        %9475 = vperm.xlu0 %9474, %v9147
        %v9476 = vpop.permute.xlu0 %9475
        %9477 = vset.pattern.permute.xlu0 0
        %9478 = vperm.xlu0 %9477, %v9171
        %v9479 = vpop.permute.xlu0 %9478
        %9480 = vset.pattern.permute.xlu0 0
        %9481 = vperm.xlu0 %9480, %v9195
        %v9482 = vpop.permute.xlu0 %9481
        %9483 = vset.pattern.permute.xlu0 0
        %9484 = vperm.xlu0 %9483, %v8838
        %v9485 = vpop.permute.xlu0 %9484
        %9486 = vset.pattern.permute.xlu0 0
        %9487 = vperm.xlu0 %9486, %v8862
        %v9488 = vpop.permute.xlu0 %9487
        %9489 = vset.pattern.permute.xlu0 0
        %9490 = vperm.xlu0 %9489, %v8886
        %v9491 = vpop.permute.xlu0 %9490
        %9492 = vset.pattern.permute.xlu0 0
        %9493 = vperm.xlu0 %9492, %v8910
        %v9494 = vpop.permute.xlu0 %9493
        %9495 = vset.pattern.permute.xlu0 0
        %9496 = vperm.xlu0 %9495, %v8934
        %v9497 = vpop.permute.xlu0 %9496
        %9498 = vset.pattern.permute.xlu0 0
        %9499 = vperm.xlu0 %9498, %v8958
        %v9500 = vpop.permute.xlu0 %9499
        %9501 = vset.pattern.permute.xlu0 0
        %9502 = vperm.xlu0 %9501, %v8982
        %v9503 = vpop.permute.xlu0 %9502
        %9504 = vset.pattern.permute.xlu0 0
        %9505 = vperm.xlu0 %9504, %v9006
        %v9506 = vpop.permute.xlu0 %9505
        %9507 = vset.pattern.permute.xlu0 0
        %9508 = vperm.xlu0 %9507, %v9030
        %v9509 = vpop.permute.xlu0 %9508
        %9510 = vset.pattern.permute.xlu0 0
        %9511 = vperm.xlu0 %9510, %v9054
        %v9512 = vpop.permute.xlu0 %9511
        %9513 = vset.pattern.permute.xlu0 0
        %9514 = vperm.xlu0 %9513, %v9078
        %v9515 = vpop.permute.xlu0 %9514
        %9516 = vset.pattern.permute.xlu0 0
        %9517 = vperm.xlu0 %9516, %v9102
        %v9518 = vpop.permute.xlu0 %9517
        %9519 = vset.pattern.permute.xlu0 0
        %9520 = vperm.xlu0 %9519, %v9126
        %v9521 = vpop.permute.xlu0 %9520
        %9522 = vset.pattern.permute.xlu0 0
        %9523 = vperm.xlu0 %9522, %v9150
        %v9524 = vpop.permute.xlu0 %9523
        %9525 = vset.pattern.permute.xlu0 0
        %9526 = vperm.xlu0 %9525, %v9174
        %v9527 = vpop.permute.xlu0 %9526
        %9528 = vset.pattern.permute.xlu0 0
        %9529 = vperm.xlu0 %9528, %v9198
        %v9530 = vpop.permute.xlu0 %9529
        %9531 = vset.pattern.permute.xlu0 0
        %9532 = vperm.xlu0 %9531, %v8841
        %v9533 = vpop.permute.xlu0 %9532
        %9534 = vset.pattern.permute.xlu0 0
        %9535 = vperm.xlu0 %9534, %v8865
        %v9536 = vpop.permute.xlu0 %9535
        %9537 = vset.pattern.permute.xlu0 0
        %9538 = vperm.xlu0 %9537, %v8889
        %v9539 = vpop.permute.xlu0 %9538
        %9540 = vset.pattern.permute.xlu0 0
        %9541 = vperm.xlu0 %9540, %v8913
        %v9542 = vpop.permute.xlu0 %9541
        %9543 = vset.pattern.permute.xlu0 0
        %9544 = vperm.xlu0 %9543, %v8937
        %v9545 = vpop.permute.xlu0 %9544
        %9546 = vset.pattern.permute.xlu0 0
        %9547 = vperm.xlu0 %9546, %v8961
        %v9548 = vpop.permute.xlu0 %9547
        %9549 = vset.pattern.permute.xlu0 0
        %9550 = vperm.xlu0 %9549, %v8985
        %v9551 = vpop.permute.xlu0 %9550
        %9552 = vset.pattern.permute.xlu0 0
        %9553 = vperm.xlu0 %9552, %v9009
        %v9554 = vpop.permute.xlu0 %9553
        %9555 = vset.pattern.permute.xlu0 0
        %9556 = vperm.xlu0 %9555, %v9033
        %v9557 = vpop.permute.xlu0 %9556
        %9558 = vset.pattern.permute.xlu0 0
        %9559 = vperm.xlu0 %9558, %v9057
        %v9560 = vpop.permute.xlu0 %9559
        %9561 = vset.pattern.permute.xlu0 0
        %9562 = vperm.xlu0 %9561, %v9081
        %v9563 = vpop.permute.xlu0 %9562
        %9564 = vset.pattern.permute.xlu0 0
        %9565 = vperm.xlu0 %9564, %v9105
        %v9566 = vpop.permute.xlu0 %9565
        %9567 = vset.pattern.permute.xlu0 0
        %9568 = vperm.xlu0 %9567, %v9129
        %v9569 = vpop.permute.xlu0 %9568
        %9570 = vset.pattern.permute.xlu0 0
        %9571 = vperm.xlu0 %9570, %v9153
        %v9572 = vpop.permute.xlu0 %9571
        %9573 = vset.pattern.permute.xlu0 0
        %9574 = vperm.xlu0 %9573, %v9177
        %v9575 = vpop.permute.xlu0 %9574
        %9576 = vset.pattern.permute.xlu0 0
        %9577 = vperm.xlu0 %9576, %v9201
        %v9578 = vpop.permute.xlu0 %9577
        %9579 = vset.pattern.permute.xlu0 0
        %9580 = vperm.xlu0 %9579, %v8844
        %v9581 = vpop.permute.xlu0 %9580
        %9582 = vset.pattern.permute.xlu0 0
        %9583 = vperm.xlu0 %9582, %v8868
        %v9584 = vpop.permute.xlu0 %9583
        %9585 = vset.pattern.permute.xlu0 0
        %9586 = vperm.xlu0 %9585, %v8892
        %v9587 = vpop.permute.xlu0 %9586
        %9588 = vset.pattern.permute.xlu0 0
        %9589 = vperm.xlu0 %9588, %v8916
        %v9590 = vpop.permute.xlu0 %9589
        %9591 = vset.pattern.permute.xlu0 0
        %9592 = vperm.xlu0 %9591, %v8940
        %v9593 = vpop.permute.xlu0 %9592
        %9594 = vset.pattern.permute.xlu0 0
        %9595 = vperm.xlu0 %9594, %v8964
        %v9596 = vpop.permute.xlu0 %9595
        %9597 = vset.pattern.permute.xlu0 0
        %9598 = vperm.xlu0 %9597, %v8988
        %v9599 = vpop.permute.xlu0 %9598
        %9600 = vset.pattern.permute.xlu0 0
        %9601 = vperm.xlu0 %9600, %v9012
        %v9602 = vpop.permute.xlu0 %9601
        %9603 = vset.pattern.permute.xlu0 0
        %9604 = vperm.xlu0 %9603, %v9036
        %v9605 = vpop.permute.xlu0 %9604
        %9606 = vset.pattern.permute.xlu0 0
        %9607 = vperm.xlu0 %9606, %v9060
        %v9608 = vpop.permute.xlu0 %9607
        %9609 = vset.pattern.permute.xlu0 0
        %9610 = vperm.xlu0 %9609, %v9084
        %v9611 = vpop.permute.xlu0 %9610
        %9612 = vset.pattern.permute.xlu0 0
        %9613 = vperm.xlu0 %9612, %v9108
        %v9614 = vpop.permute.xlu0 %9613
        %9615 = vset.pattern.permute.xlu0 0
        %9616 = vperm.xlu0 %9615, %v9132
        %v9617 = vpop.permute.xlu0 %9616
        %9618 = vset.pattern.permute.xlu0 0
        %9619 = vperm.xlu0 %9618, %v9156
        %v9620 = vpop.permute.xlu0 %9619
        %9621 = vset.pattern.permute.xlu0 0
        %9622 = vperm.xlu0 %9621, %v9180
        %v9623 = vpop.permute.xlu0 %9622
        %9624 = vset.pattern.permute.xlu0 0
        %9625 = vperm.xlu0 %9624, %v9204
        %v9626 = vpop.permute.xlu0 %9625
        %9627 = vset.pattern.permute.xlu0 0
        %9628 = vperm.xlu0 %9627, %v8847
        %v9629 = vpop.permute.xlu0 %9628
        %9630 = vset.pattern.permute.xlu0 0
        %9631 = vperm.xlu0 %9630, %v8871
        %v9632 = vpop.permute.xlu0 %9631
        %9633 = vset.pattern.permute.xlu0 0
        %9634 = vperm.xlu0 %9633, %v8895
        %v9635 = vpop.permute.xlu0 %9634
        %9636 = vset.pattern.permute.xlu0 0
        %9637 = vperm.xlu0 %9636, %v8919
        %v9638 = vpop.permute.xlu0 %9637
        %9639 = vset.pattern.permute.xlu0 0
        %9640 = vperm.xlu0 %9639, %v8943
        %v9641 = vpop.permute.xlu0 %9640
        %9642 = vset.pattern.permute.xlu0 0
        %9643 = vperm.xlu0 %9642, %v8967
        %v9644 = vpop.permute.xlu0 %9643
        %9645 = vset.pattern.permute.xlu0 0
        %9646 = vperm.xlu0 %9645, %v8991
        %v9647 = vpop.permute.xlu0 %9646
        %9648 = vset.pattern.permute.xlu0 0
        %9649 = vperm.xlu0 %9648, %v9015
        %v9650 = vpop.permute.xlu0 %9649
        %9651 = vset.pattern.permute.xlu0 0
        %9652 = vperm.xlu0 %9651, %v9039
        %v9653 = vpop.permute.xlu0 %9652
        %9654 = vset.pattern.permute.xlu0 0
        %9655 = vperm.xlu0 %9654, %v9063
        %v9656 = vpop.permute.xlu0 %9655
        %9657 = vset.pattern.permute.xlu0 0
        %9658 = vperm.xlu0 %9657, %v9087
        %v9659 = vpop.permute.xlu0 %9658
        %9660 = vset.pattern.permute.xlu0 0
        %9661 = vperm.xlu0 %9660, %v9111
        %v9662 = vpop.permute.xlu0 %9661
        %9663 = vset.pattern.permute.xlu0 0
        %9664 = vperm.xlu0 %9663, %v9135
        %v9665 = vpop.permute.xlu0 %9664
        %9666 = vset.pattern.permute.xlu0 0
        %9667 = vperm.xlu0 %9666, %v9159
        %v9668 = vpop.permute.xlu0 %9667
        %9669 = vset.pattern.permute.xlu0 0
        %9670 = vperm.xlu0 %9669, %v9183
        %v9671 = vpop.permute.xlu0 %9670
        %9672 = vset.pattern.permute.xlu0 0
        %9673 = vperm.xlu0 %9672, %v9207
        %v9674 = vpop.permute.xlu0 %9673
        %9675 = vset.pattern.permute.xlu0 0
        %9676 = vperm.xlu0 %9675, %v8850
        %v9677 = vpop.permute.xlu0 %9676
        %9678 = vset.pattern.permute.xlu0 0
        %9679 = vperm.xlu0 %9678, %v8874
        %v9680 = vpop.permute.xlu0 %9679
        %9681 = vset.pattern.permute.xlu0 0
        %9682 = vperm.xlu0 %9681, %v8898
        %v9683 = vpop.permute.xlu0 %9682
        %9684 = vset.pattern.permute.xlu0 0
        %9685 = vperm.xlu0 %9684, %v8922
        %v9686 = vpop.permute.xlu0 %9685
        %9687 = vset.pattern.permute.xlu0 0
        %9688 = vperm.xlu0 %9687, %v8946
        %v9689 = vpop.permute.xlu0 %9688
        %9690 = vset.pattern.permute.xlu0 0
        %9691 = vperm.xlu0 %9690, %v8970
        %v9692 = vpop.permute.xlu0 %9691
        %9693 = vset.pattern.permute.xlu0 0
        %9694 = vperm.xlu0 %9693, %v8994
        %v9695 = vpop.permute.xlu0 %9694
        %9696 = vset.pattern.permute.xlu0 0
        %9697 = vperm.xlu0 %9696, %v9018
        %v9698 = vpop.permute.xlu0 %9697
        %9699 = vset.pattern.permute.xlu0 0
        %9700 = vperm.xlu0 %9699, %v9042
        %v9701 = vpop.permute.xlu0 %9700
        %9702 = vset.pattern.permute.xlu0 0
        %9703 = vperm.xlu0 %9702, %v9066
        %v9704 = vpop.permute.xlu0 %9703
        %9705 = vset.pattern.permute.xlu0 0
        %9706 = vperm.xlu0 %9705, %v9090
        %v9707 = vpop.permute.xlu0 %9706
        %9708 = vset.pattern.permute.xlu0 0
        %9709 = vperm.xlu0 %9708, %v9114
        %v9710 = vpop.permute.xlu0 %9709
        %9711 = vset.pattern.permute.xlu0 0
        %9712 = vperm.xlu0 %9711, %v9138
        %v9713 = vpop.permute.xlu0 %9712
        %9714 = vset.pattern.permute.xlu0 0
        %9715 = vperm.xlu0 %9714, %v9162
        %v9716 = vpop.permute.xlu0 %9715
        %9717 = vset.pattern.permute.xlu0 0
        %9718 = vperm.xlu0 %9717, %v9186
        %v9719 = vpop.permute.xlu0 %9718
        %9720 = vset.pattern.permute.xlu0 0
        %9721 = vperm.xlu0 %9720, %v9210
        %v9722 = vpop.permute.xlu0 %9721
        %v9723 = vlaneseq
        %v9724 = vshrl.u32 %v9723, 7
        %v9725 = vsub.s32 %v3758, %v9724
        %v9726 = vrot.slane %v9341, %v9725
        %v9727 = vlaneseq
        %v9728 = vshrl.u32 %v9727, 7
        %v9729 = vsub.s32 %v3758, %v9728
        %v9730 = vrot.slane %v9344, %v9729
        %v9731 = vlaneseq
        %v9732 = vshrl.u32 %v9731, 7
        %v9733 = vsub.s32 %v3758, %v9732
        %v9734 = vrot.slane %v9347, %v9733
        %v9735 = vlaneseq
        %v9736 = vshrl.u32 %v9735, 7
        %v9737 = vsub.s32 %v3758, %v9736
        %v9738 = vrot.slane %v9350, %v9737
        %v9739 = vlaneseq
        %v9740 = vshrl.u32 %v9739, 7
        %v9741 = vsub.s32 %v3758, %v9740
        %v9742 = vrot.slane %v9353, %v9741
        %v9743 = vlaneseq
        %v9744 = vshrl.u32 %v9743, 7
        %v9745 = vsub.s32 %v3758, %v9744
        %v9746 = vrot.slane %v9356, %v9745
        %v9747 = vlaneseq
        %v9748 = vshrl.u32 %v9747, 7
        %v9749 = vsub.s32 %v3758, %v9748
        %v9750 = vrot.slane %v9359, %v9749
        %v9751 = vlaneseq
        %v9752 = vshrl.u32 %v9751, 7
        %v9753 = vsub.s32 %v3758, %v9752
        %v9754 = vrot.slane %v9362, %v9753
        %v9755 = vlaneseq
        %v9756 = vshrl.u32 %v9755, 7
        %v9757 = vsub.s32 %v3758, %v9756
        %v9758 = vrot.slane %v9365, %v9757
        %v9759 = vlaneseq
        %v9760 = vshrl.u32 %v9759, 7
        %v9761 = vsub.s32 %v3758, %v9760
        %v9762 = vrot.slane %v9368, %v9761
        %v9763 = vlaneseq
        %v9764 = vshrl.u32 %v9763, 7
        %v9765 = vsub.s32 %v3758, %v9764
        %v9766 = vrot.slane %v9371, %v9765
        %v9767 = vlaneseq
        %v9768 = vshrl.u32 %v9767, 7
        %v9769 = vsub.s32 %v3758, %v9768
        %v9770 = vrot.slane %v9374, %v9769
        %v9771 = vlaneseq
        %v9772 = vshrl.u32 %v9771, 7
        %v9773 = vsub.s32 %v3758, %v9772
        %v9774 = vrot.slane %v9377, %v9773
        %v9775 = vlaneseq
        %v9776 = vshrl.u32 %v9775, 7
        %v9777 = vsub.s32 %v3758, %v9776
        %v9778 = vrot.slane %v9380, %v9777
        %v9779 = vlaneseq
        %v9780 = vshrl.u32 %v9779, 7
        %v9781 = vsub.s32 %v3758, %v9780
        %v9782 = vrot.slane %v9383, %v9781
        %v9783 = vlaneseq
        %v9784 = vshrl.u32 %v9783, 7
        %v9785 = vsub.s32 %v3758, %v9784
        %v9786 = vrot.slane %v9386, %v9785
        %v9787 = vlaneseq
        %v9788 = vshrl.u32 %v9787, 7
        %v9789 = vsub.s32 %v3758, %v9788
        %v9790 = vrot.slane %v9389, %v9789
        %v9791 = vlaneseq
        %v9792 = vshrl.u32 %v9791, 7
        %v9793 = vsub.s32 %v3758, %v9792
        %v9794 = vrot.slane %v9392, %v9793
        %v9795 = vlaneseq
        %v9796 = vshrl.u32 %v9795, 7
        %v9797 = vsub.s32 %v3758, %v9796
        %v9798 = vrot.slane %v9395, %v9797
        %v9799 = vlaneseq
        %v9800 = vshrl.u32 %v9799, 7
        %v9801 = vsub.s32 %v3758, %v9800
        %v9802 = vrot.slane %v9398, %v9801
        %v9803 = vlaneseq
        %v9804 = vshrl.u32 %v9803, 7
        %v9805 = vsub.s32 %v3758, %v9804
        %v9806 = vrot.slane %v9401, %v9805
        %v9807 = vlaneseq
        %v9808 = vshrl.u32 %v9807, 7
        %v9809 = vsub.s32 %v3758, %v9808
        %v9810 = vrot.slane %v9404, %v9809
        %v9811 = vlaneseq
        %v9812 = vshrl.u32 %v9811, 7
        %v9813 = vsub.s32 %v3758, %v9812
        %v9814 = vrot.slane %v9407, %v9813
        %v9815 = vlaneseq
        %v9816 = vshrl.u32 %v9815, 7
        %v9817 = vsub.s32 %v3758, %v9816
        %v9818 = vrot.slane %v9410, %v9817
        %v9819 = vlaneseq
        %v9820 = vshrl.u32 %v9819, 7
        %v9821 = vsub.s32 %v3758, %v9820
        %v9822 = vrot.slane %v9413, %v9821
        %v9823 = vlaneseq
        %v9824 = vshrl.u32 %v9823, 7
        %v9825 = vsub.s32 %v3758, %v9824
        %v9826 = vrot.slane %v9416, %v9825
        %v9827 = vlaneseq
        %v9828 = vshrl.u32 %v9827, 7
        %v9829 = vsub.s32 %v3758, %v9828
        %v9830 = vrot.slane %v9419, %v9829
        %v9831 = vlaneseq
        %v9832 = vshrl.u32 %v9831, 7
        %v9833 = vsub.s32 %v3758, %v9832
        %v9834 = vrot.slane %v9422, %v9833
        %v9835 = vlaneseq
        %v9836 = vshrl.u32 %v9835, 7
        %v9837 = vsub.s32 %v3758, %v9836
        %v9838 = vrot.slane %v9425, %v9837
        %v9839 = vlaneseq
        %v9840 = vshrl.u32 %v9839, 7
        %v9841 = vsub.s32 %v3758, %v9840
        %v9842 = vrot.slane %v9428, %v9841
        %v9843 = vlaneseq
        %v9844 = vshrl.u32 %v9843, 7
        %v9845 = vsub.s32 %v3758, %v9844
        %v9846 = vrot.slane %v9431, %v9845
        %v9847 = vlaneseq
        %v9848 = vshrl.u32 %v9847, 7
        %v9849 = vsub.s32 %v3758, %v9848
        %v9850 = vrot.slane %v9434, %v9849
        %v9851 = vlaneseq
        %v9852 = vshrl.u32 %v9851, 7
        %v9853 = vsub.s32 %v3758, %v9852
        %v9854 = vrot.slane %v9437, %v9853
        %v9855 = vlaneseq
        %v9856 = vshrl.u32 %v9855, 7
        %v9857 = vsub.s32 %v3758, %v9856
        %v9858 = vrot.slane %v9440, %v9857
        %v9859 = vlaneseq
        %v9860 = vshrl.u32 %v9859, 7
        %v9861 = vsub.s32 %v3758, %v9860
        %v9862 = vrot.slane %v9443, %v9861
        %v9863 = vlaneseq
        %v9864 = vshrl.u32 %v9863, 7
        %v9865 = vsub.s32 %v3758, %v9864
        %v9866 = vrot.slane %v9446, %v9865
        %v9867 = vlaneseq
        %v9868 = vshrl.u32 %v9867, 7
        %v9869 = vsub.s32 %v3758, %v9868
        %v9870 = vrot.slane %v9449, %v9869
        %v9871 = vlaneseq
        %v9872 = vshrl.u32 %v9871, 7
        %v9873 = vsub.s32 %v3758, %v9872
        %v9874 = vrot.slane %v9452, %v9873
        %v9875 = vlaneseq
        %v9876 = vshrl.u32 %v9875, 7
        %v9877 = vsub.s32 %v3758, %v9876
        %v9878 = vrot.slane %v9455, %v9877
        %v9879 = vlaneseq
        %v9880 = vshrl.u32 %v9879, 7
        %v9881 = vsub.s32 %v3758, %v9880
        %v9882 = vrot.slane %v9458, %v9881
        %v9883 = vlaneseq
        %v9884 = vshrl.u32 %v9883, 7
        %v9885 = vsub.s32 %v3758, %v9884
        %v9886 = vrot.slane %v9461, %v9885
        %v9887 = vlaneseq
        %v9888 = vshrl.u32 %v9887, 7
        %v9889 = vsub.s32 %v3758, %v9888
        %v9890 = vrot.slane %v9464, %v9889
        %v9891 = vlaneseq
        %v9892 = vshrl.u32 %v9891, 7
        %v9893 = vsub.s32 %v3758, %v9892
        %v9894 = vrot.slane %v9467, %v9893
        %v9895 = vlaneseq
        %v9896 = vshrl.u32 %v9895, 7
        %v9897 = vsub.s32 %v3758, %v9896
        %v9898 = vrot.slane %v9470, %v9897
        %v9899 = vlaneseq
        %v9900 = vshrl.u32 %v9899, 7
        %v9901 = vsub.s32 %v3758, %v9900
        %v9902 = vrot.slane %v9473, %v9901
        %v9903 = vlaneseq
        %v9904 = vshrl.u32 %v9903, 7
        %v9905 = vsub.s32 %v3758, %v9904
        %v9906 = vrot.slane %v9476, %v9905
        %v9907 = vlaneseq
        %v9908 = vshrl.u32 %v9907, 7
        %v9909 = vsub.s32 %v3758, %v9908
        %v9910 = vrot.slane %v9479, %v9909
        %v9911 = vlaneseq
        %v9912 = vshrl.u32 %v9911, 7
        %v9913 = vsub.s32 %v3758, %v9912
        %v9914 = vrot.slane %v9482, %v9913
        %v9915 = vlaneseq
        %v9916 = vshrl.u32 %v9915, 7
        %v9917 = vsub.s32 %v3758, %v9916
        %v9918 = vrot.slane %v9485, %v9917
        %v9919 = vlaneseq
        %v9920 = vshrl.u32 %v9919, 7
        %v9921 = vsub.s32 %v3758, %v9920
        %v9922 = vrot.slane %v9488, %v9921
        %v9923 = vlaneseq
        %v9924 = vshrl.u32 %v9923, 7
        %v9925 = vsub.s32 %v3758, %v9924
        %v9926 = vrot.slane %v9491, %v9925
        %v9927 = vlaneseq
        %v9928 = vshrl.u32 %v9927, 7
        %v9929 = vsub.s32 %v3758, %v9928
        %v9930 = vrot.slane %v9494, %v9929
        %v9931 = vlaneseq
        %v9932 = vshrl.u32 %v9931, 7
        %v9933 = vsub.s32 %v3758, %v9932
        %v9934 = vrot.slane %v9497, %v9933
        %v9935 = vlaneseq
        %v9936 = vshrl.u32 %v9935, 7
        %v9937 = vsub.s32 %v3758, %v9936
        %v9938 = vrot.slane %v9500, %v9937
        %v9939 = vlaneseq
        %v9940 = vshrl.u32 %v9939, 7
        %v9941 = vsub.s32 %v3758, %v9940
        %v9942 = vrot.slane %v9503, %v9941
        %v9943 = vlaneseq
        %v9944 = vshrl.u32 %v9943, 7
        %v9945 = vsub.s32 %v3758, %v9944
        %v9946 = vrot.slane %v9506, %v9945
        %v9947 = vlaneseq
        %v9948 = vshrl.u32 %v9947, 7
        %v9949 = vsub.s32 %v3758, %v9948
        %v9950 = vrot.slane %v9509, %v9949
        %v9951 = vlaneseq
        %v9952 = vshrl.u32 %v9951, 7
        %v9953 = vsub.s32 %v3758, %v9952
        %v9954 = vrot.slane %v9512, %v9953
        %v9955 = vlaneseq
        %v9956 = vshrl.u32 %v9955, 7
        %v9957 = vsub.s32 %v3758, %v9956
        %v9958 = vrot.slane %v9515, %v9957
        %v9959 = vlaneseq
        %v9960 = vshrl.u32 %v9959, 7
        %v9961 = vsub.s32 %v3758, %v9960
        %v9962 = vrot.slane %v9518, %v9961
        %v9963 = vlaneseq
        %v9964 = vshrl.u32 %v9963, 7
        %v9965 = vsub.s32 %v3758, %v9964
        %v9966 = vrot.slane %v9521, %v9965
        %v9967 = vlaneseq
        %v9968 = vshrl.u32 %v9967, 7
        %v9969 = vsub.s32 %v3758, %v9968
        %v9970 = vrot.slane %v9524, %v9969
        %v9971 = vlaneseq
        %v9972 = vshrl.u32 %v9971, 7
        %v9973 = vsub.s32 %v3758, %v9972
        %v9974 = vrot.slane %v9527, %v9973
        %v9975 = vlaneseq
        %v9976 = vshrl.u32 %v9975, 7
        %v9977 = vsub.s32 %v3758, %v9976
        %v9978 = vrot.slane %v9530, %v9977
        %v9979 = vlaneseq
        %v9980 = vshrl.u32 %v9979, 7
        %v9981 = vsub.s32 %v3758, %v9980
        %v9982 = vrot.slane %v9533, %v9981
        %v9983 = vlaneseq
        %v9984 = vshrl.u32 %v9983, 7
        %v9985 = vsub.s32 %v3758, %v9984
        %v9986 = vrot.slane %v9536, %v9985
        %v9987 = vlaneseq
        %v9988 = vshrl.u32 %v9987, 7
        %v9989 = vsub.s32 %v3758, %v9988
        %v9990 = vrot.slane %v9539, %v9989
        %v9991 = vlaneseq
        %v9992 = vshrl.u32 %v9991, 7
        %v9993 = vsub.s32 %v3758, %v9992
        %v9994 = vrot.slane %v9542, %v9993
        %v9995 = vlaneseq
        %v9996 = vshrl.u32 %v9995, 7
        %v9997 = vsub.s32 %v3758, %v9996
        %v9998 = vrot.slane %v9545, %v9997
        %v9999 = vlaneseq
        %v10000 = vshrl.u32 %v9999, 7
        %v10001 = vsub.s32 %v3758, %v10000
        %v10002 = vrot.slane %v9548, %v10001
        %v10003 = vlaneseq
        %v10004 = vshrl.u32 %v10003, 7
        %v10005 = vsub.s32 %v3758, %v10004
        %v10006 = vrot.slane %v9551, %v10005
        %v10007 = vlaneseq
        %v10008 = vshrl.u32 %v10007, 7
        %v10009 = vsub.s32 %v3758, %v10008
        %v10010 = vrot.slane %v9554, %v10009
        %v10011 = vlaneseq
        %v10012 = vshrl.u32 %v10011, 7
        %v10013 = vsub.s32 %v3758, %v10012
        %v10014 = vrot.slane %v9557, %v10013
        %v10015 = vlaneseq
        %v10016 = vshrl.u32 %v10015, 7
        %v10017 = vsub.s32 %v3758, %v10016
        %v10018 = vrot.slane %v9560, %v10017
        %v10019 = vlaneseq
        %v10020 = vshrl.u32 %v10019, 7
        %v10021 = vsub.s32 %v3758, %v10020
        %v10022 = vrot.slane %v9563, %v10021
        %v10023 = vlaneseq
        %v10024 = vshrl.u32 %v10023, 7
        %v10025 = vsub.s32 %v3758, %v10024
        %v10026 = vrot.slane %v9566, %v10025
        %v10027 = vlaneseq
        %v10028 = vshrl.u32 %v10027, 7
        %v10029 = vsub.s32 %v3758, %v10028
        %v10030 = vrot.slane %v9569, %v10029
        %v10031 = vlaneseq
        %v10032 = vshrl.u32 %v10031, 7
        %v10033 = vsub.s32 %v3758, %v10032
        %v10034 = vrot.slane %v9572, %v10033
        %v10035 = vlaneseq
        %v10036 = vshrl.u32 %v10035, 7
        %v10037 = vsub.s32 %v3758, %v10036
        %v10038 = vrot.slane %v9575, %v10037
        %v10039 = vlaneseq
        %v10040 = vshrl.u32 %v10039, 7
        %v10041 = vsub.s32 %v3758, %v10040
        %v10042 = vrot.slane %v9578, %v10041
        %v10043 = vlaneseq
        %v10044 = vshrl.u32 %v10043, 7
        %v10045 = vsub.s32 %v3758, %v10044
        %v10046 = vrot.slane %v9581, %v10045
        %v10047 = vlaneseq
        %v10048 = vshrl.u32 %v10047, 7
        %v10049 = vsub.s32 %v3758, %v10048
        %v10050 = vrot.slane %v9584, %v10049
        %v10051 = vlaneseq
        %v10052 = vshrl.u32 %v10051, 7
        %v10053 = vsub.s32 %v3758, %v10052
        %v10054 = vrot.slane %v9587, %v10053
        %v10055 = vlaneseq
        %v10056 = vshrl.u32 %v10055, 7
        %v10057 = vsub.s32 %v3758, %v10056
        %v10058 = vrot.slane %v9590, %v10057
        %v10059 = vlaneseq
        %v10060 = vshrl.u32 %v10059, 7
        %v10061 = vsub.s32 %v3758, %v10060
        %v10062 = vrot.slane %v9593, %v10061
        %v10063 = vlaneseq
        %v10064 = vshrl.u32 %v10063, 7
        %v10065 = vsub.s32 %v3758, %v10064
        %v10066 = vrot.slane %v9596, %v10065
        %v10067 = vlaneseq
        %v10068 = vshrl.u32 %v10067, 7
        %v10069 = vsub.s32 %v3758, %v10068
        %v10070 = vrot.slane %v9599, %v10069
        %v10071 = vlaneseq
        %v10072 = vshrl.u32 %v10071, 7
        %v10073 = vsub.s32 %v3758, %v10072
        %v10074 = vrot.slane %v9602, %v10073
        %v10075 = vlaneseq
        %v10076 = vshrl.u32 %v10075, 7
        %v10077 = vsub.s32 %v3758, %v10076
        %v10078 = vrot.slane %v9605, %v10077
        %v10079 = vlaneseq
        %v10080 = vshrl.u32 %v10079, 7
        %v10081 = vsub.s32 %v3758, %v10080
        %v10082 = vrot.slane %v9608, %v10081
        %v10083 = vlaneseq
        %v10084 = vshrl.u32 %v10083, 7
        %v10085 = vsub.s32 %v3758, %v10084
        %v10086 = vrot.slane %v9611, %v10085
        %v10087 = vlaneseq
        %v10088 = vshrl.u32 %v10087, 7
        %v10089 = vsub.s32 %v3758, %v10088
        %v10090 = vrot.slane %v9614, %v10089
        %v10091 = vlaneseq
        %v10092 = vshrl.u32 %v10091, 7
        %v10093 = vsub.s32 %v3758, %v10092
        %v10094 = vrot.slane %v9617, %v10093
        %v10095 = vlaneseq
        %v10096 = vshrl.u32 %v10095, 7
        %v10097 = vsub.s32 %v3758, %v10096
        %v10098 = vrot.slane %v9620, %v10097
        %v10099 = vlaneseq
        %v10100 = vshrl.u32 %v10099, 7
        %v10101 = vsub.s32 %v3758, %v10100
        %v10102 = vrot.slane %v9623, %v10101
        %v10103 = vlaneseq
        %v10104 = vshrl.u32 %v10103, 7
        %v10105 = vsub.s32 %v3758, %v10104
        %v10106 = vrot.slane %v9626, %v10105
        %v10107 = vlaneseq
        %v10108 = vshrl.u32 %v10107, 7
        %v10109 = vsub.s32 %v3758, %v10108
        %v10110 = vrot.slane %v9629, %v10109
        %v10111 = vlaneseq
        %v10112 = vshrl.u32 %v10111, 7
        %v10113 = vsub.s32 %v3758, %v10112
        %v10114 = vrot.slane %v9632, %v10113
        %v10115 = vlaneseq
        %v10116 = vshrl.u32 %v10115, 7
        %v10117 = vsub.s32 %v3758, %v10116
        %v10118 = vrot.slane %v9635, %v10117
        %v10119 = vlaneseq
        %v10120 = vshrl.u32 %v10119, 7
        %v10121 = vsub.s32 %v3758, %v10120
        %v10122 = vrot.slane %v9638, %v10121
        %v10123 = vlaneseq
        %v10124 = vshrl.u32 %v10123, 7
        %v10125 = vsub.s32 %v3758, %v10124
        %v10126 = vrot.slane %v9641, %v10125
        %v10127 = vlaneseq
        %v10128 = vshrl.u32 %v10127, 7
        %v10129 = vsub.s32 %v3758, %v10128
        %v10130 = vrot.slane %v9644, %v10129
        %v10131 = vlaneseq
        %v10132 = vshrl.u32 %v10131, 7
        %v10133 = vsub.s32 %v3758, %v10132
        %v10134 = vrot.slane %v9647, %v10133
        %v10135 = vlaneseq
        %v10136 = vshrl.u32 %v10135, 7
        %v10137 = vsub.s32 %v3758, %v10136
        %v10138 = vrot.slane %v9650, %v10137
        %v10139 = vlaneseq
        %v10140 = vshrl.u32 %v10139, 7
        %v10141 = vsub.s32 %v3758, %v10140
        %v10142 = vrot.slane %v9653, %v10141
        %v10143 = vlaneseq
        %v10144 = vshrl.u32 %v10143, 7
        %v10145 = vsub.s32 %v3758, %v10144
        %v10146 = vrot.slane %v9656, %v10145
        %v10147 = vlaneseq
        %v10148 = vshrl.u32 %v10147, 7
        %v10149 = vsub.s32 %v3758, %v10148
        %v10150 = vrot.slane %v9659, %v10149
        %v10151 = vlaneseq
        %v10152 = vshrl.u32 %v10151, 7
        %v10153 = vsub.s32 %v3758, %v10152
        %v10154 = vrot.slane %v9662, %v10153
        %v10155 = vlaneseq
        %v10156 = vshrl.u32 %v10155, 7
        %v10157 = vsub.s32 %v3758, %v10156
        %v10158 = vrot.slane %v9665, %v10157
        %v10159 = vlaneseq
        %v10160 = vshrl.u32 %v10159, 7
        %v10161 = vsub.s32 %v3758, %v10160
        %v10162 = vrot.slane %v9668, %v10161
        %v10163 = vlaneseq
        %v10164 = vshrl.u32 %v10163, 7
        %v10165 = vsub.s32 %v3758, %v10164
        %v10166 = vrot.slane %v9671, %v10165
        %v10167 = vlaneseq
        %v10168 = vshrl.u32 %v10167, 7
        %v10169 = vsub.s32 %v3758, %v10168
        %v10170 = vrot.slane %v9674, %v10169
        %v10171 = vlaneseq
        %v10172 = vshrl.u32 %v10171, 7
        %v10173 = vsub.s32 %v3758, %v10172
        %v10174 = vrot.slane %v9677, %v10173
        %v10175 = vlaneseq
        %v10176 = vshrl.u32 %v10175, 7
        %v10177 = vsub.s32 %v3758, %v10176
        %v10178 = vrot.slane %v9680, %v10177
        %v10179 = vlaneseq
        %v10180 = vshrl.u32 %v10179, 7
        %v10181 = vsub.s32 %v3758, %v10180
        %v10182 = vrot.slane %v9683, %v10181
        %v10183 = vlaneseq
        %v10184 = vshrl.u32 %v10183, 7
        %v10185 = vsub.s32 %v3758, %v10184
        %v10186 = vrot.slane %v9686, %v10185
        %v10187 = vlaneseq
        %v10188 = vshrl.u32 %v10187, 7
        %v10189 = vsub.s32 %v3758, %v10188
        %v10190 = vrot.slane %v9689, %v10189
        %v10191 = vlaneseq
        %v10192 = vshrl.u32 %v10191, 7
        %v10193 = vsub.s32 %v3758, %v10192
        %v10194 = vrot.slane %v9692, %v10193
        %v10195 = vlaneseq
        %v10196 = vshrl.u32 %v10195, 7
        %v10197 = vsub.s32 %v3758, %v10196
        %v10198 = vrot.slane %v9695, %v10197
        %v10199 = vlaneseq
        %v10200 = vshrl.u32 %v10199, 7
        %v10201 = vsub.s32 %v3758, %v10200
        %v10202 = vrot.slane %v9698, %v10201
        %v10203 = vlaneseq
        %v10204 = vshrl.u32 %v10203, 7
        %v10205 = vsub.s32 %v3758, %v10204
        %v10206 = vrot.slane %v9701, %v10205
        %v10207 = vlaneseq
        %v10208 = vshrl.u32 %v10207, 7
        %v10209 = vsub.s32 %v3758, %v10208
        %v10210 = vrot.slane %v9704, %v10209
        %v10211 = vlaneseq
        %v10212 = vshrl.u32 %v10211, 7
        %v10213 = vsub.s32 %v3758, %v10212
        %v10214 = vrot.slane %v9707, %v10213
        %v10215 = vlaneseq
        %v10216 = vshrl.u32 %v10215, 7
        %v10217 = vsub.s32 %v3758, %v10216
        %v10218 = vrot.slane %v9710, %v10217
        %v10219 = vlaneseq
        %v10220 = vshrl.u32 %v10219, 7
        %v10221 = vsub.s32 %v3758, %v10220
        %v10222 = vrot.slane %v9713, %v10221
        %v10223 = vlaneseq
        %v10224 = vshrl.u32 %v10223, 7
        %v10225 = vsub.s32 %v3758, %v10224
        %v10226 = vrot.slane %v9716, %v10225
        %v10227 = vlaneseq
        %v10228 = vshrl.u32 %v10227, 7
        %v10229 = vsub.s32 %v3758, %v10228
        %v10230 = vrot.slane %v9719, %v10229
        %v10231 = vlaneseq
        %v10232 = vshrl.u32 %v10231, 7
        %v10233 = vsub.s32 %v3758, %v10232
        %v10234 = vrot.slane %v9722, %v10233
        %v10235 = vsel %vm4422, %v9730, %v9726
        %v10236 = vsel %vm4424, %v9734, %v10235
        %v10237 = vsel %vm4426, %v9738, %v10236
        %v10238 = vsel %vm4428, %v9742, %v10237
        %v10239 = vsel %vm4430, %v9746, %v10238
        %v10240 = vsel %vm4432, %v9750, %v10239
        %v10241 = vsel %vm4434, %v9754, %v10240
        %v10242 = vsel %vm4422, %v9762, %v9758
        %v10243 = vsel %vm4424, %v9766, %v10242
        %v10244 = vsel %vm4426, %v9770, %v10243
        %v10245 = vsel %vm4428, %v9774, %v10244
        %v10246 = vsel %vm4430, %v9778, %v10245
        %v10247 = vsel %vm4432, %v9782, %v10246
        %v10248 = vsel %vm4434, %v9786, %v10247
        %v10249 = vsel %vm4422, %v9794, %v9790
        %v10250 = vsel %vm4424, %v9798, %v10249
        %v10251 = vsel %vm4426, %v9802, %v10250
        %v10252 = vsel %vm4428, %v9806, %v10251
        %v10253 = vsel %vm4430, %v9810, %v10252
        %v10254 = vsel %vm4432, %v9814, %v10253
        %v10255 = vsel %vm4434, %v9818, %v10254
        %v10256 = vsel %vm4422, %v9826, %v9822
        %v10257 = vsel %vm4424, %v9830, %v10256
        %v10258 = vsel %vm4426, %v9834, %v10257
        %v10259 = vsel %vm4428, %v9838, %v10258
        %v10260 = vsel %vm4430, %v9842, %v10259
        %v10261 = vsel %vm4432, %v9846, %v10260
        %v10262 = vsel %vm4434, %v9850, %v10261
        %v10263 = vsel %vm4422, %v9858, %v9854
        %v10264 = vsel %vm4424, %v9862, %v10263
        %v10265 = vsel %vm4426, %v9866, %v10264
        %v10266 = vsel %vm4428, %v9870, %v10265
        %v10267 = vsel %vm4430, %v9874, %v10266
        %v10268 = vsel %vm4432, %v9878, %v10267
        %v10269 = vsel %vm4434, %v9882, %v10268
        %v10270 = vsel %vm4422, %v9890, %v9886
        %v10271 = vsel %vm4424, %v9894, %v10270
        %v10272 = vsel %vm4426, %v9898, %v10271
        %v10273 = vsel %vm4428, %v9902, %v10272
        %v10274 = vsel %vm4430, %v9906, %v10273
        %v10275 = vsel %vm4432, %v9910, %v10274
        %v10276 = vsel %vm4434, %v9914, %v10275
        %v10277 = vsel %vm4422, %v9922, %v9918
        %v10278 = vsel %vm4424, %v9926, %v10277
        %v10279 = vsel %vm4426, %v9930, %v10278
        %v10280 = vsel %vm4428, %v9934, %v10279
        %v10281 = vsel %vm4430, %v9938, %v10280
        %v10282 = vsel %vm4432, %v9942, %v10281
        %v10283 = vsel %vm4434, %v9946, %v10282
        %v10284 = vsel %vm4422, %v9954, %v9950
        %v10285 = vsel %vm4424, %v9958, %v10284
        %v10286 = vsel %vm4426, %v9962, %v10285
        %v10287 = vsel %vm4428, %v9966, %v10286
        %v10288 = vsel %vm4430, %v9970, %v10287
        %v10289 = vsel %vm4432, %v9974, %v10288
        %v10290 = vsel %vm4434, %v9978, %v10289
        %v10291 = vsel %vm4422, %v9986, %v9982
        %v10292 = vsel %vm4424, %v9990, %v10291
        %v10293 = vsel %vm4426, %v9994, %v10292
        %v10294 = vsel %vm4428, %v9998, %v10293
        %v10295 = vsel %vm4430, %v10002, %v10294
        %v10296 = vsel %vm4432, %v10006, %v10295
        %v10297 = vsel %vm4434, %v10010, %v10296
        %v10298 = vsel %vm4422, %v10018, %v10014
        %v10299 = vsel %vm4424, %v10022, %v10298
        %v10300 = vsel %vm4426, %v10026, %v10299
        %v10301 = vsel %vm4428, %v10030, %v10300
        %v10302 = vsel %vm4430, %v10034, %v10301
        %v10303 = vsel %vm4432, %v10038, %v10302
        %v10304 = vsel %vm4434, %v10042, %v10303
        %v10305 = vsel %vm4422, %v10050, %v10046
        %v10306 = vsel %vm4424, %v10054, %v10305
        %v10307 = vsel %vm4426, %v10058, %v10306
        %v10308 = vsel %vm4428, %v10062, %v10307
        %v10309 = vsel %vm4430, %v10066, %v10308
        %v10310 = vsel %vm4432, %v10070, %v10309
        %v10311 = vsel %vm4434, %v10074, %v10310
        %v10312 = vsel %vm4422, %v10082, %v10078
        %v10313 = vsel %vm4424, %v10086, %v10312
        %v10314 = vsel %vm4426, %v10090, %v10313
        %v10315 = vsel %vm4428, %v10094, %v10314
        %v10316 = vsel %vm4430, %v10098, %v10315
        %v10317 = vsel %vm4432, %v10102, %v10316
        %v10318 = vsel %vm4434, %v10106, %v10317
        %v10319 = vsel %vm4422, %v10114, %v10110
        %v10320 = vsel %vm4424, %v10118, %v10319
        %v10321 = vsel %vm4426, %v10122, %v10320
        %v10322 = vsel %vm4428, %v10126, %v10321
        %v10323 = vsel %vm4430, %v10130, %v10322
        %v10324 = vsel %vm4432, %v10134, %v10323
        %v10325 = vsel %vm4434, %v10138, %v10324
        %v10326 = vsel %vm4422, %v10146, %v10142
        %v10327 = vsel %vm4424, %v10150, %v10326
        %v10328 = vsel %vm4426, %v10154, %v10327
        %v10329 = vsel %vm4428, %v10158, %v10328
        %v10330 = vsel %vm4430, %v10162, %v10329
        %v10331 = vsel %vm4432, %v10166, %v10330
        %v10332 = vsel %vm4434, %v10170, %v10331
        %v10333 = vsel %vm4422, %v10178, %v10174
        %v10334 = vsel %vm4424, %v10182, %v10333
        %v10335 = vsel %vm4426, %v10186, %v10334
        %v10336 = vsel %vm4428, %v10190, %v10335
        %v10337 = vsel %vm4430, %v10194, %v10336
        %v10338 = vsel %vm4432, %v10198, %v10337
        %v10339 = vsel %vm4434, %v10202, %v10338
        %v10340 = vsel %vm4422, %v10210, %v10206
        %v10341 = vsel %vm4424, %v10214, %v10340
        %v10342 = vsel %vm4426, %v10218, %v10341
        %v10343 = vsel %vm4428, %v10222, %v10342
        %v10344 = vsel %vm4430, %v10226, %v10343
        %v10345 = vsel %vm4432, %v10230, %v10344
        %v10346 = vsel %vm4434, %v10234, %v10345
        %v10363 = vcombine.low %v10241, %v10269
        %v10364 = vcombine.high %v10241, %v10269
        %v10366 = vunpack.c.l.s4 1983009808
        %v10367 = vunpack.c.0.s8 %v10366
        %v10368 = vlaneseq
        %v10369 = vshrl.u32 %v10368, 7
        %v10370 = vsub.s32 %v10367, %v10369
        %v10371 = vrot.slane %v10363, %v10370
        %v10373 = vunpack.c.l.s4 1983009808
        %v10374 = vunpack.c.0.s8 %v10373
        %v10375 = vlaneseq
        %v10376 = vshrl.u32 %v10375, 7
        %v10377 = vsub.s32 %v10374, %v10376
        %v10378 = vrot.slane %v10364, %v10377
        %v10379 = vcombine.low %v10255, %v10283
        %v10380 = vcombine.high %v10255, %v10283
        %v10382 = vunpack.c.l.s4 1983009808
        %v10383 = vunpack.c.0.s8 %v10382
        %v10384 = vlaneseq
        %v10385 = vshrl.u32 %v10384, 7
        %v10386 = vsub.s32 %v10383, %v10385
        %v10387 = vrot.slane %v10379, %v10386
        %v10389 = vunpack.c.l.s4 1983009808
        %v10390 = vunpack.c.0.s8 %v10389
        %v10391 = vlaneseq
        %v10392 = vshrl.u32 %v10391, 7
        %v10393 = vsub.s32 %v10390, %v10392
        %v10394 = vrot.slane %v10380, %v10393
        %v10395 = vcombine.low %v10297, %v10325
        %v10396 = vcombine.high %v10297, %v10325
        %v10398 = vunpack.c.l.s4 1983009808
        %v10399 = vunpack.c.0.s8 %v10398
        %v10400 = vlaneseq
        %v10401 = vshrl.u32 %v10400, 7
        %v10402 = vsub.s32 %v10399, %v10401
        %v10403 = vrot.slane %v10395, %v10402
        %v10405 = vunpack.c.l.s4 1983009808
        %v10406 = vunpack.c.0.s8 %v10405
        %v10407 = vlaneseq
        %v10408 = vshrl.u32 %v10407, 7
        %v10409 = vsub.s32 %v10406, %v10408
        %v10410 = vrot.slane %v10396, %v10409
        %v10411 = vcombine.low %v10311, %v10339
        %v10412 = vcombine.high %v10311, %v10339
        %v10414 = vunpack.c.l.s4 1983009808
        %v10415 = vunpack.c.0.s8 %v10414
        %v10416 = vlaneseq
        %v10417 = vshrl.u32 %v10416, 7
        %v10418 = vsub.s32 %v10415, %v10417
        %v10419 = vrot.slane %v10411, %v10418
        %v10421 = vunpack.c.l.s4 1983009808
        %v10422 = vunpack.c.0.s8 %v10421
        %v10423 = vlaneseq
        %v10424 = vshrl.u32 %v10423, 7
        %v10425 = vsub.s32 %v10422, %v10424
        %v10426 = vrot.slane %v10412, %v10425
        %v10427 = vcombine.low %v10371, %v10387
        %v10428 = vcombine.high %v10371, %v10387
        %v10430 = vunpack.c.l.s4 1934713408
        %v10431 = vunpack.c.0.s8 %v10430
        %v10432 = vlaneseq
        %v10433 = vshrl.u32 %v10432, 7
        %v10434 = vsub.s32 %v10431, %v10433
        %v10435 = vrot.slane %v10427, %v10434
        %v10437 = vunpack.c.l.s4 1934713408
        %v10438 = vunpack.c.0.s8 %v10437
        %v10439 = vlaneseq
        %v10440 = vshrl.u32 %v10439, 7
        %v10441 = vsub.s32 %v10438, %v10440
        %v10442 = vrot.slane %v10428, %v10441
        %v10443 = vcombine.low %v10378, %v10394
        %v10444 = vcombine.high %v10378, %v10394
        %v10446 = vunpack.c.l.s4 1934713408
        %v10447 = vunpack.c.0.s8 %v10446
        %v10448 = vlaneseq
        %v10449 = vshrl.u32 %v10448, 7
        %v10450 = vsub.s32 %v10447, %v10449
        %v10451 = vrot.slane %v10443, %v10450
        %v10453 = vunpack.c.l.s4 1934713408
        %v10454 = vunpack.c.0.s8 %v10453
        %v10455 = vlaneseq
        %v10456 = vshrl.u32 %v10455, 7
        %v10457 = vsub.s32 %v10454, %v10456
        %v10458 = vrot.slane %v10444, %v10457
        %v10459 = vcombine.low %v10403, %v10419
        %v10460 = vcombine.high %v10403, %v10419
        %v10462 = vunpack.c.l.s4 1934713408
        %v10463 = vunpack.c.0.s8 %v10462
        %v10464 = vlaneseq
        %v10465 = vshrl.u32 %v10464, 7
        %v10466 = vsub.s32 %v10463, %v10465
        %v10467 = vrot.slane %v10459, %v10466
        %v10469 = vunpack.c.l.s4 1934713408
        %v10470 = vunpack.c.0.s8 %v10469
        %v10471 = vlaneseq
        %v10472 = vshrl.u32 %v10471, 7
        %v10473 = vsub.s32 %v10470, %v10472
        %v10474 = vrot.slane %v10460, %v10473
        %v10475 = vcombine.low %v10410, %v10426
        %v10476 = vcombine.high %v10410, %v10426
        %v10478 = vunpack.c.l.s4 1934713408
        %v10479 = vunpack.c.0.s8 %v10478
        %v10480 = vlaneseq
        %v10481 = vshrl.u32 %v10480, 7
        %v10482 = vsub.s32 %v10479, %v10481
        %v10483 = vrot.slane %v10475, %v10482
        %v10485 = vunpack.c.l.s4 1934713408
        %v10486 = vunpack.c.0.s8 %v10485
        %v10487 = vlaneseq
        %v10488 = vshrl.u32 %v10487, 7
        %v10489 = vsub.s32 %v10486, %v10488
        %v10490 = vrot.slane %v10476, %v10489
        %v10491 = vcombine.low %v10435, %v10467
        %v10492 = vcombine.high %v10435, %v10467
        %v10493 = vcombine.low %v10442, %v10474
        %v10494 = vcombine.high %v10442, %v10474
        %v10495 = vcombine.low %v10451, %v10483
        %v10496 = vcombine.high %v10451, %v10483
        %v10497 = vcombine.low %v10458, %v10490
        %v10498 = vcombine.high %v10458, %v10490
        %v10499 = vcombine.low %v10248, %v10276
        %v10500 = vcombine.high %v10248, %v10276
        %v10502 = vunpack.c.l.s4 1983009808
        %v10503 = vunpack.c.0.s8 %v10502
        %v10504 = vlaneseq
        %v10505 = vshrl.u32 %v10504, 7
        %v10506 = vsub.s32 %v10503, %v10505
        %v10507 = vrot.slane %v10499, %v10506
        %v10509 = vunpack.c.l.s4 1983009808
        %v10510 = vunpack.c.0.s8 %v10509
        %v10511 = vlaneseq
        %v10512 = vshrl.u32 %v10511, 7
        %v10513 = vsub.s32 %v10510, %v10512
        %v10514 = vrot.slane %v10500, %v10513
        %v10515 = vcombine.low %v10262, %v10290
        %v10516 = vcombine.high %v10262, %v10290
        %v10518 = vunpack.c.l.s4 1983009808
        %v10519 = vunpack.c.0.s8 %v10518
        %v10520 = vlaneseq
        %v10521 = vshrl.u32 %v10520, 7
        %v10522 = vsub.s32 %v10519, %v10521
        %v10523 = vrot.slane %v10515, %v10522
        %v10525 = vunpack.c.l.s4 1983009808
        %v10526 = vunpack.c.0.s8 %v10525
        %v10527 = vlaneseq
        %v10528 = vshrl.u32 %v10527, 7
        %v10529 = vsub.s32 %v10526, %v10528
        %v10530 = vrot.slane %v10516, %v10529
        %v10531 = vcombine.low %v10304, %v10332
        %v10532 = vcombine.high %v10304, %v10332
        %v10534 = vunpack.c.l.s4 1983009808
        %v10535 = vunpack.c.0.s8 %v10534
        %v10536 = vlaneseq
        %v10537 = vshrl.u32 %v10536, 7
        %v10538 = vsub.s32 %v10535, %v10537
        %v10539 = vrot.slane %v10531, %v10538
        %v10541 = vunpack.c.l.s4 1983009808
        %v10542 = vunpack.c.0.s8 %v10541
        %v10543 = vlaneseq
        %v10544 = vshrl.u32 %v10543, 7
        %v10545 = vsub.s32 %v10542, %v10544
        %v10546 = vrot.slane %v10532, %v10545
        %v10547 = vcombine.low %v10318, %v10346
        %v10548 = vcombine.high %v10318, %v10346
        %v10550 = vunpack.c.l.s4 1983009808
        %v10551 = vunpack.c.0.s8 %v10550
        %v10552 = vlaneseq
        %v10553 = vshrl.u32 %v10552, 7
        %v10554 = vsub.s32 %v10551, %v10553
        %v10555 = vrot.slane %v10547, %v10554
        %v10557 = vunpack.c.l.s4 1983009808
        %v10558 = vunpack.c.0.s8 %v10557
        %v10559 = vlaneseq
        %v10560 = vshrl.u32 %v10559, 7
        %v10561 = vsub.s32 %v10558, %v10560
        %v10562 = vrot.slane %v10548, %v10561
        %v10563 = vcombine.low %v10507, %v10523
        %v10564 = vcombine.high %v10507, %v10523
        %v10566 = vunpack.c.l.s4 1934713408
        %v10567 = vunpack.c.0.s8 %v10566
        %v10568 = vlaneseq
        %v10569 = vshrl.u32 %v10568, 7
        %v10570 = vsub.s32 %v10567, %v10569
        %v10571 = vrot.slane %v10563, %v10570
        %v10573 = vunpack.c.l.s4 1934713408
        %v10574 = vunpack.c.0.s8 %v10573
        %v10575 = vlaneseq
        %v10576 = vshrl.u32 %v10575, 7
        %v10577 = vsub.s32 %v10574, %v10576
        %v10578 = vrot.slane %v10564, %v10577
        %v10579 = vcombine.low %v10514, %v10530
        %v10580 = vcombine.high %v10514, %v10530
        %v10582 = vunpack.c.l.s4 1934713408
        %v10583 = vunpack.c.0.s8 %v10582
        %v10584 = vlaneseq
        %v10585 = vshrl.u32 %v10584, 7
        %v10586 = vsub.s32 %v10583, %v10585
        %v10587 = vrot.slane %v10579, %v10586
        %v10589 = vunpack.c.l.s4 1934713408
        %v10590 = vunpack.c.0.s8 %v10589
        %v10591 = vlaneseq
        %v10592 = vshrl.u32 %v10591, 7
        %v10593 = vsub.s32 %v10590, %v10592
        %v10594 = vrot.slane %v10580, %v10593
        %v10595 = vcombine.low %v10539, %v10555
        %v10596 = vcombine.high %v10539, %v10555
        %v10598 = vunpack.c.l.s4 1934713408
        %v10599 = vunpack.c.0.s8 %v10598
        %v10600 = vlaneseq
        %v10601 = vshrl.u32 %v10600, 7
        %v10602 = vsub.s32 %v10599, %v10601
        %v10603 = vrot.slane %v10595, %v10602
        %v10605 = vunpack.c.l.s4 1934713408
        %v10606 = vunpack.c.0.s8 %v10605
        %v10607 = vlaneseq
        %v10608 = vshrl.u32 %v10607, 7
        %v10609 = vsub.s32 %v10606, %v10608
        %v10610 = vrot.slane %v10596, %v10609
        %v10611 = vcombine.low %v10546, %v10562
        %v10612 = vcombine.high %v10546, %v10562
        %v10614 = vunpack.c.l.s4 1934713408
        %v10615 = vunpack.c.0.s8 %v10614
        %v10616 = vlaneseq
        %v10617 = vshrl.u32 %v10616, 7
        %v10618 = vsub.s32 %v10615, %v10617
        %v10619 = vrot.slane %v10611, %v10618
        %v10621 = vunpack.c.l.s4 1934713408
        %v10622 = vunpack.c.0.s8 %v10621
        %v10623 = vlaneseq
        %v10624 = vshrl.u32 %v10623, 7
        %v10625 = vsub.s32 %v10622, %v10624
        %v10626 = vrot.slane %v10612, %v10625
        %v10627 = vcombine.low %v10571, %v10603
        %v10628 = vcombine.high %v10571, %v10603
        %v10629 = vcombine.low %v10578, %v10610
        %v10630 = vcombine.high %v10578, %v10610
        %v10631 = vcombine.low %v10587, %v10619
        %v10632 = vcombine.high %v10587, %v10619
        %v10633 = vcombine.low %v10594, %v10626
        %v10634 = vcombine.high %v10594, %v10626
        %10635 = vxpose.xlu0.b32.start [1/16] %v10491, 128
        %10636 = vxpose.xlu0.b32.cont [2/16] 0.0, 128
        %10637 = vxpose.xlu0.b32.cont [3/16] 0.0, 128
        %10638 = vxpose.xlu0.b32.cont [4/16] 0.0, 128
        %10639 = vxpose.xlu0.b32.cont [5/16] 0.0, 128
        %10640 = vxpose.xlu0.b32.cont [6/16] 0.0, 128
        %10641 = vxpose.xlu0.b32.cont [7/16] 0.0, 128
        %10642 = vxpose.xlu0.b32.cont [8/16] 0.0, 128
        %10643 = vxpose.xlu0.b32.cont [9/16] 0.0, 128
        %10644 = vxpose.xlu0.b32.cont [10/16] 0.0, 128
        %10645 = vxpose.xlu0.b32.cont [11/16] 0.0, 128
        %10646 = vxpose.xlu0.b32.cont [12/16] 0.0, 128
        %10647 = vxpose.xlu0.b32.cont [13/16] 0.0, 128
        %10648 = vxpose.xlu0.b32.cont [14/16] 0.0, 128
        %10649 = vxpose.xlu0.b32.cont [15/16] 0.0, 128
        %10650 = vxpose.xlu0.b32.end [16/16] 0.0, 128
        %v10651 = vpop.trf.xlu0
        %v10652 = vpop.trf.xlu0
        %v10653 = vpop.trf.xlu0
        %v10654 = vpop.trf.xlu0
        %v10655 = vpop.trf.xlu0
        %v10656 = vpop.trf.xlu0
        %v10657 = vpop.trf.xlu0
        %v10658 = vpop.trf.xlu0
        %v10659 = vpop.trf.xlu0
        %v10660 = vpop.trf.xlu0
        %v10661 = vpop.trf.xlu0
        %v10662 = vpop.trf.xlu0
        %v10663 = vpop.trf.xlu0
        %v10664 = vpop.trf.xlu0
        %v10665 = vpop.trf.xlu0
        %v10666 = vpop.trf.xlu0
        %10667 = vxpose.xlu0.b32.start [1/16] %v10492, 128
        %10668 = vxpose.xlu0.b32.cont [2/16] 0.0, 128
        %10669 = vxpose.xlu0.b32.cont [3/16] 0.0, 128
        %10670 = vxpose.xlu0.b32.cont [4/16] 0.0, 128
        %10671 = vxpose.xlu0.b32.cont [5/16] 0.0, 128
        %10672 = vxpose.xlu0.b32.cont [6/16] 0.0, 128
        %10673 = vxpose.xlu0.b32.cont [7/16] 0.0, 128
        %10674 = vxpose.xlu0.b32.cont [8/16] 0.0, 128
        %10675 = vxpose.xlu0.b32.cont [9/16] 0.0, 128
        %10676 = vxpose.xlu0.b32.cont [10/16] 0.0, 128
        %10677 = vxpose.xlu0.b32.cont [11/16] 0.0, 128
        %10678 = vxpose.xlu0.b32.cont [12/16] 0.0, 128
        %10679 = vxpose.xlu0.b32.cont [13/16] 0.0, 128
        %10680 = vxpose.xlu0.b32.cont [14/16] 0.0, 128
        %10681 = vxpose.xlu0.b32.cont [15/16] 0.0, 128
        %10682 = vxpose.xlu0.b32.end [16/16] 0.0, 128
        %v10683 = vpop.trf.xlu0
        %v10684 = vpop.trf.xlu0
        %v10685 = vpop.trf.xlu0
        %v10686 = vpop.trf.xlu0
        %v10687 = vpop.trf.xlu0
        %v10688 = vpop.trf.xlu0
        %v10689 = vpop.trf.xlu0
        %v10690 = vpop.trf.xlu0
        %v10691 = vpop.trf.xlu0
        %v10692 = vpop.trf.xlu0
        %v10693 = vpop.trf.xlu0
        %v10694 = vpop.trf.xlu0
        %v10695 = vpop.trf.xlu0
        %v10696 = vpop.trf.xlu0
        %v10697 = vpop.trf.xlu0
        %v10698 = vpop.trf.xlu0
        %10699 = vxpose.xlu0.b32.start [1/16] %v10493, 128
        %10700 = vxpose.xlu0.b32.cont [2/16] 0.0, 128
        %10701 = vxpose.xlu0.b32.cont [3/16] 0.0, 128
        %10702 = vxpose.xlu0.b32.cont [4/16] 0.0, 128
        %10703 = vxpose.xlu0.b32.cont [5/16] 0.0, 128
        %10704 = vxpose.xlu0.b32.cont [6/16] 0.0, 128
        %10705 = vxpose.xlu0.b32.cont [7/16] 0.0, 128
        %10706 = vxpose.xlu0.b32.cont [8/16] 0.0, 128
        %10707 = vxpose.xlu0.b32.cont [9/16] 0.0, 128
        %10708 = vxpose.xlu0.b32.cont [10/16] 0.0, 128
        %10709 = vxpose.xlu0.b32.cont [11/16] 0.0, 128
        %10710 = vxpose.xlu0.b32.cont [12/16] 0.0, 128
        %10711 = vxpose.xlu0.b32.cont [13/16] 0.0, 128
        %10712 = vxpose.xlu0.b32.cont [14/16] 0.0, 128
        %10713 = vxpose.xlu0.b32.cont [15/16] 0.0, 128
        %10714 = vxpose.xlu0.b32.end [16/16] 0.0, 128
        %v10715 = vpop.trf.xlu0
        %v10716 = vpop.trf.xlu0
        %v10717 = vpop.trf.xlu0
        %v10718 = vpop.trf.xlu0
        %v10719 = vpop.trf.xlu0
        %v10720 = vpop.trf.xlu0
        %v10721 = vpop.trf.xlu0
        %v10722 = vpop.trf.xlu0
        %v10723 = vpop.trf.xlu0
        %v10724 = vpop.trf.xlu0
        %v10725 = vpop.trf.xlu0
        %v10726 = vpop.trf.xlu0
        %v10727 = vpop.trf.xlu0
        %v10728 = vpop.trf.xlu0
        %v10729 = vpop.trf.xlu0
        %v10730 = vpop.trf.xlu0
        %10731 = vxpose.xlu0.b32.start [1/16] %v10494, 128
        %10732 = vxpose.xlu0.b32.cont [2/16] 0.0, 128
        %10733 = vxpose.xlu0.b32.cont [3/16] 0.0, 128
        %10734 = vxpose.xlu0.b32.cont [4/16] 0.0, 128
        %10735 = vxpose.xlu0.b32.cont [5/16] 0.0, 128
        %10736 = vxpose.xlu0.b32.cont [6/16] 0.0, 128
        %10737 = vxpose.xlu0.b32.cont [7/16] 0.0, 128
        %10738 = vxpose.xlu0.b32.cont [8/16] 0.0, 128
        %10739 = vxpose.xlu0.b32.cont [9/16] 0.0, 128
        %10740 = vxpose.xlu0.b32.cont [10/16] 0.0, 128
        %10741 = vxpose.xlu0.b32.cont [11/16] 0.0, 128
        %10742 = vxpose.xlu0.b32.cont [12/16] 0.0, 128
        %10743 = vxpose.xlu0.b32.cont [13/16] 0.0, 128
        %10744 = vxpose.xlu0.b32.cont [14/16] 0.0, 128
        %10745 = vxpose.xlu0.b32.cont [15/16] 0.0, 128
        %10746 = vxpose.xlu0.b32.end [16/16] 0.0, 128
        %v10747 = vpop.trf.xlu0
        %v10748 = vpop.trf.xlu0
        %v10749 = vpop.trf.xlu0
        %v10750 = vpop.trf.xlu0
        %v10751 = vpop.trf.xlu0
        %v10752 = vpop.trf.xlu0
        %v10753 = vpop.trf.xlu0
        %v10754 = vpop.trf.xlu0
        %v10755 = vpop.trf.xlu0
        %v10756 = vpop.trf.xlu0
        %v10757 = vpop.trf.xlu0
        %v10758 = vpop.trf.xlu0
        %v10759 = vpop.trf.xlu0
        %v10760 = vpop.trf.xlu0
        %v10761 = vpop.trf.xlu0
        %v10762 = vpop.trf.xlu0
        %10763 = vxpose.xlu0.b32.start [1/16] %v10495, 128
        %10764 = vxpose.xlu0.b32.cont [2/16] 0.0, 128
        %10765 = vxpose.xlu0.b32.cont [3/16] 0.0, 128
        %10766 = vxpose.xlu0.b32.cont [4/16] 0.0, 128
        %10767 = vxpose.xlu0.b32.cont [5/16] 0.0, 128
        %10768 = vxpose.xlu0.b32.cont [6/16] 0.0, 128
        %10769 = vxpose.xlu0.b32.cont [7/16] 0.0, 128
        %10770 = vxpose.xlu0.b32.cont [8/16] 0.0, 128
        %10771 = vxpose.xlu0.b32.cont [9/16] 0.0, 128
        %10772 = vxpose.xlu0.b32.cont [10/16] 0.0, 128
        %10773 = vxpose.xlu0.b32.cont [11/16] 0.0, 128
        %10774 = vxpose.xlu0.b32.cont [12/16] 0.0, 128
        %10775 = vxpose.xlu0.b32.cont [13/16] 0.0, 128
        %10776 = vxpose.xlu0.b32.cont [14/16] 0.0, 128
        %10777 = vxpose.xlu0.b32.cont [15/16] 0.0, 128
        %10778 = vxpose.xlu0.b32.end [16/16] 0.0, 128
        %v10779 = vpop.trf.xlu0
        %v10780 = vpop.trf.xlu0
        %v10781 = vpop.trf.xlu0
        %v10782 = vpop.trf.xlu0
        %v10783 = vpop.trf.xlu0
        %v10784 = vpop.trf.xlu0
        %v10785 = vpop.trf.xlu0
        %v10786 = vpop.trf.xlu0
        %v10787 = vpop.trf.xlu0
        %v10788 = vpop.trf.xlu0
        %v10789 = vpop.trf.xlu0
        %v10790 = vpop.trf.xlu0
        %v10791 = vpop.trf.xlu0
        %v10792 = vpop.trf.xlu0
        %v10793 = vpop.trf.xlu0
        %v10794 = vpop.trf.xlu0
        %10795 = vxpose.xlu0.b32.start [1/16] %v10496, 128
        %10796 = vxpose.xlu0.b32.cont [2/16] 0.0, 128
        %10797 = vxpose.xlu0.b32.cont [3/16] 0.0, 128
        %10798 = vxpose.xlu0.b32.cont [4/16] 0.0, 128
        %10799 = vxpose.xlu0.b32.cont [5/16] 0.0, 128
        %10800 = vxpose.xlu0.b32.cont [6/16] 0.0, 128
        %10801 = vxpose.xlu0.b32.cont [7/16] 0.0, 128
        %10802 = vxpose.xlu0.b32.cont [8/16] 0.0, 128
        %10803 = vxpose.xlu0.b32.cont [9/16] 0.0, 128
        %10804 = vxpose.xlu0.b32.cont [10/16] 0.0, 128
        %10805 = vxpose.xlu0.b32.cont [11/16] 0.0, 128
        %10806 = vxpose.xlu0.b32.cont [12/16] 0.0, 128
        %10807 = vxpose.xlu0.b32.cont [13/16] 0.0, 128
        %10808 = vxpose.xlu0.b32.cont [14/16] 0.0, 128
        %10809 = vxpose.xlu0.b32.cont [15/16] 0.0, 128
        %10810 = vxpose.xlu0.b32.end [16/16] 0.0, 128
        %v10811 = vpop.trf.xlu0
        %v10812 = vpop.trf.xlu0
        %v10813 = vpop.trf.xlu0
        %v10814 = vpop.trf.xlu0
        %v10815 = vpop.trf.xlu0
        %v10816 = vpop.trf.xlu0
        %v10817 = vpop.trf.xlu0
        %v10818 = vpop.trf.xlu0
        %v10819 = vpop.trf.xlu0
        %v10820 = vpop.trf.xlu0
        %v10821 = vpop.trf.xlu0
        %v10822 = vpop.trf.xlu0
        %v10823 = vpop.trf.xlu0
        %v10824 = vpop.trf.xlu0
        %v10825 = vpop.trf.xlu0
        %v10826 = vpop.trf.xlu0
        %10827 = vxpose.xlu0.b32.start [1/16] %v10497, 128
        %10828 = vxpose.xlu0.b32.cont [2/16] 0.0, 128
        %10829 = vxpose.xlu0.b32.cont [3/16] 0.0, 128
        %10830 = vxpose.xlu0.b32.cont [4/16] 0.0, 128
        %10831 = vxpose.xlu0.b32.cont [5/16] 0.0, 128
        %10832 = vxpose.xlu0.b32.cont [6/16] 0.0, 128
        %10833 = vxpose.xlu0.b32.cont [7/16] 0.0, 128
        %10834 = vxpose.xlu0.b32.cont [8/16] 0.0, 128
        %10835 = vxpose.xlu0.b32.cont [9/16] 0.0, 128
        %10836 = vxpose.xlu0.b32.cont [10/16] 0.0, 128
        %10837 = vxpose.xlu0.b32.cont [11/16] 0.0, 128
        %10838 = vxpose.xlu0.b32.cont [12/16] 0.0, 128
        %10839 = vxpose.xlu0.b32.cont [13/16] 0.0, 128
        %10840 = vxpose.xlu0.b32.cont [14/16] 0.0, 128
        %10841 = vxpose.xlu0.b32.cont [15/16] 0.0, 128
        %10842 = vxpose.xlu0.b32.end [16/16] 0.0, 128
        %v10843 = vpop.trf.xlu0
        %v10844 = vpop.trf.xlu0
        %v10845 = vpop.trf.xlu0
        %v10846 = vpop.trf.xlu0
        %v10847 = vpop.trf.xlu0
        %v10848 = vpop.trf.xlu0
        %v10849 = vpop.trf.xlu0
        %v10850 = vpop.trf.xlu0
        %v10851 = vpop.trf.xlu0
        %v10852 = vpop.trf.xlu0
        %v10853 = vpop.trf.xlu0
        %v10854 = vpop.trf.xlu0
        %v10855 = vpop.trf.xlu0
        %v10856 = vpop.trf.xlu0
        %v10857 = vpop.trf.xlu0
        %v10858 = vpop.trf.xlu0
        %10859 = vxpose.xlu0.b32.start [1/16] %v10498, 128
        %10860 = vxpose.xlu0.b32.cont [2/16] 0.0, 128
        %10861 = vxpose.xlu0.b32.cont [3/16] 0.0, 128
        %10862 = vxpose.xlu0.b32.cont [4/16] 0.0, 128
        %10863 = vxpose.xlu0.b32.cont [5/16] 0.0, 128
        %10864 = vxpose.xlu0.b32.cont [6/16] 0.0, 128
        %10865 = vxpose.xlu0.b32.cont [7/16] 0.0, 128
        %10866 = vxpose.xlu0.b32.cont [8/16] 0.0, 128
        %10867 = vxpose.xlu0.b32.cont [9/16] 0.0, 128
        %10868 = vxpose.xlu0.b32.cont [10/16] 0.0, 128
        %10869 = vxpose.xlu0.b32.cont [11/16] 0.0, 128
        %10870 = vxpose.xlu0.b32.cont [12/16] 0.0, 128
        %10871 = vxpose.xlu0.b32.cont [13/16] 0.0, 128
        %10872 = vxpose.xlu0.b32.cont [14/16] 0.0, 128
        %10873 = vxpose.xlu0.b32.cont [15/16] 0.0, 128
        %10874 = vxpose.xlu0.b32.end [16/16] 0.0, 128
        %v10875 = vpop.trf.xlu0
        %v10876 = vpop.trf.xlu0
        %v10877 = vpop.trf.xlu0
        %v10878 = vpop.trf.xlu0
        %v10879 = vpop.trf.xlu0
        %v10880 = vpop.trf.xlu0
        %v10881 = vpop.trf.xlu0
        %v10882 = vpop.trf.xlu0
        %v10883 = vpop.trf.xlu0
        %v10884 = vpop.trf.xlu0
        %v10885 = vpop.trf.xlu0
        %v10886 = vpop.trf.xlu0
        %v10887 = vpop.trf.xlu0
        %v10888 = vpop.trf.xlu0
        %v10889 = vpop.trf.xlu0
        %v10890 = vpop.trf.xlu0
        %10891 = vxpose.xlu0.b32.start [1/16] %v10627, 128
        %10892 = vxpose.xlu0.b32.cont [2/16] 0.0, 128
        %10893 = vxpose.xlu0.b32.cont [3/16] 0.0, 128
        %10894 = vxpose.xlu0.b32.cont [4/16] 0.0, 128
        %10895 = vxpose.xlu0.b32.cont [5/16] 0.0, 128
        %10896 = vxpose.xlu0.b32.cont [6/16] 0.0, 128
        %10897 = vxpose.xlu0.b32.cont [7/16] 0.0, 128
        %10898 = vxpose.xlu0.b32.cont [8/16] 0.0, 128
        %10899 = vxpose.xlu0.b32.cont [9/16] 0.0, 128
        %10900 = vxpose.xlu0.b32.cont [10/16] 0.0, 128
        %10901 = vxpose.xlu0.b32.cont [11/16] 0.0, 128
        %10902 = vxpose.xlu0.b32.cont [12/16] 0.0, 128
        %10903 = vxpose.xlu0.b32.cont [13/16] 0.0, 128
        %10904 = vxpose.xlu0.b32.cont [14/16] 0.0, 128
        %10905 = vxpose.xlu0.b32.cont [15/16] 0.0, 128
        %10906 = vxpose.xlu0.b32.end [16/16] 0.0, 128
        %v10907 = vpop.trf.xlu0
        %v10908 = vpop.trf.xlu0
        %v10909 = vpop.trf.xlu0
        %v10910 = vpop.trf.xlu0
        %v10911 = vpop.trf.xlu0
        %v10912 = vpop.trf.xlu0
        %v10913 = vpop.trf.xlu0
        %v10914 = vpop.trf.xlu0
        %v10915 = vpop.trf.xlu0
        %v10916 = vpop.trf.xlu0
        %v10917 = vpop.trf.xlu0
        %v10918 = vpop.trf.xlu0
        %v10919 = vpop.trf.xlu0
        %v10920 = vpop.trf.xlu0
        %v10921 = vpop.trf.xlu0
        %v10922 = vpop.trf.xlu0
        %10923 = vxpose.xlu0.b32.start [1/16] %v10628, 128
        %10924 = vxpose.xlu0.b32.cont [2/16] 0.0, 128
        %10925 = vxpose.xlu0.b32.cont [3/16] 0.0, 128
        %10926 = vxpose.xlu0.b32.cont [4/16] 0.0, 128
        %10927 = vxpose.xlu0.b32.cont [5/16] 0.0, 128
        %10928 = vxpose.xlu0.b32.cont [6/16] 0.0, 128
        %10929 = vxpose.xlu0.b32.cont [7/16] 0.0, 128
        %10930 = vxpose.xlu0.b32.cont [8/16] 0.0, 128
        %10931 = vxpose.xlu0.b32.cont [9/16] 0.0, 128
        %10932 = vxpose.xlu0.b32.cont [10/16] 0.0, 128
        %10933 = vxpose.xlu0.b32.cont [11/16] 0.0, 128
        %10934 = vxpose.xlu0.b32.cont [12/16] 0.0, 128
        %10935 = vxpose.xlu0.b32.cont [13/16] 0.0, 128
        %10936 = vxpose.xlu0.b32.cont [14/16] 0.0, 128
        %10937 = vxpose.xlu0.b32.cont [15/16] 0.0, 128
        %10938 = vxpose.xlu0.b32.end [16/16] 0.0, 128
        %v10939 = vpop.trf.xlu0
        %v10940 = vpop.trf.xlu0
        %v10941 = vpop.trf.xlu0
        %v10942 = vpop.trf.xlu0
        %v10943 = vpop.trf.xlu0
        %v10944 = vpop.trf.xlu0
        %v10945 = vpop.trf.xlu0
        %v10946 = vpop.trf.xlu0
        %v10947 = vpop.trf.xlu0
        %v10948 = vpop.trf.xlu0
        %v10949 = vpop.trf.xlu0
        %v10950 = vpop.trf.xlu0
        %v10951 = vpop.trf.xlu0
        %v10952 = vpop.trf.xlu0
        %v10953 = vpop.trf.xlu0
        %v10954 = vpop.trf.xlu0
        %10955 = vxpose.xlu0.b32.start [1/16] %v10629, 128
        %10956 = vxpose.xlu0.b32.cont [2/16] 0.0, 128
        %10957 = vxpose.xlu0.b32.cont [3/16] 0.0, 128
        %10958 = vxpose.xlu0.b32.cont [4/16] 0.0, 128
        %10959 = vxpose.xlu0.b32.cont [5/16] 0.0, 128
        %10960 = vxpose.xlu0.b32.cont [6/16] 0.0, 128
        %10961 = vxpose.xlu0.b32.cont [7/16] 0.0, 128
        %10962 = vxpose.xlu0.b32.cont [8/16] 0.0, 128
        %10963 = vxpose.xlu0.b32.cont [9/16] 0.0, 128
        %10964 = vxpose.xlu0.b32.cont [10/16] 0.0, 128
        %10965 = vxpose.xlu0.b32.cont [11/16] 0.0, 128
        %10966 = vxpose.xlu0.b32.cont [12/16] 0.0, 128
        %10967 = vxpose.xlu0.b32.cont [13/16] 0.0, 128
        %10968 = vxpose.xlu0.b32.cont [14/16] 0.0, 128
        %10969 = vxpose.xlu0.b32.cont [15/16] 0.0, 128
        %10970 = vxpose.xlu0.b32.end [16/16] 0.0, 128
        %v10971 = vpop.trf.xlu0
        %v10972 = vpop.trf.xlu0
        %v10973 = vpop.trf.xlu0
        %v10974 = vpop.trf.xlu0
        %v10975 = vpop.trf.xlu0
        %v10976 = vpop.trf.xlu0
        %v10977 = vpop.trf.xlu0
        %v10978 = vpop.trf.xlu0
        %v10979 = vpop.trf.xlu0
        %v10980 = vpop.trf.xlu0
        %v10981 = vpop.trf.xlu0
        %v10982 = vpop.trf.xlu0
        %v10983 = vpop.trf.xlu0
        %v10984 = vpop.trf.xlu0
        %v10985 = vpop.trf.xlu0
        %v10986 = vpop.trf.xlu0
        %10987 = vxpose.xlu0.b32.start [1/16] %v10630, 128
        %10988 = vxpose.xlu0.b32.cont [2/16] 0.0, 128
        %10989 = vxpose.xlu0.b32.cont [3/16] 0.0, 128
        %10990 = vxpose.xlu0.b32.cont [4/16] 0.0, 128
        %10991 = vxpose.xlu0.b32.cont [5/16] 0.0, 128
        %10992 = vxpose.xlu0.b32.cont [6/16] 0.0, 128
        %10993 = vxpose.xlu0.b32.cont [7/16] 0.0, 128
        %10994 = vxpose.xlu0.b32.cont [8/16] 0.0, 128
        %10995 = vxpose.xlu0.b32.cont [9/16] 0.0, 128
        %10996 = vxpose.xlu0.b32.cont [10/16] 0.0, 128
        %10997 = vxpose.xlu0.b32.cont [11/16] 0.0, 128
        %10998 = vxpose.xlu0.b32.cont [12/16] 0.0, 128
        %10999 = vxpose.xlu0.b32.cont [13/16] 0.0, 128
        %11000 = vxpose.xlu0.b32.cont [14/16] 0.0, 128
        %11001 = vxpose.xlu0.b32.cont [15/16] 0.0, 128
        %11002 = vxpose.xlu0.b32.end [16/16] 0.0, 128
        %v11003 = vpop.trf.xlu0
        %v11004 = vpop.trf.xlu0
        %v11005 = vpop.trf.xlu0
        %v11006 = vpop.trf.xlu0
        %v11007 = vpop.trf.xlu0
        %v11008 = vpop.trf.xlu0
        %v11009 = vpop.trf.xlu0
        %v11010 = vpop.trf.xlu0
        %v11011 = vpop.trf.xlu0
        %v11012 = vpop.trf.xlu0
        %v11013 = vpop.trf.xlu0
        %v11014 = vpop.trf.xlu0
        %v11015 = vpop.trf.xlu0
        %v11016 = vpop.trf.xlu0
        %v11017 = vpop.trf.xlu0
        %v11018 = vpop.trf.xlu0
        %11019 = vxpose.xlu0.b32.start [1/16] %v10631, 128
        %11020 = vxpose.xlu0.b32.cont [2/16] 0.0, 128
        %11021 = vxpose.xlu0.b32.cont [3/16] 0.0, 128
        %11022 = vxpose.xlu0.b32.cont [4/16] 0.0, 128
        %11023 = vxpose.xlu0.b32.cont [5/16] 0.0, 128
        %11024 = vxpose.xlu0.b32.cont [6/16] 0.0, 128
        %11025 = vxpose.xlu0.b32.cont [7/16] 0.0, 128
        %11026 = vxpose.xlu0.b32.cont [8/16] 0.0, 128
        %11027 = vxpose.xlu0.b32.cont [9/16] 0.0, 128
        %11028 = vxpose.xlu0.b32.cont [10/16] 0.0, 128
        %11029 = vxpose.xlu0.b32.cont [11/16] 0.0, 128
        %11030 = vxpose.xlu0.b32.cont [12/16] 0.0, 128
        %11031 = vxpose.xlu0.b32.cont [13/16] 0.0, 128
        %11032 = vxpose.xlu0.b32.cont [14/16] 0.0, 128
        %11033 = vxpose.xlu0.b32.cont [15/16] 0.0, 128
        %11034 = vxpose.xlu0.b32.end [16/16] 0.0, 128
        %v11035 = vpop.trf.xlu0
        %v11036 = vpop.trf.xlu0
        %v11037 = vpop.trf.xlu0
        %v11038 = vpop.trf.xlu0
        %v11039 = vpop.trf.xlu0
        %v11040 = vpop.trf.xlu0
        %v11041 = vpop.trf.xlu0
        %v11042 = vpop.trf.xlu0
        %v11043 = vpop.trf.xlu0
        %v11044 = vpop.trf.xlu0
        %v11045 = vpop.trf.xlu0
        %v11046 = vpop.trf.xlu0
        %v11047 = vpop.trf.xlu0
        %v11048 = vpop.trf.xlu0
        %v11049 = vpop.trf.xlu0
        %v11050 = vpop.trf.xlu0
        %11051 = vxpose.xlu0.b32.start [1/16] %v10632, 128
        %11052 = vxpose.xlu0.b32.cont [2/16] 0.0, 128
        %11053 = vxpose.xlu0.b32.cont [3/16] 0.0, 128
        %11054 = vxpose.xlu0.b32.cont [4/16] 0.0, 128
        %11055 = vxpose.xlu0.b32.cont [5/16] 0.0, 128
        %11056 = vxpose.xlu0.b32.cont [6/16] 0.0, 128
        %11057 = vxpose.xlu0.b32.cont [7/16] 0.0, 128
        %11058 = vxpose.xlu0.b32.cont [8/16] 0.0, 128
        %11059 = vxpose.xlu0.b32.cont [9/16] 0.0, 128
        %11060 = vxpose.xlu0.b32.cont [10/16] 0.0, 128
        %11061 = vxpose.xlu0.b32.cont [11/16] 0.0, 128
        %11062 = vxpose.xlu0.b32.cont [12/16] 0.0, 128
        %11063 = vxpose.xlu0.b32.cont [13/16] 0.0, 128
        %11064 = vxpose.xlu0.b32.cont [14/16] 0.0, 128
        %11065 = vxpose.xlu0.b32.cont [15/16] 0.0, 128
        %11066 = vxpose.xlu0.b32.end [16/16] 0.0, 128
        %v11067 = vpop.trf.xlu0
        %v11068 = vpop.trf.xlu0
        %v11069 = vpop.trf.xlu0
        %v11070 = vpop.trf.xlu0
        %v11071 = vpop.trf.xlu0
        %v11072 = vpop.trf.xlu0
        %v11073 = vpop.trf.xlu0
        %v11074 = vpop.trf.xlu0
        %v11075 = vpop.trf.xlu0
        %v11076 = vpop.trf.xlu0
        %v11077 = vpop.trf.xlu0
        %v11078 = vpop.trf.xlu0
        %v11079 = vpop.trf.xlu0
        %v11080 = vpop.trf.xlu0
        %v11081 = vpop.trf.xlu0
        %v11082 = vpop.trf.xlu0
        %11083 = vxpose.xlu0.b32.start [1/16] %v10633, 128
        %11084 = vxpose.xlu0.b32.cont [2/16] 0.0, 128
        %11085 = vxpose.xlu0.b32.cont [3/16] 0.0, 128
        %11086 = vxpose.xlu0.b32.cont [4/16] 0.0, 128
        %11087 = vxpose.xlu0.b32.cont [5/16] 0.0, 128
        %11088 = vxpose.xlu0.b32.cont [6/16] 0.0, 128
        %11089 = vxpose.xlu0.b32.cont [7/16] 0.0, 128
        %11090 = vxpose.xlu0.b32.cont [8/16] 0.0, 128
        %11091 = vxpose.xlu0.b32.cont [9/16] 0.0, 128
        %11092 = vxpose.xlu0.b32.cont [10/16] 0.0, 128
        %11093 = vxpose.xlu0.b32.cont [11/16] 0.0, 128
        %11094 = vxpose.xlu0.b32.cont [12/16] 0.0, 128
        %11095 = vxpose.xlu0.b32.cont [13/16] 0.0, 128
        %11096 = vxpose.xlu0.b32.cont [14/16] 0.0, 128
        %11097 = vxpose.xlu0.b32.cont [15/16] 0.0, 128
        %11098 = vxpose.xlu0.b32.end [16/16] 0.0, 128
        %v11099 = vpop.trf.xlu0
        %v11100 = vpop.trf.xlu0
        %v11101 = vpop.trf.xlu0
        %v11102 = vpop.trf.xlu0
        %v11103 = vpop.trf.xlu0
        %v11104 = vpop.trf.xlu0
        %v11105 = vpop.trf.xlu0
        %v11106 = vpop.trf.xlu0
        %v11107 = vpop.trf.xlu0
        %v11108 = vpop.trf.xlu0
        %v11109 = vpop.trf.xlu0
        %v11110 = vpop.trf.xlu0
        %v11111 = vpop.trf.xlu0
        %v11112 = vpop.trf.xlu0
        %v11113 = vpop.trf.xlu0
        %v11114 = vpop.trf.xlu0
        %11115 = vxpose.xlu0.b32.start [1/16] %v10634, 128
        %11116 = vxpose.xlu0.b32.cont [2/16] 0.0, 128
        %11117 = vxpose.xlu0.b32.cont [3/16] 0.0, 128
        %11118 = vxpose.xlu0.b32.cont [4/16] 0.0, 128
        %11119 = vxpose.xlu0.b32.cont [5/16] 0.0, 128
        %11120 = vxpose.xlu0.b32.cont [6/16] 0.0, 128
        %11121 = vxpose.xlu0.b32.cont [7/16] 0.0, 128
        %11122 = vxpose.xlu0.b32.cont [8/16] 0.0, 128
        %11123 = vxpose.xlu0.b32.cont [9/16] 0.0, 128
        %11124 = vxpose.xlu0.b32.cont [10/16] 0.0, 128
        %11125 = vxpose.xlu0.b32.cont [11/16] 0.0, 128
        %11126 = vxpose.xlu0.b32.cont [12/16] 0.0, 128
        %11127 = vxpose.xlu0.b32.cont [13/16] 0.0, 128
        %11128 = vxpose.xlu0.b32.cont [14/16] 0.0, 128
        %11129 = vxpose.xlu0.b32.cont [15/16] 0.0, 128
        %11130 = vxpose.xlu0.b32.end [16/16] 0.0, 128
        %v11131 = vpop.trf.xlu0
        %v11132 = vpop.trf.xlu0
        %v11133 = vpop.trf.xlu0
        %v11134 = vpop.trf.xlu0
        %v11135 = vpop.trf.xlu0
        %v11136 = vpop.trf.xlu0
        %v11137 = vpop.trf.xlu0
        %v11138 = vpop.trf.xlu0
        %v11139 = vpop.trf.xlu0
        %v11140 = vpop.trf.xlu0
        %v11141 = vpop.trf.xlu0
        %v11142 = vpop.trf.xlu0
        %v11143 = vpop.trf.xlu0
        %v11144 = vpop.trf.xlu0
        %v11145 = vpop.trf.xlu0
        %v11146 = vpop.trf.xlu0
        %11147 = vxpose.xlu0.b32.start [1/16] %v10651, 128
        %11148 = vxpose.xlu0.b32.cont [2/16] %v10683, 128
        %11149 = vxpose.xlu0.b32.cont [3/16] %v10715, 128
        %11150 = vxpose.xlu0.b32.cont [4/16] %v10747, 128
        %11151 = vxpose.xlu0.b32.cont [5/16] %v10779, 128
        %11152 = vxpose.xlu0.b32.cont [6/16] %v10811, 128
        %11153 = vxpose.xlu0.b32.cont [7/16] %v10843, 128
        %11154 = vxpose.xlu0.b32.cont [8/16] %v10875, 128
        %11155 = vxpose.xlu0.b32.cont [9/16] %v10907, 128
        %11156 = vxpose.xlu0.b32.cont [10/16] %v10939, 128
        %11157 = vxpose.xlu0.b32.cont [11/16] %v10971, 128
        %11158 = vxpose.xlu0.b32.cont [12/16] %v11003, 128
        %11159 = vxpose.xlu0.b32.cont [13/16] %v11035, 128
        %11160 = vxpose.xlu0.b32.cont [14/16] %v11067, 128
        %11161 = vxpose.xlu0.b32.cont [15/16] %v11099, 128
        %11162 = vxpose.xlu0.b32.end [16/16] %v11131, 128
        %v11163 = vpop.trf.xlu0
        %v11164 = vpop.trf.xlu0
        %v11165 = vpop.trf.xlu0
        %v11166 = vpop.trf.xlu0
        %v11167 = vpop.trf.xlu0
        %v11168 = vpop.trf.xlu0
        %v11169 = vpop.trf.xlu0
        %v11170 = vpop.trf.xlu0
        %v11171 = vpop.trf.xlu0
        %v11172 = vpop.trf.xlu0
        %v11173 = vpop.trf.xlu0
        %v11174 = vpop.trf.xlu0
        %v11175 = vpop.trf.xlu0
        %v11176 = vpop.trf.xlu0
        %v11177 = vpop.trf.xlu0
        %v11178 = vpop.trf.xlu0
        %v11179 = vld [vmem:[#allocation5 + $0xa0] sm:$0xff]
        %v11180 = vld [vmem:[#allocation5 + $0xb0] sm:$0xff]
        %v11181 = vld [vmem:[#allocation5 + $0xc0] sm:$0xff]
        %v11182 = vld [vmem:[#allocation5 + $0xd0] sm:$0xff]
        %v11183 = vld [vmem:[#allocation5 + $0xe0] sm:$0xff]
        %v11184 = vld [vmem:[#allocation5 + $0xf0] sm:$0xff]
        %v11185 = vld [vmem:[#allocation5 + $0x100] sm:$0xff]
        %v11186 = vld [vmem:[#allocation5 + $0x110] sm:$0xff]
        %v11187 = vld [vmem:[#allocation5 + $0x120] sm:$0xff]
        %v11188 = vld [vmem:[#allocation5 + $0x130] sm:$0xff]
        %v11189 = vld [vmem:[#allocation5 + $0x140] sm:$0xff]
        %v11190 = vld [vmem:[#allocation5 + $0x150] sm:$0xff]
        %v11191 = vld [vmem:[#allocation5 + $0x160] sm:$0xff]
        %v11192 = vld [vmem:[#allocation5 + $0x170] sm:$0xff]
        %v11193 = vld [vmem:[#allocation5 + $0x180] sm:$0xff]
        %v11194 = vld [vmem:[#allocation5 + $0x190] sm:$0xff]
        %v11195 = vld [vmem:[#allocation5 + $0x1a0] ss:$0 sm:$0xff]
        %11196 = vmatprep.subr.mxu0 0.0
        %11197 = vmatpush1.msra.mxu0 %v11194
        %11198 = vmatprep.subr.mxu0 0.0
        %11199 = vmatpush1.msra.mxu0 %v11193
        %11200 = vmatprep.subr.mxu0 0.0
        %11201 = vmatpush1.msra.mxu0 %v11192
        %11202 = vmatprep.subr.mxu0 0.0
        %11203 = vmatpush1.msra.mxu0 %v11191
        %11204 = vmatprep.subr.mxu0 0.0
        %11205 = vmatpush1.msra.mxu0 %v11190
        %11206 = vmatprep.subr.mxu0 0.0
        %11207 = vmatpush1.msra.mxu0 %v11189
        %11208 = vmatprep.subr.mxu0 0.0
        %11209 = vmatpush1.msra.mxu0 %v11188
        %11210 = vmatprep.subr.mxu0 0.0
        %11211 = vmatpush1.msra.mxu0 %v11187
        %11212 = vmatprep.subr.mxu0 0.0
        %11213 = vmatpush1.msra.mxu0 %v11186
        %11214 = vmatprep.subr.mxu0 0.0
        %11215 = vmatpush1.msra.mxu0 %v11185
        %11216 = vmatprep.subr.mxu0 0.0
        %11217 = vmatpush1.msra.mxu0 %v11184
        %11218 = vmatprep.subr.mxu0 0.0
        %11219 = vmatpush1.msra.mxu0 %v11183
        %11220 = vmatprep.subr.mxu0 0.0
        %11221 = vmatpush1.msra.mxu0 %v11182
        %11222 = vmatprep.subr.mxu0 0.0
        %11223 = vmatpush1.msra.mxu0 %v11181
        %11224 = vmatprep.subr.mxu0 0.0
        %11225 = vmatpush1.msra.mxu0 %v11180
        %11226 = vmatprep.subr.mxu0 0.0
        %11227 = vmatpush1.msra.mxu0 %v11179
        %11228 = vmatprep.subr.mxu0 0.0
        %11229 = vmatpush2.msra.mxu0 0.0
        %11230 = vmatprep.subr.mxu0 0.0
        %11231 = vmatpush2.msra.mxu0 0.0
        %11232 = vmatprep.subr.mxu0 0.0
        %11233 = vmatpush2.msra.mxu0 0.0
        %11234 = vmatprep.subr.mxu0 0.0
        %11235 = vmatpush2.msra.mxu0 0.0
        %11236 = vmatprep.subr.mxu0 0.0
        %11237 = vmatpush2.msra.mxu0 0.0
        %11238 = vmatprep.subr.mxu0 0.0
        %11239 = vmatpush2.msra.mxu0 0.0
        %11240 = vmatprep.subr.mxu0 0.0
        %11241 = vmatpush2.msra.mxu0 0.0
        %11242 = vmatprep.subr.mxu0 0.0
        %11243 = vmatpush2.msra.mxu0 0.0
        %11244 = vmatprep.subr.mxu0 0.0
        %11245 = vmatpush2.msra.mxu0 0.0
        %11246 = vmatprep.subr.mxu0 0.0
        %11247 = vmatpush2.msra.mxu0 0.0
        %11248 = vmatprep.subr.mxu0 0.0
        %11249 = vmatpush2.msra.mxu0 0.0
        %11250 = vmatprep.subr.mxu0 0.0
        %11251 = vmatpush2.msra.mxu0 0.0
        %11252 = vmatprep.subr.mxu0 0.0
        %11253 = vmatpush2.msra.mxu0 0.0
        %11254 = vmatprep.subr.mxu0 0.0
        %11255 = vmatpush2.msra.mxu0 0.0
        %11256 = vmatprep.subr.mxu0 0.0
        %11257 = vmatpush2.msra.mxu0 0.0
        %11258 = vmatprep.subr.mxu0 0.0
        %11259 = vmatpush2.msra.mxu0 0.0
        %11260 = vmatprep.mubr.f32.mxu0 0.0
        %11261 = vmatmul.mubr.f32.gmra.mxu0 %v11163
        %v11262 = vpop.f32.mrf.mxu0
        %v11263 = vadd.f32 %v11195, %v11262
        %v11264 = vpop.f32.mrf.mxu0
        %11265 = vdwg.mxu0
        %11266 = vst [vmem:[%s174] sm:$0xff] %v11263
        %s11267 = sand.u32 %s75, 1
        %s11268 = scalar_lea.sflag [#allocation4], %s11267
        %s11269 = sand.u32 %s75, 1
        %s11270 = smul.addr %s11269, 8
        %s11271 = scalar_lea.vmem [#allocation7], %s11270
        // Predicated region
        $region37: #{tpu_custom_call.1} parent=27 // pred_check
          %p11272 = pneg %p85
        $region38: #{tpu_custom_call.1} parent=27 // pred_check_branch
          %11274 = sbr.rel (%p11272) target = $region40
        $region39: #{tpu_custom_call.1} parent=27 // pred_region
          %s11276 = ssub.s32 128, 128
          %11277 = vsyncadd %s11268, %s11276
          %s11278 = smul.addr %s20, 128
          %s11279 = scalar_lea.hbm %s2, %s11278
          %s11281 = sshll.u32 %s11271, 4
          %s11282 = int_to_ptr.vmem [resolvable:$true] %s11281
          %11284 = dma.vmem_to_hbm [thread:$0]  %s11282, 128, %s11279, %s11268
        $region40: #{tpu_custom_call.1} parent=27 // pred_fallthru
          _
      $region28: #{tpu_custom_call.1} parent=5 // pred_fallthru
        _
      %p11285 = scmp.le.s32.totalorder 2, %s15
      // Predicated region
      $region41: #{tpu_custom_call.1} parent=5 // pred_check
        %p11286 = pneg %p11285
      $region42: #{tpu_custom_call.1} parent=5 // pred_check_branch
        %11288 = sbr.rel (%p11286) target = $region44
      $region43: #{tpu_custom_call.1} parent=5 // pred_region
        %s11289 = ssub.s32 %s15, 2
        // Predicated region
        $region45: #{tpu_custom_call.1} parent=43 // pred_check
          %p11290 = pneg %p91
        $region46: #{tpu_custom_call.1} parent=43 // pred_check_branch
          %11292 = sbr.rel (%p11290) target = $region48
        $region47: #{tpu_custom_call.1} parent=43 // pred_region
          %s11293 = sand.u32 %s76, 1
          %s11294 = scalar_lea.sflag [#allocation4], %s11293
          %s11295 = sand.u32 %s76, 1
          %s11296 = smul.addr %s11295, 8
          %s11297 = scalar_lea.vmem [#allocation7], %s11296
          %11298 = dma.done %s11294, 128
        $region48: #{tpu_custom_call.1} parent=43 // pred_fallthru
          _
      $region44: #{tpu_custom_call.1} parent=5 // pred_fallthru
        _
    $region6: #{tpu_custom_call.1} parent=1 // loop_footer
      %s19 = sadd.s32 1, %s15
    $region7: #{tpu_custom_call.1} parent=1 // loop_footer_branch
      %14 = sbr.rel target = $region3
    $region8: #{tpu_custom_call.1} parent=1 // loop_exit
      _
    %11299 = vsyncpa [#allocation3], 1
    %s11300 = scalar_lea.sflag [#allocation3], 1
    %11301 = vsyncpa %s11300, 1
    %11302 = vsyncpa [#allocation6], 1
    %11303 = vsyncpa [#allocation4], 1
    %s11304 = scalar_lea.sflag [#allocation4], 1
    %11305 = vsyncpa %s11304, 1

</llo_original>
